<compile_context>
chip_gen: v7x
topology: tpu7x:2x2x1
jax: 0.10.0
libtpu: 0.0.40
codegen_flags: <defaults>
</compile_context>

<pallas_src>
import functools

import jax
import jax.numpy as jnp
from jax.experimental import pallas as pl
from jax.experimental.pallas import tpu as pltpu


# --------------------------- shared math helpers ----------------------------
# Plain jnp functions: traced both inside the Pallas kernels (on VMEM tiles)
# and inside the pure-JAX reference used for the correctness check.

def _channel_attention(y, w1, w2):
    """CBAM channel attention.  y: (C, HW) f32; w1: (Cr, C); w2: (C, Cr)."""
    stat = jnp.concatenate(
        [jnp.max(y, axis=1, keepdims=True),
         jnp.mean(y, axis=1, keepdims=True)], axis=1)                  # (C, 2)
    h = jnp.maximum(jnp.dot(w1, stat, preferred_element_type=jnp.float32), 0.0)
    m = jnp.dot(w2, h, preferred_element_type=jnp.float32)             # (C, 2)
    att = jax.nn.sigmoid(m[:, 0:1] + m[:, 1:2])                        # (C, 1)
    return y * att


def _spatial_attention(y, msp):
    """CBAM 7x7 spatial attention as one MXU dot.

    y: (C, HW); msp: (2*HW, HW) dense conv matrix (rows 0..HW-1 = max map,
    rows HW..2*HW-1 = mean map).
    """
    pooled = jnp.concatenate(
        [jnp.max(y, axis=0, keepdims=True),
         jnp.mean(y, axis=0, keepdims=True)], axis=1)                  # (1, 2*HW)
    conv = jnp.dot(pooled, msp, preferred_element_type=jnp.float32)    # (1, HW)
    return y * jax.nn.sigmoid(conv)


# ------------------------------ Pallas kernels ------------------------------

def _branch_kernel(xcat_ref, wcat_ref, w1s_ref, w2s_ref, msp_ref,
                   out_xl_ref, l2g_ref, x1_ref, *, co, cm):
    # xcat_ref: (1, Cl+Cg, HW); wcat_ref: (3*co + cm, Cl+Cg)
    # One MXU matmul covers convl2l / convl2g / convg2l / spec.conv1.
    y = jnp.dot(wcat_ref[...], xcat_ref[0], preferred_element_type=jnp.float32)
    w1s = w1s_ref[...]            # hoisted loads (outside the unrolled loop)
    w2s = w2s_ref[...]
    outs = []
    for b in range(3):                       # b=0: l2l, b=1: l2g, b=2: g2l
        yb = y[co * b:co * (b + 1)]          # (co, HW)
        yb = _channel_attention(yb, w1s[b], w2s[b])
        yb = _spatial_attention(yb, msp_ref[b])
        outs.append(yb)
    out_xl_ref[0] = outs[0] + outs[2]        # cbam_l2l + cbam_g2l (gate = 1)
    l2g_ref[0] = outs[1]                     # cbam_l2g, consumed by kernel C
    x1_ref[0] = jnp.maximum(y[3 * co:3 * co + cm], 0.0)   # relu(spec.conv1(x_g))


def _spectral_unit_kernel(ffu_ref, flfu_ref, w1s_ref, w2s_ref, wcv_ref,
                          msp_fu_ref, msp_lfu_ref, gfu_ref, glfu_ref):
    # FourierUnit spectral-space stage: CBAM -> 1x1 conv -> ReLU, for fu & lfu.
    w1s = w1s_ref[...]
    w2s = w2s_ref[...]
    wcv = wcv_ref[...]

    def unit(f, idx, msp):
        f = _channel_attention(f, w1s[idx], w2s[idx])
        f = _spatial_attention(f, msp)
        g = jnp.dot(wcv[idx], f, preferred_element_type=jnp.float32)
        return jnp.maximum(g, 0.0)

    gfu_ref[0] = unit(ffu_ref[0], 0, msp_fu_ref[...])
    glfu_ref[0] = unit(flfu_ref[0], 1, msp_lfu_ref[...])


def _fuse_out_xg_kernel(x1_ref, fu_ref, lfu_ref, l2g_ref, w2_ref, out_ref):
    # out_xg = conv2(x1 + real(fu) + real(lfu_tiled)) + cbam(convl2g(x_l))
    total = x1_ref[0] + fu_ref[0] + lfu_ref[0]                          # (cm, HW)
    out_ref[0] = (jnp.dot(w2_ref[...], total, preferred_element_type=jnp.float32)
                  + l2g_ref[0])


# ------------------------------ wrapper glue --------------------------------

_PARALLEL = pltpu.CompilerParams(dimension_semantics=("parallel",))


def _spatial_conv_matrix(sp, H, W):
    """Dense (2*H*W, H*W) equivalent of a zero-padded 7x7 conv on [max, mean]."""
    HW = H * W
    idx = jnp.arange(HW)
    ph, pw = idx // W, idx % W                       # output position
    qh, qw = idx // W, idx % W                       # input position
    di = qh[:, None] - ph[None, :] + 3               # (q, p)
    dj = qw[:, None] - pw[None, :] + 3
    valid = (di >= 0) & (di < 7) & (dj >= 0) & (dj < 7)
    w = sp[:, jnp.clip(di, 0, 6), jnp.clip(dj, 0, 6)]          # (2, HW, HW)
    w = jnp.where(valid[None], w, 0.0)
    return w.reshape(2 * HW, HW).astype(jnp.float32)


def _spectral_space_input(x):
    """fftn -> interleaved (real, imag) channel layout, flattened spatial."""
    # TODO(synk): FFT has no Pallas primitive; computed with jnp.fft (XLA).
    N, C, H, W = x.shape
    f = jnp.fft.fftn(x, axes=(-2, -1), norm="ortho")
    f = jnp.stack([jnp.real(f), jnp.imag(f)], axis=2)          # (N, C, 2, H, W)
    return f.reshape(N, 2 * C, H * W).astype(jnp.float32)


def _spectral_space_output(g, C, H, W):
    """Recombine to complex, ifftn, keep real part (torch .float() on complex)."""
    N = g.shape[0]
    f = g.reshape(N, C, 2, H, W)
    fc = jax.lax.complex(f[:, :, 0], f[:, :, 1])
    out = jnp.fft.ifftn(fc, s=(H, W), axes=(-2, -1), norm="ortho")
    return jnp.real(out).astype(jnp.float32)


def mam_ffc_forward(x_l, x_g, params):
    # gated=False -> g2l_gate = l2g_gate = 1 ; spa_mask=None.
    N, cl, H, W = x_l.shape
    cg = x_g.shape[1]
    HW = H * W
    Hs, Ws = H // 2, W // 2
    spec = params["spec"]
    co = params["convl2l_w"].shape[0]            # out_cl = out_cg
    cm = spec["conv1_w"].shape[0]                # out_cg // 2

    # ---- kernel A: fused 1x1 convs + CBAMs + spec.conv1 ----
    zl = jnp.zeros((co, cg), jnp.float32)
    zg = jnp.zeros((co, cl), jnp.float32)
    wcat = jnp.concatenate([
        jnp.concatenate([params["convl2l_w"], zl], axis=1),
        jnp.concatenate([params["convl2g_w"], zl], axis=1),
        jnp.concatenate([zg, params["convg2l_w"]], axis=1),
        jnp.concatenate([jnp.zeros((cm, cl), jnp.float32), spec["conv1_w"]], axis=1),
    ], axis=0)                                                   # (3*co+cm, cl+cg)
    w1s3 = jnp.stack([params["cbam_l2l"]["w1"], params["cbam_l2g"]["w1"],
                      params["cbam_g2l"]["w1"]])
    w2s3 = jnp.stack([params["cbam_l2l"]["w2"], params["cbam_l2g"]["w2"],
                      params["cbam_g2l"]["w2"]])
    msp3 = jnp.stack([_spatial_conv_matrix(params["cbam_l2l"]["sp"], H, W),
                      _spatial_conv_matrix(params["cbam_l2g"]["sp"], H, W),
                      _spatial_conv_matrix(params["cbam_g2l"]["sp"], H, W)])

    xcat = jnp.concatenate([x_l, x_g], axis=1).reshape(N, cl + cg, HW)
    xcat = xcat.astype(jnp.float32)

    out_xl, l2g, x1 = pl.pallas_call(
        functools.partial(_branch_kernel, co=co, cm=cm),
        out_shape=(jax.ShapeDtypeStruct((N, co, HW), jnp.float32),
                   jax.ShapeDtypeStruct((N, co, HW), jnp.float32),
                   jax.ShapeDtypeStruct((N, cm, HW), jnp.float32)),
        grid=(N,),
        in_specs=[
            pl.BlockSpec((1, cl + cg, HW), lambda n: (n, 0, 0)),
            pl.BlockSpec(wcat.shape, lambda n: (0, 0)),
            pl.BlockSpec(w1s3.shape, lambda n: (0, 0, 0)),
            pl.BlockSpec(w2s3.shape, lambda n: (0, 0, 0)),
            pl.BlockSpec(msp3.shape, lambda n: (0, 0, 0)),
        ],
        out_specs=(pl.BlockSpec((1, co, HW), lambda n: (n, 0, 0)),
                   pl.BlockSpec((1, co, HW), lambda n: (n, 0, 0)),
                   pl.BlockSpec((1, cm, HW), lambda n: (n, 0, 0))),
        compiler_params=_PARALLEL,
    )(xcat, wcat, w1s3, w2s3, msp3)

    x1_img = x1.reshape(N, cm, H, W)

    # ---- FFTs (XLA glue) ----
    f_fu = _spectral_space_input(x1_img)                         # (N, 2*cm, HW)
    cq = cm // 4
    xs = x1_img[:, :cq].reshape(N, cq, 2, Hs, 2, Ws)
    xs = xs.transpose(0, 4, 2, 1, 3, 5).reshape(N, 4 * cq, Hs, Ws)   # LFU quadrants
    f_lfu = _spectral_space_input(xs)                            # (N, 2*cm, Hs*Ws)

    # ---- kernel B: fused spectral-space CBAM + conv (fu & lfu) ----
    w1s2 = jnp.stack([spec["fu"]["cbam"]["w1"], spec["lfu"]["cbam"]["w1"]])
    w2s2 = jnp.stack([spec["fu"]["cbam"]["w2"], spec["lfu"]["cbam"]["w2"]])
    wcv2 = jnp.stack([spec["fu"]["conv_w"], spec["lfu"]["conv_w"]])
    msp_fu = _spatial_conv_matrix(spec["fu"]["cbam"]["sp"], H, W)
    msp_lfu = _spatial_conv_matrix(spec["lfu"]["cbam"]["sp"], Hs, Ws)

    g_fu, g_lfu = pl.pallas_call(
        _spectral_unit_kernel,
        out_shape=(jax.ShapeDtypeStruct((N, 2 * cm, HW), jnp.float32),
                   jax.ShapeDtypeStruct((N, 2 * cm, Hs * Ws), jnp.float32)),
        grid=(N,),
        in_specs=[
            pl.BlockSpec((1, 2 * cm, HW), lambda n: (n, 0, 0)),
            pl.BlockSpec((1, 2 * cm, Hs * Ws), lambda n: (n, 0, 0)),
            pl.BlockSpec(w1s2.shape, lambda n: (0, 0, 0)),
            pl.BlockSpec(w2s2.shape, lambda n: (0, 0, 0)),
            pl.BlockSpec(wcv2.shape, lambda n: (0, 0, 0)),
            pl.BlockSpec(msp_fu.shape, lambda n: (0, 0)),
            pl.BlockSpec(msp_lfu.shape, lambda n: (0, 0)),
        ],
        out_specs=(pl.BlockSpec((1, 2 * cm, HW), lambda n: (n, 0, 0)),
                   pl.BlockSpec((1, 2 * cm, Hs * Ws), lambda n: (n, 0, 0))),
        compiler_params=_PARALLEL,
    )(f_fu, f_lfu, w1s2, w2s2, wcv2, msp_fu, msp_lfu)

    # ---- IFFTs (XLA glue) + LFU spatial tiling ----
    fu_real = _spectral_space_output(g_fu, cm, H, W)             # (N, cm, H, W)
    lfu_real = _spectral_space_output(g_lfu, cm, Hs, Ws)         # (N, cm, Hs, Ws)
    lfu_tiled = jnp.tile(lfu_real, (1, 1, 2, 2))                 # .repeat(1,1,2,2)

    # ---- kernel C: spec.conv2 over residual sum + out_xg assembly ----
    out_xg = pl.pallas_call(
        _fuse_out_xg_kernel,
        out_shape=jax.ShapeDtypeStruct((N, co, HW), jnp.float32),
        grid=(N,),
        in_specs=[
            pl.BlockSpec((1, cm, HW), lambda n: (n, 0, 0)),
            pl.BlockSpec((1, cm, HW), lambda n: (n, 0, 0)),
            pl.BlockSpec((1, cm, HW), lambda n: (n, 0, 0)),
            pl.BlockSpec((1, co, HW), lambda n: (n, 0, 0)),
            pl.BlockSpec(spec["conv2_w"].shape, lambda n: (0, 0)),
        ],
        out_specs=pl.BlockSpec((1, co, HW), lambda n: (n, 0, 0)),
        compiler_params=_PARALLEL,
    )(x1, fu_real.reshape(N, cm, HW), lfu_tiled.reshape(N, cm, HW),
      l2g, spec["conv2_w"])

    return out_xl.reshape(N, co, H, W), out_xg.reshape(N, co, H, W)


# --------------------------- pure-JAX reference ------------------------------
# Exactly the same math as the Pallas path, via jax.vmap over the batch.  Used
# only in __main__ to validate the Pallas plumbing (BlockSpecs / layouts).

def mam_ffc_reference(x_l, x_g, params):
    N, cl, H, W = x_l.shape
    cg = x_g.shape[1]
    HW = H * W
    Hs, Ws = H // 2, W // 2
    spec = params["spec"]
    co = params["convl2l_w"].shape[0]
    cm = spec["conv1_w"].shape[0]

    def cbam(y, p, msp):
        return _spatial_attention(_channel_attention(y, p["w1"], p["w2"]), msp)

    msp_l2l = _spatial_conv_matrix(params["cbam_l2l"]["sp"], H, W)
    msp_l2g = _spatial_conv_matrix(params["cbam_l2g"]["sp"], H, W)
    msp_g2l = _spatial_conv_matrix(params["cbam_g2l"]["sp"], H, W)

    xl = x_l.reshape(N, cl, HW).astype(jnp.float32)
    xg = x_g.reshape(N, cg, HW).astype(jnp.float32)

    def branch(xl_n, xg_n):
        l2l = cbam(jnp.dot(params["convl2l_w"], xl_n), params["cbam_l2l"], msp_l2l)
        l2g = cbam(jnp.dot(params["convl2g_w"], xl_n), params["cbam_l2g"], msp_l2g)
        g2l = cbam(jnp.dot(params["convg2l_w"], xg_n), params["cbam_g2l"], msp_g2l)
        x1 = jnp.maximum(jnp.dot(spec["conv1_w"], xg_n), 0.0)
        return l2l + g2l, l2g, x1

    out_xl, l2g, x1 = jax.vmap(branch)(xl, xg)
    x1_img = x1.reshape(N, cm, H, W)

    def fourier_unit(x_img, fp, Hc, Wc):
        c = x_img.shape[1]
        f = _spectral_space_input(x_img)                        # (N, 2c, Hc*Wc)
        msp = _spatial_conv_matrix(fp["cbam"]["sp"], Hc, Wc)

        def per_sample(fn):
            g = cbam(fn, fp["cbam"], msp)
            return jnp.maximum(jnp.dot(fp["conv_w"], g), 0.0)

        g = jax.vmap(per_sample)(f)
        return _spectral_space_output(g, c, Hc, Wc)             # (N, c, Hc, Wc)

    fu = fourier_unit(x1_img, spec["fu"], H, W)
    cq = cm // 4
    xs = x1_img[:, :cq].reshape(N, cq, 2, Hs, 2, Ws)
    xs = xs.transpose(0, 4, 2, 1, 3, 5).reshape(N, 4 * cq, Hs, Ws)
    lfu = jnp.tile(fourier_unit(xs, spec["lfu"], Hs, Ws), (1, 1, 2, 2))

    total = (x1_img + fu + lfu).reshape(N, cm, HW)
    spec_out = jnp.einsum("oc,ncp->nop", spec["conv2_w"], total)
    out_xg = spec_out + l2g
    return out_xl.reshape(N, co, H, W), out_xg.reshape(N, co, H, W)


# -------------------------------- parameters --------------------------------

def make_params():
    keys = iter(jax.random.split(jax.random.PRNGKey(0), 64))

    def p(shape, scale=0.25):
        return (scale * jax.random.normal(next(keys), shape)).astype(jnp.float32)

    def cbam_p(ch, red=2):
        # w1: (C//red, C), w2: (C, C//red), sp: 7x7 conv weight (2 in, 1 out)
        return dict(w1=p((ch // red, ch)), w2=p((ch, ch // red)), sp=p((2, 7, 7)))

    # in_cl = in_cg = out_cl = out_cg = 8
    return dict(
        convl2l_w=p((8, 8)), convl2g_w=p((8, 8)), convg2l_w=p((8, 8)),
        cbam_l2l=cbam_p(8), cbam_l2g=cbam_p(8), cbam_g2l=cbam_p(8),
        spec=dict(
            conv1_w=p((4, 8)),                 # Conv2d(in_cg=8 -> out_cg//2=4)
            conv2_w=p((8, 4)),                 # Conv2d(out_cg//2=4 -> out_cg=8)
            fu=dict(conv_w=p((8, 8)), cbam=cbam_p(8)),   # FourierUnit(4, 4)
            lfu=dict(conv_w=p((8, 8)), cbam=cbam_p(8)),  # FourierUnit(4, 4)
        ),
    )


if __name__ == "__main__":
    params = make_params()
    kx = jax.random.split(jax.random.PRNGKey(0), 3)
    x_l = jax.random.normal(kx[1], (2, 8, 16, 16), dtype=jnp.float32)
    x_g = jax.random.normal(kx[2], (2, 8, 16, 16), dtype=jnp.float32)

    fwd = jax.jit(functools.partial(mam_ffc_forward, params=params))
    out_xl, out_xg = fwd(x_l, x_g)
    jax.block_until_ready((out_xl, out_xg))

    assert out_xl.shape == (2, 8, 16, 16) and out_xg.shape == (2, 8, 16, 16)
    assert bool(jnp.isfinite(out_xl).all()) and bool(jnp.isfinite(out_xg).all())

    # Validate Pallas plumbing against the pure-JAX reference of the same math.
    # Loose absolute bound: plumbing/layout bugs give O(1) errors; MXU-vs-XLA
    # matmul precision differences stay far below this.
    ref_xl, ref_xg = jax.jit(functools.partial(mam_ffc_reference, params=params))(
        x_l, x_g)
    jax.block_until_ready((ref_xl, ref_xg))
    err = max(float(jnp.max(jnp.abs(out_xl - ref_xl))),
              float(jnp.max(jnp.abs(out_xg - ref_xg))))
    assert err < 1e-1, f"Pallas vs reference mismatch: max abs err = {err}"

    print("KERNEL_OK")
</pallas_src>

<mosaic_0001>
module attributes {stable_mosaic.version = 11 : i64} {
  func.func @_branch_kernel(%arg0: i32, %arg1: memref<1x16x256xf32, #tpu.memory_space<vmem>>, %arg2: memref<28x16xf32, #tpu.memory_space<vmem>>, %arg3: memref<3x4x8xf32, #tpu.memory_space<vmem>>, %arg4: memref<3x8x4xf32, #tpu.memory_space<vmem>>, %arg5: memref<3x512x256xf32, #tpu.memory_space<vmem>>, %arg6: memref<1x8x256xf32, #tpu.memory_space<vmem>>, %arg7: memref<1x8x256xf32, #tpu.memory_space<vmem>>, %arg8: memref<1x4x256xf32, #tpu.memory_space<vmem>>) attributes {dimension_semantics = [#tpu.dimension_semantics<parallel>], iteration_bounds = array<i64: 2>, scalar_prefetch = 0 : i64, scratch_operands = 0 : i64, tpu.core_type = #tpu.core_type<tc>, window_params = [{transform_indices = @transform_0, window_bounds = array<i64: 1, 16, 256>}, {pipeline_mode = #tpu.pipeline_mode<synchronous>, transform_indices = @transform_1, window_bounds = array<i64: 28, 16>}, {pipeline_mode = #tpu.pipeline_mode<synchronous>, transform_indices = @transform_2, window_bounds = array<i64: 3, 4, 8>}, {pipeline_mode = #tpu.pipeline_mode<synchronous>, transform_indices = @transform_3, window_bounds = array<i64: 3, 8, 4>}, {pipeline_mode = #tpu.pipeline_mode<synchronous>, transform_indices = @transform_4, window_bounds = array<i64: 3, 512, 256>}, {transform_indices = @transform_5, window_bounds = array<i64: 1, 8, 256>}, {transform_indices = @transform_6, window_bounds = array<i64: 1, 8, 256>}, {transform_indices = @transform_7, window_bounds = array<i64: 1, 4, 256>}]} {
    %c0 = arith.constant 0 : index
    %c0_0 = arith.constant 0 : index
    %0 = vector.load %arg2[%c0, %c0_0] : memref<28x16xf32, #tpu.memory_space<vmem>>, vector<28x16xf32>
    %c0_1 = arith.constant 0 : index
    %c0_2 = arith.constant 0 : index
    %c0_3 = arith.constant 0 : index
    %1 = vector.load %arg1[%c0_1, %c0_2, %c0_3] : memref<1x16x256xf32, #tpu.memory_space<vmem>>, vector<1x16x256xf32>
    %2 = vector.shape_cast %1 : vector<1x16x256xf32> to vector<16x256xf32>
    %cst = arith.constant dense<0.000000e+00> : vector<28x256xf32>
    %3 = tpu.matmul %0, %2, %cst {dimension_numbers = #tpu.dot_dimension_numbers<[1], [0], [0], [1], [0, 0, 1, 1], [], []>} : vector<28x16xf32>, vector<16x256xf32>, vector<28x256xf32> -> vector<28x256xf32>
    %c0_4 = arith.constant 0 : index
    %c0_5 = arith.constant 0 : index
    %c0_6 = arith.constant 0 : index
    %4 = vector.load %arg3[%c0_4, %c0_5, %c0_6] : memref<3x4x8xf32, #tpu.memory_space<vmem>>, vector<3x4x8xf32>
    %c0_7 = arith.constant 0 : index
    %c0_8 = arith.constant 0 : index
    %c0_9 = arith.constant 0 : index
    %5 = vector.load %arg4[%c0_7, %c0_8, %c0_9] : memref<3x8x4xf32, #tpu.memory_space<vmem>>, vector<3x8x4xf32>
    %6 = vector.extract_strided_slice %3 {offsets = [0, 0], sizes = [8, 256], strides = [1, 1]} : vector<28x256xf32> to vector<8x256xf32>
    %7 = vector.extract_strided_slice %4 {offsets = [0, 0, 0], sizes = [1, 4, 8], strides = [1, 1, 1]} : vector<3x4x8xf32> to vector<1x4x8xf32>
    %8 = vector.shape_cast %7 : vector<1x4x8xf32> to vector<4x8xf32>
    %9 = vector.extract_strided_slice %5 {offsets = [0, 0, 0], sizes = [1, 8, 4], strides = [1, 1, 1]} : vector<3x8x4xf32> to vector<1x8x4xf32>
    %10 = vector.shape_cast %9 : vector<1x8x4xf32> to vector<8x4xf32>
    %cst_10 = arith.constant dense<0xFF800000> : vector<8xf32>
    %11 = vector.multi_reduction <maximumf>, %6, %cst_10 [1] : vector<8x256xf32> to vector<8xf32>
    %12 = vector.shape_cast %11 : vector<8xf32> to vector<8x1xf32>
    %cst_11 = arith.constant dense<0.000000e+00> : vector<8xf32>
    %13 = vector.multi_reduction <add>, %6, %cst_11 [1] : vector<8x256xf32> to vector<8xf32>
    %14 = vector.shape_cast %13 : vector<8xf32> to vector<8x1xf32>
    %cst_12 = arith.constant 2.560000e+02 : f32
    %15 = vector.broadcast %cst_12 : f32 to vector<8x1xf32>
    %16 = arith.divf %14, %15 : vector<8x1xf32>
    %17 = tpu.concatenate %12, %16 in 1 : vector<8x1xf32>, vector<8x1xf32> -> vector<8x2xf32>
    %cst_13 = arith.constant dense<0.000000e+00> : vector<4x2xf32>
    %18 = tpu.matmul %8, %17, %cst_13 {dimension_numbers = #tpu.dot_dimension_numbers<[1], [0], [0], [1], [0, 0, 1, 1], [], []>} : vector<4x8xf32>, vector<8x2xf32>, vector<4x2xf32> -> vector<4x2xf32>
    %cst_14 = arith.constant 0.000000e+00 : f32
    %19 = vector.broadcast %cst_14 : f32 to vector<4x2xf32>
    %20 = arith.maximumf %18, %19 : vector<4x2xf32>
    %cst_15 = arith.constant dense<0.000000e+00> : vector<8x2xf32>
    %21 = tpu.matmul %10, %20, %cst_15 {dimension_numbers = #tpu.dot_dimension_numbers<[1], [0], [0], [1], [0, 0, 1, 1], [], []>} : vector<8x4xf32>, vector<4x2xf32>, vector<8x2xf32> -> vector<8x2xf32>
    %22 = vector.extract_strided_slice %21 {offsets = [0, 0], sizes = [8, 1], strides = [1, 1]} : vector<8x2xf32> to vector<8x1xf32>
    %23 = vector.extract_strided_slice %21 {offsets = [0, 1], sizes = [8, 1], strides = [1, 1]} : vector<8x2xf32> to vector<8x1xf32>
    %24 = arith.addf %22, %23 : vector<8x1xf32>
    %25 = arith.negf %24 : vector<8x1xf32>
    %26 = math.exp %25 : vector<8x1xf32>
    %cst_16 = arith.constant 1.000000e+00 : f32
    %27 = vector.broadcast %cst_16 : f32 to vector<8x1xf32>
    %28 = arith.addf %27, %26 : vector<8x1xf32>
    %29 = arith.divf %27, %28 : vector<8x1xf32>
    %30 = vector.broadcast %29 : vector<8x1xf32> to vector<8x256xf32>
    %31 = arith.mulf %6, %30 : vector<8x256xf32>
    %c0_17 = arith.constant 0 : index
    %c0_18 = arith.constant 0 : index
    %c0_19 = arith.constant 0 : index
    %32 = vector.load %arg5[%c0_17, %c0_18, %c0_19] : memref<3x512x256xf32, #tpu.memory_space<vmem>>, vector<1x512x256xf32>
    %33 = vector.shape_cast %32 : vector<1x512x256xf32> to vector<512x256xf32>
    %cst_20 = arith.constant dense<0xFF800000> : vector<256xf32>
    %34 = vector.multi_reduction <maximumf>, %31, %cst_20 [0] : vector<8x256xf32> to vector<256xf32>
    %35 = vector.shape_cast %34 : vector<256xf32> to vector<1x256xf32>
    %cst_21 = arith.constant dense<0.000000e+00> : vector<256xf32>
    %36 = vector.multi_reduction <add>, %31, %cst_21 [0] : vector<8x256xf32> to vector<256xf32>
    %37 = vector.shape_cast %36 : vector<256xf32> to vector<1x256xf32>
    %cst_22 = arith.constant 8.000000e+00 : f32
    %38 = vector.broadcast %cst_22 : f32 to vector<1x256xf32>
    %39 = arith.divf %37, %38 : vector<1x256xf32>
    %40 = tpu.concatenate %35, %39 in 1 : vector<1x256xf32>, vector<1x256xf32> -> vector<1x512xf32>
    %cst_23 = arith.constant dense<0.000000e+00> : vector<1x256xf32>
    %41 = tpu.matmul %40, %33, %cst_23 {dimension_numbers = #tpu.dot_dimension_numbers<[1], [0], [0], [1], [0, 0, 1, 1], [], []>} : vector<1x512xf32>, vector<512x256xf32>, vector<1x256xf32> -> vector<1x256xf32>
    %42 = arith.negf %41 : vector<1x256xf32>
    %43 = math.exp %42 : vector<1x256xf32>
    %cst_24 = arith.constant 1.000000e+00 : f32
    %44 = vector.broadcast %cst_24 : f32 to vector<1x256xf32>
    %45 = arith.addf %44, %43 : vector<1x256xf32>
    %46 = arith.divf %44, %45 : vector<1x256xf32>
    %47 = vector.broadcast %46 : vector<1x256xf32> to vector<8x256xf32>
    %48 = arith.mulf %31, %47 : vector<8x256xf32>
    %49 = vector.extract_strided_slice %3 {offsets = [8, 0], sizes = [8, 256], strides = [1, 1]} : vector<28x256xf32> to vector<8x256xf32>
    %50 = vector.extract_strided_slice %4 {offsets = [1, 0, 0], sizes = [1, 4, 8], strides = [1, 1, 1]} : vector<3x4x8xf32> to vector<1x4x8xf32>
    %51 = vector.shape_cast %50 : vector<1x4x8xf32> to vector<4x8xf32>
    %52 = vector.extract_strided_slice %5 {offsets = [1, 0, 0], sizes = [1, 8, 4], strides = [1, 1, 1]} : vector<3x8x4xf32> to vector<1x8x4xf32>
    %53 = vector.shape_cast %52 : vector<1x8x4xf32> to vector<8x4xf32>
    %cst_25 = arith.constant dense<0xFF800000> : vector<8xf32>
    %54 = vector.multi_reduction <maximumf>, %49, %cst_25 [1] : vector<8x256xf32> to vector<8xf32>
    %55 = vector.shape_cast %54 : vector<8xf32> to vector<8x1xf32>
    %cst_26 = arith.constant dense<0.000000e+00> : vector<8xf32>
    %56 = vector.multi_reduction <add>, %49, %cst_26 [1] : vector<8x256xf32> to vector<8xf32>
    %57 = vector.shape_cast %56 : vector<8xf32> to vector<8x1xf32>
    %cst_27 = arith.constant 2.560000e+02 : f32
    %58 = vector.broadcast %cst_27 : f32 to vector<8x1xf32>
    %59 = arith.divf %57, %58 : vector<8x1xf32>
    %60 = tpu.concatenate %55, %59 in 1 : vector<8x1xf32>, vector<8x1xf32> -> vector<8x2xf32>
    %cst_28 = arith.constant dense<0.000000e+00> : vector<4x2xf32>
    %61 = tpu.matmul %51, %60, %cst_28 {dimension_numbers = #tpu.dot_dimension_numbers<[1], [0], [0], [1], [0, 0, 1, 1], [], []>} : vector<4x8xf32>, vector<8x2xf32>, vector<4x2xf32> -> vector<4x2xf32>
    %cst_29 = arith.constant 0.000000e+00 : f32
    %62 = vector.broadcast %cst_29 : f32 to vector<4x2xf32>
    %63 = arith.maximumf %61, %62 : vector<4x2xf32>
    %cst_30 = arith.constant dense<0.000000e+00> : vector<8x2xf32>
    %64 = tpu.matmul %53, %63, %cst_30 {dimension_numbers = #tpu.dot_dimension_numbers<[1], [0], [0], [1], [0, 0, 1, 1], [], []>} : vector<8x4xf32>, vector<4x2xf32>, vector<8x2xf32> -> vector<8x2xf32>
    %65 = vector.extract_strided_slice %64 {offsets = [0, 0], sizes = [8, 1], strides = [1, 1]} : vector<8x2xf32> to vector<8x1xf32>
    %66 = vector.extract_strided_slice %64 {offsets = [0, 1], sizes = [8, 1], strides = [1, 1]} : vector<8x2xf32> to vector<8x1xf32>
    %67 = arith.addf %65, %66 : vector<8x1xf32>
    %68 = arith.negf %67 : vector<8x1xf32>
    %69 = math.exp %68 : vector<8x1xf32>
    %cst_31 = arith.constant 1.000000e+00 : f32
    %70 = vector.broadcast %cst_31 : f32 to vector<8x1xf32>
    %71 = arith.addf %70, %69 : vector<8x1xf32>
    %72 = arith.divf %70, %71 : vector<8x1xf32>
    %73 = vector.broadcast %72 : vector<8x1xf32> to vector<8x256xf32>
    %74 = arith.mulf %49, %73 : vector<8x256xf32>
    %c1 = arith.constant 1 : index
    %c0_32 = arith.constant 0 : index
    %c0_33 = arith.constant 0 : index
    %75 = vector.load %arg5[%c1, %c0_32, %c0_33] : memref<3x512x256xf32, #tpu.memory_space<vmem>>, vector<1x512x256xf32>
    %76 = vector.shape_cast %75 : vector<1x512x256xf32> to vector<512x256xf32>
    %cst_34 = arith.constant dense<0xFF800000> : vector<256xf32>
    %77 = vector.multi_reduction <maximumf>, %74, %cst_34 [0] : vector<8x256xf32> to vector<256xf32>
    %78 = vector.shape_cast %77 : vector<256xf32> to vector<1x256xf32>
    %cst_35 = arith.constant dense<0.000000e+00> : vector<256xf32>
    %79 = vector.multi_reduction <add>, %74, %cst_35 [0] : vector<8x256xf32> to vector<256xf32>
    %80 = vector.shape_cast %79 : vector<256xf32> to vector<1x256xf32>
    %cst_36 = arith.constant 8.000000e+00 : f32
    %81 = vector.broadcast %cst_36 : f32 to vector<1x256xf32>
    %82 = arith.divf %80, %81 : vector<1x256xf32>
    %83 = tpu.concatenate %78, %82 in 1 : vector<1x256xf32>, vector<1x256xf32> -> vector<1x512xf32>
    %cst_37 = arith.constant dense<0.000000e+00> : vector<1x256xf32>
    %84 = tpu.matmul %83, %76, %cst_37 {dimension_numbers = #tpu.dot_dimension_numbers<[1], [0], [0], [1], [0, 0, 1, 1], [], []>} : vector<1x512xf32>, vector<512x256xf32>, vector<1x256xf32> -> vector<1x256xf32>
    %85 = arith.negf %84 : vector<1x256xf32>
    %86 = math.exp %85 : vector<1x256xf32>
    %cst_38 = arith.constant 1.000000e+00 : f32
    %87 = vector.broadcast %cst_38 : f32 to vector<1x256xf32>
    %88 = arith.addf %87, %86 : vector<1x256xf32>
    %89 = arith.divf %87, %88 : vector<1x256xf32>
    %90 = vector.broadcast %89 : vector<1x256xf32> to vector<8x256xf32>
    %91 = arith.mulf %74, %90 : vector<8x256xf32>
    %92 = vector.extract_strided_slice %3 {offsets = [16, 0], sizes = [8, 256], strides = [1, 1]} : vector<28x256xf32> to vector<8x256xf32>
    %93 = vector.extract_strided_slice %4 {offsets = [2, 0, 0], sizes = [1, 4, 8], strides = [1, 1, 1]} : vector<3x4x8xf32> to vector<1x4x8xf32>
    %94 = vector.shape_cast %93 : vector<1x4x8xf32> to vector<4x8xf32>
    %95 = vector.extract_strided_slice %5 {offsets = [2, 0, 0], sizes = [1, 8, 4], strides = [1, 1, 1]} : vector<3x8x4xf32> to vector<1x8x4xf32>
    %96 = vector.shape_cast %95 : vector<1x8x4xf32> to vector<8x4xf32>
    %cst_39 = arith.constant dense<0xFF800000> : vector<8xf32>
    %97 = vector.multi_reduction <maximumf>, %92, %cst_39 [1] : vector<8x256xf32> to vector<8xf32>
    %98 = vector.shape_cast %97 : vector<8xf32> to vector<8x1xf32>
    %cst_40 = arith.constant dense<0.000000e+00> : vector<8xf32>
    %99 = vector.multi_reduction <add>, %92, %cst_40 [1] : vector<8x256xf32> to vector<8xf32>
    %100 = vector.shape_cast %99 : vector<8xf32> to vector<8x1xf32>
    %cst_41 = arith.constant 2.560000e+02 : f32
    %101 = vector.broadcast %cst_41 : f32 to vector<8x1xf32>
    %102 = arith.divf %100, %101 : vector<8x1xf32>
    %103 = tpu.concatenate %98, %102 in 1 : vector<8x1xf32>, vector<8x1xf32> -> vector<8x2xf32>
    %cst_42 = arith.constant dense<0.000000e+00> : vector<4x2xf32>
    %104 = tpu.matmul %94, %103, %cst_42 {dimension_numbers = #tpu.dot_dimension_numbers<[1], [0], [0], [1], [0, 0, 1, 1], [], []>} : vector<4x8xf32>, vector<8x2xf32>, vector<4x2xf32> -> vector<4x2xf32>
    %cst_43 = arith.constant 0.000000e+00 : f32
    %105 = vector.broadcast %cst_43 : f32 to vector<4x2xf32>
    %106 = arith.maximumf %104, %105 : vector<4x2xf32>
    %cst_44 = arith.constant dense<0.000000e+00> : vector<8x2xf32>
    %107 = tpu.matmul %96, %106, %cst_44 {dimension_numbers = #tpu.dot_dimension_numbers<[1], [0], [0], [1], [0, 0, 1, 1], [], []>} : vector<8x4xf32>, vector<4x2xf32>, vector<8x2xf32> -> vector<8x2xf32>
    %108 = vector.extract_strided_slice %107 {offsets = [0, 0], sizes = [8, 1], strides = [1, 1]} : vector<8x2xf32> to vector<8x1xf32>
    %109 = vector.extract_strided_slice %107 {offsets = [0, 1], sizes = [8, 1], strides = [1, 1]} : vector<8x2xf32> to vector<8x1xf32>
    %110 = arith.addf %108, %109 : vector<8x1xf32>
    %111 = arith.negf %110 : vector<8x1xf32>
    %112 = math.exp %111 : vector<8x1xf32>
    %cst_45 = arith.constant 1.000000e+00 : f32
    %113 = vector.broadcast %cst_45 : f32 to vector<8x1xf32>
    %114 = arith.addf %113, %112 : vector<8x1xf32>
    %115 = arith.divf %113, %114 : vector<8x1xf32>
    %116 = vector.broadcast %115 : vector<8x1xf32> to vector<8x256xf32>
    %117 = arith.mulf %92, %116 : vector<8x256xf32>
    %c2 = arith.constant 2 : index
    %c0_46 = arith.constant 0 : index
    %c0_47 = arith.constant 0 : index
    %118 = vector.load %arg5[%c2, %c0_46, %c0_47] : memref<3x512x256xf32, #tpu.memory_space<vmem>>, vector<1x512x256xf32>
    %119 = vector.shape_cast %118 : vector<1x512x256xf32> to vector<512x256xf32>
    %cst_48 = arith.constant dense<0xFF800000> : vector<256xf32>
    %120 = vector.multi_reduction <maximumf>, %117, %cst_48 [0] : vector<8x256xf32> to vector<256xf32>
    %121 = vector.shape_cast %120 : vector<256xf32> to vector<1x256xf32>
    %cst_49 = arith.constant dense<0.000000e+00> : vector<256xf32>
    %122 = vector.multi_reduction <add>, %117, %cst_49 [0] : vector<8x256xf32> to vector<256xf32>
    %123 = vector.shape_cast %122 : vector<256xf32> to vector<1x256xf32>
    %cst_50 = arith.constant 8.000000e+00 : f32
    %124 = vector.broadcast %cst_50 : f32 to vector<1x256xf32>
    %125 = arith.divf %123, %124 : vector<1x256xf32>
    %126 = tpu.concatenate %121, %125 in 1 : vector<1x256xf32>, vector<1x256xf32> -> vector<1x512xf32>
    %cst_51 = arith.constant dense<0.000000e+00> : vector<1x256xf32>
    %127 = tpu.matmul %126, %119, %cst_51 {dimension_numbers = #tpu.dot_dimension_numbers<[1], [0], [0], [1], [0, 0, 1, 1], [], []>} : vector<1x512xf32>, vector<512x256xf32>, vector<1x256xf32> -> vector<1x256xf32>
    %128 = arith.negf %127 : vector<1x256xf32>
    %129 = math.exp %128 : vector<1x256xf32>
    %cst_52 = arith.constant 1.000000e+00 : f32
    %130 = vector.broadcast %cst_52 : f32 to vector<1x256xf32>
    %131 = arith.addf %130, %129 : vector<1x256xf32>
    %132 = arith.divf %130, %131 : vector<1x256xf32>
    %133 = vector.broadcast %132 : vector<1x256xf32> to vector<8x256xf32>
    %134 = arith.mulf %117, %133 : vector<8x256xf32>
    %135 = arith.addf %48, %134 : vector<8x256xf32>
    %c0_53 = arith.constant 0 : index
    %c0_54 = arith.constant 0 : index
    %c0_55 = arith.constant 0 : index
    %136 = vector.load %arg6[%c0_53, %c0_54, %c0_55] : memref<1x8x256xf32, #tpu.memory_space<vmem>>, vector<1x8x256xf32>
    %137 = vector.shape_cast %136 : vector<1x8x256xf32> to vector<8x256xf32>
    %138 = vector.shape_cast %135 : vector<8x256xf32> to vector<1x8x256xf32>
    tpu.vector_store %arg6[%c0_53, %c0_54, %c0_55], %138 {strides = array<i32>} : memref<1x8x256xf32, #tpu.memory_space<vmem>>, vector<1x8x256xf32>,
    %c0_56 = arith.constant 0 : index
    %c0_57 = arith.constant 0 : index
    %c0_58 = arith.constant 0 : index
    %139 = vector.load %arg7[%c0_56, %c0_57, %c0_58] : memref<1x8x256xf32, #tpu.memory_space<vmem>>, vector<1x8x256xf32>
    %140 = vector.shape_cast %139 : vector<1x8x256xf32> to vector<8x256xf32>
    %141 = vector.shape_cast %91 : vector<8x256xf32> to vector<1x8x256xf32>
    tpu.vector_store %arg7[%c0_56, %c0_57, %c0_58], %141 {strides = array<i32>} : memref<1x8x256xf32, #tpu.memory_space<vmem>>, vector<1x8x256xf32>,
    %142 = vector.extract_strided_slice %3 {offsets = [24, 0], sizes = [4, 256], strides = [1, 1]} : vector<28x256xf32> to vector<4x256xf32>
    %cst_59 = arith.constant 0.000000e+00 : f32
    %143 = vector.broadcast %cst_59 : f32 to vector<4x256xf32>
    %144 = arith.maximumf %142, %143 : vector<4x256xf32>
    %c0_60 = arith.constant 0 : index
    %c0_61 = arith.constant 0 : index
    %c0_62 = arith.constant 0 : index
    %145 = vector.load %arg8[%c0_60, %c0_61, %c0_62] : memref<1x4x256xf32, #tpu.memory_space<vmem>>, vector<1x4x256xf32>
    %146 = vector.shape_cast %145 : vector<1x4x256xf32> to vector<4x256xf32>
    %147 = vector.shape_cast %144 : vector<4x256xf32> to vector<1x4x256xf32>
    tpu.vector_store %arg8[%c0_60, %c0_61, %c0_62], %147 {strides = array<i32>} : memref<1x4x256xf32, #tpu.memory_space<vmem>>, vector<1x4x256xf32>,
    return
  }
  func.func @transform_0(%arg0: i32) -> (i32, i32, i32) {
    %c0_i32 = arith.constant 0 : i32
    %c0_i32_0 = arith.constant 0 : i32
    %c0_i32_1 = arith.constant 0 : i32
    return %arg0, %c0_i32, %c0_i32_0 : i32, i32, i32
  }
  func.func @transform_1(%arg0: i32) -> (i32, i32) {
    %c0_i32 = arith.constant 0 : i32
    %c0_i32_0 = arith.constant 0 : i32
    %c0_i32_1 = arith.constant 0 : i32
    return %c0_i32, %c0_i32_0 : i32, i32
  }
  func.func @transform_2(%arg0: i32) -> (i32, i32, i32) {
    %c0_i32 = arith.constant 0 : i32
    %c0_i32_0 = arith.constant 0 : i32
    %c0_i32_1 = arith.constant 0 : i32
    %c0_i32_2 = arith.constant 0 : i32
    return %c0_i32, %c0_i32_0, %c0_i32_1 : i32, i32, i32
  }
  func.func @transform_3(%arg0: i32) -> (i32, i32, i32) {
    %c0_i32 = arith.constant 0 : i32
    %c0_i32_0 = arith.constant 0 : i32
    %c0_i32_1 = arith.constant 0 : i32
    %c0_i32_2 = arith.constant 0 : i32
    return %c0_i32, %c0_i32_0, %c0_i32_1 : i32, i32, i32
  }
  func.func @transform_4(%arg0: i32) -> (i32, i32, i32) {
    %c0_i32 = arith.constant 0 : i32
    %c0_i32_0 = arith.constant 0 : i32
    %c0_i32_1 = arith.constant 0 : i32
    %c0_i32_2 = arith.constant 0 : i32
    return %c0_i32, %c0_i32_0, %c0_i32_1 : i32, i32, i32
  }
  func.func @transform_5(%arg0: i32) -> (i32, i32, i32) {
    %c0_i32 = arith.constant 0 : i32
    %c0_i32_0 = arith.constant 0 : i32
    %c0_i32_1 = arith.constant 0 : i32
    return %arg0, %c0_i32, %c0_i32_0 : i32, i32, i32
  }
  func.func @transform_6(%arg0: i32) -> (i32, i32, i32) {
    %c0_i32 = arith.constant 0 : i32
    %c0_i32_0 = arith.constant 0 : i32
    %c0_i32_1 = arith.constant 0 : i32
    return %arg0, %c0_i32, %c0_i32_0 : i32, i32, i32
  }
  func.func @transform_7(%arg0: i32) -> (i32, i32, i32) {
    %c0_i32 = arith.constant 0 : i32
    %c0_i32_0 = arith.constant 0 : i32
    %c0_i32_1 = arith.constant 0 : i32
    return %arg0, %c0_i32, %c0_i32_0 : i32, i32, i32
  }
}

module attributes {stable_mosaic.version = 11 : i64} {
  func.func @_spectral_unit_kernel(%arg0: i32, %arg1: memref<1x8x256xf32, #tpu.memory_space<vmem>>, %arg2: memref<1x8x64xf32, #tpu.memory_space<vmem>>, %arg3: memref<2x4x8xf32, #tpu.memory_space<vmem>>, %arg4: memref<2x8x4xf32, #tpu.memory_space<vmem>>, %arg5: memref<2x8x8xf32, #tpu.memory_space<vmem>>, %arg6: memref<512x256xf32, #tpu.memory_space<vmem>>, %arg7: memref<128x64xf32, #tpu.memory_space<vmem>>, %arg8: memref<1x8x256xf32, #tpu.memory_space<vmem>>, %arg9: memref<1x8x64xf32, #tpu.memory_space<vmem>>) attributes {dimension_semantics = [#tpu.dimension_semantics<parallel>], iteration_bounds = array<i64: 2>, scalar_prefetch = 0 : i64, scratch_operands = 0 : i64, tpu.core_type = #tpu.core_type<tc>, window_params = [{transform_indices = @transform_0, window_bounds = array<i64: 1, 8, 256>}, {transform_indices = @transform_1, window_bounds = array<i64: 1, 8, 64>}, {pipeline_mode = #tpu.pipeline_mode<synchronous>, transform_indices = @transform_2, window_bounds = array<i64: 2, 4, 8>}, {pipeline_mode = #tpu.pipeline_mode<synchronous>, transform_indices = @transform_3, window_bounds = array<i64: 2, 8, 4>}, {pipeline_mode = #tpu.pipeline_mode<synchronous>, transform_indices = @transform_4, window_bounds = array<i64: 2, 8, 8>}, {pipeline_mode = #tpu.pipeline_mode<synchronous>, transform_indices = @transform_5, window_bounds = array<i64: 512, 256>}, {pipeline_mode = #tpu.pipeline_mode<synchronous>, transform_indices = @transform_6, window_bounds = array<i64: 128, 64>}, {transform_indices = @transform_7, window_bounds = array<i64: 1, 8, 256>}, {transform_indices = @transform_8, window_bounds = array<i64: 1, 8, 64>}]} {
    %c0 = arith.constant 0 : index
    %c0_0 = arith.constant 0 : index
    %c0_1 = arith.constant 0 : index
    %0 = vector.load %arg3[%c0, %c0_0, %c0_1] : memref<2x4x8xf32, #tpu.memory_space<vmem>>, vector<2x4x8xf32>
    %c0_2 = arith.constant 0 : index
    %c0_3 = arith.constant 0 : index
    %c0_4 = arith.constant 0 : index
    %1 = vector.load %arg4[%c0_2, %c0_3, %c0_4] : memref<2x8x4xf32, #tpu.memory_space<vmem>>, vector<2x8x4xf32>
    %c0_5 = arith.constant 0 : index
    %c0_6 = arith.constant 0 : index
    %c0_7 = arith.constant 0 : index
    %2 = vector.load %arg5[%c0_5, %c0_6, %c0_7] : memref<2x8x8xf32, #tpu.memory_space<vmem>>, vector<2x8x8xf32>
    %c0_8 = arith.constant 0 : index
    %c0_9 = arith.constant 0 : index
    %c0_10 = arith.constant 0 : index
    %3 = vector.load %arg1[%c0_8, %c0_9, %c0_10] : memref<1x8x256xf32, #tpu.memory_space<vmem>>, vector<1x8x256xf32>
    %4 = vector.shape_cast %3 : vector<1x8x256xf32> to vector<8x256xf32>
    %c0_11 = arith.constant 0 : index
    %c0_12 = arith.constant 0 : index
    %5 = vector.load %arg6[%c0_11, %c0_12] : memref<512x256xf32, #tpu.memory_space<vmem>>, vector<512x256xf32>
    %6 = vector.extract_strided_slice %0 {offsets = [0, 0, 0], sizes = [1, 4, 8], strides = [1, 1, 1]} : vector<2x4x8xf32> to vector<1x4x8xf32>
    %7 = vector.shape_cast %6 : vector<1x4x8xf32> to vector<4x8xf32>
    %8 = vector.extract_strided_slice %1 {offsets = [0, 0, 0], sizes = [1, 8, 4], strides = [1, 1, 1]} : vector<2x8x4xf32> to vector<1x8x4xf32>
    %9 = vector.shape_cast %8 : vector<1x8x4xf32> to vector<8x4xf32>
    %cst = arith.constant dense<0xFF800000> : vector<8xf32>
    %10 = vector.multi_reduction <maximumf>, %4, %cst [1] : vector<8x256xf32> to vector<8xf32>
    %11 = vector.shape_cast %10 : vector<8xf32> to vector<8x1xf32>
    %cst_13 = arith.constant dense<0.000000e+00> : vector<8xf32>
    %12 = vector.multi_reduction <add>, %4, %cst_13 [1] : vector<8x256xf32> to vector<8xf32>
    %13 = vector.shape_cast %12 : vector<8xf32> to vector<8x1xf32>
    %cst_14 = arith.constant 2.560000e+02 : f32
    %14 = vector.broadcast %cst_14 : f32 to vector<8x1xf32>
    %15 = arith.divf %13, %14 : vector<8x1xf32>
    %16 = tpu.concatenate %11, %15 in 1 : vector<8x1xf32>, vector<8x1xf32> -> vector<8x2xf32>
    %cst_15 = arith.constant dense<0.000000e+00> : vector<4x2xf32>
    %17 = tpu.matmul %7, %16, %cst_15 {dimension_numbers = #tpu.dot_dimension_numbers<[1], [0], [0], [1], [0, 0, 1, 1], [], []>} : vector<4x8xf32>, vector<8x2xf32>, vector<4x2xf32> -> vector<4x2xf32>
    %cst_16 = arith.constant 0.000000e+00 : f32
    %18 = vector.broadcast %cst_16 : f32 to vector<4x2xf32>
    %19 = arith.maximumf %17, %18 : vector<4x2xf32>
    %cst_17 = arith.constant dense<0.000000e+00> : vector<8x2xf32>
    %20 = tpu.matmul %9, %19, %cst_17 {dimension_numbers = #tpu.dot_dimension_numbers<[1], [0], [0], [1], [0, 0, 1, 1], [], []>} : vector<8x4xf32>, vector<4x2xf32>, vector<8x2xf32> -> vector<8x2xf32>
    %21 = vector.extract_strided_slice %20 {offsets = [0, 0], sizes = [8, 1], strides = [1, 1]} : vector<8x2xf32> to vector<8x1xf32>
    %22 = vector.extract_strided_slice %20 {offsets = [0, 1], sizes = [8, 1], strides = [1, 1]} : vector<8x2xf32> to vector<8x1xf32>
    %23 = arith.addf %21, %22 : vector<8x1xf32>
    %24 = arith.negf %23 : vector<8x1xf32>
    %25 = math.exp %24 : vector<8x1xf32>
    %cst_18 = arith.constant 1.000000e+00 : f32
    %26 = vector.broadcast %cst_18 : f32 to vector<8x1xf32>
    %27 = arith.addf %26, %25 : vector<8x1xf32>
    %28 = arith.divf %26, %27 : vector<8x1xf32>
    %29 = vector.broadcast %28 : vector<8x1xf32> to vector<8x256xf32>
    %30 = arith.mulf %4, %29 : vector<8x256xf32>
    %cst_19 = arith.constant dense<0xFF800000> : vector<256xf32>
    %31 = vector.multi_reduction <maximumf>, %30, %cst_19 [0] : vector<8x256xf32> to vector<256xf32>
    %32 = vector.shape_cast %31 : vector<256xf32> to vector<1x256xf32>
    %cst_20 = arith.constant dense<0.000000e+00> : vector<256xf32>
    %33 = vector.multi_reduction <add>, %30, %cst_20 [0] : vector<8x256xf32> to vector<256xf32>
    %34 = vector.shape_cast %33 : vector<256xf32> to vector<1x256xf32>
    %cst_21 = arith.constant 8.000000e+00 : f32
    %35 = vector.broadcast %cst_21 : f32 to vector<1x256xf32>
    %36 = arith.divf %34, %35 : vector<1x256xf32>
    %37 = tpu.concatenate %32, %36 in 1 : vector<1x256xf32>, vector<1x256xf32> -> vector<1x512xf32>
    %cst_22 = arith.constant dense<0.000000e+00> : vector<1x256xf32>
    %38 = tpu.matmul %37, %5, %cst_22 {dimension_numbers = #tpu.dot_dimension_numbers<[1], [0], [0], [1], [0, 0, 1, 1], [], []>} : vector<1x512xf32>, vector<512x256xf32>, vector<1x256xf32> -> vector<1x256xf32>
    %39 = arith.negf %38 : vector<1x256xf32>
    %40 = math.exp %39 : vector<1x256xf32>
    %cst_23 = arith.constant 1.000000e+00 : f32
    %41 = vector.broadcast %cst_23 : f32 to vector<1x256xf32>
    %42 = arith.addf %41, %40 : vector<1x256xf32>
    %43 = arith.divf %41, %42 : vector<1x256xf32>
    %44 = vector.broadcast %43 : vector<1x256xf32> to vector<8x256xf32>
    %45 = arith.mulf %30, %44 : vector<8x256xf32>
    %46 = vector.extract_strided_slice %2 {offsets = [0, 0, 0], sizes = [1, 8, 8], strides = [1, 1, 1]} : vector<2x8x8xf32> to vector<1x8x8xf32>
    %47 = vector.shape_cast %46 : vector<1x8x8xf32> to vector<8x8xf32>
    %cst_24 = arith.constant dense<0.000000e+00> : vector<8x256xf32>
    %48 = tpu.matmul %47, %45, %cst_24 {dimension_numbers = #tpu.dot_dimension_numbers<[1], [0], [0], [1], [0, 0, 1, 1], [], []>} : vector<8x8xf32>, vector<8x256xf32>, vector<8x256xf32> -> vector<8x256xf32>
    %cst_25 = arith.constant 0.000000e+00 : f32
    %49 = vector.broadcast %cst_25 : f32 to vector<8x256xf32>
    %50 = arith.maximumf %48, %49 : vector<8x256xf32>
    %c0_26 = arith.constant 0 : index
    %c0_27 = arith.constant 0 : index
    %c0_28 = arith.constant 0 : index
    %51 = vector.load %arg8[%c0_26, %c0_27, %c0_28] : memref<1x8x256xf32, #tpu.memory_space<vmem>>, vector<1x8x256xf32>
    %52 = vector.shape_cast %51 : vector<1x8x256xf32> to vector<8x256xf32>
    %53 = vector.shape_cast %50 : vector<8x256xf32> to vector<1x8x256xf32>
    tpu.vector_store %arg8[%c0_26, %c0_27, %c0_28], %53 {strides = array<i32>} : memref<1x8x256xf32, #tpu.memory_space<vmem>>, vector<1x8x256xf32>,
    %c0_29 = arith.constant 0 : index
    %c0_30 = arith.constant 0 : index
    %c0_31 = arith.constant 0 : index
    %54 = vector.load %arg2[%c0_29, %c0_30, %c0_31] : memref<1x8x64xf32, #tpu.memory_space<vmem>>, vector<1x8x64xf32>
    %55 = vector.shape_cast %54 : vector<1x8x64xf32> to vector<8x64xf32>
    %c0_32 = arith.constant 0 : index
    %c0_33 = arith.constant 0 : index
    %56 = vector.load %arg7[%c0_32, %c0_33] : memref<128x64xf32, #tpu.memory_space<vmem>>, vector<128x64xf32>
    %57 = vector.extract_strided_slice %0 {offsets = [1, 0, 0], sizes = [1, 4, 8], strides = [1, 1, 1]} : vector<2x4x8xf32> to vector<1x4x8xf32>
    %58 = vector.shape_cast %57 : vector<1x4x8xf32> to vector<4x8xf32>
    %59 = vector.extract_strided_slice %1 {offsets = [1, 0, 0], sizes = [1, 8, 4], strides = [1, 1, 1]} : vector<2x8x4xf32> to vector<1x8x4xf32>
    %60 = vector.shape_cast %59 : vector<1x8x4xf32> to vector<8x4xf32>
    %cst_34 = arith.constant dense<0xFF800000> : vector<8xf32>
    %61 = vector.multi_reduction <maximumf>, %55, %cst_34 [1] : vector<8x64xf32> to vector<8xf32>
    %62 = vector.shape_cast %61 : vector<8xf32> to vector<8x1xf32>
    %cst_35 = arith.constant dense<0.000000e+00> : vector<8xf32>
    %63 = vector.multi_reduction <add>, %55, %cst_35 [1] : vector<8x64xf32> to vector<8xf32>
    %64 = vector.shape_cast %63 : vector<8xf32> to vector<8x1xf32>
    %cst_36 = arith.constant 6.400000e+01 : f32
    %65 = vector.broadcast %cst_36 : f32 to vector<8x1xf32>
    %66 = arith.divf %64, %65 : vector<8x1xf32>
    %67 = tpu.concatenate %62, %66 in 1 : vector<8x1xf32>, vector<8x1xf32> -> vector<8x2xf32>
    %cst_37 = arith.constant dense<0.000000e+00> : vector<4x2xf32>
    %68 = tpu.matmul %58, %67, %cst_37 {dimension_numbers = #tpu.dot_dimension_numbers<[1], [0], [0], [1], [0, 0, 1, 1], [], []>} : vector<4x8xf32>, vector<8x2xf32>, vector<4x2xf32> -> vector<4x2xf32>
    %cst_38 = arith.constant 0.000000e+00 : f32
    %69 = vector.broadcast %cst_38 : f32 to vector<4x2xf32>
    %70 = arith.maximumf %68, %69 : vector<4x2xf32>
    %cst_39 = arith.constant dense<0.000000e+00> : vector<8x2xf32>
    %71 = tpu.matmul %60, %70, %cst_39 {dimension_numbers = #tpu.dot_dimension_numbers<[1], [0], [0], [1], [0, 0, 1, 1], [], []>} : vector<8x4xf32>, vector<4x2xf32>, vector<8x2xf32> -> vector<8x2xf32>
    %72 = vector.extract_strided_slice %71 {offsets = [0, 0], sizes = [8, 1], strides = [1, 1]} : vector<8x2xf32> to vector<8x1xf32>
    %73 = vector.extract_strided_slice %71 {offsets = [0, 1], sizes = [8, 1], strides = [1, 1]} : vector<8x2xf32> to vector<8x1xf32>
    %74 = arith.addf %72, %73 : vector<8x1xf32>
    %75 = arith.negf %74 : vector<8x1xf32>
    %76 = math.exp %75 : vector<8x1xf32>
    %cst_40 = arith.constant 1.000000e+00 : f32
    %77 = vector.broadcast %cst_40 : f32 to vector<8x1xf32>
    %78 = arith.addf %77, %76 : vector<8x1xf32>
    %79 = arith.divf %77, %78 : vector<8x1xf32>
    %80 = vector.broadcast %79 : vector<8x1xf32> to vector<8x64xf32>
    %81 = arith.mulf %55, %80 : vector<8x64xf32>
    %cst_41 = arith.constant dense<0xFF800000> : vector<64xf32>
    %82 = vector.multi_reduction <maximumf>, %81, %cst_41 [0] : vector<8x64xf32> to vector<64xf32>
    %83 = vector.shape_cast %82 : vector<64xf32> to vector<1x64xf32>
    %cst_42 = arith.constant dense<0.000000e+00> : vector<64xf32>
    %84 = vector.multi_reduction <add>, %81, %cst_42 [0] : vector<8x64xf32> to vector<64xf32>
    %85 = vector.shape_cast %84 : vector<64xf32> to vector<1x64xf32>
    %cst_43 = arith.constant 8.000000e+00 : f32
    %86 = vector.broadcast %cst_43 : f32 to vector<1x64xf32>
    %87 = arith.divf %85, %86 : vector<1x64xf32>
    %88 = tpu.concatenate %83, %87 in 1 : vector<1x64xf32>, vector<1x64xf32> -> vector<1x128xf32>
    %cst_44 = arith.constant dense<0.000000e+00> : vector<1x64xf32>
    %89 = tpu.matmul %88, %56, %cst_44 {dimension_numbers = #tpu.dot_dimension_numbers<[1], [0], [0], [1], [0, 0, 1, 1], [], []>} : vector<1x128xf32>, vector<128x64xf32>, vector<1x64xf32> -> vector<1x64xf32>
    %90 = arith.negf %89 : vector<1x64xf32>
    %91 = math.exp %90 : vector<1x64xf32>
    %cst_45 = arith.constant 1.000000e+00 : f32
    %92 = vector.broadcast %cst_45 : f32 to vector<1x64xf32>
    %93 = arith.addf %92, %91 : vector<1x64xf32>
    %94 = arith.divf %92, %93 : vector<1x64xf32>
    %95 = vector.broadcast %94 : vector<1x64xf32> to vector<8x64xf32>
    %96 = arith.mulf %81, %95 : vector<8x64xf32>
    %97 = vector.extract_strided_slice %2 {offsets = [1, 0, 0], sizes = [1, 8, 8], strides = [1, 1, 1]} : vector<2x8x8xf32> to vector<1x8x8xf32>
    %98 = vector.shape_cast %97 : vector<1x8x8xf32> to vector<8x8xf32>
    %cst_46 = arith.constant dense<0.000000e+00> : vector<8x64xf32>
    %99 = tpu.matmul %98, %96, %cst_46 {dimension_numbers = #tpu.dot_dimension_numbers<[1], [0], [0], [1], [0, 0, 1, 1], [], []>} : vector<8x8xf32>, vector<8x64xf32>, vector<8x64xf32> -> vector<8x64xf32>
    %cst_47 = arith.constant 0.000000e+00 : f32
    %100 = vector.broadcast %cst_47 : f32 to vector<8x64xf32>
    %101 = arith.maximumf %99, %100 : vector<8x64xf32>
    %c0_48 = arith.constant 0 : index
    %c0_49 = arith.constant 0 : index
    %c0_50 = arith.constant 0 : index
    %102 = vector.load %arg9[%c0_48, %c0_49, %c0_50] : memref<1x8x64xf32, #tpu.memory_space<vmem>>, vector<1x8x64xf32>
    %103 = vector.shape_cast %102 : vector<1x8x64xf32> to vector<8x64xf32>
    %104 = vector.shape_cast %101 : vector<8x64xf32> to vector<1x8x64xf32>
    tpu.vector_store %arg9[%c0_48, %c0_49, %c0_50], %104 {strides = array<i32>} : memref<1x8x64xf32, #tpu.memory_space<vmem>>, vector<1x8x64xf32>,
    return
  }
  func.func @transform_0(%arg0: i32) -> (i32, i32, i32) {
    %c0_i32 = arith.constant 0 : i32
    %c0_i32_0 = arith.constant 0 : i32
    %c0_i32_1 = arith.constant 0 : i32
    return %arg0, %c0_i32, %c0_i32_0 : i32, i32, i32
  }
  func.func @transform_1(%arg0: i32) -> (i32, i32, i32) {
    %c0_i32 = arith.constant 0 : i32
    %c0_i32_0 = arith.constant 0 : i32
    %c0_i32_1 = arith.constant 0 : i32
    return %arg0, %c0_i32, %c0_i32_0 : i32, i32, i32
  }
  func.func @transform_2(%arg0: i32) -> (i32, i32, i32) {
    %c0_i32 = arith.constant 0 : i32
    %c0_i32_0 = arith.constant 0 : i32
    %c0_i32_1 = arith.constant 0 : i32
    %c0_i32_2 = arith.constant 0 : i32
    return %c0_i32, %c0_i32_0, %c0_i32_1 : i32, i32, i32
  }
  func.func @transform_3(%arg0: i32) -> (i32, i32, i32) {
    %c0_i32 = arith.constant 0 : i32
    %c0_i32_0 = arith.constant 0 : i32
    %c0_i32_1 = arith.constant 0 : i32
    %c0_i32_2 = arith.constant 0 : i32
    return %c0_i32, %c0_i32_0, %c0_i32_1 : i32, i32, i32
  }
  func.func @transform_4(%arg0: i32) -> (i32, i32, i32) {
    %c0_i32 = arith.constant 0 : i32
    %c0_i32_0 = arith.constant 0 : i32
    %c0_i32_1 = arith.constant 0 : i32
    %c0_i32_2 = arith.constant 0 : i32
    return %c0_i32, %c0_i32_0, %c0_i32_1 : i32, i32, i32
  }
  func.func @transform_5(%arg0: i32) -> (i32, i32) {
    %c0_i32 = arith.constant 0 : i32
    %c0_i32_0 = arith.constant 0 : i32
    %c0_i32_1 = arith.constant 0 : i32
    return %c0_i32, %c0_i32_0 : i32, i32
  }
  func.func @transform_6(%arg0: i32) -> (i32, i32) {
    %c0_i32 = arith.constant 0 : i32
    %c0_i32_0 = arith.constant 0 : i32
    %c0_i32_1 = arith.constant 0 : i32
    return %c0_i32, %c0_i32_0 : i32, i32
  }
  func.func @transform_7(%arg0: i32) -> (i32, i32, i32) {
    %c0_i32 = arith.constant 0 : i32
    %c0_i32_0 = arith.constant 0 : i32
    %c0_i32_1 = arith.constant 0 : i32
    return %arg0, %c0_i32, %c0_i32_0 : i32, i32, i32
  }
  func.func @transform_8(%arg0: i32) -> (i32, i32, i32) {
    %c0_i32 = arith.constant 0 : i32
    %c0_i32_0 = arith.constant 0 : i32
    %c0_i32_1 = arith.constant 0 : i32
    return %arg0, %c0_i32, %c0_i32_0 : i32, i32, i32
  }
}

module attributes {stable_mosaic.version = 11 : i64} {
  func.func @_fuse_out_xg_kernel(%arg0: i32, %arg1: memref<1x4x256xf32, #tpu.memory_space<vmem>>, %arg2: memref<1x4x256xf32, #tpu.memory_space<vmem>>, %arg3: memref<1x4x256xf32, #tpu.memory_space<vmem>>, %arg4: memref<1x8x256xf32, #tpu.memory_space<vmem>>, %arg5: memref<8x4xf32, #tpu.memory_space<vmem>>, %arg6: memref<1x8x256xf32, #tpu.memory_space<vmem>>) attributes {dimension_semantics = [#tpu.dimension_semantics<parallel>], iteration_bounds = array<i64: 2>, scalar_prefetch = 0 : i64, scratch_operands = 0 : i64, tpu.core_type = #tpu.core_type<tc>, window_params = [{transform_indices = @transform_0, window_bounds = array<i64: 1, 4, 256>}, {transform_indices = @transform_1, window_bounds = array<i64: 1, 4, 256>}, {transform_indices = @transform_2, window_bounds = array<i64: 1, 4, 256>}, {transform_indices = @transform_3, window_bounds = array<i64: 1, 8, 256>}, {pipeline_mode = #tpu.pipeline_mode<synchronous>, transform_indices = @transform_4, window_bounds = array<i64: 8, 4>}, {transform_indices = @transform_5, window_bounds = array<i64: 1, 8, 256>}]} {
    %c0 = arith.constant 0 : index
    %c0_0 = arith.constant 0 : index
    %c0_1 = arith.constant 0 : index
    %0 = vector.load %arg1[%c0, %c0_0, %c0_1] : memref<1x4x256xf32, #tpu.memory_space<vmem>>, vector<1x4x256xf32>
    %1 = vector.shape_cast %0 : vector<1x4x256xf32> to vector<4x256xf32>
    %c0_2 = arith.constant 0 : index
    %c0_3 = arith.constant 0 : index
    %c0_4 = arith.constant 0 : index
    %2 = vector.load %arg2[%c0_2, %c0_3, %c0_4] : memref<1x4x256xf32, #tpu.memory_space<vmem>>, vector<1x4x256xf32>
    %3 = vector.shape_cast %2 : vector<1x4x256xf32> to vector<4x256xf32>
    %4 = arith.addf %1, %3 : vector<4x256xf32>
    %c0_5 = arith.constant 0 : index
    %c0_6 = arith.constant 0 : index
    %c0_7 = arith.constant 0 : index
    %5 = vector.load %arg3[%c0_5, %c0_6, %c0_7] : memref<1x4x256xf32, #tpu.memory_space<vmem>>, vector<1x4x256xf32>
    %6 = vector.shape_cast %5 : vector<1x4x256xf32> to vector<4x256xf32>
    %7 = arith.addf %4, %6 : vector<4x256xf32>
    %c0_8 = arith.constant 0 : index
    %c0_9 = arith.constant 0 : index
    %8 = vector.load %arg5[%c0_8, %c0_9] : memref<8x4xf32, #tpu.memory_space<vmem>>, vector<8x4xf32>
    %cst = arith.constant dense<0.000000e+00> : vector<8x256xf32>
    %9 = tpu.matmul %8, %7, %cst {dimension_numbers = #tpu.dot_dimension_numbers<[1], [0], [0], [1], [0, 0, 1, 1], [], []>} : vector<8x4xf32>, vector<4x256xf32>, vector<8x256xf32> -> vector<8x256xf32>
    %c0_10 = arith.constant 0 : index
    %c0_11 = arith.constant 0 : index
    %c0_12 = arith.constant 0 : index
    %10 = vector.load %arg4[%c0_10, %c0_11, %c0_12] : memref<1x8x256xf32, #tpu.memory_space<vmem>>, vector<1x8x256xf32>
    %11 = vector.shape_cast %10 : vector<1x8x256xf32> to vector<8x256xf32>
    %12 = arith.addf %9, %11 : vector<8x256xf32>
    %c0_13 = arith.constant 0 : index
    %c0_14 = arith.constant 0 : index
    %c0_15 = arith.constant 0 : index
    %13 = vector.load %arg6[%c0_13, %c0_14, %c0_15] : memref<1x8x256xf32, #tpu.memory_space<vmem>>, vector<1x8x256xf32>
    %14 = vector.shape_cast %13 : vector<1x8x256xf32> to vector<8x256xf32>
    %15 = vector.shape_cast %12 : vector<8x256xf32> to vector<1x8x256xf32>
    tpu.vector_store %arg6[%c0_13, %c0_14, %c0_15], %15 {strides = array<i32>} : memref<1x8x256xf32, #tpu.memory_space<vmem>>, vector<1x8x256xf32>,
    return
  }
  func.func @transform_0(%arg0: i32) -> (i32, i32, i32) {
    %c0_i32 = arith.constant 0 : i32
    %c0_i32_0 = arith.constant 0 : i32
    %c0_i32_1 = arith.constant 0 : i32
    return %arg0, %c0_i32, %c0_i32_0 : i32, i32, i32
  }
  func.func @transform_1(%arg0: i32) -> (i32, i32, i32) {
    %c0_i32 = arith.constant 0 : i32
    %c0_i32_0 = arith.constant 0 : i32
    %c0_i32_1 = arith.constant 0 : i32
    return %arg0, %c0_i32, %c0_i32_0 : i32, i32, i32
  }
  func.func @transform_2(%arg0: i32) -> (i32, i32, i32) {
    %c0_i32 = arith.constant 0 : i32
    %c0_i32_0 = arith.constant 0 : i32
    %c0_i32_1 = arith.constant 0 : i32
    return %arg0, %c0_i32, %c0_i32_0 : i32, i32, i32
  }
  func.func @transform_3(%arg0: i32) -> (i32, i32, i32) {
    %c0_i32 = arith.constant 0 : i32
    %c0_i32_0 = arith.constant 0 : i32
    %c0_i32_1 = arith.constant 0 : i32
    return %arg0, %c0_i32, %c0_i32_0 : i32, i32, i32
  }
  func.func @transform_4(%arg0: i32) -> (i32, i32) {
    %c0_i32 = arith.constant 0 : i32
    %c0_i32_0 = arith.constant 0 : i32
    %c0_i32_1 = arith.constant 0 : i32
    return %c0_i32, %c0_i32_0 : i32, i32
  }
  func.func @transform_5(%arg0: i32) -> (i32, i32, i32) {
    %c0_i32 = arith.constant 0 : i32
    %c0_i32_0 = arith.constant 0 : i32
    %c0_i32_1 = arith.constant 0 : i32
    return %arg0, %c0_i32, %c0_i32_0 : i32, i32, i32
  }
}

</mosaic_0001>

<llo_original>
// kernel: mam_ffc_forward.3
$region0: #{mam_ffc_forward.3}
  #allocation0 [shape = 'u32[]', space=smem, size = 0x4, offset = 0x4, fixed_abs, tag = 'smem constant byte address 0x4 - core index']
  #allocation1 [shape = 'u32[144,128]{1,0:T(1,128)}', space=vmem, size = 0x12000, scoped, tag = 'internal scratch']
  %s0 = inlined_call_operand.vmem [shape: f32[2,16,256], index: 0, kind: input, shape index: {}]
  %s1 = inlined_call_operand.vmem [shape: f32[28,16], index: 1, kind: input, shape index: {}]
  %s2 = inlined_call_operand.vmem [shape: f32[3,4,8], index: 2, kind: input, shape index: {}]
  %s3 = inlined_call_operand.vmem [shape: f32[3,8,4], index: 3, kind: input, shape index: {}]
  %s4 = inlined_call_operand.vmem [shape: f32[3,512,256], index: 4, kind: input, shape index: {}]
  %s5 = inlined_call_operand.vmem [shape: f32[2,8,256], index: 5, kind: output, shape index: {0}]
  %s6 = inlined_call_operand.vmem [shape: f32[2,8,256], index: 6, kind: output, shape index: {1}]
  %s7 = inlined_call_operand.vmem [shape: f32[2,4,256], index: 7, kind: output, shape index: {2}]
  %8 = xla_tuple %s5, %s6, %s7
  %s9 = sld [smem:[#allocation0]]
  $region69: #{mam_ffc_forward.3} parent=0
    _
  %s11 = ssub.s32 1, %s9
  %s12 = scalar_select 0, %s11, %s9
  loop: start=0, step=1, limit=4
  $region2: #{mam_ffc_forward.3} parent=0 // loop_pre_header
    _
  $region3: #{mam_ffc_forward.3} parent=0 // loop_header
    %s14 = sphi 0, %s18
    %p15 = scmp.ge.s32.totalorder %s14, 4
    %s24 = sphi 0, %s26
    %s27 = sphi 0, %s24
    %s28 = sphi 0, %s27
    %s44 = sphi 0, %s28
    %s48 = sphi 0, %s48
    %s50 = sphi 0, %s48
    %s51 = sphi 0, %s50
    %s65 = sphi 0, %s51
    %s69 = sphi 0, %s69
    %s71 = sphi 0, %s69
    %s72 = sphi 0, %s71
    %s86 = sphi 0, %s72
    %s90 = sphi 0, %s90
    %s92 = sphi 0, %s90
    %s93 = sphi 0, %s92
    %s107 = sphi 0, %s93
    %s111 = sphi 0, %s111
    %s113 = sphi 0, %s111
    %s114 = sphi 0, %s113
    %s128 = sphi 0, %s114
    %s134 = sphi 0, %s136
    %s137 = sphi 0, %s134
    %s138 = sphi 0, %s137
    %s154 = sphi 0, %s138
    %s160 = sphi 0, %s162
    %s163 = sphi 0, %s160
    %s164 = sphi 0, %s163
    %s180 = sphi 0, %s164
    %s186 = sphi 0, %s188
    %s189 = sphi 0, %s186
    %s190 = sphi 0, %s189
    %s206 = sphi 0, %s190
  $region4: #{mam_ffc_forward.3} parent=0 // loop_header_branch
    %17 = sbr.rel (%p15) target = $region8
  $region5: #{mam_ffc_forward.3} parent=0 // loop_body
    %s19 = ssub.s32 %s14, 1
    %s20 = ssub.s32 %s14, 2
    %s21 = sadd.s32 %s14, 1
    %s22 = ssub.s32 %s14, %s21
    %p23 = scmp.eq.s32.totalorder %s22, 0
    %s25 = sadd.s32 %s24, 1
    %s26 = scalar_select %p23, %s24, %s25
    %p29 = pneg %p23
    %p30 = scmp.eq.s32.totalorder %s14, 1
    %p31 = por %p29, %p30
    %p32 = scmp.ne.s32.totalorder %s24, %s27
    %p33 = scmp.eq.s32.totalorder %s14, 0
    %p34 = por %p32, %p33
    %p35 = scmp.ne.s32.totalorder %s24, %s27
    %p36 = scmp.eq.s32.totalorder %s19, 1
    %p37 = por %p35, %p36
    %p38 = scmp.ne.s32.totalorder %s27, %s28
    %p39 = scmp.eq.s32.totalorder %s19, 0
    %p40 = por %p38, %p39
    %p41 = scmp.ne.s32.totalorder %s27, %s28
    %p42 = scmp.eq.s32.totalorder %s20, 1
    %p43 = por %p41, %p42
    %p45 = scmp.ne.s32.totalorder %s28, %s44
    %p46 = scmp.eq.s32.totalorder %s20, 0
    %p47 = por %p45, %p46
    %s49 = sadd.s32 %s48, 1
    %p52 = scmp.eq.s32.totalorder %s14, 1
    %p53 = scmp.ne.s32.totalorder %s48, %s50
    %p54 = scmp.eq.s32.totalorder %s14, 0
    %p55 = por %p53, %p54
    %p56 = scmp.ne.s32.totalorder %s48, %s50
    %p57 = scmp.eq.s32.totalorder %s19, 1
    %p58 = por %p56, %p57
    %p59 = scmp.ne.s32.totalorder %s50, %s51
    %p60 = scmp.eq.s32.totalorder %s19, 0
    %p61 = por %p59, %p60
    %p62 = scmp.ne.s32.totalorder %s50, %s51
    %p63 = scmp.eq.s32.totalorder %s20, 1
    %p64 = por %p62, %p63
    %p66 = scmp.ne.s32.totalorder %s51, %s65
    %p67 = scmp.eq.s32.totalorder %s20, 0
    %p68 = por %p66, %p67
    %s70 = sadd.s32 %s69, 1
    %p73 = scmp.eq.s32.totalorder %s14, 1
    %p74 = scmp.ne.s32.totalorder %s69, %s71
    %p75 = scmp.eq.s32.totalorder %s14, 0
    %p76 = por %p74, %p75
    %p77 = scmp.ne.s32.totalorder %s69, %s71
    %p78 = scmp.eq.s32.totalorder %s19, 1
    %p79 = por %p77, %p78
    %p80 = scmp.ne.s32.totalorder %s71, %s72
    %p81 = scmp.eq.s32.totalorder %s19, 0
    %p82 = por %p80, %p81
    %p83 = scmp.ne.s32.totalorder %s71, %s72
    %p84 = scmp.eq.s32.totalorder %s20, 1
    %p85 = por %p83, %p84
    %p87 = scmp.ne.s32.totalorder %s72, %s86
    %p88 = scmp.eq.s32.totalorder %s20, 0
    %p89 = por %p87, %p88
    %s91 = sadd.s32 %s90, 1
    %p94 = scmp.eq.s32.totalorder %s14, 1
    %p95 = scmp.ne.s32.totalorder %s90, %s92
    %p96 = scmp.eq.s32.totalorder %s14, 0
    %p97 = por %p95, %p96
    %p98 = scmp.ne.s32.totalorder %s90, %s92
    %p99 = scmp.eq.s32.totalorder %s19, 1
    %p100 = por %p98, %p99
    %p101 = scmp.ne.s32.totalorder %s92, %s93
    %p102 = scmp.eq.s32.totalorder %s19, 0
    %p103 = por %p101, %p102
    %p104 = scmp.ne.s32.totalorder %s92, %s93
    %p105 = scmp.eq.s32.totalorder %s20, 1
    %p106 = por %p104, %p105
    %p108 = scmp.ne.s32.totalorder %s93, %s107
    %p109 = scmp.eq.s32.totalorder %s20, 0
    %p110 = por %p108, %p109
    %s112 = sadd.s32 %s111, 1
    %p115 = scmp.eq.s32.totalorder %s14, 1
    %p116 = scmp.ne.s32.totalorder %s111, %s113
    %p117 = scmp.eq.s32.totalorder %s14, 0
    %p118 = por %p116, %p117
    %p119 = scmp.ne.s32.totalorder %s111, %s113
    %p120 = scmp.eq.s32.totalorder %s19, 1
    %p121 = por %p119, %p120
    %p122 = scmp.ne.s32.totalorder %s113, %s114
    %p123 = scmp.eq.s32.totalorder %s19, 0
    %p124 = por %p122, %p123
    %p125 = scmp.ne.s32.totalorder %s113, %s114
    %p126 = scmp.eq.s32.totalorder %s20, 1
    %p127 = por %p125, %p126
    %p129 = scmp.ne.s32.totalorder %s114, %s128
    %p130 = scmp.eq.s32.totalorder %s20, 0
    %p131 = por %p129, %p130
    %s132 = ssub.s32 %s14, %s21
    %p133 = scmp.eq.s32.totalorder %s132, 0
    %s135 = sadd.s32 %s134, 1
    %s136 = scalar_select %p133, %s134, %s135
    %p139 = pneg %p133
    %p140 = scmp.eq.s32.totalorder %s14, 1
    %p141 = por %p139, %p140
    %p142 = scmp.ne.s32.totalorder %s134, %s137
    %p143 = scmp.eq.s32.totalorder %s14, 0
    %p144 = por %p142, %p143
    %p145 = scmp.ne.s32.totalorder %s134, %s137
    %p146 = scmp.eq.s32.totalorder %s19, 1
    %p147 = por %p145, %p146
    %p148 = scmp.ne.s32.totalorder %s137, %s138
    %p149 = scmp.eq.s32.totalorder %s19, 0
    %p150 = por %p148, %p149
    %p151 = scmp.ne.s32.totalorder %s137, %s138
    %p152 = scmp.eq.s32.totalorder %s20, 1
    %p153 = por %p151, %p152
    %p155 = scmp.ne.s32.totalorder %s138, %s154
    %p156 = scmp.eq.s32.totalorder %s20, 0
    %p157 = por %p155, %p156
    %s158 = ssub.s32 %s14, %s21
    %p159 = scmp.eq.s32.totalorder %s158, 0
    %s161 = sadd.s32 %s160, 1
    %s162 = scalar_select %p159, %s160, %s161
    %p165 = pneg %p159
    %p166 = scmp.eq.s32.totalorder %s14, 1
    %p167 = por %p165, %p166
    %p168 = scmp.ne.s32.totalorder %s160, %s163
    %p169 = scmp.eq.s32.totalorder %s14, 0
    %p170 = por %p168, %p169
    %p171 = scmp.ne.s32.totalorder %s160, %s163
    %p172 = scmp.eq.s32.totalorder %s19, 1
    %p173 = por %p171, %p172
    %p174 = scmp.ne.s32.totalorder %s163, %s164
    %p175 = scmp.eq.s32.totalorder %s19, 0
    %p176 = por %p174, %p175
    %p177 = scmp.ne.s32.totalorder %s163, %s164
    %p178 = scmp.eq.s32.totalorder %s20, 1
    %p179 = por %p177, %p178
    %p181 = scmp.ne.s32.totalorder %s164, %s180
    %p182 = scmp.eq.s32.totalorder %s20, 0
    %p183 = por %p181, %p182
    %s184 = ssub.s32 %s14, %s21
    %p185 = scmp.eq.s32.totalorder %s184, 0
    %s187 = sadd.s32 %s186, 1
    %s188 = scalar_select %p185, %s186, %s187
    %p191 = pneg %p185
    %p192 = scmp.eq.s32.totalorder %s14, 1
    %p193 = por %p191, %p192
    %p194 = scmp.ne.s32.totalorder %s186, %s189
    %p195 = scmp.eq.s32.totalorder %s14, 0
    %p196 = por %p194, %p195
    %p197 = scmp.ne.s32.totalorder %s186, %s189
    %p198 = scmp.eq.s32.totalorder %s19, 1
    %p199 = por %p197, %p198
    %p200 = scmp.ne.s32.totalorder %s189, %s190
    %p201 = scmp.eq.s32.totalorder %s19, 0
    %p202 = por %p200, %p201
    %p203 = scmp.ne.s32.totalorder %s189, %s190
    %p204 = scmp.eq.s32.totalorder %s20, 1
    %p205 = por %p203, %p204
    %p207 = scmp.ne.s32.totalorder %s190, %s206
    %p208 = scmp.eq.s32.totalorder %s20, 0
    %p209 = por %p207, %p208
    %p210 = scmp.le.s32.totalorder 1, %s14
    %p211 = scmp.lt.s32.totalorder %s14, 3
    %p212 = pnand %p210, %p211
    %p213 = pneg %p212
    // Predicated region
    $region9: #{mam_ffc_forward.3} parent=5 // pred_check
      _
    $region10: #{mam_ffc_forward.3} parent=5 // pred_check_branch
      %215 = sbr.rel (%p212) target = $region12
    $region11: #{mam_ffc_forward.3} parent=5 // pred_region
      %s216 = ssub.s32 %s14, 1
      // Predicated region
      $region13: #{mam_ffc_forward.3} parent=11 // pred_check
        %p217 = pneg %p61
      $region14: #{mam_ffc_forward.3} parent=11 // pred_check_branch
        %219 = sbr.rel (%p217) target = $region16
      $region15: #{mam_ffc_forward.3} parent=11 // pred_region
        _
      $region16: #{mam_ffc_forward.3} parent=11 // pred_fallthru
        _
      // Predicated region
      $region17: #{mam_ffc_forward.3} parent=11 // pred_check
        %p220 = pneg %p82
      $region18: #{mam_ffc_forward.3} parent=11 // pred_check_branch
        %222 = sbr.rel (%p220) target = $region20
      $region19: #{mam_ffc_forward.3} parent=11 // pred_region
        _
      $region20: #{mam_ffc_forward.3} parent=11 // pred_fallthru
        _
      // Predicated region
      $region21: #{mam_ffc_forward.3} parent=11 // pred_check
        %p223 = pneg %p103
      $region22: #{mam_ffc_forward.3} parent=11 // pred_check_branch
        %225 = sbr.rel (%p223) target = $region24
      $region23: #{mam_ffc_forward.3} parent=11 // pred_region
        _
      $region24: #{mam_ffc_forward.3} parent=11 // pred_fallthru
        _
      // Predicated region
      $region25: #{mam_ffc_forward.3} parent=11 // pred_check
        %p226 = pneg %p124
      $region26: #{mam_ffc_forward.3} parent=11 // pred_check_branch
        %228 = sbr.rel (%p226) target = $region28
      $region27: #{mam_ffc_forward.3} parent=11 // pred_region
        _
      $region28: #{mam_ffc_forward.3} parent=11 // pred_fallthru
        _
    $region12: #{mam_ffc_forward.3} parent=5 // pred_fallthru
      _
    %p229 = scmp.lt.s32.totalorder %s14, 2
    // Predicated region
    $region29: #{mam_ffc_forward.3} parent=5 // pred_check
      %p230 = pneg %p229
    $region30: #{mam_ffc_forward.3} parent=5 // pred_check_branch
      %232 = sbr.rel (%p230) target = $region32
    $region31: #{mam_ffc_forward.3} parent=5 // pred_region
      // Predicated region
      $region33: #{mam_ffc_forward.3} parent=31 // pred_check
        %p233 = pneg %p34
      $region34: #{mam_ffc_forward.3} parent=31 // pred_check_branch
        %235 = sbr.rel (%p233) target = $region36
      $region35: #{mam_ffc_forward.3} parent=31 // pred_region
        %p236 = scmp.lt.s32.totalorder %s14, 1
        %s237 = scalar_select %p236, %s14, 1
        %s238 = smul.addr %s237, 4
        %s239 = smul.addr %s238, 8
        %s240 = scalar_lea.vmem %s0, %s239
      $region36: #{mam_ffc_forward.3} parent=31 // pred_fallthru
        _
    $region32: #{mam_ffc_forward.3} parent=5 // pred_fallthru
      _
    %p241 = scmp.le.s32.totalorder 1, %s14
    %p242 = scmp.lt.s32.totalorder %s14, 3
    %p243 = pnand %p241, %p242
    %p244 = pneg %p243
    // Predicated region
    $region37: #{mam_ffc_forward.3} parent=5 // pred_check
      _
    $region38: #{mam_ffc_forward.3} parent=5 // pred_check_branch
      %246 = sbr.rel (%p243) target = $region40
    $region39: #{mam_ffc_forward.3} parent=5 // pred_region
      %s247 = ssub.s32 %s14, 1
      %p248 = scmp.lt.s32.totalorder %s19, 1
      %s249 = scalar_select %p248, %s19, 1
      %s250 = smul.addr %s249, 4
      %s251 = smul.addr %s250, 8
      %s252 = scalar_lea.vmem %s0, %s251
      %p253 = pneg %p40
      %p254 = pneg %p37
      %p255 = pneg %p61
      %p256 = pneg %p58
      %p257 = pneg %p82
      %p258 = pneg %p79
      %p259 = pneg %p103
      %p260 = pneg %p100
      %p261 = pneg %p124
      %p262 = pneg %p121
      %p263 = pneg %p150
      %p264 = pneg %p147
      %p265 = scmp.lt.s32.totalorder %s19, 1
      %s266 = scalar_select %p265, %s19, 1
      %s267 = smul.addr %s266, 2
      %s268 = smul.addr %s267, 8
      %s269 = scalar_lea.vmem %s5, %s268
      %p270 = pneg %p176
      %p271 = pneg %p173
      %p272 = scmp.lt.s32.totalorder %s19, 1
      %s273 = scalar_select %p272, %s19, 1
      %s274 = smul.addr %s273, 2
      %s275 = smul.addr %s274, 8
      %s276 = scalar_lea.vmem %s6, %s275
      %p277 = pneg %p202
      %p278 = pneg %p199
      %p279 = scmp.lt.s32.totalorder %s19, 1
      %s280 = scalar_select %p279, %s19, 1
      %s281 = smul.addr %s280, 2
      %s282 = smul.addr %s281, 4
      %s283 = scalar_lea.vmem %s7, %s282
      %p284 = scmp.lt.s32.totalorder %s19, 1
      %s285 = scalar_select %p284, %s19, 1
      %s286 = smul.addr %s285, 4
      %s287 = smul.addr %s286, 8
      %s288 = scalar_lea.vmem %s0, %s287
      %p289 = scmp.lt.s32.totalorder %s19, 1
      %s290 = scalar_select %p289, %s19, 1
      %s291 = smul.addr %s290, 2
      %s292 = smul.addr %s291, 8
      %s293 = scalar_lea.vmem %s5, %s292
      %p294 = scmp.lt.s32.totalorder %s19, 1
      %s295 = scalar_select %p294, %s19, 1
      %s296 = smul.addr %s295, 2
      %s297 = smul.addr %s296, 8
      %s298 = scalar_lea.vmem %s6, %s297
      %p299 = scmp.lt.s32.totalorder %s19, 1
      %s300 = scalar_select %p299, %s19, 1
      %s301 = smul.addr %s300, 2
      %s302 = smul.addr %s301, 4
      %s303 = scalar_lea.vmem %s7, %s302
      %v304 = vld [vmem:[%s1] sm:$0xff]
      %v305 = vld [vmem:[%s1 + $0x8] sm:$0xff]
      %v306 = vld [vmem:[%s1 + $0x10] sm:$0xff]
      %v307 = vld [vmem:[%s1 + $0x18] sm:$0xf]
      %v308 = vld [vmem:[%s288] sm:$0xff]
      %v309 = vld [vmem:[%s288 + $0x8] sm:$0xff]
      %v310 = vld [vmem:[%s288 + $0x10] sm:$0xff]
      %v311 = vld [vmem:[%s288 + $0x18] sm:$0xff]
      %vm312 = vcmask 130048
      %v314 = vsel %vm312, %v304, 0
      %v317 = vsel %vm312, %v305, 0
      %v320 = vsel %vm312, %v306, 0
      %v323 = vsel %vm312, %v307, 0
      %325 = vmatprep.subr.mxu0 %v309
      %326 = vmatpush1.msra.mxu0 %v308
      %327 = vmatprep.subr.mxu0 %v311
      %328 = vmatpush1.msra.mxu0 %v310
      %329 = vmatprep.subr.mxu0 0.0
      %330 = vmatpush1.msra.mxu0 0.0
      %331 = vmatprep.subr.mxu0 0.0
      %332 = vmatpush1.msra.mxu0 0.0
      %333 = vmatprep.subr.mxu0 0.0
      %334 = vmatpush1.msra.mxu0 0.0
      %335 = vmatprep.subr.mxu0 0.0
      %336 = vmatpush1.msra.mxu0 0.0
      %337 = vmatprep.subr.mxu0 0.0
      %338 = vmatpush1.msra.mxu0 0.0
      %339 = vmatprep.subr.mxu0 0.0
      %340 = vmatpush1.msra.mxu0 0.0
      %341 = vmatprep.subr.mxu0 0.0
      %342 = vmatpush1.msra.mxu0 0.0
      %343 = vmatprep.subr.mxu0 0.0
      %344 = vmatpush1.msra.mxu0 0.0
      %345 = vmatprep.subr.mxu0 0.0
      %346 = vmatpush1.msra.mxu0 0.0
      %347 = vmatprep.subr.mxu0 0.0
      %348 = vmatpush1.msra.mxu0 0.0
      %349 = vmatprep.subr.mxu0 0.0
      %350 = vmatpush1.msra.mxu0 0.0
      %351 = vmatprep.subr.mxu0 0.0
      %352 = vmatpush1.msra.mxu0 0.0
      %353 = vmatprep.subr.mxu0 0.0
      %354 = vmatpush1.msra.mxu0 0.0
      %355 = vmatprep.subr.mxu0 0.0
      %356 = vmatpush1.msra.mxu0 0.0
      %357 = vmatprep.subr.mxu0 0.0
      %358 = vmatpush1.msra.mxu0 0.0
      %359 = vmatprep.subr.mxu0 0.0
      %360 = vmatpush1.msra.mxu0 0.0
      %361 = vmatprep.subr.mxu0 0.0
      %362 = vmatpush1.msra.mxu0 0.0
      %363 = vmatprep.subr.mxu0 0.0
      %364 = vmatpush1.msra.mxu0 0.0
      %365 = vmatprep.subr.mxu0 0.0
      %366 = vmatpush1.msra.mxu0 0.0
      %367 = vmatprep.subr.mxu0 0.0
      %368 = vmatpush1.msra.mxu0 0.0
      %369 = vmatprep.subr.mxu0 0.0
      %370 = vmatpush1.msra.mxu0 0.0
      %371 = vmatprep.subr.mxu0 0.0
      %372 = vmatpush1.msra.mxu0 0.0
      %373 = vmatprep.subr.mxu0 0.0
      %374 = vmatpush1.msra.mxu0 0.0
      %375 = vmatprep.subr.mxu0 0.0
      %376 = vmatpush1.msra.mxu0 0.0
      %377 = vmatprep.subr.mxu0 0.0
      %378 = vmatpush1.msra.mxu0 0.0
      %379 = vmatprep.subr.mxu0 0.0
      %380 = vmatpush1.msra.mxu0 0.0
      %381 = vmatprep.subr.mxu0 0.0
      %382 = vmatpush1.msra.mxu0 0.0
      %383 = vmatprep.subr.mxu0 0.0
      %384 = vmatpush1.msra.mxu0 0.0
      %385 = vmatprep.subr.mxu0 0.0
      %386 = vmatpush1.msra.mxu0 0.0
      %387 = vmatprep.subr.mxu0 0.0
      %388 = vmatpush1.msra.mxu0 0.0
      %389 = vmatprep.mubr.f32.mxu0 0.0
      %390 = vmatmul.mubr.f32.gmra.mrb[0].mxu0 %v314
      %v391 = vpop.f32.mrb[0].mxu0
      %v392 = vadd.f32 0.0, %v391
      %v393 = vpop.f32.mrb[0].mxu0
      %v394 = vadd.f32 0.0, %v393
      %395 = vmatprep.mubr.f32.mxu0 0.0
      %396 = vmatmul.mubr.f32.gmra.mrb[0].mxu0 %v317
      %v397 = vpop.f32.mrb[0].mxu0
      %v398 = vadd.f32 0.0, %v397
      %v399 = vpop.f32.mrb[0].mxu0
      %v400 = vadd.f32 0.0, %v399
      %401 = vmatprep.mubr.f32.mxu0 0.0
      %402 = vmatmul.mubr.f32.gmra.mrb[0].mxu0 %v320
      %v403 = vpop.f32.mrb[0].mxu0
      %v404 = vadd.f32 0.0, %v403
      %v405 = vpop.f32.mrb[0].mxu0
      %v406 = vadd.f32 0.0, %v405
      %407 = vmatprep.mubr.f32.mxu0 0.0
      %408 = vmatmul.mubr.f32.gmra.mrb[0].mxu0 %v323
      %v409 = vpop.f32.mrb[0].mxu0
      %v410 = vadd.f32 0.0, %v409
      %v411 = vpop.f32.mrb[0].mxu0
      %v412 = vadd.f32 0.0, %v411
      %413 = vdwg.mxu0
      %v414 = vld [vmem:[%s2] sm:$0xf]
      %v415 = vld [vmem:[%s2 + $0x4] sm:$0xf]
      %v416 = vld [vmem:[%s2 + $0x8] sm:$0xf]
      %v417 = vld [vmem:[%s3] sm:$0xff]
      %v418 = vld [vmem:[%s3 + $0x8] sm:$0xff]
      %v419 = vld [vmem:[%s3 + $0x10] sm:$0xff]
      %v420 = vmax.f32 %v392, %v394
      %421 = vmax.xlane.f32.xlu0 %v420
      %v422 = vpop.xlane.xlu0 %421
      %v423 = vadd.f32 %v392, %v394
      %424 = vadd.xlane.f32.xlu0 %v423
      %v425 = vpop.xlane.xlu0 %424
      %v426 = vrcp.pop 256.0
      %v427 = vmul.f32 %v425, %v426
      %vm428 = vcmask 7168
      %v429 = vsel %vm428, %v422, %v427
      %vm430 = vcmask 64512
      %v432 = vsel %vm430, %v414, 0
      %434 = vmatprep.subr.mxu0 0.0
      %435 = vmatpush1.msra.mxu0 %v429
      %436 = vmatprep.subr.mxu0 0.0
      %437 = vmatpush1.msra.mxu0 0.0
      %438 = vmatprep.subr.mxu0 0.0
      %439 = vmatpush1.msra.mxu0 0.0
      %440 = vmatprep.subr.mxu0 0.0
      %441 = vmatpush1.msra.mxu0 0.0
      %442 = vmatprep.subr.mxu0 0.0
      %443 = vmatpush1.msra.mxu0 0.0
      %444 = vmatprep.subr.mxu0 0.0
      %445 = vmatpush1.msra.mxu0 0.0
      %446 = vmatprep.subr.mxu0 0.0
      %447 = vmatpush1.msra.mxu0 0.0
      %448 = vmatprep.subr.mxu0 0.0
      %449 = vmatpush1.msra.mxu0 0.0
      %450 = vmatprep.subr.mxu0 0.0
      %451 = vmatpush1.msra.mxu0 0.0
      %452 = vmatprep.subr.mxu0 0.0
      %453 = vmatpush1.msra.mxu0 0.0
      %454 = vmatprep.subr.mxu0 0.0
      %455 = vmatpush1.msra.mxu0 0.0
      %456 = vmatprep.subr.mxu0 0.0
      %457 = vmatpush1.msra.mxu0 0.0
      %458 = vmatprep.subr.mxu0 0.0
      %459 = vmatpush1.msra.mxu0 0.0
      %460 = vmatprep.subr.mxu0 0.0
      %461 = vmatpush1.msra.mxu0 0.0
      %462 = vmatprep.subr.mxu0 0.0
      %463 = vmatpush1.msra.mxu0 0.0
      %464 = vmatprep.subr.mxu0 0.0
      %465 = vmatpush1.msra.mxu0 0.0
      %466 = vmatprep.subr.mxu0 0.0
      %467 = vmatpush1.msra.mxu0 0.0
      %468 = vmatprep.subr.mxu0 0.0
      %469 = vmatpush1.msra.mxu0 0.0
      %470 = vmatprep.subr.mxu0 0.0
      %471 = vmatpush1.msra.mxu0 0.0
      %472 = vmatprep.subr.mxu0 0.0
      %473 = vmatpush1.msra.mxu0 0.0
      %474 = vmatprep.subr.mxu0 0.0
      %475 = vmatpush1.msra.mxu0 0.0
      %476 = vmatprep.subr.mxu0 0.0
      %477 = vmatpush1.msra.mxu0 0.0
      %478 = vmatprep.subr.mxu0 0.0
      %479 = vmatpush1.msra.mxu0 0.0
      %480 = vmatprep.subr.mxu0 0.0
      %481 = vmatpush1.msra.mxu0 0.0
      %482 = vmatprep.subr.mxu0 0.0
      %483 = vmatpush1.msra.mxu0 0.0
      %484 = vmatprep.subr.mxu0 0.0
      %485 = vmatpush1.msra.mxu0 0.0
      %486 = vmatprep.subr.mxu0 0.0
      %487 = vmatpush1.msra.mxu0 0.0
      %488 = vmatprep.subr.mxu0 0.0
      %489 = vmatpush1.msra.mxu0 0.0
      %490 = vmatprep.subr.mxu0 0.0
      %491 = vmatpush1.msra.mxu0 0.0
      %492 = vmatprep.subr.mxu0 0.0
      %493 = vmatpush1.msra.mxu0 0.0
      %494 = vmatprep.subr.mxu0 0.0
      %495 = vmatpush1.msra.mxu0 0.0
      %496 = vmatprep.subr.mxu0 0.0
      %497 = vmatpush1.msra.mxu0 0.0
      %498 = vmatprep.mubr.f32.mxu0 0.0
      %499 = vmatmul.mubr.f32.gmra.mrb[0].mxu0 %v432
      %v500 = vpop.f32.mrb[0].mxu0
      %v501 = vadd.f32 0.0, %v500
      %v502 = vpop.f32.mrb[0].mxu0
      %503 = vdwg.mxu0
      %v504 = vmax.f32 %v501, 0.0
      %vm505 = vcmask 31744
      %v507 = vsel %vm505, %v417, 0
      %vm509 = vcmask 1043456
      %v511 = vsel %vm509, %v504, 0
      %513 = vmatprep.subr.mxu0 0.0
      %514 = vmatpush1.msra.mxu0 %v511
      %515 = vmatprep.subr.mxu0 0.0
      %516 = vmatpush1.msra.mxu0 0.0
      %517 = vmatprep.subr.mxu0 0.0
      %518 = vmatpush1.msra.mxu0 0.0
      %519 = vmatprep.subr.mxu0 0.0
      %520 = vmatpush1.msra.mxu0 0.0
      %521 = vmatprep.subr.mxu0 0.0
      %522 = vmatpush1.msra.mxu0 0.0
      %523 = vmatprep.subr.mxu0 0.0
      %524 = vmatpush1.msra.mxu0 0.0
      %525 = vmatprep.subr.mxu0 0.0
      %526 = vmatpush1.msra.mxu0 0.0
      %527 = vmatprep.subr.mxu0 0.0
      %528 = vmatpush1.msra.mxu0 0.0
      %529 = vmatprep.subr.mxu0 0.0
      %530 = vmatpush1.msra.mxu0 0.0
      %531 = vmatprep.subr.mxu0 0.0
      %532 = vmatpush1.msra.mxu0 0.0
      %533 = vmatprep.subr.mxu0 0.0
      %534 = vmatpush1.msra.mxu0 0.0
      %535 = vmatprep.subr.mxu0 0.0
      %536 = vmatpush1.msra.mxu0 0.0
      %537 = vmatprep.subr.mxu0 0.0
      %538 = vmatpush1.msra.mxu0 0.0
      %539 = vmatprep.subr.mxu0 0.0
      %540 = vmatpush1.msra.mxu0 0.0
      %541 = vmatprep.subr.mxu0 0.0
      %542 = vmatpush1.msra.mxu0 0.0
      %543 = vmatprep.subr.mxu0 0.0
      %544 = vmatpush1.msra.mxu0 0.0
      %545 = vmatprep.subr.mxu0 0.0
      %546 = vmatpush1.msra.mxu0 0.0
      %547 = vmatprep.subr.mxu0 0.0
      %548 = vmatpush1.msra.mxu0 0.0
      %549 = vmatprep.subr.mxu0 0.0
      %550 = vmatpush1.msra.mxu0 0.0
      %551 = vmatprep.subr.mxu0 0.0
      %552 = vmatpush1.msra.mxu0 0.0
      %553 = vmatprep.subr.mxu0 0.0
      %554 = vmatpush1.msra.mxu0 0.0
      %555 = vmatprep.subr.mxu0 0.0
      %556 = vmatpush1.msra.mxu0 0.0
      %557 = vmatprep.subr.mxu0 0.0
      %558 = vmatpush1.msra.mxu0 0.0
      %559 = vmatprep.subr.mxu0 0.0
      %560 = vmatpush1.msra.mxu0 0.0
      %561 = vmatprep.subr.mxu0 0.0
      %562 = vmatpush1.msra.mxu0 0.0
      %563 = vmatprep.subr.mxu0 0.0
      %564 = vmatpush1.msra.mxu0 0.0
      %565 = vmatprep.subr.mxu0 0.0
      %566 = vmatpush1.msra.mxu0 0.0
      %567 = vmatprep.subr.mxu0 0.0
      %568 = vmatpush1.msra.mxu0 0.0
      %569 = vmatprep.subr.mxu0 0.0
      %570 = vmatpush1.msra.mxu0 0.0
      %571 = vmatprep.subr.mxu0 0.0
      %572 = vmatpush1.msra.mxu0 0.0
      %573 = vmatprep.subr.mxu0 0.0
      %574 = vmatpush1.msra.mxu0 0.0
      %575 = vmatprep.subr.mxu0 0.0
      %576 = vmatpush1.msra.mxu0 0.0
      %577 = vmatprep.mubr.f32.mxu0 0.0
      %578 = vmatmul.mubr.f32.gmra.mrb[0].mxu0 %v507
      %v579 = vpop.f32.mrb[0].mxu0
      %v580 = vadd.f32 0.0, %v579
      %v581 = vpop.f32.mrb[0].mxu0
      %582 = vdwg.mxu0
      %584 = vrot.lane.b32.xlu0 %v580, 127
      %v585 = vpop.permute.xlu0 %584
      %v587 = vadd.f32 %v580, %v585
      %v588 = vxor.u32 %v587, 2147483648
      %v589 = vmul.f32 %v588, 1.442695
      %v590 = vpow.pop %v589
      %v591 = vadd.f32 %v590, 1.0
      %v592 = vrcp.pop %v591
      %v593 = vmul.f32 1.0, %v592
      %595 = vset.pattern.permute.xlu0 0
      %596 = vperm.xlu0 %595, %v593
      %v597 = vpop.permute.xlu0 %596
      %v599 = vmul.f32 %v392, %v597
      %v600 = vmul.f32 %v394, %v597
      %v601 = vld [vmem:[%s4] sm:$0xff]
      %v602 = vld [vmem:[%s4 + $0x8] sm:$0xff]
      %v603 = vld [vmem:[%s4 + $0x10] sm:$0xff]
      %v604 = vld [vmem:[%s4 + $0x18] sm:$0xff]
      %v605 = vld [vmem:[%s4 + $0x20] sm:$0xff]
      %v606 = vld [vmem:[%s4 + $0x28] sm:$0xff]
      %v607 = vld [vmem:[%s4 + $0x30] sm:$0xff]
      %v608 = vld [vmem:[%s4 + $0x38] sm:$0xff]
      %v609 = vld [vmem:[%s4 + $0x40] sm:$0xff]
      %v610 = vld [vmem:[%s4 + $0x48] sm:$0xff]
      %v611 = vld [vmem:[%s4 + $0x50] sm:$0xff]
      %v612 = vld [vmem:[%s4 + $0x58] sm:$0xff]
      %v613 = vld [vmem:[%s4 + $0x60] sm:$0xff]
      %v614 = vld [vmem:[%s4 + $0x68] sm:$0xff]
      %v615 = vld [vmem:[%s4 + $0x70] sm:$0xff]
      %v616 = vld [vmem:[%s4 + $0x78] sm:$0xff]
      %v617 = vld [vmem:[%s4 + $0x80] sm:$0xff]
      %v618 = vld [vmem:[%s4 + $0x88] sm:$0xff]
      %v619 = vld [vmem:[%s4 + $0x90] sm:$0xff]
      %v620 = vld [vmem:[%s4 + $0x98] sm:$0xff]
      %v621 = vld [vmem:[%s4 + $0xa0] sm:$0xff]
      %v622 = vld [vmem:[%s4 + $0xa8] sm:$0xff]
      %v623 = vld [vmem:[%s4 + $0xb0] sm:$0xff]
      %v624 = vld [vmem:[%s4 + $0xb8] sm:$0xff]
      %v625 = vld [vmem:[%s4 + $0xc0] sm:$0xff]
      %v626 = vld [vmem:[%s4 + $0xc8] sm:$0xff]
      %v627 = vld [vmem:[%s4 + $0xd0] sm:$0xff]
      %v628 = vld [vmem:[%s4 + $0xd8] sm:$0xff]
      %v629 = vld [vmem:[%s4 + $0xe0] sm:$0xff]
      %v630 = vld [vmem:[%s4 + $0xe8] sm:$0xff]
      %v631 = vld [vmem:[%s4 + $0xf0] sm:$0xff]
      %v632 = vld [vmem:[%s4 + $0xf8] sm:$0xff]
      %v633 = vld [vmem:[%s4 + $0x100] sm:$0xff]
      %v634 = vld [vmem:[%s4 + $0x108] sm:$0xff]
      %v635 = vld [vmem:[%s4 + $0x110] sm:$0xff]
      %v636 = vld [vmem:[%s4 + $0x118] sm:$0xff]
      %v637 = vld [vmem:[%s4 + $0x120] sm:$0xff]
      %v638 = vld [vmem:[%s4 + $0x128] sm:$0xff]
      %v639 = vld [vmem:[%s4 + $0x130] sm:$0xff]
      %v640 = vld [vmem:[%s4 + $0x138] sm:$0xff]
      %v641 = vld [vmem:[%s4 + $0x140] sm:$0xff]
      %v642 = vld [vmem:[%s4 + $0x148] sm:$0xff]
      %v643 = vld [vmem:[%s4 + $0x150] sm:$0xff]
      %v644 = vld [vmem:[%s4 + $0x158] sm:$0xff]
      %v645 = vld [vmem:[%s4 + $0x160] sm:$0xff]
      %v646 = vld [vmem:[%s4 + $0x168] sm:$0xff]
      %v647 = vld [vmem:[%s4 + $0x170] sm:$0xff]
      %v648 = vld [vmem:[%s4 + $0x178] sm:$0xff]
      %v649 = vld [vmem:[%s4 + $0x180] sm:$0xff]
      %v650 = vld [vmem:[%s4 + $0x188] sm:$0xff]
      %v651 = vld [vmem:[%s4 + $0x190] sm:$0xff]
      %v652 = vld [vmem:[%s4 + $0x198] sm:$0xff]
      %v653 = vld [vmem:[%s4 + $0x1a0] sm:$0xff]
      %v654 = vld [vmem:[%s4 + $0x1a8] sm:$0xff]
      %v655 = vld [vmem:[%s4 + $0x1b0] sm:$0xff]
      %v656 = vld [vmem:[%s4 + $0x1b8] sm:$0xff]
      %v657 = vld [vmem:[%s4 + $0x1c0] sm:$0xff]
      %v658 = vld [vmem:[%s4 + $0x1c8] sm:$0xff]
      %v659 = vld [vmem:[%s4 + $0x1d0] sm:$0xff]
      %v660 = vld [vmem:[%s4 + $0x1d8] sm:$0xff]
      %v661 = vld [vmem:[%s4 + $0x1e0] sm:$0xff]
      %v662 = vld [vmem:[%s4 + $0x1e8] sm:$0xff]
      %v663 = vld [vmem:[%s4 + $0x1f0] sm:$0xff]
      %v664 = vld [vmem:[%s4 + $0x1f8] sm:$0xff]
      %v665 = vld [vmem:[%s4 + $0x200] sm:$0xff]
      %v666 = vld [vmem:[%s4 + $0x208] sm:$0xff]
      %v667 = vld [vmem:[%s4 + $0x210] sm:$0xff]
      %v668 = vld [vmem:[%s4 + $0x218] sm:$0xff]
      %v669 = vld [vmem:[%s4 + $0x220] sm:$0xff]
      %v670 = vld [vmem:[%s4 + $0x228] sm:$0xff]
      %v671 = vld [vmem:[%s4 + $0x230] sm:$0xff]
      %v672 = vld [vmem:[%s4 + $0x238] sm:$0xff]
      %v673 = vld [vmem:[%s4 + $0x240] sm:$0xff]
      %v674 = vld [vmem:[%s4 + $0x248] sm:$0xff]
      %v675 = vld [vmem:[%s4 + $0x250] sm:$0xff]
      %v676 = vld [vmem:[%s4 + $0x258] sm:$0xff]
      %v677 = vld [vmem:[%s4 + $0x260] sm:$0xff]
      %v678 = vld [vmem:[%s4 + $0x268] sm:$0xff]
      %v679 = vld [vmem:[%s4 + $0x270] sm:$0xff]
      %v680 = vld [vmem:[%s4 + $0x278] sm:$0xff]
      %v681 = vld [vmem:[%s4 + $0x280] sm:$0xff]
      %v682 = vld [vmem:[%s4 + $0x288] sm:$0xff]
      %v683 = vld [vmem:[%s4 + $0x290] sm:$0xff]
      %v684 = vld [vmem:[%s4 + $0x298] sm:$0xff]
      %v685 = vld [vmem:[%s4 + $0x2a0] sm:$0xff]
      %v686 = vld [vmem:[%s4 + $0x2a8] sm:$0xff]
      %v687 = vld [vmem:[%s4 + $0x2b0] sm:$0xff]
      %v688 = vld [vmem:[%s4 + $0x2b8] sm:$0xff]
      %v689 = vld [vmem:[%s4 + $0x2c0] sm:$0xff]
      %v690 = vld [vmem:[%s4 + $0x2c8] sm:$0xff]
      %v691 = vld [vmem:[%s4 + $0x2d0] sm:$0xff]
      %v692 = vld [vmem:[%s4 + $0x2d8] sm:$0xff]
      %v693 = vld [vmem:[%s4 + $0x2e0] sm:$0xff]
      %v694 = vld [vmem:[%s4 + $0x2e8] sm:$0xff]
      %v695 = vld [vmem:[%s4 + $0x2f0] sm:$0xff]
      %v696 = vld [vmem:[%s4 + $0x2f8] sm:$0xff]
      %v697 = vld [vmem:[%s4 + $0x300] sm:$0xff]
      %v698 = vld [vmem:[%s4 + $0x308] sm:$0xff]
      %v699 = vld [vmem:[%s4 + $0x310] sm:$0xff]
      %v700 = vld [vmem:[%s4 + $0x318] sm:$0xff]
      %v701 = vld [vmem:[%s4 + $0x320] sm:$0xff]
      %v702 = vld [vmem:[%s4 + $0x328] sm:$0xff]
      %v703 = vld [vmem:[%s4 + $0x330] sm:$0xff]
      %v704 = vld [vmem:[%s4 + $0x338] sm:$0xff]
      %v705 = vld [vmem:[%s4 + $0x340] sm:$0xff]
      %v706 = vld [vmem:[%s4 + $0x348] sm:$0xff]
      %v707 = vld [vmem:[%s4 + $0x350] sm:$0xff]
      %v708 = vld [vmem:[%s4 + $0x358] sm:$0xff]
      %v709 = vld [vmem:[%s4 + $0x360] sm:$0xff]
      %v710 = vld [vmem:[%s4 + $0x368] sm:$0xff]
      %v711 = vld [vmem:[%s4 + $0x370] sm:$0xff]
      %v712 = vld [vmem:[%s4 + $0x378] sm:$0xff]
      %v713 = vld [vmem:[%s4 + $0x380] sm:$0xff]
      %v714 = vld [vmem:[%s4 + $0x388] sm:$0xff]
      %v715 = vld [vmem:[%s4 + $0x390] sm:$0xff]
      %v716 = vld [vmem:[%s4 + $0x398] sm:$0xff]
      %v717 = vld [vmem:[%s4 + $0x3a0] sm:$0xff]
      %v718 = vld [vmem:[%s4 + $0x3a8] sm:$0xff]
      %v719 = vld [vmem:[%s4 + $0x3b0] sm:$0xff]
      %v720 = vld [vmem:[%s4 + $0x3b8] sm:$0xff]
      %v721 = vld [vmem:[%s4 + $0x3c0] sm:$0xff]
      %v722 = vld [vmem:[%s4 + $0x3c8] sm:$0xff]
      %v723 = vld [vmem:[%s4 + $0x3d0] sm:$0xff]
      %v724 = vld [vmem:[%s4 + $0x3d8] sm:$0xff]
      %v725 = vld [vmem:[%s4 + $0x3e0] sm:$0xff]
      %v726 = vld [vmem:[%s4 + $0x3e8] sm:$0xff]
      %v727 = vld [vmem:[%s4 + $0x3f0] sm:$0xff]
      %v728 = vld [vmem:[%s4 + $0x3f8] sm:$0xff]
      %v729 = vrot.slane %v599, 4
      %v730 = vmax.f32 %v599, %v729
      %v731 = vrot.slane %v730, 2
      %v732 = vmax.f32 %v730, %v731
      %v733 = vrot.slane %v732, 1
      %v734 = vmax.f32 %v732, %v733
      %v735 = vrot.slane %v600, 4
      %v736 = vmax.f32 %v600, %v735
      %v737 = vrot.slane %v736, 2
      %v738 = vmax.f32 %v736, %v737
      %v739 = vrot.slane %v738, 1
      %v740 = vmax.f32 %v738, %v739
      %v741 = vrot.slane %v599, 4
      %v742 = vadd.f32 %v599, %v741
      %v743 = vrot.slane %v742, 2
      %v744 = vadd.f32 %v742, %v743
      %v745 = vrot.slane %v744, 1
      %v746 = vadd.f32 %v744, %v745
      %v747 = vrot.slane %v600, 4
      %v748 = vadd.f32 %v600, %v747
      %v749 = vrot.slane %v748, 2
      %v750 = vadd.f32 %v748, %v749
      %v751 = vrot.slane %v750, 1
      %v752 = vadd.f32 %v750, %v751
      %v753 = vrcp.pop 8.0
      %v754 = vmul.f32 %v746, %v753
      %v755 = vmul.f32 %v752, %v753
      %756 = vmatprep.subr.mxu0 %v602
      %757 = vmatpush1.msra.mxu0 %v601
      %758 = vmatprep.subr.mxu0 %v604
      %759 = vmatpush1.msra.mxu0 %v603
      %760 = vmatprep.subr.mxu0 %v606
      %761 = vmatpush1.msra.mxu0 %v605
      %762 = vmatprep.subr.mxu0 %v608
      %763 = vmatpush1.msra.mxu0 %v607
      %764 = vmatprep.subr.mxu0 %v610
      %765 = vmatpush1.msra.mxu0 %v609
      %766 = vmatprep.subr.mxu0 %v612
      %767 = vmatpush1.msra.mxu0 %v611
      %768 = vmatprep.subr.mxu0 %v614
      %769 = vmatpush1.msra.mxu0 %v613
      %770 = vmatprep.subr.mxu0 %v616
      %771 = vmatpush1.msra.mxu0 %v615
      %772 = vmatprep.subr.mxu0 %v618
      %773 = vmatpush1.msra.mxu0 %v617
      %774 = vmatprep.subr.mxu0 %v620
      %775 = vmatpush1.msra.mxu0 %v619
      %776 = vmatprep.subr.mxu0 %v622
      %777 = vmatpush1.msra.mxu0 %v621
      %778 = vmatprep.subr.mxu0 %v624
      %779 = vmatpush1.msra.mxu0 %v623
      %780 = vmatprep.subr.mxu0 %v626
      %781 = vmatpush1.msra.mxu0 %v625
      %782 = vmatprep.subr.mxu0 %v628
      %783 = vmatpush1.msra.mxu0 %v627
      %784 = vmatprep.subr.mxu0 %v630
      %785 = vmatpush1.msra.mxu0 %v629
      %786 = vmatprep.subr.mxu0 %v632
      %787 = vmatpush1.msra.mxu0 %v631
      %788 = vmatprep.subr.mxu0 %v634
      %789 = vmatpush1.msra.mxu0 %v633
      %790 = vmatprep.subr.mxu0 %v636
      %791 = vmatpush1.msra.mxu0 %v635
      %792 = vmatprep.subr.mxu0 %v638
      %793 = vmatpush1.msra.mxu0 %v637
      %794 = vmatprep.subr.mxu0 %v640
      %795 = vmatpush1.msra.mxu0 %v639
      %796 = vmatprep.subr.mxu0 %v642
      %797 = vmatpush1.msra.mxu0 %v641
      %798 = vmatprep.subr.mxu0 %v644
      %799 = vmatpush1.msra.mxu0 %v643
      %800 = vmatprep.subr.mxu0 %v646
      %801 = vmatpush1.msra.mxu0 %v645
      %802 = vmatprep.subr.mxu0 %v648
      %803 = vmatpush1.msra.mxu0 %v647
      %804 = vmatprep.subr.mxu0 %v650
      %805 = vmatpush1.msra.mxu0 %v649
      %806 = vmatprep.subr.mxu0 %v652
      %807 = vmatpush1.msra.mxu0 %v651
      %808 = vmatprep.subr.mxu0 %v654
      %809 = vmatpush1.msra.mxu0 %v653
      %810 = vmatprep.subr.mxu0 %v656
      %811 = vmatpush1.msra.mxu0 %v655
      %812 = vmatprep.subr.mxu0 %v658
      %813 = vmatpush1.msra.mxu0 %v657
      %814 = vmatprep.subr.mxu0 %v660
      %815 = vmatpush1.msra.mxu0 %v659
      %816 = vmatprep.subr.mxu0 %v662
      %817 = vmatpush1.msra.mxu0 %v661
      %818 = vmatprep.subr.mxu0 %v664
      %819 = vmatpush1.msra.mxu0 %v663
      %820 = vmatprep.mubr.f32.mxu0 %v740
      %821 = vmatmul.mubr.f32.gmra.mrb[0].mxu0 %v734
      %v822 = vpop.f32.mrb[0].mxu0
      %v823 = vadd.f32 0.0, %v822
      %v824 = vpop.f32.mrb[0].mxu0
      %v825 = vadd.f32 0.0, %v824
      %826 = vdwg.mxu0
      %827 = vmatprep.subr.mxu0 %v666
      %828 = vmatpush1.msra.mxu0 %v665
      %829 = vmatprep.subr.mxu0 %v668
      %830 = vmatpush1.msra.mxu0 %v667
      %831 = vmatprep.subr.mxu0 %v670
      %832 = vmatpush1.msra.mxu0 %v669
      %833 = vmatprep.subr.mxu0 %v672
      %834 = vmatpush1.msra.mxu0 %v671
      %835 = vmatprep.subr.mxu0 %v674
      %836 = vmatpush1.msra.mxu0 %v673
      %837 = vmatprep.subr.mxu0 %v676
      %838 = vmatpush1.msra.mxu0 %v675
      %839 = vmatprep.subr.mxu0 %v678
      %840 = vmatpush1.msra.mxu0 %v677
      %841 = vmatprep.subr.mxu0 %v680
      %842 = vmatpush1.msra.mxu0 %v679
      %843 = vmatprep.subr.mxu0 %v682
      %844 = vmatpush1.msra.mxu0 %v681
      %845 = vmatprep.subr.mxu0 %v684
      %846 = vmatpush1.msra.mxu0 %v683
      %847 = vmatprep.subr.mxu0 %v686
      %848 = vmatpush1.msra.mxu0 %v685
      %849 = vmatprep.subr.mxu0 %v688
      %850 = vmatpush1.msra.mxu0 %v687
      %851 = vmatprep.subr.mxu0 %v690
      %852 = vmatpush1.msra.mxu0 %v689
      %853 = vmatprep.subr.mxu0 %v692
      %854 = vmatpush1.msra.mxu0 %v691
      %855 = vmatprep.subr.mxu0 %v694
      %856 = vmatpush1.msra.mxu0 %v693
      %857 = vmatprep.subr.mxu0 %v696
      %858 = vmatpush1.msra.mxu0 %v695
      %859 = vmatprep.subr.mxu0 %v698
      %860 = vmatpush1.msra.mxu0 %v697
      %861 = vmatprep.subr.mxu0 %v700
      %862 = vmatpush1.msra.mxu0 %v699
      %863 = vmatprep.subr.mxu0 %v702
      %864 = vmatpush1.msra.mxu0 %v701
      %865 = vmatprep.subr.mxu0 %v704
      %866 = vmatpush1.msra.mxu0 %v703
      %867 = vmatprep.subr.mxu0 %v706
      %868 = vmatpush1.msra.mxu0 %v705
      %869 = vmatprep.subr.mxu0 %v708
      %870 = vmatpush1.msra.mxu0 %v707
      %871 = vmatprep.subr.mxu0 %v710
      %872 = vmatpush1.msra.mxu0 %v709
      %873 = vmatprep.subr.mxu0 %v712
      %874 = vmatpush1.msra.mxu0 %v711
      %875 = vmatprep.subr.mxu0 %v714
      %876 = vmatpush1.msra.mxu0 %v713
      %877 = vmatprep.subr.mxu0 %v716
      %878 = vmatpush1.msra.mxu0 %v715
      %879 = vmatprep.subr.mxu0 %v718
      %880 = vmatpush1.msra.mxu0 %v717
      %881 = vmatprep.subr.mxu0 %v720
      %882 = vmatpush1.msra.mxu0 %v719
      %883 = vmatprep.subr.mxu0 %v722
      %884 = vmatpush1.msra.mxu0 %v721
      %885 = vmatprep.subr.mxu0 %v724
      %886 = vmatpush1.msra.mxu0 %v723
      %887 = vmatprep.subr.mxu0 %v726
      %888 = vmatpush1.msra.mxu0 %v725
      %889 = vmatprep.subr.mxu0 %v728
      %890 = vmatpush1.msra.mxu0 %v727
      %891 = vmatprep.mubr.f32.mxu0 %v755
      %892 = vmatmul.mubr.f32.gmra.mrb[0].mxu0 %v754
      %v893 = vpop.f32.mrb[0].mxu0
      %v894 = vadd.f32 %v823, %v893
      %v895 = vpop.f32.mrb[0].mxu0
      %v896 = vadd.f32 %v825, %v895
      %897 = vdwg.mxu0
      %v898 = vxor.u32 %v894, 2147483648
      %v899 = vxor.u32 %v896, 2147483648
      %v900 = vmul.f32 %v898, 1.442695
      %v901 = vpow.pop %v900
      %v902 = vmul.f32 %v899, 1.442695
      %v903 = vpow.pop %v902
      %v904 = vadd.f32 %v901, 1.0
      %v905 = vadd.f32 %v903, 1.0
      %v906 = vrcp.pop %v904
      %v907 = vmul.f32 1.0, %v906
      %v908 = vrcp.pop %v905
      %v909 = vmul.f32 1.0, %v908
      %v910 = vlaneseq
      %v911 = vshrl.u32 %v910, 7
      %v912 = vsub.s32 0, %v911
      %v913 = vrot.slane %v907, %v912
      %v914 = vlaneseq
      %v915 = vshrl.u32 %v914, 7
      %v916 = vsub.s32 0, %v915
      %v917 = vrot.slane %v909, %v916
      %v918 = vmul.f32 %v599, %v913
      %v919 = vmul.f32 %v600, %v917
      %v920 = vmax.f32 %v398, %v400
      %921 = vmax.xlane.f32.xlu0 %v920
      %v922 = vpop.xlane.xlu0 %921
      %v923 = vadd.f32 %v398, %v400
      %924 = vadd.xlane.f32.xlu0 %v923
      %v925 = vpop.xlane.xlu0 %924
      %v926 = vmul.f32 %v925, %v426
      %v927 = vsel %vm428, %v922, %v926
      %v929 = vsel %vm430, %v415, 0
      %931 = vmatprep.subr.mxu0 0.0
      %932 = vmatpush1.msra.mxu0 %v927
      %933 = vmatprep.subr.mxu0 0.0
      %934 = vmatpush1.msra.mxu0 0.0
      %935 = vmatprep.subr.mxu0 0.0
      %936 = vmatpush1.msra.mxu0 0.0
      %937 = vmatprep.subr.mxu0 0.0
      %938 = vmatpush1.msra.mxu0 0.0
      %939 = vmatprep.subr.mxu0 0.0
      %940 = vmatpush1.msra.mxu0 0.0
      %941 = vmatprep.subr.mxu0 0.0
      %942 = vmatpush1.msra.mxu0 0.0
      %943 = vmatprep.subr.mxu0 0.0
      %944 = vmatpush1.msra.mxu0 0.0
      %945 = vmatprep.subr.mxu0 0.0
      %946 = vmatpush1.msra.mxu0 0.0
      %947 = vmatprep.subr.mxu0 0.0
      %948 = vmatpush1.msra.mxu0 0.0
      %949 = vmatprep.subr.mxu0 0.0
      %950 = vmatpush1.msra.mxu0 0.0
      %951 = vmatprep.subr.mxu0 0.0
      %952 = vmatpush1.msra.mxu0 0.0
      %953 = vmatprep.subr.mxu0 0.0
      %954 = vmatpush1.msra.mxu0 0.0
      %955 = vmatprep.subr.mxu0 0.0
      %956 = vmatpush1.msra.mxu0 0.0
      %957 = vmatprep.subr.mxu0 0.0
      %958 = vmatpush1.msra.mxu0 0.0
      %959 = vmatprep.subr.mxu0 0.0
      %960 = vmatpush1.msra.mxu0 0.0
      %961 = vmatprep.subr.mxu0 0.0
      %962 = vmatpush1.msra.mxu0 0.0
      %963 = vmatprep.subr.mxu0 0.0
      %964 = vmatpush1.msra.mxu0 0.0
      %965 = vmatprep.subr.mxu0 0.0
      %966 = vmatpush1.msra.mxu0 0.0
      %967 = vmatprep.subr.mxu0 0.0
      %968 = vmatpush1.msra.mxu0 0.0
      %969 = vmatprep.subr.mxu0 0.0
      %970 = vmatpush1.msra.mxu0 0.0
      %971 = vmatprep.subr.mxu0 0.0
      %972 = vmatpush1.msra.mxu0 0.0
      %973 = vmatprep.subr.mxu0 0.0
      %974 = vmatpush1.msra.mxu0 0.0
      %975 = vmatprep.subr.mxu0 0.0
      %976 = vmatpush1.msra.mxu0 0.0
      %977 = vmatprep.subr.mxu0 0.0
      %978 = vmatpush1.msra.mxu0 0.0
      %979 = vmatprep.subr.mxu0 0.0
      %980 = vmatpush1.msra.mxu0 0.0
      %981 = vmatprep.subr.mxu0 0.0
      %982 = vmatpush1.msra.mxu0 0.0
      %983 = vmatprep.subr.mxu0 0.0
      %984 = vmatpush1.msra.mxu0 0.0
      %985 = vmatprep.subr.mxu0 0.0
      %986 = vmatpush1.msra.mxu0 0.0
      %987 = vmatprep.subr.mxu0 0.0
      %988 = vmatpush1.msra.mxu0 0.0
      %989 = vmatprep.subr.mxu0 0.0
      %990 = vmatpush1.msra.mxu0 0.0
      %991 = vmatprep.subr.mxu0 0.0
      %992 = vmatpush1.msra.mxu0 0.0
      %993 = vmatprep.subr.mxu0 0.0
      %994 = vmatpush1.msra.mxu0 0.0
      %995 = vmatprep.mubr.f32.mxu0 0.0
      %996 = vmatmul.mubr.f32.gmra.mrb[0].mxu0 %v929
      %v997 = vpop.f32.mrb[0].mxu0
      %v998 = vadd.f32 0.0, %v997
      %v999 = vpop.f32.mrb[0].mxu0
      %1000 = vdwg.mxu0
      %v1001 = vmax.f32 %v998, 0.0
      %v1003 = vsel %vm505, %v418, 0
      %v1006 = vsel %vm509, %v1001, 0
      %1008 = vmatprep.subr.mxu0 0.0
      %1009 = vmatpush1.msra.mxu0 %v1006
      %1010 = vmatprep.subr.mxu0 0.0
      %1011 = vmatpush1.msra.mxu0 0.0
      %1012 = vmatprep.subr.mxu0 0.0
      %1013 = vmatpush1.msra.mxu0 0.0
      %1014 = vmatprep.subr.mxu0 0.0
      %1015 = vmatpush1.msra.mxu0 0.0
      %1016 = vmatprep.subr.mxu0 0.0
      %1017 = vmatpush1.msra.mxu0 0.0
      %1018 = vmatprep.subr.mxu0 0.0
      %1019 = vmatpush1.msra.mxu0 0.0
      %1020 = vmatprep.subr.mxu0 0.0
      %1021 = vmatpush1.msra.mxu0 0.0
      %1022 = vmatprep.subr.mxu0 0.0
      %1023 = vmatpush1.msra.mxu0 0.0
      %1024 = vmatprep.subr.mxu0 0.0
      %1025 = vmatpush1.msra.mxu0 0.0
      %1026 = vmatprep.subr.mxu0 0.0
      %1027 = vmatpush1.msra.mxu0 0.0
      %1028 = vmatprep.subr.mxu0 0.0
      %1029 = vmatpush1.msra.mxu0 0.0
      %1030 = vmatprep.subr.mxu0 0.0
      %1031 = vmatpush1.msra.mxu0 0.0
      %1032 = vmatprep.subr.mxu0 0.0
      %1033 = vmatpush1.msra.mxu0 0.0
      %1034 = vmatprep.subr.mxu0 0.0
      %1035 = vmatpush1.msra.mxu0 0.0
      %1036 = vmatprep.subr.mxu0 0.0
      %1037 = vmatpush1.msra.mxu0 0.0
      %1038 = vmatprep.subr.mxu0 0.0
      %1039 = vmatpush1.msra.mxu0 0.0
      %1040 = vmatprep.subr.mxu0 0.0
      %1041 = vmatpush1.msra.mxu0 0.0
      %1042 = vmatprep.subr.mxu0 0.0
      %1043 = vmatpush1.msra.mxu0 0.0
      %1044 = vmatprep.subr.mxu0 0.0
      %1045 = vmatpush1.msra.mxu0 0.0
      %1046 = vmatprep.subr.mxu0 0.0
      %1047 = vmatpush1.msra.mxu0 0.0
      %1048 = vmatprep.subr.mxu0 0.0
      %1049 = vmatpush1.msra.mxu0 0.0
      %1050 = vmatprep.subr.mxu0 0.0
      %1051 = vmatpush1.msra.mxu0 0.0
      %1052 = vmatprep.subr.mxu0 0.0
      %1053 = vmatpush1.msra.mxu0 0.0
      %1054 = vmatprep.subr.mxu0 0.0
      %1055 = vmatpush1.msra.mxu0 0.0
      %1056 = vmatprep.subr.mxu0 0.0
      %1057 = vmatpush1.msra.mxu0 0.0
      %1058 = vmatprep.subr.mxu0 0.0
      %1059 = vmatpush1.msra.mxu0 0.0
      %1060 = vmatprep.subr.mxu0 0.0
      %1061 = vmatpush1.msra.mxu0 0.0
      %1062 = vmatprep.subr.mxu0 0.0
      %1063 = vmatpush1.msra.mxu0 0.0
      %1064 = vmatprep.subr.mxu0 0.0
      %1065 = vmatpush1.msra.mxu0 0.0
      %1066 = vmatprep.subr.mxu0 0.0
      %1067 = vmatpush1.msra.mxu0 0.0
      %1068 = vmatprep.subr.mxu0 0.0
      %1069 = vmatpush1.msra.mxu0 0.0
      %1070 = vmatprep.subr.mxu0 0.0
      %1071 = vmatpush1.msra.mxu0 0.0
      %1072 = vmatprep.mubr.f32.mxu0 0.0
      %1073 = vmatmul.mubr.f32.gmra.mrb[0].mxu0 %v1003
      %v1074 = vpop.f32.mrb[0].mxu0
      %v1075 = vadd.f32 0.0, %v1074
      %v1076 = vpop.f32.mrb[0].mxu0
      %1077 = vdwg.mxu0
      %1079 = vrot.lane.b32.xlu0 %v1075, 127
      %v1080 = vpop.permute.xlu0 %1079
      %v1082 = vadd.f32 %v1075, %v1080
      %v1083 = vxor.u32 %v1082, 2147483648
      %v1084 = vmul.f32 %v1083, 1.442695
      %v1085 = vpow.pop %v1084
      %v1086 = vadd.f32 %v1085, 1.0
      %v1087 = vrcp.pop %v1086
      %v1088 = vmul.f32 1.0, %v1087
      %1090 = vset.pattern.permute.xlu0 0
      %1091 = vperm.xlu0 %1090, %v1088
      %v1092 = vpop.permute.xlu0 %1091
      %v1094 = vmul.f32 %v398, %v1092
      %v1095 = vmul.f32 %v400, %v1092
      %s1096 = scalar_lea.vmem %s4, 1024
      %v1097 = vld [vmem:[%s1096] sm:$0xff]
      %v1098 = vld [vmem:[%s1096 + $0x8] sm:$0xff]
      %v1099 = vld [vmem:[%s1096 + $0x10] sm:$0xff]
      %v1100 = vld [vmem:[%s1096 + $0x18] sm:$0xff]
      %v1101 = vld [vmem:[%s1096 + $0x20] sm:$0xff]
      %v1102 = vld [vmem:[%s1096 + $0x28] sm:$0xff]
      %v1103 = vld [vmem:[%s1096 + $0x30] sm:$0xff]
      %v1104 = vld [vmem:[%s1096 + $0x38] sm:$0xff]
      %v1105 = vld [vmem:[%s1096 + $0x40] sm:$0xff]
      %v1106 = vld [vmem:[%s1096 + $0x48] sm:$0xff]
      %v1107 = vld [vmem:[%s1096 + $0x50] sm:$0xff]
      %v1108 = vld [vmem:[%s1096 + $0x58] sm:$0xff]
      %v1109 = vld [vmem:[%s1096 + $0x60] sm:$0xff]
      %v1110 = vld [vmem:[%s1096 + $0x68] sm:$0xff]
      %v1111 = vld [vmem:[%s1096 + $0x70] sm:$0xff]
      %v1112 = vld [vmem:[%s1096 + $0x78] sm:$0xff]
      %v1113 = vld [vmem:[%s1096 + $0x80] sm:$0xff]
      %v1114 = vld [vmem:[%s1096 + $0x88] sm:$0xff]
      %v1115 = vld [vmem:[%s1096 + $0x90] sm:$0xff]
      %v1116 = vld [vmem:[%s1096 + $0x98] sm:$0xff]
      %v1117 = vld [vmem:[%s1096 + $0xa0] sm:$0xff]
      %v1118 = vld [vmem:[%s1096 + $0xa8] sm:$0xff]
      %v1119 = vld [vmem:[%s1096 + $0xb0] sm:$0xff]
      %v1120 = vld [vmem:[%s1096 + $0xb8] sm:$0xff]
      %v1121 = vld [vmem:[%s1096 + $0xc0] sm:$0xff]
      %v1122 = vld [vmem:[%s1096 + $0xc8] sm:$0xff]
      %v1123 = vld [vmem:[%s1096 + $0xd0] sm:$0xff]
      %v1124 = vld [vmem:[%s1096 + $0xd8] sm:$0xff]
      %v1125 = vld [vmem:[%s1096 + $0xe0] sm:$0xff]
      %v1126 = vld [vmem:[%s1096 + $0xe8] sm:$0xff]
      %v1127 = vld [vmem:[%s1096 + $0xf0] sm:$0xff]
      %v1128 = vld [vmem:[%s1096 + $0xf8] sm:$0xff]
      %v1129 = vld [vmem:[%s1096 + $0x100] sm:$0xff]
      %v1130 = vld [vmem:[%s1096 + $0x108] sm:$0xff]
      %v1131 = vld [vmem:[%s1096 + $0x110] sm:$0xff]
      %v1132 = vld [vmem:[%s1096 + $0x118] sm:$0xff]
      %v1133 = vld [vmem:[%s1096 + $0x120] sm:$0xff]
      %v1134 = vld [vmem:[%s1096 + $0x128] sm:$0xff]
      %v1135 = vld [vmem:[%s1096 + $0x130] sm:$0xff]
      %v1136 = vld [vmem:[%s1096 + $0x138] sm:$0xff]
      %v1137 = vld [vmem:[%s1096 + $0x140] sm:$0xff]
      %v1138 = vld [vmem:[%s1096 + $0x148] sm:$0xff]
      %v1139 = vld [vmem:[%s1096 + $0x150] sm:$0xff]
      %v1140 = vld [vmem:[%s1096 + $0x158] sm:$0xff]
      %v1141 = vld [vmem:[%s1096 + $0x160] sm:$0xff]
      %v1142 = vld [vmem:[%s1096 + $0x168] sm:$0xff]
      %v1143 = vld [vmem:[%s1096 + $0x170] sm:$0xff]
      %v1144 = vld [vmem:[%s1096 + $0x178] sm:$0xff]
      %v1145 = vld [vmem:[%s1096 + $0x180] sm:$0xff]
      %v1146 = vld [vmem:[%s1096 + $0x188] sm:$0xff]
      %v1147 = vld [vmem:[%s1096 + $0x190] sm:$0xff]
      %v1148 = vld [vmem:[%s1096 + $0x198] sm:$0xff]
      %v1149 = vld [vmem:[%s1096 + $0x1a0] sm:$0xff]
      %v1150 = vld [vmem:[%s1096 + $0x1a8] sm:$0xff]
      %v1151 = vld [vmem:[%s1096 + $0x1b0] sm:$0xff]
      %v1152 = vld [vmem:[%s1096 + $0x1b8] sm:$0xff]
      %v1153 = vld [vmem:[%s1096 + $0x1c0] sm:$0xff]
      %v1154 = vld [vmem:[%s1096 + $0x1c8] sm:$0xff]
      %v1155 = vld [vmem:[%s1096 + $0x1d0] sm:$0xff]
      %v1156 = vld [vmem:[%s1096 + $0x1d8] sm:$0xff]
      %v1157 = vld [vmem:[%s1096 + $0x1e0] sm:$0xff]
      %v1158 = vld [vmem:[%s1096 + $0x1e8] sm:$0xff]
      %v1159 = vld [vmem:[%s1096 + $0x1f0] sm:$0xff]
      %v1160 = vld [vmem:[%s1096 + $0x1f8] sm:$0xff]
      %v1161 = vld [vmem:[%s1096 + $0x200] sm:$0xff]
      %v1162 = vld [vmem:[%s1096 + $0x208] sm:$0xff]
      %v1163 = vld [vmem:[%s1096 + $0x210] sm:$0xff]
      %v1164 = vld [vmem:[%s1096 + $0x218] sm:$0xff]
      %v1165 = vld [vmem:[%s1096 + $0x220] sm:$0xff]
      %v1166 = vld [vmem:[%s1096 + $0x228] sm:$0xff]
      %v1167 = vld [vmem:[%s1096 + $0x230] sm:$0xff]
      %v1168 = vld [vmem:[%s1096 + $0x238] sm:$0xff]
      %v1169 = vld [vmem:[%s1096 + $0x240] sm:$0xff]
      %v1170 = vld [vmem:[%s1096 + $0x248] sm:$0xff]
      %v1171 = vld [vmem:[%s1096 + $0x250] sm:$0xff]
      %v1172 = vld [vmem:[%s1096 + $0x258] sm:$0xff]
      %v1173 = vld [vmem:[%s1096 + $0x260] sm:$0xff]
      %v1174 = vld [vmem:[%s1096 + $0x268] sm:$0xff]
      %v1175 = vld [vmem:[%s1096 + $0x270] sm:$0xff]
      %v1176 = vld [vmem:[%s1096 + $0x278] sm:$0xff]
      %v1177 = vld [vmem:[%s1096 + $0x280] sm:$0xff]
      %v1178 = vld [vmem:[%s1096 + $0x288] sm:$0xff]
      %v1179 = vld [vmem:[%s1096 + $0x290] sm:$0xff]
      %v1180 = vld [vmem:[%s1096 + $0x298] sm:$0xff]
      %v1181 = vld [vmem:[%s1096 + $0x2a0] sm:$0xff]
      %v1182 = vld [vmem:[%s1096 + $0x2a8] sm:$0xff]
      %v1183 = vld [vmem:[%s1096 + $0x2b0] sm:$0xff]
      %v1184 = vld [vmem:[%s1096 + $0x2b8] sm:$0xff]
      %v1185 = vld [vmem:[%s1096 + $0x2c0] sm:$0xff]
      %v1186 = vld [vmem:[%s1096 + $0x2c8] sm:$0xff]
      %v1187 = vld [vmem:[%s1096 + $0x2d0] sm:$0xff]
      %v1188 = vld [vmem:[%s1096 + $0x2d8] sm:$0xff]
      %v1189 = vld [vmem:[%s1096 + $0x2e0] sm:$0xff]
      %v1190 = vld [vmem:[%s1096 + $0x2e8] sm:$0xff]
      %v1191 = vld [vmem:[%s1096 + $0x2f0] sm:$0xff]
      %v1192 = vld [vmem:[%s1096 + $0x2f8] sm:$0xff]
      %v1193 = vld [vmem:[%s1096 + $0x300] sm:$0xff]
      %v1194 = vld [vmem:[%s1096 + $0x308] sm:$0xff]
      %v1195 = vld [vmem:[%s1096 + $0x310] sm:$0xff]
      %v1196 = vld [vmem:[%s1096 + $0x318] sm:$0xff]
      %v1197 = vld [vmem:[%s1096 + $0x320] sm:$0xff]
      %v1198 = vld [vmem:[%s1096 + $0x328] sm:$0xff]
      %v1199 = vld [vmem:[%s1096 + $0x330] sm:$0xff]
      %v1200 = vld [vmem:[%s1096 + $0x338] sm:$0xff]
      %v1201 = vld [vmem:[%s1096 + $0x340] sm:$0xff]
      %v1202 = vld [vmem:[%s1096 + $0x348] sm:$0xff]
      %v1203 = vld [vmem:[%s1096 + $0x350] sm:$0xff]
      %v1204 = vld [vmem:[%s1096 + $0x358] sm:$0xff]
      %v1205 = vld [vmem:[%s1096 + $0x360] sm:$0xff]
      %v1206 = vld [vmem:[%s1096 + $0x368] sm:$0xff]
      %v1207 = vld [vmem:[%s1096 + $0x370] sm:$0xff]
      %v1208 = vld [vmem:[%s1096 + $0x378] sm:$0xff]
      %v1209 = vld [vmem:[%s1096 + $0x380] sm:$0xff]
      %v1210 = vld [vmem:[%s1096 + $0x388] sm:$0xff]
      %v1211 = vld [vmem:[%s1096 + $0x390] sm:$0xff]
      %v1212 = vld [vmem:[%s1096 + $0x398] sm:$0xff]
      %v1213 = vld [vmem:[%s1096 + $0x3a0] sm:$0xff]
      %v1214 = vld [vmem:[%s1096 + $0x3a8] sm:$0xff]
      %v1215 = vld [vmem:[%s1096 + $0x3b0] sm:$0xff]
      %v1216 = vld [vmem:[%s1096 + $0x3b8] sm:$0xff]
      %v1217 = vld [vmem:[%s1096 + $0x3c0] sm:$0xff]
      %v1218 = vld [vmem:[%s1096 + $0x3c8] sm:$0xff]
      %v1219 = vld [vmem:[%s1096 + $0x3d0] sm:$0xff]
      %v1220 = vld [vmem:[%s1096 + $0x3d8] sm:$0xff]
      %v1221 = vld [vmem:[%s1096 + $0x3e0] sm:$0xff]
      %v1222 = vld [vmem:[%s1096 + $0x3e8] sm:$0xff]
      %v1223 = vld [vmem:[%s1096 + $0x3f0] sm:$0xff]
      %v1224 = vld [vmem:[%s1096 + $0x3f8] sm:$0xff]
      %v1225 = vrot.slane %v1094, 4
      %v1226 = vmax.f32 %v1094, %v1225
      %v1227 = vrot.slane %v1226, 2
      %v1228 = vmax.f32 %v1226, %v1227
      %v1229 = vrot.slane %v1228, 1
      %v1230 = vmax.f32 %v1228, %v1229
      %v1231 = vrot.slane %v1095, 4
      %v1232 = vmax.f32 %v1095, %v1231
      %v1233 = vrot.slane %v1232, 2
      %v1234 = vmax.f32 %v1232, %v1233
      %v1235 = vrot.slane %v1234, 1
      %v1236 = vmax.f32 %v1234, %v1235
      %v1237 = vrot.slane %v1094, 4
      %v1238 = vadd.f32 %v1094, %v1237
      %v1239 = vrot.slane %v1238, 2
      %v1240 = vadd.f32 %v1238, %v1239
      %v1241 = vrot.slane %v1240, 1
      %v1242 = vadd.f32 %v1240, %v1241
      %v1243 = vrot.slane %v1095, 4
      %v1244 = vadd.f32 %v1095, %v1243
      %v1245 = vrot.slane %v1244, 2
      %v1246 = vadd.f32 %v1244, %v1245
      %v1247 = vrot.slane %v1246, 1
      %v1248 = vadd.f32 %v1246, %v1247
      %v1249 = vmul.f32 %v1242, %v753
      %v1250 = vmul.f32 %v1248, %v753
      %1251 = vmatprep.subr.mxu0 %v1098
      %1252 = vmatpush1.msra.mxu0 %v1097
      %1253 = vmatprep.subr.mxu0 %v1100
      %1254 = vmatpush1.msra.mxu0 %v1099
      %1255 = vmatprep.subr.mxu0 %v1102
      %1256 = vmatpush1.msra.mxu0 %v1101
      %1257 = vmatprep.subr.mxu0 %v1104
      %1258 = vmatpush1.msra.mxu0 %v1103
      %1259 = vmatprep.subr.mxu0 %v1106
      %1260 = vmatpush1.msra.mxu0 %v1105
      %1261 = vmatprep.subr.mxu0 %v1108
      %1262 = vmatpush1.msra.mxu0 %v1107
      %1263 = vmatprep.subr.mxu0 %v1110
      %1264 = vmatpush1.msra.mxu0 %v1109
      %1265 = vmatprep.subr.mxu0 %v1112
      %1266 = vmatpush1.msra.mxu0 %v1111
      %1267 = vmatprep.subr.mxu0 %v1114
      %1268 = vmatpush1.msra.mxu0 %v1113
      %1269 = vmatprep.subr.mxu0 %v1116
      %1270 = vmatpush1.msra.mxu0 %v1115
      %1271 = vmatprep.subr.mxu0 %v1118
      %1272 = vmatpush1.msra.mxu0 %v1117
      %1273 = vmatprep.subr.mxu0 %v1120
      %1274 = vmatpush1.msra.mxu0 %v1119
      %1275 = vmatprep.subr.mxu0 %v1122
      %1276 = vmatpush1.msra.mxu0 %v1121
      %1277 = vmatprep.subr.mxu0 %v1124
      %1278 = vmatpush1.msra.mxu0 %v1123
      %1279 = vmatprep.subr.mxu0 %v1126
      %1280 = vmatpush1.msra.mxu0 %v1125
      %1281 = vmatprep.subr.mxu0 %v1128
      %1282 = vmatpush1.msra.mxu0 %v1127
      %1283 = vmatprep.subr.mxu0 %v1130
      %1284 = vmatpush1.msra.mxu0 %v1129
      %1285 = vmatprep.subr.mxu0 %v1132
      %1286 = vmatpush1.msra.mxu0 %v1131
      %1287 = vmatprep.subr.mxu0 %v1134
      %1288 = vmatpush1.msra.mxu0 %v1133
      %1289 = vmatprep.subr.mxu0 %v1136
      %1290 = vmatpush1.msra.mxu0 %v1135
      %1291 = vmatprep.subr.mxu0 %v1138
      %1292 = vmatpush1.msra.mxu0 %v1137
      %1293 = vmatprep.subr.mxu0 %v1140
      %1294 = vmatpush1.msra.mxu0 %v1139
      %1295 = vmatprep.subr.mxu0 %v1142
      %1296 = vmatpush1.msra.mxu0 %v1141
      %1297 = vmatprep.subr.mxu0 %v1144
      %1298 = vmatpush1.msra.mxu0 %v1143
      %1299 = vmatprep.subr.mxu0 %v1146
      %1300 = vmatpush1.msra.mxu0 %v1145
      %1301 = vmatprep.subr.mxu0 %v1148
      %1302 = vmatpush1.msra.mxu0 %v1147
      %1303 = vmatprep.subr.mxu0 %v1150
      %1304 = vmatpush1.msra.mxu0 %v1149
      %1305 = vmatprep.subr.mxu0 %v1152
      %1306 = vmatpush1.msra.mxu0 %v1151
      %1307 = vmatprep.subr.mxu0 %v1154
      %1308 = vmatpush1.msra.mxu0 %v1153
      %1309 = vmatprep.subr.mxu0 %v1156
      %1310 = vmatpush1.msra.mxu0 %v1155
      %1311 = vmatprep.subr.mxu0 %v1158
      %1312 = vmatpush1.msra.mxu0 %v1157
      %1313 = vmatprep.subr.mxu0 %v1160
      %1314 = vmatpush1.msra.mxu0 %v1159
      %1315 = vmatprep.mubr.f32.mxu0 %v1236
      %1316 = vmatmul.mubr.f32.gmra.mrb[0].mxu0 %v1230
      %v1317 = vpop.f32.mrb[0].mxu0
      %v1318 = vadd.f32 0.0, %v1317
      %v1319 = vpop.f32.mrb[0].mxu0
      %v1320 = vadd.f32 0.0, %v1319
      %1321 = vdwg.mxu0
      %1322 = vmatprep.subr.mxu0 %v1162
      %1323 = vmatpush1.msra.mxu0 %v1161
      %1324 = vmatprep.subr.mxu0 %v1164
      %1325 = vmatpush1.msra.mxu0 %v1163
      %1326 = vmatprep.subr.mxu0 %v1166
      %1327 = vmatpush1.msra.mxu0 %v1165
      %1328 = vmatprep.subr.mxu0 %v1168
      %1329 = vmatpush1.msra.mxu0 %v1167
      %1330 = vmatprep.subr.mxu0 %v1170
      %1331 = vmatpush1.msra.mxu0 %v1169
      %1332 = vmatprep.subr.mxu0 %v1172
      %1333 = vmatpush1.msra.mxu0 %v1171
      %1334 = vmatprep.subr.mxu0 %v1174
      %1335 = vmatpush1.msra.mxu0 %v1173
      %1336 = vmatprep.subr.mxu0 %v1176
      %1337 = vmatpush1.msra.mxu0 %v1175
      %1338 = vmatprep.subr.mxu0 %v1178
      %1339 = vmatpush1.msra.mxu0 %v1177
      %1340 = vmatprep.subr.mxu0 %v1180
      %1341 = vmatpush1.msra.mxu0 %v1179
      %1342 = vmatprep.subr.mxu0 %v1182
      %1343 = vmatpush1.msra.mxu0 %v1181
      %1344 = vmatprep.subr.mxu0 %v1184
      %1345 = vmatpush1.msra.mxu0 %v1183
      %1346 = vmatprep.subr.mxu0 %v1186
      %1347 = vmatpush1.msra.mxu0 %v1185
      %1348 = vmatprep.subr.mxu0 %v1188
      %1349 = vmatpush1.msra.mxu0 %v1187
      %1350 = vmatprep.subr.mxu0 %v1190
      %1351 = vmatpush1.msra.mxu0 %v1189
      %1352 = vmatprep.subr.mxu0 %v1192
      %1353 = vmatpush1.msra.mxu0 %v1191
      %1354 = vmatprep.subr.mxu0 %v1194
      %1355 = vmatpush1.msra.mxu0 %v1193
      %1356 = vmatprep.subr.mxu0 %v1196
      %1357 = vmatpush1.msra.mxu0 %v1195
      %1358 = vmatprep.subr.mxu0 %v1198
      %1359 = vmatpush1.msra.mxu0 %v1197
      %1360 = vmatprep.subr.mxu0 %v1200
      %1361 = vmatpush1.msra.mxu0 %v1199
      %1362 = vmatprep.subr.mxu0 %v1202
      %1363 = vmatpush1.msra.mxu0 %v1201
      %1364 = vmatprep.subr.mxu0 %v1204
      %1365 = vmatpush1.msra.mxu0 %v1203
      %1366 = vmatprep.subr.mxu0 %v1206
      %1367 = vmatpush1.msra.mxu0 %v1205
      %1368 = vmatprep.subr.mxu0 %v1208
      %1369 = vmatpush1.msra.mxu0 %v1207
      %1370 = vmatprep.subr.mxu0 %v1210
      %1371 = vmatpush1.msra.mxu0 %v1209
      %1372 = vmatprep.subr.mxu0 %v1212
      %1373 = vmatpush1.msra.mxu0 %v1211
      %1374 = vmatprep.subr.mxu0 %v1214
      %1375 = vmatpush1.msra.mxu0 %v1213
      %1376 = vmatprep.subr.mxu0 %v1216
      %1377 = vmatpush1.msra.mxu0 %v1215
      %1378 = vmatprep.subr.mxu0 %v1218
      %1379 = vmatpush1.msra.mxu0 %v1217
      %1380 = vmatprep.subr.mxu0 %v1220
      %1381 = vmatpush1.msra.mxu0 %v1219
      %1382 = vmatprep.subr.mxu0 %v1222
      %1383 = vmatpush1.msra.mxu0 %v1221
      %1384 = vmatprep.subr.mxu0 %v1224
      %1385 = vmatpush1.msra.mxu0 %v1223
      %1386 = vmatprep.mubr.f32.mxu0 %v1250
      %1387 = vmatmul.mubr.f32.gmra.mrb[0].mxu0 %v1249
      %v1388 = vpop.f32.mrb[0].mxu0
      %v1389 = vadd.f32 %v1318, %v1388
      %v1390 = vpop.f32.mrb[0].mxu0
      %v1391 = vadd.f32 %v1320, %v1390
      %1392 = vdwg.mxu0
      %v1393 = vxor.u32 %v1389, 2147483648
      %v1394 = vxor.u32 %v1391, 2147483648
      %v1395 = vmul.f32 %v1393, 1.442695
      %v1396 = vpow.pop %v1395
      %v1397 = vmul.f32 %v1394, 1.442695
      %v1398 = vpow.pop %v1397
      %v1399 = vadd.f32 %v1396, 1.0
      %v1400 = vadd.f32 %v1398, 1.0
      %v1401 = vrcp.pop %v1399
      %v1402 = vmul.f32 1.0, %v1401
      %v1403 = vrcp.pop %v1400
      %v1404 = vmul.f32 1.0, %v1403
      %v1405 = vlaneseq
      %v1406 = vshrl.u32 %v1405, 7
      %v1407 = vsub.s32 0, %v1406
      %v1408 = vrot.slane %v1402, %v1407
      %v1409 = vlaneseq
      %v1410 = vshrl.u32 %v1409, 7
      %v1411 = vsub.s32 0, %v1410
      %v1412 = vrot.slane %v1404, %v1411
      %v1413 = vmul.f32 %v1094, %v1408
      %v1414 = vmul.f32 %v1095, %v1412
      %v1415 = vmax.f32 %v404, %v406
      %1416 = vmax.xlane.f32.xlu0 %v1415
      %v1417 = vpop.xlane.xlu0 %1416
      %v1418 = vadd.f32 %v404, %v406
      %1419 = vadd.xlane.f32.xlu0 %v1418
      %v1420 = vpop.xlane.xlu0 %1419
      %v1421 = vmul.f32 %v1420, %v426
      %v1422 = vsel %vm428, %v1417, %v1421
      %v1424 = vsel %vm430, %v416, 0
      %1426 = vmatprep.subr.mxu0 0.0
      %1427 = vmatpush1.msra.mxu0 %v1422
      %1428 = vmatprep.subr.mxu0 0.0
      %1429 = vmatpush1.msra.mxu0 0.0
      %1430 = vmatprep.subr.mxu0 0.0
      %1431 = vmatpush1.msra.mxu0 0.0
      %1432 = vmatprep.subr.mxu0 0.0
      %1433 = vmatpush1.msra.mxu0 0.0
      %1434 = vmatprep.subr.mxu0 0.0
      %1435 = vmatpush1.msra.mxu0 0.0
      %1436 = vmatprep.subr.mxu0 0.0
      %1437 = vmatpush1.msra.mxu0 0.0
      %1438 = vmatprep.subr.mxu0 0.0
      %1439 = vmatpush1.msra.mxu0 0.0
      %1440 = vmatprep.subr.mxu0 0.0
      %1441 = vmatpush1.msra.mxu0 0.0
      %1442 = vmatprep.subr.mxu0 0.0
      %1443 = vmatpush1.msra.mxu0 0.0
      %1444 = vmatprep.subr.mxu0 0.0
      %1445 = vmatpush1.msra.mxu0 0.0
      %1446 = vmatprep.subr.mxu0 0.0
      %1447 = vmatpush1.msra.mxu0 0.0
      %1448 = vmatprep.subr.mxu0 0.0
      %1449 = vmatpush1.msra.mxu0 0.0
      %1450 = vmatprep.subr.mxu0 0.0
      %1451 = vmatpush1.msra.mxu0 0.0
      %1452 = vmatprep.subr.mxu0 0.0
      %1453 = vmatpush1.msra.mxu0 0.0
      %1454 = vmatprep.subr.mxu0 0.0
      %1455 = vmatpush1.msra.mxu0 0.0
      %1456 = vmatprep.subr.mxu0 0.0
      %1457 = vmatpush1.msra.mxu0 0.0
      %1458 = vmatprep.subr.mxu0 0.0
      %1459 = vmatpush1.msra.mxu0 0.0
      %1460 = vmatprep.subr.mxu0 0.0
      %1461 = vmatpush1.msra.mxu0 0.0
      %1462 = vmatprep.subr.mxu0 0.0
      %1463 = vmatpush1.msra.mxu0 0.0
      %1464 = vmatprep.subr.mxu0 0.0
      %1465 = vmatpush1.msra.mxu0 0.0
      %1466 = vmatprep.subr.mxu0 0.0
      %1467 = vmatpush1.msra.mxu0 0.0
      %1468 = vmatprep.subr.mxu0 0.0
      %1469 = vmatpush1.msra.mxu0 0.0
      %1470 = vmatprep.subr.mxu0 0.0
      %1471 = vmatpush1.msra.mxu0 0.0
      %1472 = vmatprep.subr.mxu0 0.0
      %1473 = vmatpush1.msra.mxu0 0.0
      %1474 = vmatprep.subr.mxu0 0.0
      %1475 = vmatpush1.msra.mxu0 0.0
      %1476 = vmatprep.subr.mxu0 0.0
      %1477 = vmatpush1.msra.mxu0 0.0
      %1478 = vmatprep.subr.mxu0 0.0
      %1479 = vmatpush1.msra.mxu0 0.0
      %1480 = vmatprep.subr.mxu0 0.0
      %1481 = vmatpush1.msra.mxu0 0.0
      %1482 = vmatprep.subr.mxu0 0.0
      %1483 = vmatpush1.msra.mxu0 0.0
      %1484 = vmatprep.subr.mxu0 0.0
      %1485 = vmatpush1.msra.mxu0 0.0
      %1486 = vmatprep.subr.mxu0 0.0
      %1487 = vmatpush1.msra.mxu0 0.0
      %1488 = vmatprep.subr.mxu0 0.0
      %1489 = vmatpush1.msra.mxu0 0.0
      %1490 = vmatprep.mubr.f32.mxu0 0.0
      %1491 = vmatmul.mubr.f32.gmra.mrb[0].mxu0 %v1424
      %v1492 = vpop.f32.mrb[0].mxu0
      %v1493 = vadd.f32 0.0, %v1492
      %v1494 = vpop.f32.mrb[0].mxu0
      %1495 = vdwg.mxu0
      %v1496 = vmax.f32 %v1493, 0.0
      %v1498 = vsel %vm505, %v419, 0
      %v1501 = vsel %vm509, %v1496, 0
      %1503 = vmatprep.subr.mxu0 0.0
      %1504 = vmatpush1.msra.mxu0 %v1501
      %1505 = vmatprep.subr.mxu0 0.0
      %1506 = vmatpush1.msra.mxu0 0.0
      %1507 = vmatprep.subr.mxu0 0.0
      %1508 = vmatpush1.msra.mxu0 0.0
      %1509 = vmatprep.subr.mxu0 0.0
      %1510 = vmatpush1.msra.mxu0 0.0
      %1511 = vmatprep.subr.mxu0 0.0
      %1512 = vmatpush1.msra.mxu0 0.0
      %1513 = vmatprep.subr.mxu0 0.0
      %1514 = vmatpush1.msra.mxu0 0.0
      %1515 = vmatprep.subr.mxu0 0.0
      %1516 = vmatpush1.msra.mxu0 0.0
      %1517 = vmatprep.subr.mxu0 0.0
      %1518 = vmatpush1.msra.mxu0 0.0
      %1519 = vmatprep.subr.mxu0 0.0
      %1520 = vmatpush1.msra.mxu0 0.0
      %1521 = vmatprep.subr.mxu0 0.0
      %1522 = vmatpush1.msra.mxu0 0.0
      %1523 = vmatprep.subr.mxu0 0.0
      %1524 = vmatpush1.msra.mxu0 0.0
      %1525 = vmatprep.subr.mxu0 0.0
      %1526 = vmatpush1.msra.mxu0 0.0
      %1527 = vmatprep.subr.mxu0 0.0
      %1528 = vmatpush1.msra.mxu0 0.0
      %1529 = vmatprep.subr.mxu0 0.0
      %1530 = vmatpush1.msra.mxu0 0.0
      %1531 = vmatprep.subr.mxu0 0.0
      %1532 = vmatpush1.msra.mxu0 0.0
      %1533 = vmatprep.subr.mxu0 0.0
      %1534 = vmatpush1.msra.mxu0 0.0
      %1535 = vmatprep.subr.mxu0 0.0
      %1536 = vmatpush1.msra.mxu0 0.0
      %1537 = vmatprep.subr.mxu0 0.0
      %1538 = vmatpush1.msra.mxu0 0.0
      %1539 = vmatprep.subr.mxu0 0.0
      %1540 = vmatpush1.msra.mxu0 0.0
      %1541 = vmatprep.subr.mxu0 0.0
      %1542 = vmatpush1.msra.mxu0 0.0
      %1543 = vmatprep.subr.mxu0 0.0
      %1544 = vmatpush1.msra.mxu0 0.0
      %1545 = vmatprep.subr.mxu0 0.0
      %1546 = vmatpush1.msra.mxu0 0.0
      %1547 = vmatprep.subr.mxu0 0.0
      %1548 = vmatpush1.msra.mxu0 0.0
      %1549 = vmatprep.subr.mxu0 0.0
      %1550 = vmatpush1.msra.mxu0 0.0
      %1551 = vmatprep.subr.mxu0 0.0
      %1552 = vmatpush1.msra.mxu0 0.0
      %1553 = vmatprep.subr.mxu0 0.0
      %1554 = vmatpush1.msra.mxu0 0.0
      %1555 = vmatprep.subr.mxu0 0.0
      %1556 = vmatpush1.msra.mxu0 0.0
      %1557 = vmatprep.subr.mxu0 0.0
      %1558 = vmatpush1.msra.mxu0 0.0
      %1559 = vmatprep.subr.mxu0 0.0
      %1560 = vmatpush1.msra.mxu0 0.0
      %1561 = vmatprep.subr.mxu0 0.0
      %1562 = vmatpush1.msra.mxu0 0.0
      %1563 = vmatprep.subr.mxu0 0.0
      %1564 = vmatpush1.msra.mxu0 0.0
      %1565 = vmatprep.subr.mxu0 0.0
      %1566 = vmatpush1.msra.mxu0 0.0
      %1567 = vmatprep.mubr.f32.mxu0 0.0
      %1568 = vmatmul.mubr.f32.gmra.mrb[0].mxu0 %v1498
      %v1569 = vpop.f32.mrb[0].mxu0
      %v1570 = vadd.f32 0.0, %v1569
      %v1571 = vpop.f32.mrb[0].mxu0
      %1572 = vdwg.mxu0
      %1574 = vrot.lane.b32.xlu0 %v1570, 127
      %v1575 = vpop.permute.xlu0 %1574
      %v1577 = vadd.f32 %v1570, %v1575
      %v1578 = vxor.u32 %v1577, 2147483648
      %v1579 = vmul.f32 %v1578, 1.442695
      %v1580 = vpow.pop %v1579
      %v1581 = vadd.f32 %v1580, 1.0
      %v1582 = vrcp.pop %v1581
      %v1583 = vmul.f32 1.0, %v1582
      %1585 = vset.pattern.permute.xlu0 0
      %1586 = vperm.xlu0 %1585, %v1583
      %v1587 = vpop.permute.xlu0 %1586
      %v1589 = vmul.f32 %v404, %v1587
      %v1590 = vmul.f32 %v406, %v1587
      %s1591 = scalar_lea.vmem %s4, 2048
      %v1592 = vld [vmem:[%s1591] sm:$0xff]
      %v1593 = vld [vmem:[%s1591 + $0x8] sm:$0xff]
      %v1594 = vld [vmem:[%s1591 + $0x10] sm:$0xff]
      %v1595 = vld [vmem:[%s1591 + $0x18] sm:$0xff]
      %v1596 = vld [vmem:[%s1591 + $0x20] sm:$0xff]
      %v1597 = vld [vmem:[%s1591 + $0x28] sm:$0xff]
      %v1598 = vld [vmem:[%s1591 + $0x30] sm:$0xff]
      %v1599 = vld [vmem:[%s1591 + $0x38] sm:$0xff]
      %v1600 = vld [vmem:[%s1591 + $0x40] sm:$0xff]
      %v1601 = vld [vmem:[%s1591 + $0x48] sm:$0xff]
      %v1602 = vld [vmem:[%s1591 + $0x50] sm:$0xff]
      %v1603 = vld [vmem:[%s1591 + $0x58] sm:$0xff]
      %v1604 = vld [vmem:[%s1591 + $0x60] sm:$0xff]
      %v1605 = vld [vmem:[%s1591 + $0x68] sm:$0xff]
      %v1606 = vld [vmem:[%s1591 + $0x70] sm:$0xff]
      %v1607 = vld [vmem:[%s1591 + $0x78] sm:$0xff]
      %v1608 = vld [vmem:[%s1591 + $0x80] sm:$0xff]
      %v1609 = vld [vmem:[%s1591 + $0x88] sm:$0xff]
      %v1610 = vld [vmem:[%s1591 + $0x90] sm:$0xff]
      %v1611 = vld [vmem:[%s1591 + $0x98] sm:$0xff]
      %v1612 = vld [vmem:[%s1591 + $0xa0] sm:$0xff]
      %v1613 = vld [vmem:[%s1591 + $0xa8] sm:$0xff]
      %v1614 = vld [vmem:[%s1591 + $0xb0] sm:$0xff]
      %v1615 = vld [vmem:[%s1591 + $0xb8] sm:$0xff]
      %v1616 = vld [vmem:[%s1591 + $0xc0] sm:$0xff]
      %v1617 = vld [vmem:[%s1591 + $0xc8] sm:$0xff]
      %v1618 = vld [vmem:[%s1591 + $0xd0] sm:$0xff]
      %v1619 = vld [vmem:[%s1591 + $0xd8] sm:$0xff]
      %v1620 = vld [vmem:[%s1591 + $0xe0] sm:$0xff]
      %v1621 = vld [vmem:[%s1591 + $0xe8] sm:$0xff]
      %v1622 = vld [vmem:[%s1591 + $0xf0] sm:$0xff]
      %v1623 = vld [vmem:[%s1591 + $0xf8] sm:$0xff]
      %v1624 = vld [vmem:[%s1591 + $0x100] sm:$0xff]
      %v1625 = vld [vmem:[%s1591 + $0x108] sm:$0xff]
      %v1626 = vld [vmem:[%s1591 + $0x110] sm:$0xff]
      %v1627 = vld [vmem:[%s1591 + $0x118] sm:$0xff]
      %v1628 = vld [vmem:[%s1591 + $0x120] sm:$0xff]
      %v1629 = vld [vmem:[%s1591 + $0x128] sm:$0xff]
      %v1630 = vld [vmem:[%s1591 + $0x130] sm:$0xff]
      %v1631 = vld [vmem:[%s1591 + $0x138] sm:$0xff]
      %v1632 = vld [vmem:[%s1591 + $0x140] sm:$0xff]
      %v1633 = vld [vmem:[%s1591 + $0x148] sm:$0xff]
      %v1634 = vld [vmem:[%s1591 + $0x150] sm:$0xff]
      %v1635 = vld [vmem:[%s1591 + $0x158] sm:$0xff]
      %v1636 = vld [vmem:[%s1591 + $0x160] sm:$0xff]
      %v1637 = vld [vmem:[%s1591 + $0x168] sm:$0xff]
      %v1638 = vld [vmem:[%s1591 + $0x170] sm:$0xff]
      %v1639 = vld [vmem:[%s1591 + $0x178] sm:$0xff]
      %v1640 = vld [vmem:[%s1591 + $0x180] sm:$0xff]
      %v1641 = vld [vmem:[%s1591 + $0x188] sm:$0xff]
      %v1642 = vld [vmem:[%s1591 + $0x190] sm:$0xff]
      %v1643 = vld [vmem:[%s1591 + $0x198] sm:$0xff]
      %v1644 = vld [vmem:[%s1591 + $0x1a0] sm:$0xff]
      %v1645 = vld [vmem:[%s1591 + $0x1a8] sm:$0xff]
      %v1646 = vld [vmem:[%s1591 + $0x1b0] sm:$0xff]
      %v1647 = vld [vmem:[%s1591 + $0x1b8] sm:$0xff]
      %v1648 = vld [vmem:[%s1591 + $0x1c0] sm:$0xff]
      %v1649 = vld [vmem:[%s1591 + $0x1c8] sm:$0xff]
      %v1650 = vld [vmem:[%s1591 + $0x1d0] sm:$0xff]
      %v1651 = vld [vmem:[%s1591 + $0x1d8] sm:$0xff]
      %v1652 = vld [vmem:[%s1591 + $0x1e0] sm:$0xff]
      %v1653 = vld [vmem:[%s1591 + $0x1e8] sm:$0xff]
      %v1654 = vld [vmem:[%s1591 + $0x1f0] sm:$0xff]
      %v1655 = vld [vmem:[%s1591 + $0x1f8] sm:$0xff]
      %v1656 = vld [vmem:[%s1591 + $0x200] sm:$0xff]
      %v1657 = vld [vmem:[%s1591 + $0x208] sm:$0xff]
      %v1658 = vld [vmem:[%s1591 + $0x210] sm:$0xff]
      %v1659 = vld [vmem:[%s1591 + $0x218] sm:$0xff]
      %v1660 = vld [vmem:[%s1591 + $0x220] sm:$0xff]
      %v1661 = vld [vmem:[%s1591 + $0x228] sm:$0xff]
      %v1662 = vld [vmem:[%s1591 + $0x230] sm:$0xff]
      %v1663 = vld [vmem:[%s1591 + $0x238] sm:$0xff]
      %v1664 = vld [vmem:[%s1591 + $0x240] sm:$0xff]
      %v1665 = vld [vmem:[%s1591 + $0x248] sm:$0xff]
      %v1666 = vld [vmem:[%s1591 + $0x250] sm:$0xff]
      %v1667 = vld [vmem:[%s1591 + $0x258] sm:$0xff]
      %v1668 = vld [vmem:[%s1591 + $0x260] sm:$0xff]
      %v1669 = vld [vmem:[%s1591 + $0x268] sm:$0xff]
      %v1670 = vld [vmem:[%s1591 + $0x270] sm:$0xff]
      %v1671 = vld [vmem:[%s1591 + $0x278] sm:$0xff]
      %v1672 = vld [vmem:[%s1591 + $0x280] sm:$0xff]
      %v1673 = vld [vmem:[%s1591 + $0x288] sm:$0xff]
      %v1674 = vld [vmem:[%s1591 + $0x290] sm:$0xff]
      %v1675 = vld [vmem:[%s1591 + $0x298] sm:$0xff]
      %v1676 = vld [vmem:[%s1591 + $0x2a0] sm:$0xff]
      %v1677 = vld [vmem:[%s1591 + $0x2a8] sm:$0xff]
      %v1678 = vld [vmem:[%s1591 + $0x2b0] sm:$0xff]
      %v1679 = vld [vmem:[%s1591 + $0x2b8] sm:$0xff]
      %v1680 = vld [vmem:[%s1591 + $0x2c0] sm:$0xff]
      %v1681 = vld [vmem:[%s1591 + $0x2c8] sm:$0xff]
      %v1682 = vld [vmem:[%s1591 + $0x2d0] sm:$0xff]
      %v1683 = vld [vmem:[%s1591 + $0x2d8] sm:$0xff]
      %v1684 = vld [vmem:[%s1591 + $0x2e0] sm:$0xff]
      %v1685 = vld [vmem:[%s1591 + $0x2e8] sm:$0xff]
      %v1686 = vld [vmem:[%s1591 + $0x2f0] sm:$0xff]
      %v1687 = vld [vmem:[%s1591 + $0x2f8] sm:$0xff]
      %v1688 = vld [vmem:[%s1591 + $0x300] sm:$0xff]
      %v1689 = vld [vmem:[%s1591 + $0x308] sm:$0xff]
      %v1690 = vld [vmem:[%s1591 + $0x310] sm:$0xff]
      %v1691 = vld [vmem:[%s1591 + $0x318] sm:$0xff]
      %v1692 = vld [vmem:[%s1591 + $0x320] sm:$0xff]
      %v1693 = vld [vmem:[%s1591 + $0x328] sm:$0xff]
      %v1694 = vld [vmem:[%s1591 + $0x330] sm:$0xff]
      %v1695 = vld [vmem:[%s1591 + $0x338] sm:$0xff]
      %v1696 = vld [vmem:[%s1591 + $0x340] sm:$0xff]
      %v1697 = vld [vmem:[%s1591 + $0x348] sm:$0xff]
      %v1698 = vld [vmem:[%s1591 + $0x350] sm:$0xff]
      %v1699 = vld [vmem:[%s1591 + $0x358] sm:$0xff]
      %v1700 = vld [vmem:[%s1591 + $0x360] sm:$0xff]
      %v1701 = vld [vmem:[%s1591 + $0x368] sm:$0xff]
      %v1702 = vld [vmem:[%s1591 + $0x370] sm:$0xff]
      %v1703 = vld [vmem:[%s1591 + $0x378] sm:$0xff]
      %v1704 = vld [vmem:[%s1591 + $0x380] sm:$0xff]
      %v1705 = vld [vmem:[%s1591 + $0x388] sm:$0xff]
      %v1706 = vld [vmem:[%s1591 + $0x390] sm:$0xff]
      %v1707 = vld [vmem:[%s1591 + $0x398] sm:$0xff]
      %v1708 = vld [vmem:[%s1591 + $0x3a0] sm:$0xff]
      %v1709 = vld [vmem:[%s1591 + $0x3a8] sm:$0xff]
      %v1710 = vld [vmem:[%s1591 + $0x3b0] sm:$0xff]
      %v1711 = vld [vmem:[%s1591 + $0x3b8] sm:$0xff]
      %v1712 = vld [vmem:[%s1591 + $0x3c0] sm:$0xff]
      %v1713 = vld [vmem:[%s1591 + $0x3c8] sm:$0xff]
      %v1714 = vld [vmem:[%s1591 + $0x3d0] sm:$0xff]
      %v1715 = vld [vmem:[%s1591 + $0x3d8] sm:$0xff]
      %v1716 = vld [vmem:[%s1591 + $0x3e0] sm:$0xff]
      %v1717 = vld [vmem:[%s1591 + $0x3e8] sm:$0xff]
      %v1718 = vld [vmem:[%s1591 + $0x3f0] sm:$0xff]
      %v1719 = vld [vmem:[%s1591 + $0x3f8] sm:$0xff]
      %v1720 = vrot.slane %v1589, 4
      %v1721 = vmax.f32 %v1589, %v1720
      %v1722 = vrot.slane %v1721, 2
      %v1723 = vmax.f32 %v1721, %v1722
      %v1724 = vrot.slane %v1723, 1
      %v1725 = vmax.f32 %v1723, %v1724
      %v1726 = vrot.slane %v1590, 4
      %v1727 = vmax.f32 %v1590, %v1726
      %v1728 = vrot.slane %v1727, 2
      %v1729 = vmax.f32 %v1727, %v1728
      %v1730 = vrot.slane %v1729, 1
      %v1731 = vmax.f32 %v1729, %v1730
      %v1732 = vrot.slane %v1589, 4
      %v1733 = vadd.f32 %v1589, %v1732
      %v1734 = vrot.slane %v1733, 2
      %v1735 = vadd.f32 %v1733, %v1734
      %v1736 = vrot.slane %v1735, 1
      %v1737 = vadd.f32 %v1735, %v1736
      %v1738 = vrot.slane %v1590, 4
      %v1739 = vadd.f32 %v1590, %v1738
      %v1740 = vrot.slane %v1739, 2
      %v1741 = vadd.f32 %v1739, %v1740
      %v1742 = vrot.slane %v1741, 1
      %v1743 = vadd.f32 %v1741, %v1742
      %v1744 = vmul.f32 %v1737, %v753
      %v1745 = vmul.f32 %v1743, %v753
      %1746 = vmatprep.subr.mxu0 %v1593
      %1747 = vmatpush1.msra.mxu0 %v1592
      %1748 = vmatprep.subr.mxu0 %v1595
      %1749 = vmatpush1.msra.mxu0 %v1594
      %1750 = vmatprep.subr.mxu0 %v1597
      %1751 = vmatpush1.msra.mxu0 %v1596
      %1752 = vmatprep.subr.mxu0 %v1599
      %1753 = vmatpush1.msra.mxu0 %v1598
      %1754 = vmatprep.subr.mxu0 %v1601
      %1755 = vmatpush1.msra.mxu0 %v1600
      %1756 = vmatprep.subr.mxu0 %v1603
      %1757 = vmatpush1.msra.mxu0 %v1602
      %1758 = vmatprep.subr.mxu0 %v1605
      %1759 = vmatpush1.msra.mxu0 %v1604
      %1760 = vmatprep.subr.mxu0 %v1607
      %1761 = vmatpush1.msra.mxu0 %v1606
      %1762 = vmatprep.subr.mxu0 %v1609
      %1763 = vmatpush1.msra.mxu0 %v1608
      %1764 = vmatprep.subr.mxu0 %v1611
      %1765 = vmatpush1.msra.mxu0 %v1610
      %1766 = vmatprep.subr.mxu0 %v1613
      %1767 = vmatpush1.msra.mxu0 %v1612
      %1768 = vmatprep.subr.mxu0 %v1615
      %1769 = vmatpush1.msra.mxu0 %v1614
      %1770 = vmatprep.subr.mxu0 %v1617
      %1771 = vmatpush1.msra.mxu0 %v1616
      %1772 = vmatprep.subr.mxu0 %v1619
      %1773 = vmatpush1.msra.mxu0 %v1618
      %1774 = vmatprep.subr.mxu0 %v1621
      %1775 = vmatpush1.msra.mxu0 %v1620
      %1776 = vmatprep.subr.mxu0 %v1623
      %1777 = vmatpush1.msra.mxu0 %v1622
      %1778 = vmatprep.subr.mxu0 %v1625
      %1779 = vmatpush1.msra.mxu0 %v1624
      %1780 = vmatprep.subr.mxu0 %v1627
      %1781 = vmatpush1.msra.mxu0 %v1626
      %1782 = vmatprep.subr.mxu0 %v1629
      %1783 = vmatpush1.msra.mxu0 %v1628
      %1784 = vmatprep.subr.mxu0 %v1631
      %1785 = vmatpush1.msra.mxu0 %v1630
      %1786 = vmatprep.subr.mxu0 %v1633
      %1787 = vmatpush1.msra.mxu0 %v1632
      %1788 = vmatprep.subr.mxu0 %v1635
      %1789 = vmatpush1.msra.mxu0 %v1634
      %1790 = vmatprep.subr.mxu0 %v1637
      %1791 = vmatpush1.msra.mxu0 %v1636
      %1792 = vmatprep.subr.mxu0 %v1639
      %1793 = vmatpush1.msra.mxu0 %v1638
      %1794 = vmatprep.subr.mxu0 %v1641
      %1795 = vmatpush1.msra.mxu0 %v1640
      %1796 = vmatprep.subr.mxu0 %v1643
      %1797 = vmatpush1.msra.mxu0 %v1642
      %1798 = vmatprep.subr.mxu0 %v1645
      %1799 = vmatpush1.msra.mxu0 %v1644
      %1800 = vmatprep.subr.mxu0 %v1647
      %1801 = vmatpush1.msra.mxu0 %v1646
      %1802 = vmatprep.subr.mxu0 %v1649
      %1803 = vmatpush1.msra.mxu0 %v1648
      %1804 = vmatprep.subr.mxu0 %v1651
      %1805 = vmatpush1.msra.mxu0 %v1650
      %1806 = vmatprep.subr.mxu0 %v1653
      %1807 = vmatpush1.msra.mxu0 %v1652
      %1808 = vmatprep.subr.mxu0 %v1655
      %1809 = vmatpush1.msra.mxu0 %v1654
      %1810 = vmatprep.mubr.f32.mxu0 %v1731
      %1811 = vmatmul.mubr.f32.gmra.mrb[0].mxu0 %v1725
      %v1812 = vpop.f32.mrb[0].mxu0
      %v1813 = vadd.f32 0.0, %v1812
      %v1814 = vpop.f32.mrb[0].mxu0
      %v1815 = vadd.f32 0.0, %v1814
      %1816 = vdwg.mxu0
      %1817 = vmatprep.subr.mxu0 %v1657
      %1818 = vmatpush1.msra.mxu0 %v1656
      %1819 = vmatprep.subr.mxu0 %v1659
      %1820 = vmatpush1.msra.mxu0 %v1658
      %1821 = vmatprep.subr.mxu0 %v1661
      %1822 = vmatpush1.msra.mxu0 %v1660
      %1823 = vmatprep.subr.mxu0 %v1663
      %1824 = vmatpush1.msra.mxu0 %v1662
      %1825 = vmatprep.subr.mxu0 %v1665
      %1826 = vmatpush1.msra.mxu0 %v1664
      %1827 = vmatprep.subr.mxu0 %v1667
      %1828 = vmatpush1.msra.mxu0 %v1666
      %1829 = vmatprep.subr.mxu0 %v1669
      %1830 = vmatpush1.msra.mxu0 %v1668
      %1831 = vmatprep.subr.mxu0 %v1671
      %1832 = vmatpush1.msra.mxu0 %v1670
      %1833 = vmatprep.subr.mxu0 %v1673
      %1834 = vmatpush1.msra.mxu0 %v1672
      %1835 = vmatprep.subr.mxu0 %v1675
      %1836 = vmatpush1.msra.mxu0 %v1674
      %1837 = vmatprep.subr.mxu0 %v1677
      %1838 = vmatpush1.msra.mxu0 %v1676
      %1839 = vmatprep.subr.mxu0 %v1679
      %1840 = vmatpush1.msra.mxu0 %v1678
      %1841 = vmatprep.subr.mxu0 %v1681
      %1842 = vmatpush1.msra.mxu0 %v1680
      %1843 = vmatprep.subr.mxu0 %v1683
      %1844 = vmatpush1.msra.mxu0 %v1682
      %1845 = vmatprep.subr.mxu0 %v1685
      %1846 = vmatpush1.msra.mxu0 %v1684
      %1847 = vmatprep.subr.mxu0 %v1687
      %1848 = vmatpush1.msra.mxu0 %v1686
      %1849 = vmatprep.subr.mxu0 %v1689
      %1850 = vmatpush1.msra.mxu0 %v1688
      %1851 = vmatprep.subr.mxu0 %v1691
      %1852 = vmatpush1.msra.mxu0 %v1690
      %1853 = vmatprep.subr.mxu0 %v1693
      %1854 = vmatpush1.msra.mxu0 %v1692
      %1855 = vmatprep.subr.mxu0 %v1695
      %1856 = vmatpush1.msra.mxu0 %v1694
      %1857 = vmatprep.subr.mxu0 %v1697
      %1858 = vmatpush1.msra.mxu0 %v1696
      %1859 = vmatprep.subr.mxu0 %v1699
      %1860 = vmatpush1.msra.mxu0 %v1698
      %1861 = vmatprep.subr.mxu0 %v1701
      %1862 = vmatpush1.msra.mxu0 %v1700
      %1863 = vmatprep.subr.mxu0 %v1703
      %1864 = vmatpush1.msra.mxu0 %v1702
      %1865 = vmatprep.subr.mxu0 %v1705
      %1866 = vmatpush1.msra.mxu0 %v1704
      %1867 = vmatprep.subr.mxu0 %v1707
      %1868 = vmatpush1.msra.mxu0 %v1706
      %1869 = vmatprep.subr.mxu0 %v1709
      %1870 = vmatpush1.msra.mxu0 %v1708
      %1871 = vmatprep.subr.mxu0 %v1711
      %1872 = vmatpush1.msra.mxu0 %v1710
      %1873 = vmatprep.subr.mxu0 %v1713
      %1874 = vmatpush1.msra.mxu0 %v1712
      %1875 = vmatprep.subr.mxu0 %v1715
      %1876 = vmatpush1.msra.mxu0 %v1714
      %1877 = vmatprep.subr.mxu0 %v1717
      %1878 = vmatpush1.msra.mxu0 %v1716
      %1879 = vmatprep.subr.mxu0 %v1719
      %1880 = vmatpush1.msra.mxu0 %v1718
      %1881 = vmatprep.mubr.f32.mxu0 %v1745
      %1882 = vmatmul.mubr.f32.gmra.mrb[0].mxu0 %v1744
      %v1883 = vpop.f32.mrb[0].mxu0
      %v1884 = vadd.f32 %v1813, %v1883
      %v1885 = vpop.f32.mrb[0].mxu0
      %v1886 = vadd.f32 %v1815, %v1885
      %1887 = vdwg.mxu0
      %v1888 = vxor.u32 %v1884, 2147483648
      %v1889 = vxor.u32 %v1886, 2147483648
      %v1890 = vmul.f32 %v1888, 1.442695
      %v1891 = vpow.pop %v1890
      %v1892 = vmul.f32 %v1889, 1.442695
      %v1893 = vpow.pop %v1892
      %v1894 = vadd.f32 %v1891, 1.0
      %v1895 = vadd.f32 %v1893, 1.0
      %v1896 = vrcp.pop %v1894
      %v1897 = vmul.f32 1.0, %v1896
      %v1898 = vrcp.pop %v1895
      %v1899 = vmul.f32 1.0, %v1898
      %v1900 = vlaneseq
      %v1901 = vshrl.u32 %v1900, 7
      %v1902 = vsub.s32 0, %v1901
      %v1903 = vrot.slane %v1897, %v1902
      %v1904 = vlaneseq
      %v1905 = vshrl.u32 %v1904, 7
      %v1906 = vsub.s32 0, %v1905
      %v1907 = vrot.slane %v1899, %v1906
      %v1908 = vmul.f32 %v1589, %v1903
      %v1909 = vmul.f32 %v1590, %v1907
      %v1910 = vadd.f32 %v918, %v1908
      %v1911 = vadd.f32 %v919, %v1909
      %1912 = vst [vmem:[%s293] sm:$0xff] %v1910
      %1913 = vst [vmem:[%s293 + $0x8] sm:$0xff] %v1911
      %1914 = vst [vmem:[%s298] sm:$0xff] %v1413
      %1915 = vst [vmem:[%s298 + $0x8] sm:$0xff] %v1414
      %v1916 = vmax.f32 %v410, 0.0
      %v1917 = vmax.f32 %v412, 0.0
      %v1920 = vcombine.low %v1916, %v1917
      %1922 = vst [vmem:[%s303] sm:$0xff] %v1920
      %p1923 = scmp.lt.s32.totalorder %s19, 1
      %s1924 = scalar_select %p1923, %s19, 1
      %s1925 = smul.addr %s1924, 2
      %s1926 = smul.addr %s1925, 8
      %s1927 = scalar_lea.vmem %s5, %s1926
      %p1928 = scmp.lt.s32.totalorder %s19, 1
      %s1929 = scalar_select %p1928, %s19, 1
      %s1930 = smul.addr %s1929, 2
      %s1931 = smul.addr %s1930, 8
      %s1932 = scalar_lea.vmem %s6, %s1931
      %p1933 = scmp.lt.s32.totalorder %s19, 1
      %s1934 = scalar_select %p1933, %s19, 1
      %s1935 = smul.addr %s1934, 2
      %s1936 = smul.addr %s1935, 4
      %s1937 = scalar_lea.vmem %s7, %s1936
      // Predicated region
      $region41: #{mam_ffc_forward.3} parent=39 // pred_check
        %p1938 = pneg %p147
      $region42: #{mam_ffc_forward.3} parent=39 // pred_check_branch
        %1940 = sbr.rel (%p1938) target = $region44
      $region43: #{mam_ffc_forward.3} parent=39 // pred_region
        _
      $region44: #{mam_ffc_forward.3} parent=39 // pred_fallthru
        _
      // Predicated region
      $region45: #{mam_ffc_forward.3} parent=39 // pred_check
        %p1941 = pneg %p173
      $region46: #{mam_ffc_forward.3} parent=39 // pred_check_branch
        %1943 = sbr.rel (%p1941) target = $region48
      $region47: #{mam_ffc_forward.3} parent=39 // pred_region
        _
      $region48: #{mam_ffc_forward.3} parent=39 // pred_fallthru
        _
      // Predicated region
      $region49: #{mam_ffc_forward.3} parent=39 // pred_check
        %p1944 = pneg %p199
      $region50: #{mam_ffc_forward.3} parent=39 // pred_check_branch
        %1946 = sbr.rel (%p1944) target = $region52
      $region51: #{mam_ffc_forward.3} parent=39 // pred_region
        _
      $region52: #{mam_ffc_forward.3} parent=39 // pred_fallthru
        _
    $region40: #{mam_ffc_forward.3} parent=5 // pred_fallthru
      _
    %p1947 = scmp.le.s32.totalorder 2, %s14
    // Predicated region
    $region53: #{mam_ffc_forward.3} parent=5 // pred_check
      %p1948 = pneg %p1947
    $region54: #{mam_ffc_forward.3} parent=5 // pred_check_branch
      %1950 = sbr.rel (%p1948) target = $region56
    $region55: #{mam_ffc_forward.3} parent=5 // pred_region
      %s1951 = ssub.s32 %s14, 2
      // Predicated region
      $region57: #{mam_ffc_forward.3} parent=55 // pred_check
        %p1952 = pneg %p153
      $region58: #{mam_ffc_forward.3} parent=55 // pred_check_branch
        %1954 = sbr.rel (%p1952) target = $region60
      $region59: #{mam_ffc_forward.3} parent=55 // pred_region
        %p1955 = scmp.lt.s32.totalorder %s20, 1
        %s1956 = scalar_select %p1955, %s20, 1
        %s1957 = smul.addr %s1956, 2
        %s1958 = smul.addr %s1957, 8
        %s1959 = scalar_lea.vmem %s5, %s1958
      $region60: #{mam_ffc_forward.3} parent=55 // pred_fallthru
        _
      // Predicated region
      $region61: #{mam_ffc_forward.3} parent=55 // pred_check
        %p1960 = pneg %p179
      $region62: #{mam_ffc_forward.3} parent=55 // pred_check_branch
        %1962 = sbr.rel (%p1960) target = $region64
      $region63: #{mam_ffc_forward.3} parent=55 // pred_region
        %p1963 = scmp.lt.s32.totalorder %s20, 1
        %s1964 = scalar_select %p1963, %s20, 1
        %s1965 = smul.addr %s1964, 2
        %s1966 = smul.addr %s1965, 8
        %s1967 = scalar_lea.vmem %s6, %s1966
      $region64: #{mam_ffc_forward.3} parent=55 // pred_fallthru
        _
      // Predicated region
      $region65: #{mam_ffc_forward.3} parent=55 // pred_check
        %p1968 = pneg %p205
      $region66: #{mam_ffc_forward.3} parent=55 // pred_check_branch
        %1970 = sbr.rel (%p1968) target = $region68
      $region67: #{mam_ffc_forward.3} parent=55 // pred_region
        %p1971 = scmp.lt.s32.totalorder %s20, 1
        %s1972 = scalar_select %p1971, %s20, 1
        %s1973 = smul.addr %s1972, 2
        %s1974 = smul.addr %s1973, 4
        %s1975 = scalar_lea.vmem %s7, %s1974
      $region68: #{mam_ffc_forward.3} parent=55 // pred_fallthru
        _
    $region56: #{mam_ffc_forward.3} parent=5 // pred_fallthru
      _
  $region6: #{mam_ffc_forward.3} parent=0 // loop_footer
    %s18 = sadd.s32 1, %s14
  $region7: #{mam_ffc_forward.3} parent=0 // loop_footer_branch
    %13 = sbr.rel target = $region3
  $region8: #{mam_ffc_forward.3} parent=0 // loop_exit
    _

// kernel: mam_ffc_forward.4
$region0: #{mam_ffc_forward.4}
  #allocation0 [shape = 'u32[]', space=smem, size = 0x4, offset = 0x4, fixed_abs, tag = 'smem constant byte address 0x4 - core index']
  #allocation1 [shape = 'u32[144,128]{1,0:T(1,128)}', space=vmem, size = 0x12000, scoped, tag = 'internal scratch']
  %s0 = inlined_call_operand.vmem [shape: f32[2,8,256], index: 0, kind: input, shape index: {}]
  %s1 = inlined_call_operand.vmem [shape: f32[2,8,64], index: 1, kind: input, shape index: {}]
  %s2 = inlined_call_operand.vmem [shape: f32[2,4,8], index: 2, kind: input, shape index: {}]
  %s3 = inlined_call_operand.vmem [shape: f32[2,8,4], index: 3, kind: input, shape index: {}]
  %s4 = inlined_call_operand.vmem [shape: f32[2,8,8], index: 4, kind: input, shape index: {}]
  %s5 = inlined_call_operand.vmem [shape: f32[512,256], index: 5, kind: input, shape index: {}]
  %s6 = inlined_call_operand.vmem [shape: f32[128,64], index: 6, kind: input, shape index: {}]
  %s7 = inlined_call_operand.vmem [shape: f32[2,8,256], index: 7, kind: output, shape index: {0}]
  %s8 = inlined_call_operand.vmem [shape: f32[2,8,64], index: 8, kind: output, shape index: {1}]
  %9 = xla_tuple %s7, %s8
  %s10 = sld [smem:[#allocation0]]
  $region69: #{mam_ffc_forward.4} parent=0
    _
  %s12 = ssub.s32 1, %s10
  %s13 = scalar_select 0, %s12, %s10
  loop: start=0, step=1, limit=4
  $region2: #{mam_ffc_forward.4} parent=0 // loop_pre_header
    _
  $region3: #{mam_ffc_forward.4} parent=0 // loop_header
    %s15 = sphi 0, %s19
    %p16 = scmp.ge.s32.totalorder %s15, 4
    %s25 = sphi 0, %s27
    %s28 = sphi 0, %s25
    %s29 = sphi 0, %s28
    %s45 = sphi 0, %s29
    %s51 = sphi 0, %s53
    %s54 = sphi 0, %s51
    %s55 = sphi 0, %s54
    %s71 = sphi 0, %s55
    %s75 = sphi 0, %s75
    %s77 = sphi 0, %s75
    %s78 = sphi 0, %s77
    %s92 = sphi 0, %s78
    %s96 = sphi 0, %s96
    %s98 = sphi 0, %s96
    %s99 = sphi 0, %s98
    %s113 = sphi 0, %s99
    %s117 = sphi 0, %s117
    %s119 = sphi 0, %s117
    %s120 = sphi 0, %s119
    %s134 = sphi 0, %s120
    %s138 = sphi 0, %s138
    %s140 = sphi 0, %s138
    %s141 = sphi 0, %s140
    %s155 = sphi 0, %s141
    %s159 = sphi 0, %s159
    %s161 = sphi 0, %s159
    %s162 = sphi 0, %s161
    %s176 = sphi 0, %s162
    %s182 = sphi 0, %s184
    %s185 = sphi 0, %s182
    %s186 = sphi 0, %s185
    %s202 = sphi 0, %s186
    %s208 = sphi 0, %s210
    %s211 = sphi 0, %s208
    %s212 = sphi 0, %s211
    %s228 = sphi 0, %s212
  $region4: #{mam_ffc_forward.4} parent=0 // loop_header_branch
    %18 = sbr.rel (%p16) target = $region8
  $region5: #{mam_ffc_forward.4} parent=0 // loop_body
    %s20 = ssub.s32 %s15, 1
    %s21 = ssub.s32 %s15, 2
    %s22 = sadd.s32 %s15, 1
    %s23 = ssub.s32 %s15, %s22
    %p24 = scmp.eq.s32.totalorder %s23, 0
    %s26 = sadd.s32 %s25, 1
    %s27 = scalar_select %p24, %s25, %s26
    %p30 = pneg %p24
    %p31 = scmp.eq.s32.totalorder %s15, 1
    %p32 = por %p30, %p31
    %p33 = scmp.ne.s32.totalorder %s25, %s28
    %p34 = scmp.eq.s32.totalorder %s15, 0
    %p35 = por %p33, %p34
    %p36 = scmp.ne.s32.totalorder %s25, %s28
    %p37 = scmp.eq.s32.totalorder %s20, 1
    %p38 = por %p36, %p37
    %p39 = scmp.ne.s32.totalorder %s28, %s29
    %p40 = scmp.eq.s32.totalorder %s20, 0
    %p41 = por %p39, %p40
    %p42 = scmp.ne.s32.totalorder %s28, %s29
    %p43 = scmp.eq.s32.totalorder %s21, 1
    %p44 = por %p42, %p43
    %p46 = scmp.ne.s32.totalorder %s29, %s45
    %p47 = scmp.eq.s32.totalorder %s21, 0
    %p48 = por %p46, %p47
    %s49 = ssub.s32 %s15, %s22
    %p50 = scmp.eq.s32.totalorder %s49, 0
    %s52 = sadd.s32 %s51, 1
    %s53 = scalar_select %p50, %s51, %s52
    %p56 = pneg %p50
    %p57 = scmp.eq.s32.totalorder %s15, 1
    %p58 = por %p56, %p57
    %p59 = scmp.ne.s32.totalorder %s51, %s54
    %p60 = scmp.eq.s32.totalorder %s15, 0
    %p61 = por %p59, %p60
    %p62 = scmp.ne.s32.totalorder %s51, %s54
    %p63 = scmp.eq.s32.totalorder %s20, 1
    %p64 = por %p62, %p63
    %p65 = scmp.ne.s32.totalorder %s54, %s55
    %p66 = scmp.eq.s32.totalorder %s20, 0
    %p67 = por %p65, %p66
    %p68 = scmp.ne.s32.totalorder %s54, %s55
    %p69 = scmp.eq.s32.totalorder %s21, 1
    %p70 = por %p68, %p69
    %p72 = scmp.ne.s32.totalorder %s55, %s71
    %p73 = scmp.eq.s32.totalorder %s21, 0
    %p74 = por %p72, %p73
    %s76 = sadd.s32 %s75, 1
    %p79 = scmp.eq.s32.totalorder %s15, 1
    %p80 = scmp.ne.s32.totalorder %s75, %s77
    %p81 = scmp.eq.s32.totalorder %s15, 0
    %p82 = por %p80, %p81
    %p83 = scmp.ne.s32.totalorder %s75, %s77
    %p84 = scmp.eq.s32.totalorder %s20, 1
    %p85 = por %p83, %p84
    %p86 = scmp.ne.s32.totalorder %s77, %s78
    %p87 = scmp.eq.s32.totalorder %s20, 0
    %p88 = por %p86, %p87
    %p89 = scmp.ne.s32.totalorder %s77, %s78
    %p90 = scmp.eq.s32.totalorder %s21, 1
    %p91 = por %p89, %p90
    %p93 = scmp.ne.s32.totalorder %s78, %s92
    %p94 = scmp.eq.s32.totalorder %s21, 0
    %p95 = por %p93, %p94
    %s97 = sadd.s32 %s96, 1
    %p100 = scmp.eq.s32.totalorder %s15, 1
    %p101 = scmp.ne.s32.totalorder %s96, %s98
    %p102 = scmp.eq.s32.totalorder %s15, 0
    %p103 = por %p101, %p102
    %p104 = scmp.ne.s32.totalorder %s96, %s98
    %p105 = scmp.eq.s32.totalorder %s20, 1
    %p106 = por %p104, %p105
    %p107 = scmp.ne.s32.totalorder %s98, %s99
    %p108 = scmp.eq.s32.totalorder %s20, 0
    %p109 = por %p107, %p108
    %p110 = scmp.ne.s32.totalorder %s98, %s99
    %p111 = scmp.eq.s32.totalorder %s21, 1
    %p112 = por %p110, %p111
    %p114 = scmp.ne.s32.totalorder %s99, %s113
    %p115 = scmp.eq.s32.totalorder %s21, 0
    %p116 = por %p114, %p115
    %s118 = sadd.s32 %s117, 1
    %p121 = scmp.eq.s32.totalorder %s15, 1
    %p122 = scmp.ne.s32.totalorder %s117, %s119
    %p123 = scmp.eq.s32.totalorder %s15, 0
    %p124 = por %p122, %p123
    %p125 = scmp.ne.s32.totalorder %s117, %s119
    %p126 = scmp.eq.s32.totalorder %s20, 1
    %p127 = por %p125, %p126
    %p128 = scmp.ne.s32.totalorder %s119, %s120
    %p129 = scmp.eq.s32.totalorder %s20, 0
    %p130 = por %p128, %p129
    %p131 = scmp.ne.s32.totalorder %s119, %s120
    %p132 = scmp.eq.s32.totalorder %s21, 1
    %p133 = por %p131, %p132
    %p135 = scmp.ne.s32.totalorder %s120, %s134
    %p136 = scmp.eq.s32.totalorder %s21, 0
    %p137 = por %p135, %p136
    %s139 = sadd.s32 %s138, 1
    %p142 = scmp.eq.s32.totalorder %s15, 1
    %p143 = scmp.ne.s32.totalorder %s138, %s140
    %p144 = scmp.eq.s32.totalorder %s15, 0
    %p145 = por %p143, %p144
    %p146 = scmp.ne.s32.totalorder %s138, %s140
    %p147 = scmp.eq.s32.totalorder %s20, 1
    %p148 = por %p146, %p147
    %p149 = scmp.ne.s32.totalorder %s140, %s141
    %p150 = scmp.eq.s32.totalorder %s20, 0
    %p151 = por %p149, %p150
    %p152 = scmp.ne.s32.totalorder %s140, %s141
    %p153 = scmp.eq.s32.totalorder %s21, 1
    %p154 = por %p152, %p153
    %p156 = scmp.ne.s32.totalorder %s141, %s155
    %p157 = scmp.eq.s32.totalorder %s21, 0
    %p158 = por %p156, %p157
    %s160 = sadd.s32 %s159, 1
    %p163 = scmp.eq.s32.totalorder %s15, 1
    %p164 = scmp.ne.s32.totalorder %s159, %s161
    %p165 = scmp.eq.s32.totalorder %s15, 0
    %p166 = por %p164, %p165
    %p167 = scmp.ne.s32.totalorder %s159, %s161
    %p168 = scmp.eq.s32.totalorder %s20, 1
    %p169 = por %p167, %p168
    %p170 = scmp.ne.s32.totalorder %s161, %s162
    %p171 = scmp.eq.s32.totalorder %s20, 0
    %p172 = por %p170, %p171
    %p173 = scmp.ne.s32.totalorder %s161, %s162
    %p174 = scmp.eq.s32.totalorder %s21, 1
    %p175 = por %p173, %p174
    %p177 = scmp.ne.s32.totalorder %s162, %s176
    %p178 = scmp.eq.s32.totalorder %s21, 0
    %p179 = por %p177, %p178
    %s180 = ssub.s32 %s15, %s22
    %p181 = scmp.eq.s32.totalorder %s180, 0
    %s183 = sadd.s32 %s182, 1
    %s184 = scalar_select %p181, %s182, %s183
    %p187 = pneg %p181
    %p188 = scmp.eq.s32.totalorder %s15, 1
    %p189 = por %p187, %p188
    %p190 = scmp.ne.s32.totalorder %s182, %s185
    %p191 = scmp.eq.s32.totalorder %s15, 0
    %p192 = por %p190, %p191
    %p193 = scmp.ne.s32.totalorder %s182, %s185
    %p194 = scmp.eq.s32.totalorder %s20, 1
    %p195 = por %p193, %p194
    %p196 = scmp.ne.s32.totalorder %s185, %s186
    %p197 = scmp.eq.s32.totalorder %s20, 0
    %p198 = por %p196, %p197
    %p199 = scmp.ne.s32.totalorder %s185, %s186
    %p200 = scmp.eq.s32.totalorder %s21, 1
    %p201 = por %p199, %p200
    %p203 = scmp.ne.s32.totalorder %s186, %s202
    %p204 = scmp.eq.s32.totalorder %s21, 0
    %p205 = por %p203, %p204
    %s206 = ssub.s32 %s15, %s22
    %p207 = scmp.eq.s32.totalorder %s206, 0
    %s209 = sadd.s32 %s208, 1
    %s210 = scalar_select %p207, %s208, %s209
    %p213 = pneg %p207
    %p214 = scmp.eq.s32.totalorder %s15, 1
    %p215 = por %p213, %p214
    %p216 = scmp.ne.s32.totalorder %s208, %s211
    %p217 = scmp.eq.s32.totalorder %s15, 0
    %p218 = por %p216, %p217
    %p219 = scmp.ne.s32.totalorder %s208, %s211
    %p220 = scmp.eq.s32.totalorder %s20, 1
    %p221 = por %p219, %p220
    %p222 = scmp.ne.s32.totalorder %s211, %s212
    %p223 = scmp.eq.s32.totalorder %s20, 0
    %p224 = por %p222, %p223
    %p225 = scmp.ne.s32.totalorder %s211, %s212
    %p226 = scmp.eq.s32.totalorder %s21, 1
    %p227 = por %p225, %p226
    %p229 = scmp.ne.s32.totalorder %s212, %s228
    %p230 = scmp.eq.s32.totalorder %s21, 0
    %p231 = por %p229, %p230
    %p232 = scmp.le.s32.totalorder 1, %s15
    %p233 = scmp.lt.s32.totalorder %s15, 3
    %p234 = pnand %p232, %p233
    %p235 = pneg %p234
    // Predicated region
    $region9: #{mam_ffc_forward.4} parent=5 // pred_check
      _
    $region10: #{mam_ffc_forward.4} parent=5 // pred_check_branch
      %237 = sbr.rel (%p234) target = $region12
    $region11: #{mam_ffc_forward.4} parent=5 // pred_region
      %s238 = ssub.s32 %s15, 1
      // Predicated region
      $region13: #{mam_ffc_forward.4} parent=11 // pred_check
        %p239 = pneg %p88
      $region14: #{mam_ffc_forward.4} parent=11 // pred_check_branch
        %241 = sbr.rel (%p239) target = $region16
      $region15: #{mam_ffc_forward.4} parent=11 // pred_region
        _
      $region16: #{mam_ffc_forward.4} parent=11 // pred_fallthru
        _
      // Predicated region
      $region17: #{mam_ffc_forward.4} parent=11 // pred_check
        %p242 = pneg %p109
      $region18: #{mam_ffc_forward.4} parent=11 // pred_check_branch
        %244 = sbr.rel (%p242) target = $region20
      $region19: #{mam_ffc_forward.4} parent=11 // pred_region
        _
      $region20: #{mam_ffc_forward.4} parent=11 // pred_fallthru
        _
      // Predicated region
      $region21: #{mam_ffc_forward.4} parent=11 // pred_check
        %p245 = pneg %p130
      $region22: #{mam_ffc_forward.4} parent=11 // pred_check_branch
        %247 = sbr.rel (%p245) target = $region24
      $region23: #{mam_ffc_forward.4} parent=11 // pred_region
        _
      $region24: #{mam_ffc_forward.4} parent=11 // pred_fallthru
        _
      // Predicated region
      $region25: #{mam_ffc_forward.4} parent=11 // pred_check
        %p248 = pneg %p151
      $region26: #{mam_ffc_forward.4} parent=11 // pred_check_branch
        %250 = sbr.rel (%p248) target = $region28
      $region27: #{mam_ffc_forward.4} parent=11 // pred_region
        _
      $region28: #{mam_ffc_forward.4} parent=11 // pred_fallthru
        _
      // Predicated region
      $region29: #{mam_ffc_forward.4} parent=11 // pred_check
        %p251 = pneg %p172
      $region30: #{mam_ffc_forward.4} parent=11 // pred_check_branch
        %253 = sbr.rel (%p251) target = $region32
      $region31: #{mam_ffc_forward.4} parent=11 // pred_region
        _
      $region32: #{mam_ffc_forward.4} parent=11 // pred_fallthru
        _
    $region12: #{mam_ffc_forward.4} parent=5 // pred_fallthru
      _
    %p254 = scmp.lt.s32.totalorder %s15, 2
    // Predicated region
    $region33: #{mam_ffc_forward.4} parent=5 // pred_check
      %p255 = pneg %p254
    $region34: #{mam_ffc_forward.4} parent=5 // pred_check_branch
      %257 = sbr.rel (%p255) target = $region36
    $region35: #{mam_ffc_forward.4} parent=5 // pred_region
      // Predicated region
      $region37: #{mam_ffc_forward.4} parent=35 // pred_check
        %p258 = pneg %p35
      $region38: #{mam_ffc_forward.4} parent=35 // pred_check_branch
        %260 = sbr.rel (%p258) target = $region40
      $region39: #{mam_ffc_forward.4} parent=35 // pred_region
        %p261 = scmp.lt.s32.totalorder %s15, 1
        %s262 = scalar_select %p261, %s15, 1
        %s263 = smul.addr %s262, 2
        %s264 = smul.addr %s263, 8
        %s265 = scalar_lea.vmem %s0, %s264
      $region40: #{mam_ffc_forward.4} parent=35 // pred_fallthru
        _
      // Predicated region
      $region41: #{mam_ffc_forward.4} parent=35 // pred_check
        %p266 = pneg %p61
      $region42: #{mam_ffc_forward.4} parent=35 // pred_check_branch
        %268 = sbr.rel (%p266) target = $region44
      $region43: #{mam_ffc_forward.4} parent=35 // pred_region
        %p269 = scmp.lt.s32.totalorder %s15, 1
        %s270 = scalar_select %p269, %s15, 1
        %s271 = smul.addr %s270, 8
        %s272 = scalar_lea.vmem %s1, %s271
      $region44: #{mam_ffc_forward.4} parent=35 // pred_fallthru
        _
    $region36: #{mam_ffc_forward.4} parent=5 // pred_fallthru
      _
    %p273 = scmp.le.s32.totalorder 1, %s15
    %p274 = scmp.lt.s32.totalorder %s15, 3
    %p275 = pnand %p273, %p274
    %p276 = pneg %p275
    // Predicated region
    $region45: #{mam_ffc_forward.4} parent=5 // pred_check
      _
    $region46: #{mam_ffc_forward.4} parent=5 // pred_check_branch
      %278 = sbr.rel (%p275) target = $region48
    $region47: #{mam_ffc_forward.4} parent=5 // pred_region
      %s279 = ssub.s32 %s15, 1
      %p280 = scmp.lt.s32.totalorder %s20, 1
      %s281 = scalar_select %p280, %s20, 1
      %s282 = smul.addr %s281, 2
      %s283 = smul.addr %s282, 8
      %s284 = scalar_lea.vmem %s0, %s283
      %p285 = pneg %p41
      %p286 = pneg %p38
      %p287 = scmp.lt.s32.totalorder %s20, 1
      %s288 = scalar_select %p287, %s20, 1
      %s289 = smul.addr %s288, 8
      %s290 = scalar_lea.vmem %s1, %s289
      %p291 = pneg %p67
      %p292 = pneg %p64
      %p293 = pneg %p88
      %p294 = pneg %p85
      %p295 = pneg %p109
      %p296 = pneg %p106
      %p297 = pneg %p130
      %p298 = pneg %p127
      %p299 = pneg %p151
      %p300 = pneg %p148
      %p301 = pneg %p172
      %p302 = pneg %p169
      %p303 = pneg %p198
      %p304 = pneg %p195
      %p305 = scmp.lt.s32.totalorder %s20, 1
      %s306 = scalar_select %p305, %s20, 1
      %s307 = smul.addr %s306, 2
      %s308 = smul.addr %s307, 8
      %s309 = scalar_lea.vmem %s7, %s308
      %p310 = pneg %p224
      %p311 = pneg %p221
      %p312 = scmp.lt.s32.totalorder %s20, 1
      %s313 = scalar_select %p312, %s20, 1
      %s314 = smul.addr %s313, 8
      %s315 = scalar_lea.vmem %s8, %s314
      %p316 = scmp.lt.s32.totalorder %s20, 1
      %s317 = scalar_select %p316, %s20, 1
      %s318 = smul.addr %s317, 2
      %s319 = smul.addr %s318, 8
      %s320 = scalar_lea.vmem %s0, %s319
      %p321 = scmp.lt.s32.totalorder %s20, 1
      %s322 = scalar_select %p321, %s20, 1
      %s323 = smul.addr %s322, 8
      %s324 = scalar_lea.vmem %s1, %s323
      %p325 = scmp.lt.s32.totalorder %s20, 1
      %s326 = scalar_select %p325, %s20, 1
      %s327 = smul.addr %s326, 2
      %s328 = smul.addr %s327, 8
      %s329 = scalar_lea.vmem %s7, %s328
      %p330 = scmp.lt.s32.totalorder %s20, 1
      %s331 = scalar_select %p330, %s20, 1
      %s332 = smul.addr %s331, 8
      %s333 = scalar_lea.vmem %s8, %s332
      %v334 = vld [vmem:[%s2] sm:$0xf]
      %v335 = vld [vmem:[%s2 + $0x4] sm:$0xf]
      %v336 = vld [vmem:[%s3] sm:$0xff]
      %v337 = vld [vmem:[%s3 + $0x8] sm:$0xff]
      %v338 = vld [vmem:[%s4] sm:$0xff]
      %v339 = vld [vmem:[%s4 + $0x8] sm:$0xff]
      %v340 = vld [vmem:[%s320] sm:$0xff]
      %v341 = vld [vmem:[%s320 + $0x8] sm:$0xff]
      %v342 = vld [vmem:[%s5] sm:$0xff]
      %v343 = vld [vmem:[%s5 + $0x8] sm:$0xff]
      %v344 = vld [vmem:[%s5 + $0x10] sm:$0xff]
      %v345 = vld [vmem:[%s5 + $0x18] sm:$0xff]
      %v346 = vld [vmem:[%s5 + $0x20] sm:$0xff]
      %v347 = vld [vmem:[%s5 + $0x28] sm:$0xff]
      %v348 = vld [vmem:[%s5 + $0x30] sm:$0xff]
      %v349 = vld [vmem:[%s5 + $0x38] sm:$0xff]
      %v350 = vld [vmem:[%s5 + $0x40] sm:$0xff]
      %v351 = vld [vmem:[%s5 + $0x48] sm:$0xff]
      %v352 = vld [vmem:[%s5 + $0x50] sm:$0xff]
      %v353 = vld [vmem:[%s5 + $0x58] sm:$0xff]
      %v354 = vld [vmem:[%s5 + $0x60] sm:$0xff]
      %v355 = vld [vmem:[%s5 + $0x68] sm:$0xff]
      %v356 = vld [vmem:[%s5 + $0x70] sm:$0xff]
      %v357 = vld [vmem:[%s5 + $0x78] sm:$0xff]
      %v358 = vld [vmem:[%s5 + $0x80] sm:$0xff]
      %v359 = vld [vmem:[%s5 + $0x88] sm:$0xff]
      %v360 = vld [vmem:[%s5 + $0x90] sm:$0xff]
      %v361 = vld [vmem:[%s5 + $0x98] sm:$0xff]
      %v362 = vld [vmem:[%s5 + $0xa0] sm:$0xff]
      %v363 = vld [vmem:[%s5 + $0xa8] sm:$0xff]
      %v364 = vld [vmem:[%s5 + $0xb0] sm:$0xff]
      %v365 = vld [vmem:[%s5 + $0xb8] sm:$0xff]
      %v366 = vld [vmem:[%s5 + $0xc0] sm:$0xff]
      %v367 = vld [vmem:[%s5 + $0xc8] sm:$0xff]
      %v368 = vld [vmem:[%s5 + $0xd0] sm:$0xff]
      %v369 = vld [vmem:[%s5 + $0xd8] sm:$0xff]
      %v370 = vld [vmem:[%s5 + $0xe0] sm:$0xff]
      %v371 = vld [vmem:[%s5 + $0xe8] sm:$0xff]
      %v372 = vld [vmem:[%s5 + $0xf0] sm:$0xff]
      %v373 = vld [vmem:[%s5 + $0xf8] sm:$0xff]
      %v374 = vld [vmem:[%s5 + $0x100] sm:$0xff]
      %v375 = vld [vmem:[%s5 + $0x108] sm:$0xff]
      %v376 = vld [vmem:[%s5 + $0x110] sm:$0xff]
      %v377 = vld [vmem:[%s5 + $0x118] sm:$0xff]
      %v378 = vld [vmem:[%s5 + $0x120] sm:$0xff]
      %v379 = vld [vmem:[%s5 + $0x128] sm:$0xff]
      %v380 = vld [vmem:[%s5 + $0x130] sm:$0xff]
      %v381 = vld [vmem:[%s5 + $0x138] sm:$0xff]
      %v382 = vld [vmem:[%s5 + $0x140] sm:$0xff]
      %v383 = vld [vmem:[%s5 + $0x148] sm:$0xff]
      %v384 = vld [vmem:[%s5 + $0x150] sm:$0xff]
      %v385 = vld [vmem:[%s5 + $0x158] sm:$0xff]
      %v386 = vld [vmem:[%s5 + $0x160] sm:$0xff]
      %v387 = vld [vmem:[%s5 + $0x168] sm:$0xff]
      %v388 = vld [vmem:[%s5 + $0x170] sm:$0xff]
      %v389 = vld [vmem:[%s5 + $0x178] sm:$0xff]
      %v390 = vld [vmem:[%s5 + $0x180] sm:$0xff]
      %v391 = vld [vmem:[%s5 + $0x188] sm:$0xff]
      %v392 = vld [vmem:[%s5 + $0x190] sm:$0xff]
      %v393 = vld [vmem:[%s5 + $0x198] sm:$0xff]
      %v394 = vld [vmem:[%s5 + $0x1a0] sm:$0xff]
      %v395 = vld [vmem:[%s5 + $0x1a8] sm:$0xff]
      %v396 = vld [vmem:[%s5 + $0x1b0] sm:$0xff]
      %v397 = vld [vmem:[%s5 + $0x1b8] sm:$0xff]
      %v398 = vld [vmem:[%s5 + $0x1c0] sm:$0xff]
      %v399 = vld [vmem:[%s5 + $0x1c8] sm:$0xff]
      %v400 = vld [vmem:[%s5 + $0x1d0] sm:$0xff]
      %v401 = vld [vmem:[%s5 + $0x1d8] sm:$0xff]
      %v402 = vld [vmem:[%s5 + $0x1e0] sm:$0xff]
      %v403 = vld [vmem:[%s5 + $0x1e8] sm:$0xff]
      %v404 = vld [vmem:[%s5 + $0x1f0] sm:$0xff]
      %v405 = vld [vmem:[%s5 + $0x1f8] sm:$0xff]
      %v406 = vld [vmem:[%s5 + $0x200] sm:$0xff]
      %v407 = vld [vmem:[%s5 + $0x208] sm:$0xff]
      %v408 = vld [vmem:[%s5 + $0x210] sm:$0xff]
      %v409 = vld [vmem:[%s5 + $0x218] sm:$0xff]
      %v410 = vld [vmem:[%s5 + $0x220] sm:$0xff]
      %v411 = vld [vmem:[%s5 + $0x228] sm:$0xff]
      %v412 = vld [vmem:[%s5 + $0x230] sm:$0xff]
      %v413 = vld [vmem:[%s5 + $0x238] sm:$0xff]
      %v414 = vld [vmem:[%s5 + $0x240] sm:$0xff]
      %v415 = vld [vmem:[%s5 + $0x248] sm:$0xff]
      %v416 = vld [vmem:[%s5 + $0x250] sm:$0xff]
      %v417 = vld [vmem:[%s5 + $0x258] sm:$0xff]
      %v418 = vld [vmem:[%s5 + $0x260] sm:$0xff]
      %v419 = vld [vmem:[%s5 + $0x268] sm:$0xff]
      %v420 = vld [vmem:[%s5 + $0x270] sm:$0xff]
      %v421 = vld [vmem:[%s5 + $0x278] sm:$0xff]
      %v422 = vld [vmem:[%s5 + $0x280] sm:$0xff]
      %v423 = vld [vmem:[%s5 + $0x288] sm:$0xff]
      %v424 = vld [vmem:[%s5 + $0x290] sm:$0xff]
      %v425 = vld [vmem:[%s5 + $0x298] sm:$0xff]
      %v426 = vld [vmem:[%s5 + $0x2a0] sm:$0xff]
      %v427 = vld [vmem:[%s5 + $0x2a8] sm:$0xff]
      %v428 = vld [vmem:[%s5 + $0x2b0] sm:$0xff]
      %v429 = vld [vmem:[%s5 + $0x2b8] sm:$0xff]
      %v430 = vld [vmem:[%s5 + $0x2c0] sm:$0xff]
      %v431 = vld [vmem:[%s5 + $0x2c8] sm:$0xff]
      %v432 = vld [vmem:[%s5 + $0x2d0] sm:$0xff]
      %v433 = vld [vmem:[%s5 + $0x2d8] sm:$0xff]
      %v434 = vld [vmem:[%s5 + $0x2e0] sm:$0xff]
      %v435 = vld [vmem:[%s5 + $0x2e8] sm:$0xff]
      %v436 = vld [vmem:[%s5 + $0x2f0] sm:$0xff]
      %v437 = vld [vmem:[%s5 + $0x2f8] sm:$0xff]
      %v438 = vld [vmem:[%s5 + $0x300] sm:$0xff]
      %v439 = vld [vmem:[%s5 + $0x308] sm:$0xff]
      %v440 = vld [vmem:[%s5 + $0x310] sm:$0xff]
      %v441 = vld [vmem:[%s5 + $0x318] sm:$0xff]
      %v442 = vld [vmem:[%s5 + $0x320] sm:$0xff]
      %v443 = vld [vmem:[%s5 + $0x328] sm:$0xff]
      %v444 = vld [vmem:[%s5 + $0x330] sm:$0xff]
      %v445 = vld [vmem:[%s5 + $0x338] sm:$0xff]
      %v446 = vld [vmem:[%s5 + $0x340] sm:$0xff]
      %v447 = vld [vmem:[%s5 + $0x348] sm:$0xff]
      %v448 = vld [vmem:[%s5 + $0x350] sm:$0xff]
      %v449 = vld [vmem:[%s5 + $0x358] sm:$0xff]
      %v450 = vld [vmem:[%s5 + $0x360] sm:$0xff]
      %v451 = vld [vmem:[%s5 + $0x368] sm:$0xff]
      %v452 = vld [vmem:[%s5 + $0x370] sm:$0xff]
      %v453 = vld [vmem:[%s5 + $0x378] sm:$0xff]
      %v454 = vld [vmem:[%s5 + $0x380] sm:$0xff]
      %v455 = vld [vmem:[%s5 + $0x388] sm:$0xff]
      %v456 = vld [vmem:[%s5 + $0x390] sm:$0xff]
      %v457 = vld [vmem:[%s5 + $0x398] sm:$0xff]
      %v458 = vld [vmem:[%s5 + $0x3a0] sm:$0xff]
      %v459 = vld [vmem:[%s5 + $0x3a8] sm:$0xff]
      %v460 = vld [vmem:[%s5 + $0x3b0] sm:$0xff]
      %v461 = vld [vmem:[%s5 + $0x3b8] sm:$0xff]
      %v462 = vld [vmem:[%s5 + $0x3c0] sm:$0xff]
      %v463 = vld [vmem:[%s5 + $0x3c8] sm:$0xff]
      %v464 = vld [vmem:[%s5 + $0x3d0] sm:$0xff]
      %v465 = vld [vmem:[%s5 + $0x3d8] sm:$0xff]
      %v466 = vld [vmem:[%s5 + $0x3e0] sm:$0xff]
      %v467 = vld [vmem:[%s5 + $0x3e8] sm:$0xff]
      %v468 = vld [vmem:[%s5 + $0x3f0] sm:$0xff]
      %v469 = vld [vmem:[%s5 + $0x3f8] sm:$0xff]
      %v470 = vmax.f32 %v340, %v341
      %471 = vmax.xlane.f32.xlu0 %v470
      %v472 = vpop.xlane.xlu0 %471
      %v473 = vadd.f32 %v340, %v341
      %474 = vadd.xlane.f32.xlu0 %v473
      %v475 = vpop.xlane.xlu0 %474
      %v476 = vrcp.pop 256.0
      %v477 = vmul.f32 %v475, %v476
      %vm478 = vcmask 7168
      %v479 = vsel %vm478, %v472, %v477
      %vm480 = vcmask 64512
      %v482 = vsel %vm480, %v334, 0
      %484 = vmatprep.subr.mxu0 0.0
      %485 = vmatpush1.msra.mxu0 %v479
      %486 = vmatprep.subr.mxu0 0.0
      %487 = vmatpush1.msra.mxu0 0.0
      %488 = vmatprep.subr.mxu0 0.0
      %489 = vmatpush1.msra.mxu0 0.0
      %490 = vmatprep.subr.mxu0 0.0
      %491 = vmatpush1.msra.mxu0 0.0
      %492 = vmatprep.subr.mxu0 0.0
      %493 = vmatpush1.msra.mxu0 0.0
      %494 = vmatprep.subr.mxu0 0.0
      %495 = vmatpush1.msra.mxu0 0.0
      %496 = vmatprep.subr.mxu0 0.0
      %497 = vmatpush1.msra.mxu0 0.0
      %498 = vmatprep.subr.mxu0 0.0
      %499 = vmatpush1.msra.mxu0 0.0
      %500 = vmatprep.subr.mxu0 0.0
      %501 = vmatpush1.msra.mxu0 0.0
      %502 = vmatprep.subr.mxu0 0.0
      %503 = vmatpush1.msra.mxu0 0.0
      %504 = vmatprep.subr.mxu0 0.0
      %505 = vmatpush1.msra.mxu0 0.0
      %506 = vmatprep.subr.mxu0 0.0
      %507 = vmatpush1.msra.mxu0 0.0
      %508 = vmatprep.subr.mxu0 0.0
      %509 = vmatpush1.msra.mxu0 0.0
      %510 = vmatprep.subr.mxu0 0.0
      %511 = vmatpush1.msra.mxu0 0.0
      %512 = vmatprep.subr.mxu0 0.0
      %513 = vmatpush1.msra.mxu0 0.0
      %514 = vmatprep.subr.mxu0 0.0
      %515 = vmatpush1.msra.mxu0 0.0
      %516 = vmatprep.subr.mxu0 0.0
      %517 = vmatpush1.msra.mxu0 0.0
      %518 = vmatprep.subr.mxu0 0.0
      %519 = vmatpush1.msra.mxu0 0.0
      %520 = vmatprep.subr.mxu0 0.0
      %521 = vmatpush1.msra.mxu0 0.0
      %522 = vmatprep.subr.mxu0 0.0
      %523 = vmatpush1.msra.mxu0 0.0
      %524 = vmatprep.subr.mxu0 0.0
      %525 = vmatpush1.msra.mxu0 0.0
      %526 = vmatprep.subr.mxu0 0.0
      %527 = vmatpush1.msra.mxu0 0.0
      %528 = vmatprep.subr.mxu0 0.0
      %529 = vmatpush1.msra.mxu0 0.0
      %530 = vmatprep.subr.mxu0 0.0
      %531 = vmatpush1.msra.mxu0 0.0
      %532 = vmatprep.subr.mxu0 0.0
      %533 = vmatpush1.msra.mxu0 0.0
      %534 = vmatprep.subr.mxu0 0.0
      %535 = vmatpush1.msra.mxu0 0.0
      %536 = vmatprep.subr.mxu0 0.0
      %537 = vmatpush1.msra.mxu0 0.0
      %538 = vmatprep.subr.mxu0 0.0
      %539 = vmatpush1.msra.mxu0 0.0
      %540 = vmatprep.subr.mxu0 0.0
      %541 = vmatpush1.msra.mxu0 0.0
      %542 = vmatprep.subr.mxu0 0.0
      %543 = vmatpush1.msra.mxu0 0.0
      %544 = vmatprep.subr.mxu0 0.0
      %545 = vmatpush1.msra.mxu0 0.0
      %546 = vmatprep.subr.mxu0 0.0
      %547 = vmatpush1.msra.mxu0 0.0
      %548 = vmatprep.mubr.f32.mxu0 0.0
      %549 = vmatmul.mubr.f32.gmra.mrb[0].mxu0 %v482
      %v550 = vpop.f32.mrb[0].mxu0
      %v551 = vadd.f32 0.0, %v550
      %v552 = vpop.f32.mrb[0].mxu0
      %553 = vdwg.mxu0
      %v554 = vmax.f32 %v551, 0.0
      %vm555 = vcmask 31744
      %v557 = vsel %vm555, %v336, 0
      %vm559 = vcmask 1043456
      %v561 = vsel %vm559, %v554, 0
      %563 = vmatprep.subr.mxu0 0.0
      %564 = vmatpush1.msra.mxu0 %v561
      %565 = vmatprep.subr.mxu0 0.0
      %566 = vmatpush1.msra.mxu0 0.0
      %567 = vmatprep.subr.mxu0 0.0
      %568 = vmatpush1.msra.mxu0 0.0
      %569 = vmatprep.subr.mxu0 0.0
      %570 = vmatpush1.msra.mxu0 0.0
      %571 = vmatprep.subr.mxu0 0.0
      %572 = vmatpush1.msra.mxu0 0.0
      %573 = vmatprep.subr.mxu0 0.0
      %574 = vmatpush1.msra.mxu0 0.0
      %575 = vmatprep.subr.mxu0 0.0
      %576 = vmatpush1.msra.mxu0 0.0
      %577 = vmatprep.subr.mxu0 0.0
      %578 = vmatpush1.msra.mxu0 0.0
      %579 = vmatprep.subr.mxu0 0.0
      %580 = vmatpush1.msra.mxu0 0.0
      %581 = vmatprep.subr.mxu0 0.0
      %582 = vmatpush1.msra.mxu0 0.0
      %583 = vmatprep.subr.mxu0 0.0
      %584 = vmatpush1.msra.mxu0 0.0
      %585 = vmatprep.subr.mxu0 0.0
      %586 = vmatpush1.msra.mxu0 0.0
      %587 = vmatprep.subr.mxu0 0.0
      %588 = vmatpush1.msra.mxu0 0.0
      %589 = vmatprep.subr.mxu0 0.0
      %590 = vmatpush1.msra.mxu0 0.0
      %591 = vmatprep.subr.mxu0 0.0
      %592 = vmatpush1.msra.mxu0 0.0
      %593 = vmatprep.subr.mxu0 0.0
      %594 = vmatpush1.msra.mxu0 0.0
      %595 = vmatprep.subr.mxu0 0.0
      %596 = vmatpush1.msra.mxu0 0.0
      %597 = vmatprep.subr.mxu0 0.0
      %598 = vmatpush1.msra.mxu0 0.0
      %599 = vmatprep.subr.mxu0 0.0
      %600 = vmatpush1.msra.mxu0 0.0
      %601 = vmatprep.subr.mxu0 0.0
      %602 = vmatpush1.msra.mxu0 0.0
      %603 = vmatprep.subr.mxu0 0.0
      %604 = vmatpush1.msra.mxu0 0.0
      %605 = vmatprep.subr.mxu0 0.0
      %606 = vmatpush1.msra.mxu0 0.0
      %607 = vmatprep.subr.mxu0 0.0
      %608 = vmatpush1.msra.mxu0 0.0
      %609 = vmatprep.subr.mxu0 0.0
      %610 = vmatpush1.msra.mxu0 0.0
      %611 = vmatprep.subr.mxu0 0.0
      %612 = vmatpush1.msra.mxu0 0.0
      %613 = vmatprep.subr.mxu0 0.0
      %614 = vmatpush1.msra.mxu0 0.0
      %615 = vmatprep.subr.mxu0 0.0
      %616 = vmatpush1.msra.mxu0 0.0
      %617 = vmatprep.subr.mxu0 0.0
      %618 = vmatpush1.msra.mxu0 0.0
      %619 = vmatprep.subr.mxu0 0.0
      %620 = vmatpush1.msra.mxu0 0.0
      %621 = vmatprep.subr.mxu0 0.0
      %622 = vmatpush1.msra.mxu0 0.0
      %623 = vmatprep.subr.mxu0 0.0
      %624 = vmatpush1.msra.mxu0 0.0
      %625 = vmatprep.subr.mxu0 0.0
      %626 = vmatpush1.msra.mxu0 0.0
      %627 = vmatprep.mubr.f32.mxu0 0.0
      %628 = vmatmul.mubr.f32.gmra.mrb[0].mxu0 %v557
      %v629 = vpop.f32.mrb[0].mxu0
      %v630 = vadd.f32 0.0, %v629
      %v631 = vpop.f32.mrb[0].mxu0
      %632 = vdwg.mxu0
      %634 = vrot.lane.b32.xlu0 %v630, 127
      %v635 = vpop.permute.xlu0 %634
      %v637 = vadd.f32 %v630, %v635
      %v638 = vxor.u32 %v637, 2147483648
      %v639 = vmul.f32 %v638, 1.442695
      %v640 = vpow.pop %v639
      %v641 = vadd.f32 %v640, 1.0
      %v642 = vrcp.pop %v641
      %v643 = vmul.f32 1.0, %v642
      %645 = vset.pattern.permute.xlu0 0
      %646 = vperm.xlu0 %645, %v643
      %v647 = vpop.permute.xlu0 %646
      %v649 = vmul.f32 %v340, %v647
      %v650 = vmul.f32 %v341, %v647
      %v651 = vrot.slane %v649, 4
      %v652 = vmax.f32 %v649, %v651
      %v653 = vrot.slane %v652, 2
      %v654 = vmax.f32 %v652, %v653
      %v655 = vrot.slane %v654, 1
      %v656 = vmax.f32 %v654, %v655
      %v657 = vrot.slane %v650, 4
      %v658 = vmax.f32 %v650, %v657
      %v659 = vrot.slane %v658, 2
      %v660 = vmax.f32 %v658, %v659
      %v661 = vrot.slane %v660, 1
      %v662 = vmax.f32 %v660, %v661
      %v663 = vrot.slane %v649, 4
      %v664 = vadd.f32 %v649, %v663
      %v665 = vrot.slane %v664, 2
      %v666 = vadd.f32 %v664, %v665
      %v667 = vrot.slane %v666, 1
      %v668 = vadd.f32 %v666, %v667
      %v669 = vrot.slane %v650, 4
      %v670 = vadd.f32 %v650, %v669
      %v671 = vrot.slane %v670, 2
      %v672 = vadd.f32 %v670, %v671
      %v673 = vrot.slane %v672, 1
      %v674 = vadd.f32 %v672, %v673
      %v675 = vrcp.pop 8.0
      %v676 = vmul.f32 %v668, %v675
      %v677 = vmul.f32 %v674, %v675
      %678 = vmatprep.subr.mxu0 %v343
      %679 = vmatpush1.msra.mxu0 %v342
      %680 = vmatprep.subr.mxu0 %v345
      %681 = vmatpush1.msra.mxu0 %v344
      %682 = vmatprep.subr.mxu0 %v347
      %683 = vmatpush1.msra.mxu0 %v346
      %684 = vmatprep.subr.mxu0 %v349
      %685 = vmatpush1.msra.mxu0 %v348
      %686 = vmatprep.subr.mxu0 %v351
      %687 = vmatpush1.msra.mxu0 %v350
      %688 = vmatprep.subr.mxu0 %v353
      %689 = vmatpush1.msra.mxu0 %v352
      %690 = vmatprep.subr.mxu0 %v355
      %691 = vmatpush1.msra.mxu0 %v354
      %692 = vmatprep.subr.mxu0 %v357
      %693 = vmatpush1.msra.mxu0 %v356
      %694 = vmatprep.subr.mxu0 %v359
      %695 = vmatpush1.msra.mxu0 %v358
      %696 = vmatprep.subr.mxu0 %v361
      %697 = vmatpush1.msra.mxu0 %v360
      %698 = vmatprep.subr.mxu0 %v363
      %699 = vmatpush1.msra.mxu0 %v362
      %700 = vmatprep.subr.mxu0 %v365
      %701 = vmatpush1.msra.mxu0 %v364
      %702 = vmatprep.subr.mxu0 %v367
      %703 = vmatpush1.msra.mxu0 %v366
      %704 = vmatprep.subr.mxu0 %v369
      %705 = vmatpush1.msra.mxu0 %v368
      %706 = vmatprep.subr.mxu0 %v371
      %707 = vmatpush1.msra.mxu0 %v370
      %708 = vmatprep.subr.mxu0 %v373
      %709 = vmatpush1.msra.mxu0 %v372
      %710 = vmatprep.subr.mxu0 %v375
      %711 = vmatpush1.msra.mxu0 %v374
      %712 = vmatprep.subr.mxu0 %v377
      %713 = vmatpush1.msra.mxu0 %v376
      %714 = vmatprep.subr.mxu0 %v379
      %715 = vmatpush1.msra.mxu0 %v378
      %716 = vmatprep.subr.mxu0 %v381
      %717 = vmatpush1.msra.mxu0 %v380
      %718 = vmatprep.subr.mxu0 %v383
      %719 = vmatpush1.msra.mxu0 %v382
      %720 = vmatprep.subr.mxu0 %v385
      %721 = vmatpush1.msra.mxu0 %v384
      %722 = vmatprep.subr.mxu0 %v387
      %723 = vmatpush1.msra.mxu0 %v386
      %724 = vmatprep.subr.mxu0 %v389
      %725 = vmatpush1.msra.mxu0 %v388
      %726 = vmatprep.subr.mxu0 %v391
      %727 = vmatpush1.msra.mxu0 %v390
      %728 = vmatprep.subr.mxu0 %v393
      %729 = vmatpush1.msra.mxu0 %v392
      %730 = vmatprep.subr.mxu0 %v395
      %731 = vmatpush1.msra.mxu0 %v394
      %732 = vmatprep.subr.mxu0 %v397
      %733 = vmatpush1.msra.mxu0 %v396
      %734 = vmatprep.subr.mxu0 %v399
      %735 = vmatpush1.msra.mxu0 %v398
      %736 = vmatprep.subr.mxu0 %v401
      %737 = vmatpush1.msra.mxu0 %v400
      %738 = vmatprep.subr.mxu0 %v403
      %739 = vmatpush1.msra.mxu0 %v402
      %740 = vmatprep.subr.mxu0 %v405
      %741 = vmatpush1.msra.mxu0 %v404
      %742 = vmatprep.mubr.f32.mxu0 %v662
      %743 = vmatmul.mubr.f32.gmra.mrb[0].mxu0 %v656
      %v744 = vpop.f32.mrb[0].mxu0
      %v745 = vadd.f32 0.0, %v744
      %v746 = vpop.f32.mrb[0].mxu0
      %v747 = vadd.f32 0.0, %v746
      %748 = vdwg.mxu0
      %749 = vmatprep.subr.mxu0 %v407
      %750 = vmatpush1.msra.mxu0 %v406
      %751 = vmatprep.subr.mxu0 %v409
      %752 = vmatpush1.msra.mxu0 %v408
      %753 = vmatprep.subr.mxu0 %v411
      %754 = vmatpush1.msra.mxu0 %v410
      %755 = vmatprep.subr.mxu0 %v413
      %756 = vmatpush1.msra.mxu0 %v412
      %757 = vmatprep.subr.mxu0 %v415
      %758 = vmatpush1.msra.mxu0 %v414
      %759 = vmatprep.subr.mxu0 %v417
      %760 = vmatpush1.msra.mxu0 %v416
      %761 = vmatprep.subr.mxu0 %v419
      %762 = vmatpush1.msra.mxu0 %v418
      %763 = vmatprep.subr.mxu0 %v421
      %764 = vmatpush1.msra.mxu0 %v420
      %765 = vmatprep.subr.mxu0 %v423
      %766 = vmatpush1.msra.mxu0 %v422
      %767 = vmatprep.subr.mxu0 %v425
      %768 = vmatpush1.msra.mxu0 %v424
      %769 = vmatprep.subr.mxu0 %v427
      %770 = vmatpush1.msra.mxu0 %v426
      %771 = vmatprep.subr.mxu0 %v429
      %772 = vmatpush1.msra.mxu0 %v428
      %773 = vmatprep.subr.mxu0 %v431
      %774 = vmatpush1.msra.mxu0 %v430
      %775 = vmatprep.subr.mxu0 %v433
      %776 = vmatpush1.msra.mxu0 %v432
      %777 = vmatprep.subr.mxu0 %v435
      %778 = vmatpush1.msra.mxu0 %v434
      %779 = vmatprep.subr.mxu0 %v437
      %780 = vmatpush1.msra.mxu0 %v436
      %781 = vmatprep.subr.mxu0 %v439
      %782 = vmatpush1.msra.mxu0 %v438
      %783 = vmatprep.subr.mxu0 %v441
      %784 = vmatpush1.msra.mxu0 %v440
      %785 = vmatprep.subr.mxu0 %v443
      %786 = vmatpush1.msra.mxu0 %v442
      %787 = vmatprep.subr.mxu0 %v445
      %788 = vmatpush1.msra.mxu0 %v444
      %789 = vmatprep.subr.mxu0 %v447
      %790 = vmatpush1.msra.mxu0 %v446
      %791 = vmatprep.subr.mxu0 %v449
      %792 = vmatpush1.msra.mxu0 %v448
      %793 = vmatprep.subr.mxu0 %v451
      %794 = vmatpush1.msra.mxu0 %v450
      %795 = vmatprep.subr.mxu0 %v453
      %796 = vmatpush1.msra.mxu0 %v452
      %797 = vmatprep.subr.mxu0 %v455
      %798 = vmatpush1.msra.mxu0 %v454
      %799 = vmatprep.subr.mxu0 %v457
      %800 = vmatpush1.msra.mxu0 %v456
      %801 = vmatprep.subr.mxu0 %v459
      %802 = vmatpush1.msra.mxu0 %v458
      %803 = vmatprep.subr.mxu0 %v461
      %804 = vmatpush1.msra.mxu0 %v460
      %805 = vmatprep.subr.mxu0 %v463
      %806 = vmatpush1.msra.mxu0 %v462
      %807 = vmatprep.subr.mxu0 %v465
      %808 = vmatpush1.msra.mxu0 %v464
      %809 = vmatprep.subr.mxu0 %v467
      %810 = vmatpush1.msra.mxu0 %v466
      %811 = vmatprep.subr.mxu0 %v469
      %812 = vmatpush1.msra.mxu0 %v468
      %813 = vmatprep.mubr.f32.mxu0 %v677
      %814 = vmatmul.mubr.f32.gmra.mrb[0].mxu0 %v676
      %v815 = vpop.f32.mrb[0].mxu0
      %v816 = vadd.f32 %v745, %v815
      %v817 = vpop.f32.mrb[0].mxu0
      %v818 = vadd.f32 %v747, %v817
      %819 = vdwg.mxu0
      %v820 = vxor.u32 %v816, 2147483648
      %v821 = vxor.u32 %v818, 2147483648
      %v822 = vmul.f32 %v820, 1.442695
      %v823 = vpow.pop %v822
      %v824 = vmul.f32 %v821, 1.442695
      %v825 = vpow.pop %v824
      %v826 = vadd.f32 %v823, 1.0
      %v827 = vadd.f32 %v825, 1.0
      %v828 = vrcp.pop %v826
      %v829 = vmul.f32 1.0, %v828
      %v830 = vrcp.pop %v827
      %v831 = vmul.f32 1.0, %v830
      %v832 = vlaneseq
      %v833 = vshrl.u32 %v832, 7
      %v834 = vsub.s32 0, %v833
      %v835 = vrot.slane %v829, %v834
      %v836 = vlaneseq
      %v837 = vshrl.u32 %v836, 7
      %v838 = vsub.s32 0, %v837
      %v839 = vrot.slane %v831, %v838
      %v840 = vmul.f32 %v649, %v835
      %v841 = vmul.f32 %v650, %v839
      %v843 = vsel %vm480, %v338, 0
      %845 = vmatprep.subr.mxu0 %v841
      %846 = vmatpush1.msra.mxu0 %v840
      %847 = vmatprep.subr.mxu0 0.0
      %848 = vmatpush1.msra.mxu0 0.0
      %849 = vmatprep.subr.mxu0 0.0
      %850 = vmatpush1.msra.mxu0 0.0
      %851 = vmatprep.subr.mxu0 0.0
      %852 = vmatpush1.msra.mxu0 0.0
      %853 = vmatprep.subr.mxu0 0.0
      %854 = vmatpush1.msra.mxu0 0.0
      %855 = vmatprep.subr.mxu0 0.0
      %856 = vmatpush1.msra.mxu0 0.0
      %857 = vmatprep.subr.mxu0 0.0
      %858 = vmatpush1.msra.mxu0 0.0
      %859 = vmatprep.subr.mxu0 0.0
      %860 = vmatpush1.msra.mxu0 0.0
      %861 = vmatprep.subr.mxu0 0.0
      %862 = vmatpush1.msra.mxu0 0.0
      %863 = vmatprep.subr.mxu0 0.0
      %864 = vmatpush1.msra.mxu0 0.0
      %865 = vmatprep.subr.mxu0 0.0
      %866 = vmatpush1.msra.mxu0 0.0
      %867 = vmatprep.subr.mxu0 0.0
      %868 = vmatpush1.msra.mxu0 0.0
      %869 = vmatprep.subr.mxu0 0.0
      %870 = vmatpush1.msra.mxu0 0.0
      %871 = vmatprep.subr.mxu0 0.0
      %872 = vmatpush1.msra.mxu0 0.0
      %873 = vmatprep.subr.mxu0 0.0
      %874 = vmatpush1.msra.mxu0 0.0
      %875 = vmatprep.subr.mxu0 0.0
      %876 = vmatpush1.msra.mxu0 0.0
      %877 = vmatprep.subr.mxu0 0.0
      %878 = vmatpush1.msra.mxu0 0.0
      %879 = vmatprep.subr.mxu0 0.0
      %880 = vmatpush1.msra.mxu0 0.0
      %881 = vmatprep.subr.mxu0 0.0
      %882 = vmatpush1.msra.mxu0 0.0
      %883 = vmatprep.subr.mxu0 0.0
      %884 = vmatpush1.msra.mxu0 0.0
      %885 = vmatprep.subr.mxu0 0.0
      %886 = vmatpush1.msra.mxu0 0.0
      %887 = vmatprep.subr.mxu0 0.0
      %888 = vmatpush1.msra.mxu0 0.0
      %889 = vmatprep.subr.mxu0 0.0
      %890 = vmatpush1.msra.mxu0 0.0
      %891 = vmatprep.subr.mxu0 0.0
      %892 = vmatpush1.msra.mxu0 0.0
      %893 = vmatprep.subr.mxu0 0.0
      %894 = vmatpush1.msra.mxu0 0.0
      %895 = vmatprep.subr.mxu0 0.0
      %896 = vmatpush1.msra.mxu0 0.0
      %897 = vmatprep.subr.mxu0 0.0
      %898 = vmatpush1.msra.mxu0 0.0
      %899 = vmatprep.subr.mxu0 0.0
      %900 = vmatpush1.msra.mxu0 0.0
      %901 = vmatprep.subr.mxu0 0.0
      %902 = vmatpush1.msra.mxu0 0.0
      %903 = vmatprep.subr.mxu0 0.0
      %904 = vmatpush1.msra.mxu0 0.0
      %905 = vmatprep.subr.mxu0 0.0
      %906 = vmatpush1.msra.mxu0 0.0
      %907 = vmatprep.subr.mxu0 0.0
      %908 = vmatpush1.msra.mxu0 0.0
      %909 = vmatprep.mubr.f32.mxu0 0.0
      %910 = vmatmul.mubr.f32.gmra.mrb[0].mxu0 %v843
      %v911 = vpop.f32.mrb[0].mxu0
      %v912 = vadd.f32 0.0, %v911
      %v913 = vpop.f32.mrb[0].mxu0
      %v914 = vadd.f32 0.0, %v913
      %915 = vdwg.mxu0
      %v916 = vmax.f32 %v912, 0.0
      %v917 = vmax.f32 %v914, 0.0
      %918 = vst [vmem:[%s329] sm:$0xff] %v916
      %919 = vst [vmem:[%s329 + $0x8] sm:$0xff] %v917
      %v920 = vld [vmem:[%s324] sm:$0xff]
      %v921 = vld [vmem:[%s6] sm:$0xff]
      %v922 = vld [vmem:[%s6 + $0x8] sm:$0xff]
      %v923 = vld [vmem:[%s6 + $0x10] sm:$0xff]
      %v924 = vld [vmem:[%s6 + $0x18] sm:$0xff]
      %v925 = vld [vmem:[%s6 + $0x20] sm:$0xff]
      %v926 = vld [vmem:[%s6 + $0x28] sm:$0xff]
      %v927 = vld [vmem:[%s6 + $0x30] sm:$0xff]
      %v928 = vld [vmem:[%s6 + $0x38] sm:$0xff]
      %v929 = vld [vmem:[%s6 + $0x40] sm:$0xff]
      %v930 = vld [vmem:[%s6 + $0x48] sm:$0xff]
      %v931 = vld [vmem:[%s6 + $0x50] sm:$0xff]
      %v932 = vld [vmem:[%s6 + $0x58] sm:$0xff]
      %v933 = vld [vmem:[%s6 + $0x60] sm:$0xff]
      %v934 = vld [vmem:[%s6 + $0x68] sm:$0xff]
      %v935 = vld [vmem:[%s6 + $0x70] sm:$0xff]
      %v936 = vld [vmem:[%s6 + $0x78] sm:$0xff]
      %vm937 = vcmask 523264
      %v938 = vsel %vm937, %v920, -inf
      %939 = vmax.xlane.f32.xlu0 %v938
      %v940 = vpop.xlane.xlu0 %939
      %v941 = vsel %vm937, %v920, 0.0
      %942 = vadd.xlane.f32.xlu0 %v941
      %v943 = vpop.xlane.xlu0 %942
      %v944 = vrcp.pop 64.0
      %v945 = vmul.f32 %v943, %v944
      %v946 = vsel %vm478, %v940, %v945
      %v948 = vsel %vm480, %v335, 0
      %950 = vmatprep.subr.mxu0 0.0
      %951 = vmatpush1.msra.mxu0 %v946
      %952 = vmatprep.subr.mxu0 0.0
      %953 = vmatpush1.msra.mxu0 0.0
      %954 = vmatprep.subr.mxu0 0.0
      %955 = vmatpush1.msra.mxu0 0.0
      %956 = vmatprep.subr.mxu0 0.0
      %957 = vmatpush1.msra.mxu0 0.0
      %958 = vmatprep.subr.mxu0 0.0
      %959 = vmatpush1.msra.mxu0 0.0
      %960 = vmatprep.subr.mxu0 0.0
      %961 = vmatpush1.msra.mxu0 0.0
      %962 = vmatprep.subr.mxu0 0.0
      %963 = vmatpush1.msra.mxu0 0.0
      %964 = vmatprep.subr.mxu0 0.0
      %965 = vmatpush1.msra.mxu0 0.0
      %966 = vmatprep.subr.mxu0 0.0
      %967 = vmatpush1.msra.mxu0 0.0
      %968 = vmatprep.subr.mxu0 0.0
      %969 = vmatpush1.msra.mxu0 0.0
      %970 = vmatprep.subr.mxu0 0.0
      %971 = vmatpush1.msra.mxu0 0.0
      %972 = vmatprep.subr.mxu0 0.0
      %973 = vmatpush1.msra.mxu0 0.0
      %974 = vmatprep.subr.mxu0 0.0
      %975 = vmatpush1.msra.mxu0 0.0
      %976 = vmatprep.subr.mxu0 0.0
      %977 = vmatpush1.msra.mxu0 0.0
      %978 = vmatprep.subr.mxu0 0.0
      %979 = vmatpush1.msra.mxu0 0.0
      %980 = vmatprep.subr.mxu0 0.0
      %981 = vmatpush1.msra.mxu0 0.0
      %982 = vmatprep.subr.mxu0 0.0
      %983 = vmatpush1.msra.mxu0 0.0
      %984 = vmatprep.subr.mxu0 0.0
      %985 = vmatpush1.msra.mxu0 0.0
      %986 = vmatprep.subr.mxu0 0.0
      %987 = vmatpush1.msra.mxu0 0.0
      %988 = vmatprep.subr.mxu0 0.0
      %989 = vmatpush1.msra.mxu0 0.0
      %990 = vmatprep.subr.mxu0 0.0
      %991 = vmatpush1.msra.mxu0 0.0
      %992 = vmatprep.subr.mxu0 0.0
      %993 = vmatpush1.msra.mxu0 0.0
      %994 = vmatprep.subr.mxu0 0.0
      %995 = vmatpush1.msra.mxu0 0.0
      %996 = vmatprep.subr.mxu0 0.0
      %997 = vmatpush1.msra.mxu0 0.0
      %998 = vmatprep.subr.mxu0 0.0
      %999 = vmatpush1.msra.mxu0 0.0
      %1000 = vmatprep.subr.mxu0 0.0
      %1001 = vmatpush1.msra.mxu0 0.0
      %1002 = vmatprep.subr.mxu0 0.0
      %1003 = vmatpush1.msra.mxu0 0.0
      %1004 = vmatprep.subr.mxu0 0.0
      %1005 = vmatpush1.msra.mxu0 0.0
      %1006 = vmatprep.subr.mxu0 0.0
      %1007 = vmatpush1.msra.mxu0 0.0
      %1008 = vmatprep.subr.mxu0 0.0
      %1009 = vmatpush1.msra.mxu0 0.0
      %1010 = vmatprep.subr.mxu0 0.0
      %1011 = vmatpush1.msra.mxu0 0.0
      %1012 = vmatprep.subr.mxu0 0.0
      %1013 = vmatpush1.msra.mxu0 0.0
      %1014 = vmatprep.mubr.f32.mxu0 0.0
      %1015 = vmatmul.mubr.f32.gmra.mrb[0].mxu0 %v948
      %v1016 = vpop.f32.mrb[0].mxu0
      %v1017 = vadd.f32 0.0, %v1016
      %v1018 = vpop.f32.mrb[0].mxu0
      %1019 = vdwg.mxu0
      %v1020 = vmax.f32 %v1017, 0.0
      %v1022 = vsel %vm555, %v337, 0
      %v1025 = vsel %vm559, %v1020, 0
      %1027 = vmatprep.subr.mxu0 0.0
      %1028 = vmatpush1.msra.mxu0 %v1025
      %1029 = vmatprep.subr.mxu0 0.0
      %1030 = vmatpush1.msra.mxu0 0.0
      %1031 = vmatprep.subr.mxu0 0.0
      %1032 = vmatpush1.msra.mxu0 0.0
      %1033 = vmatprep.subr.mxu0 0.0
      %1034 = vmatpush1.msra.mxu0 0.0
      %1035 = vmatprep.subr.mxu0 0.0
      %1036 = vmatpush1.msra.mxu0 0.0
      %1037 = vmatprep.subr.mxu0 0.0
      %1038 = vmatpush1.msra.mxu0 0.0
      %1039 = vmatprep.subr.mxu0 0.0
      %1040 = vmatpush1.msra.mxu0 0.0
      %1041 = vmatprep.subr.mxu0 0.0
      %1042 = vmatpush1.msra.mxu0 0.0
      %1043 = vmatprep.subr.mxu0 0.0
      %1044 = vmatpush1.msra.mxu0 0.0
      %1045 = vmatprep.subr.mxu0 0.0
      %1046 = vmatpush1.msra.mxu0 0.0
      %1047 = vmatprep.subr.mxu0 0.0
      %1048 = vmatpush1.msra.mxu0 0.0
      %1049 = vmatprep.subr.mxu0 0.0
      %1050 = vmatpush1.msra.mxu0 0.0
      %1051 = vmatprep.subr.mxu0 0.0
      %1052 = vmatpush1.msra.mxu0 0.0
      %1053 = vmatprep.subr.mxu0 0.0
      %1054 = vmatpush1.msra.mxu0 0.0
      %1055 = vmatprep.subr.mxu0 0.0
      %1056 = vmatpush1.msra.mxu0 0.0
      %1057 = vmatprep.subr.mxu0 0.0
      %1058 = vmatpush1.msra.mxu0 0.0
      %1059 = vmatprep.subr.mxu0 0.0
      %1060 = vmatpush1.msra.mxu0 0.0
      %1061 = vmatprep.subr.mxu0 0.0
      %1062 = vmatpush1.msra.mxu0 0.0
      %1063 = vmatprep.subr.mxu0 0.0
      %1064 = vmatpush1.msra.mxu0 0.0
      %1065 = vmatprep.subr.mxu0 0.0
      %1066 = vmatpush1.msra.mxu0 0.0
      %1067 = vmatprep.subr.mxu0 0.0
      %1068 = vmatpush1.msra.mxu0 0.0
      %1069 = vmatprep.subr.mxu0 0.0
      %1070 = vmatpush1.msra.mxu0 0.0
      %1071 = vmatprep.subr.mxu0 0.0
      %1072 = vmatpush1.msra.mxu0 0.0
      %1073 = vmatprep.subr.mxu0 0.0
      %1074 = vmatpush1.msra.mxu0 0.0
      %1075 = vmatprep.subr.mxu0 0.0
      %1076 = vmatpush1.msra.mxu0 0.0
      %1077 = vmatprep.subr.mxu0 0.0
      %1078 = vmatpush1.msra.mxu0 0.0
      %1079 = vmatprep.subr.mxu0 0.0
      %1080 = vmatpush1.msra.mxu0 0.0
      %1081 = vmatprep.subr.mxu0 0.0
      %1082 = vmatpush1.msra.mxu0 0.0
      %1083 = vmatprep.subr.mxu0 0.0
      %1084 = vmatpush1.msra.mxu0 0.0
      %1085 = vmatprep.subr.mxu0 0.0
      %1086 = vmatpush1.msra.mxu0 0.0
      %1087 = vmatprep.subr.mxu0 0.0
      %1088 = vmatpush1.msra.mxu0 0.0
      %1089 = vmatprep.subr.mxu0 0.0
      %1090 = vmatpush1.msra.mxu0 0.0
      %1091 = vmatprep.mubr.f32.mxu0 0.0
      %1092 = vmatmul.mubr.f32.gmra.mrb[0].mxu0 %v1022
      %v1093 = vpop.f32.mrb[0].mxu0
      %v1094 = vadd.f32 0.0, %v1093
      %v1095 = vpop.f32.mrb[0].mxu0
      %1096 = vdwg.mxu0
      %1098 = vrot.lane.b32.xlu0 %v1094, 127
      %v1099 = vpop.permute.xlu0 %1098
      %v1101 = vadd.f32 %v1094, %v1099
      %v1102 = vxor.u32 %v1101, 2147483648
      %v1103 = vmul.f32 %v1102, 1.442695
      %v1104 = vpow.pop %v1103
      %v1105 = vadd.f32 %v1104, 1.0
      %v1106 = vrcp.pop %v1105
      %v1107 = vmul.f32 1.0, %v1106
      %1109 = vset.pattern.permute.xlu0 0
      %1110 = vperm.xlu0 %1109, %v1107
      %v1111 = vpop.permute.xlu0 %1110
      %v1113 = vmul.f32 %v920, %v1111
      %v1114 = vsel %vm937, %v1113, -inf
      %v1115 = vrot.slane %v1114, 4
      %v1116 = vmax.f32 %v1114, %v1115
      %v1117 = vrot.slane %v1116, 2
      %v1118 = vmax.f32 %v1116, %v1117
      %v1119 = vrot.slane %v1118, 1
      %v1120 = vmax.f32 %v1118, %v1119
      %v1121 = vsel %vm937, %v1113, 0.0
      %v1122 = vrot.slane %v1121, 4
      %v1123 = vadd.f32 %v1121, %v1122
      %v1124 = vrot.slane %v1123, 2
      %v1125 = vadd.f32 %v1123, %v1124
      %v1126 = vrot.slane %v1125, 1
      %v1127 = vadd.f32 %v1125, %v1126
      %v1128 = vmul.f32 %v1127, %v675
      %1130 = vrot.lane.b32.xlu0 %v1128, 64
      %v1131 = vpop.permute.xlu0 %1130
      %v1133 = vsel %vm937, %v1120, %v1131
      %1134 = vmatprep.subr.mxu0 0.0
      %1135 = vmatpush1.msra.mxu0 %v921
      %1136 = vmatprep.subr.mxu0 0.0
      %1137 = vmatpush1.msra.mxu0 %v922
      %1138 = vmatprep.subr.mxu0 0.0
      %1139 = vmatpush1.msra.mxu0 %v923
      %1140 = vmatprep.subr.mxu0 0.0
      %1141 = vmatpush1.msra.mxu0 %v924
      %1142 = vmatprep.subr.mxu0 0.0
      %1143 = vmatpush1.msra.mxu0 %v925
      %1144 = vmatprep.subr.mxu0 0.0
      %1145 = vmatpush1.msra.mxu0 %v926
      %1146 = vmatprep.subr.mxu0 0.0
      %1147 = vmatpush1.msra.mxu0 %v927
      %1148 = vmatprep.subr.mxu0 0.0
      %1149 = vmatpush1.msra.mxu0 %v928
      %1150 = vmatprep.subr.mxu0 0.0
      %1151 = vmatpush1.msra.mxu0 %v929
      %1152 = vmatprep.subr.mxu0 0.0
      %1153 = vmatpush1.msra.mxu0 %v930
      %1154 = vmatprep.subr.mxu0 0.0
      %1155 = vmatpush1.msra.mxu0 %v931
      %1156 = vmatprep.subr.mxu0 0.0
      %1157 = vmatpush1.msra.mxu0 %v932
      %1158 = vmatprep.subr.mxu0 0.0
      %1159 = vmatpush1.msra.mxu0 %v933
      %1160 = vmatprep.subr.mxu0 0.0
      %1161 = vmatpush1.msra.mxu0 %v934
      %1162 = vmatprep.subr.mxu0 0.0
      %1163 = vmatpush1.msra.mxu0 %v935
      %1164 = vmatprep.subr.mxu0 0.0
      %1165 = vmatpush1.msra.mxu0 %v936
      %1166 = vmatprep.subr.mxu0 0.0
      %1167 = vmatpush1.msra.mxu0 0.0
      %1168 = vmatprep.subr.mxu0 0.0
      %1169 = vmatpush1.msra.mxu0 0.0
      %1170 = vmatprep.subr.mxu0 0.0
      %1171 = vmatpush1.msra.mxu0 0.0
      %1172 = vmatprep.subr.mxu0 0.0
      %1173 = vmatpush1.msra.mxu0 0.0
      %1174 = vmatprep.subr.mxu0 0.0
      %1175 = vmatpush1.msra.mxu0 0.0
      %1176 = vmatprep.subr.mxu0 0.0
      %1177 = vmatpush1.msra.mxu0 0.0
      %1178 = vmatprep.subr.mxu0 0.0
      %1179 = vmatpush1.msra.mxu0 0.0
      %1180 = vmatprep.subr.mxu0 0.0
      %1181 = vmatpush1.msra.mxu0 0.0
      %1182 = vmatprep.subr.mxu0 0.0
      %1183 = vmatpush1.msra.mxu0 0.0
      %1184 = vmatprep.subr.mxu0 0.0
      %1185 = vmatpush1.msra.mxu0 0.0
      %1186 = vmatprep.subr.mxu0 0.0
      %1187 = vmatpush1.msra.mxu0 0.0
      %1188 = vmatprep.subr.mxu0 0.0
      %1189 = vmatpush1.msra.mxu0 0.0
      %1190 = vmatprep.subr.mxu0 0.0
      %1191 = vmatpush1.msra.mxu0 0.0
      %1192 = vmatprep.subr.mxu0 0.0
      %1193 = vmatpush1.msra.mxu0 0.0
      %1194 = vmatprep.subr.mxu0 0.0
      %1195 = vmatpush1.msra.mxu0 0.0
      %1196 = vmatprep.subr.mxu0 0.0
      %1197 = vmatpush1.msra.mxu0 0.0
      %1198 = vmatprep.mubr.f32.mxu0 0.0
      %1199 = vmatmul.mubr.f32.gmra.mrb[0].mxu0 %v1133
      %v1200 = vpop.f32.mrb[0].mxu0
      %v1201 = vadd.f32 0.0, %v1200
      %v1202 = vpop.f32.mrb[0].mxu0
      %1203 = vdwg.mxu0
      %v1204 = vxor.u32 %v1201, 2147483648
      %v1205 = vmul.f32 %v1204, 1.442695
      %v1206 = vpow.pop %v1205
      %v1207 = vadd.f32 %v1206, 1.0
      %v1208 = vrcp.pop %v1207
      %v1209 = vmul.f32 1.0, %v1208
      %v1210 = vlaneseq
      %v1211 = vshrl.u32 %v1210, 7
      %v1212 = vsub.s32 0, %v1211
      %v1213 = vrot.slane %v1209, %v1212
      %v1214 = vmul.f32 %v1113, %v1213
      %v1216 = vsel %vm480, %v339, 0
      %1218 = vmatprep.subr.mxu0 0.0
      %1219 = vmatpush1.msra.mxu0 %v1214
      %1220 = vmatprep.subr.mxu0 0.0
      %1221 = vmatpush1.msra.mxu0 0.0
      %1222 = vmatprep.subr.mxu0 0.0
      %1223 = vmatpush1.msra.mxu0 0.0
      %1224 = vmatprep.subr.mxu0 0.0
      %1225 = vmatpush1.msra.mxu0 0.0
      %1226 = vmatprep.subr.mxu0 0.0
      %1227 = vmatpush1.msra.mxu0 0.0
      %1228 = vmatprep.subr.mxu0 0.0
      %1229 = vmatpush1.msra.mxu0 0.0
      %1230 = vmatprep.subr.mxu0 0.0
      %1231 = vmatpush1.msra.mxu0 0.0
      %1232 = vmatprep.subr.mxu0 0.0
      %1233 = vmatpush1.msra.mxu0 0.0
      %1234 = vmatprep.subr.mxu0 0.0
      %1235 = vmatpush1.msra.mxu0 0.0
      %1236 = vmatprep.subr.mxu0 0.0
      %1237 = vmatpush1.msra.mxu0 0.0
      %1238 = vmatprep.subr.mxu0 0.0
      %1239 = vmatpush1.msra.mxu0 0.0
      %1240 = vmatprep.subr.mxu0 0.0
      %1241 = vmatpush1.msra.mxu0 0.0
      %1242 = vmatprep.subr.mxu0 0.0
      %1243 = vmatpush1.msra.mxu0 0.0
      %1244 = vmatprep.subr.mxu0 0.0
      %1245 = vmatpush1.msra.mxu0 0.0
      %1246 = vmatprep.subr.mxu0 0.0
      %1247 = vmatpush1.msra.mxu0 0.0
      %1248 = vmatprep.subr.mxu0 0.0
      %1249 = vmatpush1.msra.mxu0 0.0
      %1250 = vmatprep.subr.mxu0 0.0
      %1251 = vmatpush1.msra.mxu0 0.0
      %1252 = vmatprep.subr.mxu0 0.0
      %1253 = vmatpush1.msra.mxu0 0.0
      %1254 = vmatprep.subr.mxu0 0.0
      %1255 = vmatpush1.msra.mxu0 0.0
      %1256 = vmatprep.subr.mxu0 0.0
      %1257 = vmatpush1.msra.mxu0 0.0
      %1258 = vmatprep.subr.mxu0 0.0
      %1259 = vmatpush1.msra.mxu0 0.0
      %1260 = vmatprep.subr.mxu0 0.0
      %1261 = vmatpush1.msra.mxu0 0.0
      %1262 = vmatprep.subr.mxu0 0.0
      %1263 = vmatpush1.msra.mxu0 0.0
      %1264 = vmatprep.subr.mxu0 0.0
      %1265 = vmatpush1.msra.mxu0 0.0
      %1266 = vmatprep.subr.mxu0 0.0
      %1267 = vmatpush1.msra.mxu0 0.0
      %1268 = vmatprep.subr.mxu0 0.0
      %1269 = vmatpush1.msra.mxu0 0.0
      %1270 = vmatprep.subr.mxu0 0.0
      %1271 = vmatpush1.msra.mxu0 0.0
      %1272 = vmatprep.subr.mxu0 0.0
      %1273 = vmatpush1.msra.mxu0 0.0
      %1274 = vmatprep.subr.mxu0 0.0
      %1275 = vmatpush1.msra.mxu0 0.0
      %1276 = vmatprep.subr.mxu0 0.0
      %1277 = vmatpush1.msra.mxu0 0.0
      %1278 = vmatprep.subr.mxu0 0.0
      %1279 = vmatpush1.msra.mxu0 0.0
      %1280 = vmatprep.subr.mxu0 0.0
      %1281 = vmatpush1.msra.mxu0 0.0
      %1282 = vmatprep.mubr.f32.mxu0 0.0
      %1283 = vmatmul.mubr.f32.gmra.mrb[0].mxu0 %v1216
      %v1284 = vpop.f32.mrb[0].mxu0
      %v1285 = vadd.f32 0.0, %v1284
      %v1286 = vpop.f32.mrb[0].mxu0
      %1287 = vdwg.mxu0
      %v1288 = vmax.f32 %v1285, 0.0
      %1289 = vst.msk [vmem:[%s333] sm:$0xff] %vm937, %v1288
      %p1290 = scmp.lt.s32.totalorder %s20, 1
      %s1291 = scalar_select %p1290, %s20, 1
      %s1292 = smul.addr %s1291, 2
      %s1293 = smul.addr %s1292, 8
      %s1294 = scalar_lea.vmem %s7, %s1293
      %p1295 = scmp.lt.s32.totalorder %s20, 1
      %s1296 = scalar_select %p1295, %s20, 1
      %s1297 = smul.addr %s1296, 8
      %s1298 = scalar_lea.vmem %s8, %s1297
      // Predicated region
      $region49: #{mam_ffc_forward.4} parent=47 // pred_check
        %p1299 = pneg %p195
      $region50: #{mam_ffc_forward.4} parent=47 // pred_check_branch
        %1301 = sbr.rel (%p1299) target = $region52
      $region51: #{mam_ffc_forward.4} parent=47 // pred_region
        _
      $region52: #{mam_ffc_forward.4} parent=47 // pred_fallthru
        _
      // Predicated region
      $region53: #{mam_ffc_forward.4} parent=47 // pred_check
        %p1302 = pneg %p221
      $region54: #{mam_ffc_forward.4} parent=47 // pred_check_branch
        %1304 = sbr.rel (%p1302) target = $region56
      $region55: #{mam_ffc_forward.4} parent=47 // pred_region
        _
      $region56: #{mam_ffc_forward.4} parent=47 // pred_fallthru
        _
    $region48: #{mam_ffc_forward.4} parent=5 // pred_fallthru
      _
    %p1305 = scmp.le.s32.totalorder 2, %s15
    // Predicated region
    $region57: #{mam_ffc_forward.4} parent=5 // pred_check
      %p1306 = pneg %p1305
    $region58: #{mam_ffc_forward.4} parent=5 // pred_check_branch
      %1308 = sbr.rel (%p1306) target = $region60
    $region59: #{mam_ffc_forward.4} parent=5 // pred_region
      %s1309 = ssub.s32 %s15, 2
      // Predicated region
      $region61: #{mam_ffc_forward.4} parent=59 // pred_check
        %p1310 = pneg %p201
      $region62: #{mam_ffc_forward.4} parent=59 // pred_check_branch
        %1312 = sbr.rel (%p1310) target = $region64
      $region63: #{mam_ffc_forward.4} parent=59 // pred_region
        %p1313 = scmp.lt.s32.totalorder %s21, 1
        %s1314 = scalar_select %p1313, %s21, 1
        %s1315 = smul.addr %s1314, 2
        %s1316 = smul.addr %s1315, 8
        %s1317 = scalar_lea.vmem %s7, %s1316
      $region64: #{mam_ffc_forward.4} parent=59 // pred_fallthru
        _
      // Predicated region
      $region65: #{mam_ffc_forward.4} parent=59 // pred_check
        %p1318 = pneg %p227
      $region66: #{mam_ffc_forward.4} parent=59 // pred_check_branch
        %1320 = sbr.rel (%p1318) target = $region68
      $region67: #{mam_ffc_forward.4} parent=59 // pred_region
        %p1321 = scmp.lt.s32.totalorder %s21, 1
        %s1322 = scalar_select %p1321, %s21, 1
        %s1323 = smul.addr %s1322, 8
        %s1324 = scalar_lea.vmem %s8, %s1323
      $region68: #{mam_ffc_forward.4} parent=59 // pred_fallthru
        _
    $region60: #{mam_ffc_forward.4} parent=5 // pred_fallthru
      _
  $region6: #{mam_ffc_forward.4} parent=0 // loop_footer
    %s19 = sadd.s32 1, %s15
  $region7: #{mam_ffc_forward.4} parent=0 // loop_footer_branch
    %14 = sbr.rel target = $region3
  $region8: #{mam_ffc_forward.4} parent=0 // loop_exit
    _

// kernel: tile.9
$region0: #{tile.9}
  %s0 = inlined_call_operand.vmem [shape: f32[2,4,2,8,2,8], index: 0, kind: input, shape index: {}]
  %s1 = inlined_call_operand.vmem [shape: f32[2,4,256], index: 1, kind: output, shape index: {}]
  $region1: #{tile.9} parent=0
    #allocation0 [shape = 'u8[16384]{0}', space=vmem, size = 0x4000, scoped, tag = 'scoped mem for output reshape']
    #allocation1 [shape = 'u8[524288]{0}', space=vmem, size = 0x80000, scoped, tag = 'scoped mem for input reshape']
    %s3 = sshllo.u32 0, 2
    %s4 = smul.addr 2, 127
    %s5 = scalar_lea.vmem %s0, %s4
    %v6 = vld [vmem:[%s5] sm:%s3]
    %s7 = scalar_lea.vmem [#allocation1], 1016
    %8 = vst [vmem:[%s7] sm:%s3] %v6
    %s9 = smul.addr 2, 126
    %s10 = scalar_lea.vmem %s0, %s9
    %v11 = vld [vmem:[%s10] sm:%s3]
    %s12 = scalar_lea.vmem [#allocation1], 1008
    %13 = vst [vmem:[%s12] sm:%s3] %v11
    %s14 = smul.addr 2, 125
    %s15 = scalar_lea.vmem %s0, %s14
    %v16 = vld [vmem:[%s15] sm:%s3]
    %s17 = scalar_lea.vmem [#allocation1], 1000
    %18 = vst [vmem:[%s17] sm:%s3] %v16
    %s19 = smul.addr 2, 124
    %s20 = scalar_lea.vmem %s0, %s19
    %v21 = vld [vmem:[%s20] sm:%s3]
    %s22 = scalar_lea.vmem [#allocation1], 992
    %23 = vst [vmem:[%s22] sm:%s3] %v21
    %s24 = smul.addr 2, 123
    %s25 = scalar_lea.vmem %s0, %s24
    %v26 = vld [vmem:[%s25] sm:%s3]
    %s27 = scalar_lea.vmem [#allocation1], 984
    %28 = vst [vmem:[%s27] sm:%s3] %v26
    %s29 = smul.addr 2, 122
    %s30 = scalar_lea.vmem %s0, %s29
    %v31 = vld [vmem:[%s30] sm:%s3]
    %s32 = scalar_lea.vmem [#allocation1], 976
    %33 = vst [vmem:[%s32] sm:%s3] %v31
    %s34 = smul.addr 2, 121
    %s35 = scalar_lea.vmem %s0, %s34
    %v36 = vld [vmem:[%s35] sm:%s3]
    %s37 = scalar_lea.vmem [#allocation1], 968
    %38 = vst [vmem:[%s37] sm:%s3] %v36
    %s39 = smul.addr 2, 120
    %s40 = scalar_lea.vmem %s0, %s39
    %v41 = vld [vmem:[%s40] sm:%s3]
    %s42 = scalar_lea.vmem [#allocation1], 960
    %43 = vst [vmem:[%s42] sm:%s3] %v41
    %s44 = smul.addr 2, 119
    %s45 = scalar_lea.vmem %s0, %s44
    %v46 = vld [vmem:[%s45] sm:%s3]
    %s47 = scalar_lea.vmem [#allocation1], 952
    %48 = vst [vmem:[%s47] sm:%s3] %v46
    %s49 = smul.addr 2, 118
    %s50 = scalar_lea.vmem %s0, %s49
    %v51 = vld [vmem:[%s50] sm:%s3]
    %s52 = scalar_lea.vmem [#allocation1], 944
    %53 = vst [vmem:[%s52] sm:%s3] %v51
    %s54 = smul.addr 2, 117
    %s55 = scalar_lea.vmem %s0, %s54
    %v56 = vld [vmem:[%s55] sm:%s3]
    %s57 = scalar_lea.vmem [#allocation1], 936
    %58 = vst [vmem:[%s57] sm:%s3] %v56
    %s59 = smul.addr 2, 116
    %s60 = scalar_lea.vmem %s0, %s59
    %v61 = vld [vmem:[%s60] sm:%s3]
    %s62 = scalar_lea.vmem [#allocation1], 928
    %63 = vst [vmem:[%s62] sm:%s3] %v61
    %s64 = smul.addr 2, 115
    %s65 = scalar_lea.vmem %s0, %s64
    %v66 = vld [vmem:[%s65] sm:%s3]
    %s67 = scalar_lea.vmem [#allocation1], 920
    %68 = vst [vmem:[%s67] sm:%s3] %v66
    %s69 = smul.addr 2, 114
    %s70 = scalar_lea.vmem %s0, %s69
    %v71 = vld [vmem:[%s70] sm:%s3]
    %s72 = scalar_lea.vmem [#allocation1], 912
    %73 = vst [vmem:[%s72] sm:%s3] %v71
    %s74 = smul.addr 2, 113
    %s75 = scalar_lea.vmem %s0, %s74
    %v76 = vld [vmem:[%s75] sm:%s3]
    %s77 = scalar_lea.vmem [#allocation1], 904
    %78 = vst [vmem:[%s77] sm:%s3] %v76
    %s79 = smul.addr 2, 112
    %s80 = scalar_lea.vmem %s0, %s79
    %v81 = vld [vmem:[%s80] sm:%s3]
    %s82 = scalar_lea.vmem [#allocation1], 896
    %83 = vst [vmem:[%s82] sm:%s3] %v81
    %s84 = smul.addr 2, 111
    %s85 = scalar_lea.vmem %s0, %s84
    %v86 = vld [vmem:[%s85] sm:%s3]
    %s87 = scalar_lea.vmem [#allocation1], 888
    %88 = vst [vmem:[%s87] sm:%s3] %v86
    %s89 = smul.addr 2, 110
    %s90 = scalar_lea.vmem %s0, %s89
    %v91 = vld [vmem:[%s90] sm:%s3]
    %s92 = scalar_lea.vmem [#allocation1], 880
    %93 = vst [vmem:[%s92] sm:%s3] %v91
    %s94 = smul.addr 2, 109
    %s95 = scalar_lea.vmem %s0, %s94
    %v96 = vld [vmem:[%s95] sm:%s3]
    %s97 = scalar_lea.vmem [#allocation1], 872
    %98 = vst [vmem:[%s97] sm:%s3] %v96
    %s99 = smul.addr 2, 108
    %s100 = scalar_lea.vmem %s0, %s99
    %v101 = vld [vmem:[%s100] sm:%s3]
    %s102 = scalar_lea.vmem [#allocation1], 864
    %103 = vst [vmem:[%s102] sm:%s3] %v101
    %s104 = smul.addr 2, 107
    %s105 = scalar_lea.vmem %s0, %s104
    %v106 = vld [vmem:[%s105] sm:%s3]
    %s107 = scalar_lea.vmem [#allocation1], 856
    %108 = vst [vmem:[%s107] sm:%s3] %v106
    %s109 = smul.addr 2, 106
    %s110 = scalar_lea.vmem %s0, %s109
    %v111 = vld [vmem:[%s110] sm:%s3]
    %s112 = scalar_lea.vmem [#allocation1], 848
    %113 = vst [vmem:[%s112] sm:%s3] %v111
    %s114 = smul.addr 2, 105
    %s115 = scalar_lea.vmem %s0, %s114
    %v116 = vld [vmem:[%s115] sm:%s3]
    %s117 = scalar_lea.vmem [#allocation1], 840
    %118 = vst [vmem:[%s117] sm:%s3] %v116
    %s119 = smul.addr 2, 104
    %s120 = scalar_lea.vmem %s0, %s119
    %v121 = vld [vmem:[%s120] sm:%s3]
    %s122 = scalar_lea.vmem [#allocation1], 832
    %123 = vst [vmem:[%s122] sm:%s3] %v121
    %s124 = smul.addr 2, 103
    %s125 = scalar_lea.vmem %s0, %s124
    %v126 = vld [vmem:[%s125] sm:%s3]
    %s127 = scalar_lea.vmem [#allocation1], 824
    %128 = vst [vmem:[%s127] sm:%s3] %v126
    %s129 = smul.addr 2, 102
    %s130 = scalar_lea.vmem %s0, %s129
    %v131 = vld [vmem:[%s130] sm:%s3]
    %s132 = scalar_lea.vmem [#allocation1], 816
    %133 = vst [vmem:[%s132] sm:%s3] %v131
    %s134 = smul.addr 2, 101
    %s135 = scalar_lea.vmem %s0, %s134
    %v136 = vld [vmem:[%s135] sm:%s3]
    %s137 = scalar_lea.vmem [#allocation1], 808
    %138 = vst [vmem:[%s137] sm:%s3] %v136
    %s139 = smul.addr 2, 100
    %s140 = scalar_lea.vmem %s0, %s139
    %v141 = vld [vmem:[%s140] sm:%s3]
    %s142 = scalar_lea.vmem [#allocation1], 800
    %143 = vst [vmem:[%s142] sm:%s3] %v141
    %s144 = smul.addr 2, 99
    %s145 = scalar_lea.vmem %s0, %s144
    %v146 = vld [vmem:[%s145] sm:%s3]
    %s147 = scalar_lea.vmem [#allocation1], 792
    %148 = vst [vmem:[%s147] sm:%s3] %v146
    %s149 = smul.addr 2, 98
    %s150 = scalar_lea.vmem %s0, %s149
    %v151 = vld [vmem:[%s150] sm:%s3]
    %s152 = scalar_lea.vmem [#allocation1], 784
    %153 = vst [vmem:[%s152] sm:%s3] %v151
    %s154 = smul.addr 2, 97
    %s155 = scalar_lea.vmem %s0, %s154
    %v156 = vld [vmem:[%s155] sm:%s3]
    %s157 = scalar_lea.vmem [#allocation1], 776
    %158 = vst [vmem:[%s157] sm:%s3] %v156
    %s159 = smul.addr 2, 96
    %s160 = scalar_lea.vmem %s0, %s159
    %v161 = vld [vmem:[%s160] sm:%s3]
    %s162 = scalar_lea.vmem [#allocation1], 768
    %163 = vst [vmem:[%s162] sm:%s3] %v161
    %s164 = smul.addr 2, 95
    %s165 = scalar_lea.vmem %s0, %s164
    %v166 = vld [vmem:[%s165] sm:%s3]
    %s167 = scalar_lea.vmem [#allocation1], 760
    %168 = vst [vmem:[%s167] sm:%s3] %v166
    %s169 = smul.addr 2, 94
    %s170 = scalar_lea.vmem %s0, %s169
    %v171 = vld [vmem:[%s170] sm:%s3]
    %s172 = scalar_lea.vmem [#allocation1], 752
    %173 = vst [vmem:[%s172] sm:%s3] %v171
    %s174 = smul.addr 2, 93
    %s175 = scalar_lea.vmem %s0, %s174
    %v176 = vld [vmem:[%s175] sm:%s3]
    %s177 = scalar_lea.vmem [#allocation1], 744
    %178 = vst [vmem:[%s177] sm:%s3] %v176
    %s179 = smul.addr 2, 92
    %s180 = scalar_lea.vmem %s0, %s179
    %v181 = vld [vmem:[%s180] sm:%s3]
    %s182 = scalar_lea.vmem [#allocation1], 736
    %183 = vst [vmem:[%s182] sm:%s3] %v181
    %s184 = smul.addr 2, 91
    %s185 = scalar_lea.vmem %s0, %s184
    %v186 = vld [vmem:[%s185] sm:%s3]
    %s187 = scalar_lea.vmem [#allocation1], 728
    %188 = vst [vmem:[%s187] sm:%s3] %v186
    %s189 = smul.addr 2, 90
    %s190 = scalar_lea.vmem %s0, %s189
    %v191 = vld [vmem:[%s190] sm:%s3]
    %s192 = scalar_lea.vmem [#allocation1], 720
    %193 = vst [vmem:[%s192] sm:%s3] %v191
    %s194 = smul.addr 2, 89
    %s195 = scalar_lea.vmem %s0, %s194
    %v196 = vld [vmem:[%s195] sm:%s3]
    %s197 = scalar_lea.vmem [#allocation1], 712
    %198 = vst [vmem:[%s197] sm:%s3] %v196
    %s199 = smul.addr 2, 88
    %s200 = scalar_lea.vmem %s0, %s199
    %v201 = vld [vmem:[%s200] sm:%s3]
    %s202 = scalar_lea.vmem [#allocation1], 704
    %203 = vst [vmem:[%s202] sm:%s3] %v201
    %s204 = smul.addr 2, 87
    %s205 = scalar_lea.vmem %s0, %s204
    %v206 = vld [vmem:[%s205] sm:%s3]
    %s207 = scalar_lea.vmem [#allocation1], 696
    %208 = vst [vmem:[%s207] sm:%s3] %v206
    %s209 = smul.addr 2, 86
    %s210 = scalar_lea.vmem %s0, %s209
    %v211 = vld [vmem:[%s210] sm:%s3]
    %s212 = scalar_lea.vmem [#allocation1], 688
    %213 = vst [vmem:[%s212] sm:%s3] %v211
    %s214 = smul.addr 2, 85
    %s215 = scalar_lea.vmem %s0, %s214
    %v216 = vld [vmem:[%s215] sm:%s3]
    %s217 = scalar_lea.vmem [#allocation1], 680
    %218 = vst [vmem:[%s217] sm:%s3] %v216
    %s219 = smul.addr 2, 84
    %s220 = scalar_lea.vmem %s0, %s219
    %v221 = vld [vmem:[%s220] sm:%s3]
    %s222 = scalar_lea.vmem [#allocation1], 672
    %223 = vst [vmem:[%s222] sm:%s3] %v221
    %s224 = smul.addr 2, 83
    %s225 = scalar_lea.vmem %s0, %s224
    %v226 = vld [vmem:[%s225] sm:%s3]
    %s227 = scalar_lea.vmem [#allocation1], 664
    %228 = vst [vmem:[%s227] sm:%s3] %v226
    %s229 = smul.addr 2, 82
    %s230 = scalar_lea.vmem %s0, %s229
    %v231 = vld [vmem:[%s230] sm:%s3]
    %s232 = scalar_lea.vmem [#allocation1], 656
    %233 = vst [vmem:[%s232] sm:%s3] %v231
    %s234 = smul.addr 2, 81
    %s235 = scalar_lea.vmem %s0, %s234
    %v236 = vld [vmem:[%s235] sm:%s3]
    %s237 = scalar_lea.vmem [#allocation1], 648
    %238 = vst [vmem:[%s237] sm:%s3] %v236
    %s239 = smul.addr 2, 80
    %s240 = scalar_lea.vmem %s0, %s239
    %v241 = vld [vmem:[%s240] sm:%s3]
    %s242 = scalar_lea.vmem [#allocation1], 640
    %243 = vst [vmem:[%s242] sm:%s3] %v241
    %s244 = smul.addr 2, 79
    %s245 = scalar_lea.vmem %s0, %s244
    %v246 = vld [vmem:[%s245] sm:%s3]
    %s247 = scalar_lea.vmem [#allocation1], 632
    %248 = vst [vmem:[%s247] sm:%s3] %v246
    %s249 = smul.addr 2, 78
    %s250 = scalar_lea.vmem %s0, %s249
    %v251 = vld [vmem:[%s250] sm:%s3]
    %s252 = scalar_lea.vmem [#allocation1], 624
    %253 = vst [vmem:[%s252] sm:%s3] %v251
    %s254 = smul.addr 2, 77
    %s255 = scalar_lea.vmem %s0, %s254
    %v256 = vld [vmem:[%s255] sm:%s3]
    %s257 = scalar_lea.vmem [#allocation1], 616
    %258 = vst [vmem:[%s257] sm:%s3] %v256
    %s259 = smul.addr 2, 76
    %s260 = scalar_lea.vmem %s0, %s259
    %v261 = vld [vmem:[%s260] sm:%s3]
    %s262 = scalar_lea.vmem [#allocation1], 608
    %263 = vst [vmem:[%s262] sm:%s3] %v261
    %s264 = smul.addr 2, 75
    %s265 = scalar_lea.vmem %s0, %s264
    %v266 = vld [vmem:[%s265] sm:%s3]
    %s267 = scalar_lea.vmem [#allocation1], 600
    %268 = vst [vmem:[%s267] sm:%s3] %v266
    %s269 = smul.addr 2, 74
    %s270 = scalar_lea.vmem %s0, %s269
    %v271 = vld [vmem:[%s270] sm:%s3]
    %s272 = scalar_lea.vmem [#allocation1], 592
    %273 = vst [vmem:[%s272] sm:%s3] %v271
    %s274 = smul.addr 2, 73
    %s275 = scalar_lea.vmem %s0, %s274
    %v276 = vld [vmem:[%s275] sm:%s3]
    %s277 = scalar_lea.vmem [#allocation1], 584
    %278 = vst [vmem:[%s277] sm:%s3] %v276
    %s279 = smul.addr 2, 72
    %s280 = scalar_lea.vmem %s0, %s279
    %v281 = vld [vmem:[%s280] sm:%s3]
    %s282 = scalar_lea.vmem [#allocation1], 576
    %283 = vst [vmem:[%s282] sm:%s3] %v281
    %s284 = smul.addr 2, 71
    %s285 = scalar_lea.vmem %s0, %s284
    %v286 = vld [vmem:[%s285] sm:%s3]
    %s287 = scalar_lea.vmem [#allocation1], 568
    %288 = vst [vmem:[%s287] sm:%s3] %v286
    %s289 = smul.addr 2, 70
    %s290 = scalar_lea.vmem %s0, %s289
    %v291 = vld [vmem:[%s290] sm:%s3]
    %s292 = scalar_lea.vmem [#allocation1], 560
    %293 = vst [vmem:[%s292] sm:%s3] %v291
    %s294 = smul.addr 2, 69
    %s295 = scalar_lea.vmem %s0, %s294
    %v296 = vld [vmem:[%s295] sm:%s3]
    %s297 = scalar_lea.vmem [#allocation1], 552
    %298 = vst [vmem:[%s297] sm:%s3] %v296
    %s299 = smul.addr 2, 68
    %s300 = scalar_lea.vmem %s0, %s299
    %v301 = vld [vmem:[%s300] sm:%s3]
    %s302 = scalar_lea.vmem [#allocation1], 544
    %303 = vst [vmem:[%s302] sm:%s3] %v301
    %s304 = smul.addr 2, 67
    %s305 = scalar_lea.vmem %s0, %s304
    %v306 = vld [vmem:[%s305] sm:%s3]
    %s307 = scalar_lea.vmem [#allocation1], 536
    %308 = vst [vmem:[%s307] sm:%s3] %v306
    %s309 = smul.addr 2, 66
    %s310 = scalar_lea.vmem %s0, %s309
    %v311 = vld [vmem:[%s310] sm:%s3]
    %s312 = scalar_lea.vmem [#allocation1], 528
    %313 = vst [vmem:[%s312] sm:%s3] %v311
    %s314 = smul.addr 2, 65
    %s315 = scalar_lea.vmem %s0, %s314
    %v316 = vld [vmem:[%s315] sm:%s3]
    %s317 = scalar_lea.vmem [#allocation1], 520
    %318 = vst [vmem:[%s317] sm:%s3] %v316
    %s319 = smul.addr 2, 64
    %s320 = scalar_lea.vmem %s0, %s319
    %v321 = vld [vmem:[%s320] sm:%s3]
    %s322 = scalar_lea.vmem [#allocation1], 512
    %323 = vst [vmem:[%s322] sm:%s3] %v321
    %s324 = smul.addr 2, 63
    %s325 = scalar_lea.vmem %s0, %s324
    %v326 = vld [vmem:[%s325] sm:%s3]
    %s327 = scalar_lea.vmem [#allocation1], 504
    %328 = vst [vmem:[%s327] sm:%s3] %v326
    %s329 = smul.addr 2, 62
    %s330 = scalar_lea.vmem %s0, %s329
    %v331 = vld [vmem:[%s330] sm:%s3]
    %s332 = scalar_lea.vmem [#allocation1], 496
    %333 = vst [vmem:[%s332] sm:%s3] %v331
    %s334 = smul.addr 2, 61
    %s335 = scalar_lea.vmem %s0, %s334
    %v336 = vld [vmem:[%s335] sm:%s3]
    %s337 = scalar_lea.vmem [#allocation1], 488
    %338 = vst [vmem:[%s337] sm:%s3] %v336
    %s339 = smul.addr 2, 60
    %s340 = scalar_lea.vmem %s0, %s339
    %v341 = vld [vmem:[%s340] sm:%s3]
    %s342 = scalar_lea.vmem [#allocation1], 480
    %343 = vst [vmem:[%s342] sm:%s3] %v341
    %s344 = smul.addr 2, 59
    %s345 = scalar_lea.vmem %s0, %s344
    %v346 = vld [vmem:[%s345] sm:%s3]
    %s347 = scalar_lea.vmem [#allocation1], 472
    %348 = vst [vmem:[%s347] sm:%s3] %v346
    %s349 = smul.addr 2, 58
    %s350 = scalar_lea.vmem %s0, %s349
    %v351 = vld [vmem:[%s350] sm:%s3]
    %s352 = scalar_lea.vmem [#allocation1], 464
    %353 = vst [vmem:[%s352] sm:%s3] %v351
    %s354 = smul.addr 2, 57
    %s355 = scalar_lea.vmem %s0, %s354
    %v356 = vld [vmem:[%s355] sm:%s3]
    %s357 = scalar_lea.vmem [#allocation1], 456
    %358 = vst [vmem:[%s357] sm:%s3] %v356
    %s359 = smul.addr 2, 56
    %s360 = scalar_lea.vmem %s0, %s359
    %v361 = vld [vmem:[%s360] sm:%s3]
    %s362 = scalar_lea.vmem [#allocation1], 448
    %363 = vst [vmem:[%s362] sm:%s3] %v361
    %s364 = smul.addr 2, 55
    %s365 = scalar_lea.vmem %s0, %s364
    %v366 = vld [vmem:[%s365] sm:%s3]
    %s367 = scalar_lea.vmem [#allocation1], 440
    %368 = vst [vmem:[%s367] sm:%s3] %v366
    %s369 = smul.addr 2, 54
    %s370 = scalar_lea.vmem %s0, %s369
    %v371 = vld [vmem:[%s370] sm:%s3]
    %s372 = scalar_lea.vmem [#allocation1], 432
    %373 = vst [vmem:[%s372] sm:%s3] %v371
    %s374 = smul.addr 2, 53
    %s375 = scalar_lea.vmem %s0, %s374
    %v376 = vld [vmem:[%s375] sm:%s3]
    %s377 = scalar_lea.vmem [#allocation1], 424
    %378 = vst [vmem:[%s377] sm:%s3] %v376
    %s379 = smul.addr 2, 52
    %s380 = scalar_lea.vmem %s0, %s379
    %v381 = vld [vmem:[%s380] sm:%s3]
    %s382 = scalar_lea.vmem [#allocation1], 416
    %383 = vst [vmem:[%s382] sm:%s3] %v381
    %s384 = smul.addr 2, 51
    %s385 = scalar_lea.vmem %s0, %s384
    %v386 = vld [vmem:[%s385] sm:%s3]
    %s387 = scalar_lea.vmem [#allocation1], 408
    %388 = vst [vmem:[%s387] sm:%s3] %v386
    %s389 = smul.addr 2, 50
    %s390 = scalar_lea.vmem %s0, %s389
    %v391 = vld [vmem:[%s390] sm:%s3]
    %s392 = scalar_lea.vmem [#allocation1], 400
    %393 = vst [vmem:[%s392] sm:%s3] %v391
    %s394 = smul.addr 2, 49
    %s395 = scalar_lea.vmem %s0, %s394
    %v396 = vld [vmem:[%s395] sm:%s3]
    %s397 = scalar_lea.vmem [#allocation1], 392
    %398 = vst [vmem:[%s397] sm:%s3] %v396
    %s399 = smul.addr 2, 48
    %s400 = scalar_lea.vmem %s0, %s399
    %v401 = vld [vmem:[%s400] sm:%s3]
    %s402 = scalar_lea.vmem [#allocation1], 384
    %403 = vst [vmem:[%s402] sm:%s3] %v401
    %s404 = smul.addr 2, 47
    %s405 = scalar_lea.vmem %s0, %s404
    %v406 = vld [vmem:[%s405] sm:%s3]
    %s407 = scalar_lea.vmem [#allocation1], 376
    %408 = vst [vmem:[%s407] sm:%s3] %v406
    %s409 = smul.addr 2, 46
    %s410 = scalar_lea.vmem %s0, %s409
    %v411 = vld [vmem:[%s410] sm:%s3]
    %s412 = scalar_lea.vmem [#allocation1], 368
    %413 = vst [vmem:[%s412] sm:%s3] %v411
    %s414 = smul.addr 2, 45
    %s415 = scalar_lea.vmem %s0, %s414
    %v416 = vld [vmem:[%s415] sm:%s3]
    %s417 = scalar_lea.vmem [#allocation1], 360
    %418 = vst [vmem:[%s417] sm:%s3] %v416
    %s419 = smul.addr 2, 44
    %s420 = scalar_lea.vmem %s0, %s419
    %v421 = vld [vmem:[%s420] sm:%s3]
    %s422 = scalar_lea.vmem [#allocation1], 352
    %423 = vst [vmem:[%s422] sm:%s3] %v421
    %s424 = smul.addr 2, 43
    %s425 = scalar_lea.vmem %s0, %s424
    %v426 = vld [vmem:[%s425] sm:%s3]
    %s427 = scalar_lea.vmem [#allocation1], 344
    %428 = vst [vmem:[%s427] sm:%s3] %v426
    %s429 = smul.addr 2, 42
    %s430 = scalar_lea.vmem %s0, %s429
    %v431 = vld [vmem:[%s430] sm:%s3]
    %s432 = scalar_lea.vmem [#allocation1], 336
    %433 = vst [vmem:[%s432] sm:%s3] %v431
    %s434 = smul.addr 2, 41
    %s435 = scalar_lea.vmem %s0, %s434
    %v436 = vld [vmem:[%s435] sm:%s3]
    %s437 = scalar_lea.vmem [#allocation1], 328
    %438 = vst [vmem:[%s437] sm:%s3] %v436
    %s439 = smul.addr 2, 40
    %s440 = scalar_lea.vmem %s0, %s439
    %v441 = vld [vmem:[%s440] sm:%s3]
    %s442 = scalar_lea.vmem [#allocation1], 320
    %443 = vst [vmem:[%s442] sm:%s3] %v441
    %s444 = smul.addr 2, 39
    %s445 = scalar_lea.vmem %s0, %s444
    %v446 = vld [vmem:[%s445] sm:%s3]
    %s447 = scalar_lea.vmem [#allocation1], 312
    %448 = vst [vmem:[%s447] sm:%s3] %v446
    %s449 = smul.addr 2, 38
    %s450 = scalar_lea.vmem %s0, %s449
    %v451 = vld [vmem:[%s450] sm:%s3]
    %s452 = scalar_lea.vmem [#allocation1], 304
    %453 = vst [vmem:[%s452] sm:%s3] %v451
    %s454 = smul.addr 2, 37
    %s455 = scalar_lea.vmem %s0, %s454
    %v456 = vld [vmem:[%s455] sm:%s3]
    %s457 = scalar_lea.vmem [#allocation1], 296
    %458 = vst [vmem:[%s457] sm:%s3] %v456
    %s459 = smul.addr 2, 36
    %s460 = scalar_lea.vmem %s0, %s459
    %v461 = vld [vmem:[%s460] sm:%s3]
    %s462 = scalar_lea.vmem [#allocation1], 288
    %463 = vst [vmem:[%s462] sm:%s3] %v461
    %s464 = smul.addr 2, 35
    %s465 = scalar_lea.vmem %s0, %s464
    %v466 = vld [vmem:[%s465] sm:%s3]
    %s467 = scalar_lea.vmem [#allocation1], 280
    %468 = vst [vmem:[%s467] sm:%s3] %v466
    %s469 = smul.addr 2, 34
    %s470 = scalar_lea.vmem %s0, %s469
    %v471 = vld [vmem:[%s470] sm:%s3]
    %s472 = scalar_lea.vmem [#allocation1], 272
    %473 = vst [vmem:[%s472] sm:%s3] %v471
    %s474 = smul.addr 2, 33
    %s475 = scalar_lea.vmem %s0, %s474
    %v476 = vld [vmem:[%s475] sm:%s3]
    %s477 = scalar_lea.vmem [#allocation1], 264
    %478 = vst [vmem:[%s477] sm:%s3] %v476
    %s479 = smul.addr 2, 32
    %s480 = scalar_lea.vmem %s0, %s479
    %v481 = vld [vmem:[%s480] sm:%s3]
    %s482 = scalar_lea.vmem [#allocation1], 256
    %483 = vst [vmem:[%s482] sm:%s3] %v481
    %s484 = smul.addr 2, 31
    %s485 = scalar_lea.vmem %s0, %s484
    %v486 = vld [vmem:[%s485] sm:%s3]
    %s487 = scalar_lea.vmem [#allocation1], 248
    %488 = vst [vmem:[%s487] sm:%s3] %v486
    %s489 = smul.addr 2, 30
    %s490 = scalar_lea.vmem %s0, %s489
    %v491 = vld [vmem:[%s490] sm:%s3]
    %s492 = scalar_lea.vmem [#allocation1], 240
    %493 = vst [vmem:[%s492] sm:%s3] %v491
    %s494 = smul.addr 2, 29
    %s495 = scalar_lea.vmem %s0, %s494
    %v496 = vld [vmem:[%s495] sm:%s3]
    %s497 = scalar_lea.vmem [#allocation1], 232
    %498 = vst [vmem:[%s497] sm:%s3] %v496
    %s499 = smul.addr 2, 28
    %s500 = scalar_lea.vmem %s0, %s499
    %v501 = vld [vmem:[%s500] sm:%s3]
    %s502 = scalar_lea.vmem [#allocation1], 224
    %503 = vst [vmem:[%s502] sm:%s3] %v501
    %s504 = smul.addr 2, 27
    %s505 = scalar_lea.vmem %s0, %s504
    %v506 = vld [vmem:[%s505] sm:%s3]
    %s507 = scalar_lea.vmem [#allocation1], 216
    %508 = vst [vmem:[%s507] sm:%s3] %v506
    %s509 = smul.addr 2, 26
    %s510 = scalar_lea.vmem %s0, %s509
    %v511 = vld [vmem:[%s510] sm:%s3]
    %s512 = scalar_lea.vmem [#allocation1], 208
    %513 = vst [vmem:[%s512] sm:%s3] %v511
    %s514 = smul.addr 2, 25
    %s515 = scalar_lea.vmem %s0, %s514
    %v516 = vld [vmem:[%s515] sm:%s3]
    %s517 = scalar_lea.vmem [#allocation1], 200
    %518 = vst [vmem:[%s517] sm:%s3] %v516
    %s519 = smul.addr 2, 24
    %s520 = scalar_lea.vmem %s0, %s519
    %v521 = vld [vmem:[%s520] sm:%s3]
    %s522 = scalar_lea.vmem [#allocation1], 192
    %523 = vst [vmem:[%s522] sm:%s3] %v521
    %s524 = smul.addr 2, 23
    %s525 = scalar_lea.vmem %s0, %s524
    %v526 = vld [vmem:[%s525] sm:%s3]
    %s527 = scalar_lea.vmem [#allocation1], 184
    %528 = vst [vmem:[%s527] sm:%s3] %v526
    %s529 = smul.addr 2, 22
    %s530 = scalar_lea.vmem %s0, %s529
    %v531 = vld [vmem:[%s530] sm:%s3]
    %s532 = scalar_lea.vmem [#allocation1], 176
    %533 = vst [vmem:[%s532] sm:%s3] %v531
    %s534 = smul.addr 2, 21
    %s535 = scalar_lea.vmem %s0, %s534
    %v536 = vld [vmem:[%s535] sm:%s3]
    %s537 = scalar_lea.vmem [#allocation1], 168
    %538 = vst [vmem:[%s537] sm:%s3] %v536
    %s539 = smul.addr 2, 20
    %s540 = scalar_lea.vmem %s0, %s539
    %v541 = vld [vmem:[%s540] sm:%s3]
    %s542 = scalar_lea.vmem [#allocation1], 160
    %543 = vst [vmem:[%s542] sm:%s3] %v541
    %s544 = smul.addr 2, 19
    %s545 = scalar_lea.vmem %s0, %s544
    %v546 = vld [vmem:[%s545] sm:%s3]
    %s547 = scalar_lea.vmem [#allocation1], 152
    %548 = vst [vmem:[%s547] sm:%s3] %v546
    %s549 = smul.addr 2, 18
    %s550 = scalar_lea.vmem %s0, %s549
    %v551 = vld [vmem:[%s550] sm:%s3]
    %s552 = scalar_lea.vmem [#allocation1], 144
    %553 = vst [vmem:[%s552] sm:%s3] %v551
    %s554 = smul.addr 2, 17
    %s555 = scalar_lea.vmem %s0, %s554
    %v556 = vld [vmem:[%s555] sm:%s3]
    %s557 = scalar_lea.vmem [#allocation1], 136
    %558 = vst [vmem:[%s557] sm:%s3] %v556
    %s559 = smul.addr 2, 16
    %s560 = scalar_lea.vmem %s0, %s559
    %v561 = vld [vmem:[%s560] sm:%s3]
    %s562 = scalar_lea.vmem [#allocation1], 128
    %563 = vst [vmem:[%s562] sm:%s3] %v561
    %s564 = smul.addr 2, 15
    %s565 = scalar_lea.vmem %s0, %s564
    %v566 = vld [vmem:[%s565] sm:%s3]
    %s567 = scalar_lea.vmem [#allocation1], 120
    %568 = vst [vmem:[%s567] sm:%s3] %v566
    %s569 = smul.addr 2, 14
    %s570 = scalar_lea.vmem %s0, %s569
    %v571 = vld [vmem:[%s570] sm:%s3]
    %s572 = scalar_lea.vmem [#allocation1], 112
    %573 = vst [vmem:[%s572] sm:%s3] %v571
    %s574 = smul.addr 2, 13
    %s575 = scalar_lea.vmem %s0, %s574
    %v576 = vld [vmem:[%s575] sm:%s3]
    %s577 = scalar_lea.vmem [#allocation1], 104
    %578 = vst [vmem:[%s577] sm:%s3] %v576
    %s579 = smul.addr 2, 12
    %s580 = scalar_lea.vmem %s0, %s579
    %v581 = vld [vmem:[%s580] sm:%s3]
    %s582 = scalar_lea.vmem [#allocation1], 96
    %583 = vst [vmem:[%s582] sm:%s3] %v581
    %s584 = smul.addr 2, 11
    %s585 = scalar_lea.vmem %s0, %s584
    %v586 = vld [vmem:[%s585] sm:%s3]
    %s587 = scalar_lea.vmem [#allocation1], 88
    %588 = vst [vmem:[%s587] sm:%s3] %v586
    %s589 = smul.addr 2, 10
    %s590 = scalar_lea.vmem %s0, %s589
    %v591 = vld [vmem:[%s590] sm:%s3]
    %s592 = scalar_lea.vmem [#allocation1], 80
    %593 = vst [vmem:[%s592] sm:%s3] %v591
    %s594 = smul.addr 2, 9
    %s595 = scalar_lea.vmem %s0, %s594
    %v596 = vld [vmem:[%s595] sm:%s3]
    %s597 = scalar_lea.vmem [#allocation1], 72
    %598 = vst [vmem:[%s597] sm:%s3] %v596
    %s599 = smul.addr 2, 8
    %s600 = scalar_lea.vmem %s0, %s599
    %v601 = vld [vmem:[%s600] sm:%s3]
    %s602 = scalar_lea.vmem [#allocation1], 64
    %603 = vst [vmem:[%s602] sm:%s3] %v601
    %s604 = smul.addr 2, 7
    %s605 = scalar_lea.vmem %s0, %s604
    %v606 = vld [vmem:[%s605] sm:%s3]
    %s607 = scalar_lea.vmem [#allocation1], 56
    %608 = vst [vmem:[%s607] sm:%s3] %v606
    %s609 = smul.addr 2, 6
    %s610 = scalar_lea.vmem %s0, %s609
    %v611 = vld [vmem:[%s610] sm:%s3]
    %s612 = scalar_lea.vmem [#allocation1], 48
    %613 = vst [vmem:[%s612] sm:%s3] %v611
    %s614 = smul.addr 2, 5
    %s615 = scalar_lea.vmem %s0, %s614
    %v616 = vld [vmem:[%s615] sm:%s3]
    %s617 = scalar_lea.vmem [#allocation1], 40
    %618 = vst [vmem:[%s617] sm:%s3] %v616
    %s619 = smul.addr 2, 4
    %s620 = scalar_lea.vmem %s0, %s619
    %v621 = vld [vmem:[%s620] sm:%s3]
    %s622 = scalar_lea.vmem [#allocation1], 32
    %623 = vst [vmem:[%s622] sm:%s3] %v621
    %s624 = smul.addr 2, 3
    %s625 = scalar_lea.vmem %s0, %s624
    %v626 = vld [vmem:[%s625] sm:%s3]
    %s627 = scalar_lea.vmem [#allocation1], 24
    %628 = vst [vmem:[%s627] sm:%s3] %v626
    %s629 = smul.addr 2, 2
    %s630 = scalar_lea.vmem %s0, %s629
    %v631 = vld [vmem:[%s630] sm:%s3]
    %s632 = scalar_lea.vmem [#allocation1], 16
    %633 = vst [vmem:[%s632] sm:%s3] %v631
    %s634 = scalar_lea.vmem %s0, 2
    %v635 = vld [vmem:[%s634] sm:%s3]
    %s636 = scalar_lea.vmem [#allocation1], 8
    %637 = vst [vmem:[%s636] sm:%s3] %v635
    %v638 = vld [vmem:[%s0] sm:%s3]
    %639 = vst [vmem:[#allocation1] sm:%s3] %v638
    %v640 = vld [vmem:[#allocation1] sm:$0x1]
    %s641 = scalar_lea.vmem [#allocation1], 63
    %v642 = vld [vmem:[%s641] sm:$0x2]
    %vm643 = vcmask 1041409
    %v644 = vsel %vm643, %v642, %v640
    %s645 = scalar_lea.vmem [#allocation1], 126
    %v646 = vld [vmem:[%s645] sm:$0x4]
    %vm647 = vcmask 1042434
    %v648 = vsel %vm647, %v646, %v644
    %s649 = scalar_lea.vmem [#allocation1], 189
    %v650 = vld [vmem:[%s649] sm:$0x8]
    %vm651 = vcmask 1043459
    %v652 = vsel %vm651, %v650, %v648
    %s653 = scalar_lea.vmem [#allocation1], 252
    %v654 = vld [vmem:[%s653] sm:$0x10]
    %vm655 = vcmask 1044484
    %v656 = vsel %vm655, %v654, %v652
    %s657 = scalar_lea.vmem [#allocation1], 315
    %v658 = vld [vmem:[%s657] sm:$0x20]
    %vm659 = vcmask 1045509
    %v660 = vsel %vm659, %v658, %v656
    %s661 = scalar_lea.vmem [#allocation1], 378
    %v662 = vld [vmem:[%s661] sm:$0x40]
    %vm663 = vcmask 1046534
    %v664 = vsel %vm663, %v662, %v660
    %s665 = scalar_lea.vmem [#allocation1], 441
    %v666 = vld [vmem:[%s665] sm:$0x80]
    %vm667 = vcmask 1047559
    %v668 = vsel %vm667, %v666, %v664
    %vm669 = vcmask 64512
    %670 = vst.msk [vmem:[#allocation0] ss:$8 sm:$0x3] %vm669, %v668
    %s671 = scalar_lea.vmem [#allocation0], 4294967281
    %672 = vst.msk [vmem:[%s671] ss:$8 sm:$0xc] %vm669, %v668
    %s673 = scalar_lea.vmem [#allocation0], 4294967266
    %674 = vst.msk [vmem:[%s673] ss:$8 sm:$0x30] %vm669, %v668
    %s675 = scalar_lea.vmem [#allocation0], 4294967251
    %676 = vst.msk [vmem:[%s675] ss:$8 sm:$0xc0] %vm669, %v668
    %s677 = scalar_lea.vmem [#allocation1], 512
    %v678 = vld [vmem:[%s677] sm:$0x1]
    %s679 = scalar_lea.vmem [#allocation1], 575
    %v680 = vld [vmem:[%s679] sm:$0x2]
    %vm681 = vcmask 1041409
    %v682 = vsel %vm681, %v680, %v678
    %s683 = scalar_lea.vmem [#allocation1], 638
    %v684 = vld [vmem:[%s683] sm:$0x4]
    %vm685 = vcmask 1042434
    %v686 = vsel %vm685, %v684, %v682
    %s687 = scalar_lea.vmem [#allocation1], 701
    %v688 = vld [vmem:[%s687] sm:$0x8]
    %vm689 = vcmask 1043459
    %v690 = vsel %vm689, %v688, %v686
    %s691 = scalar_lea.vmem [#allocation1], 764
    %v692 = vld [vmem:[%s691] sm:$0x10]
    %vm693 = vcmask 1044484
    %v694 = vsel %vm693, %v692, %v690
    %s695 = scalar_lea.vmem [#allocation1], 827
    %v696 = vld [vmem:[%s695] sm:$0x20]
    %vm697 = vcmask 1045509
    %v698 = vsel %vm697, %v696, %v694
    %s699 = scalar_lea.vmem [#allocation1], 890
    %v700 = vld [vmem:[%s699] sm:$0x40]
    %vm701 = vcmask 1046534
    %v702 = vsel %vm701, %v700, %v698
    %s703 = scalar_lea.vmem [#allocation1], 953
    %v704 = vld [vmem:[%s703] sm:$0x80]
    %vm705 = vcmask 1047559
    %v706 = vsel %vm705, %v704, %v702
    %vm707 = vcmask 64512
    %s708 = scalar_lea.vmem [#allocation0], 16
    %709 = vst.msk [vmem:[%s708] ss:$8 sm:$0x3] %vm707, %v706
    %s710 = scalar_lea.vmem [#allocation0], 1
    %711 = vst.msk [vmem:[%s710] ss:$8 sm:$0xc] %vm707, %v706
    %s712 = scalar_lea.vmem [#allocation0], 4294967282
    %713 = vst.msk [vmem:[%s712] ss:$8 sm:$0x30] %vm707, %v706
    %s714 = scalar_lea.vmem [#allocation0], 4294967267
    %715 = vst.msk [vmem:[%s714] ss:$8 sm:$0xc0] %vm707, %v706
    %s716 = scalar_lea.vmem [#allocation1], 57
    %v717 = vld [vmem:[%s716] sm:$0x1]
    %s718 = scalar_lea.vmem [#allocation1], 184
    %v719 = vld [vmem:[%s718] sm:$0x2]
    %vm720 = vcmask 1041409
    %v721 = vsel %vm720, %v719, %v717
    %s722 = scalar_lea.vmem [#allocation1], 311
    %v723 = vld [vmem:[%s722] sm:$0x4]
    %vm724 = vcmask 1042434
    %v725 = vsel %vm724, %v723, %v721
    %s726 = scalar_lea.vmem [#allocation1], 438
    %v727 = vld [vmem:[%s726] sm:$0x8]
    %vm728 = vcmask 1043459
    %v729 = vsel %vm728, %v727, %v725
    %s730 = scalar_lea.vmem [#allocation1], 117
    %v731 = vld [vmem:[%s730] sm:$0x10]
    %vm732 = vcmask 1044484
    %v733 = vsel %vm732, %v731, %v729
    %s734 = scalar_lea.vmem [#allocation1], 244
    %v735 = vld [vmem:[%s734] sm:$0x20]
    %vm736 = vcmask 1045509
    %v737 = vsel %vm736, %v735, %v733
    %s738 = scalar_lea.vmem [#allocation1], 371
    %v739 = vld [vmem:[%s738] sm:$0x40]
    %vm740 = vcmask 1046534
    %v741 = vsel %vm740, %v739, %v737
    %s742 = scalar_lea.vmem [#allocation1], 498
    %v743 = vld [vmem:[%s742] sm:$0x80]
    %vm744 = vcmask 1047559
    %v745 = vsel %vm744, %v743, %v741
    %746 = vrot.lane.b32.xlu0 %v745, 120
    %v747 = vpop.permute.xlu0 %746
    %vm748 = vcmask 1048512
    %749 = vst.msk [vmem:[#allocation0] sm:$0xf] %vm748, %v747
    %s750 = scalar_lea.vmem [#allocation0], 4
    %751 = vst.msk [vmem:[%s750] sm:$0xf0] %vm748, %v747
    %s752 = scalar_lea.vmem [#allocation1], 569
    %v753 = vld [vmem:[%s752] sm:$0x1]
    %s754 = scalar_lea.vmem [#allocation1], 696
    %v755 = vld [vmem:[%s754] sm:$0x2]
    %vm756 = vcmask 1041409
    %v757 = vsel %vm756, %v755, %v753
    %s758 = scalar_lea.vmem [#allocation1], 823
    %v759 = vld [vmem:[%s758] sm:$0x4]
    %vm760 = vcmask 1042434
    %v761 = vsel %vm760, %v759, %v757
    %s762 = scalar_lea.vmem [#allocation1], 950
    %v763 = vld [vmem:[%s762] sm:$0x8]
    %vm764 = vcmask 1043459
    %v765 = vsel %vm764, %v763, %v761
    %s766 = scalar_lea.vmem [#allocation1], 629
    %v767 = vld [vmem:[%s766] sm:$0x10]
    %vm768 = vcmask 1044484
    %v769 = vsel %vm768, %v767, %v765
    %s770 = scalar_lea.vmem [#allocation1], 756
    %v771 = vld [vmem:[%s770] sm:$0x20]
    %vm772 = vcmask 1045509
    %v773 = vsel %vm772, %v771, %v769
    %s774 = scalar_lea.vmem [#allocation1], 883
    %v775 = vld [vmem:[%s774] sm:$0x40]
    %vm776 = vcmask 1046534
    %v777 = vsel %vm776, %v775, %v773
    %s778 = scalar_lea.vmem [#allocation1], 1010
    %v779 = vld [vmem:[%s778] sm:$0x80]
    %vm780 = vcmask 1047559
    %v781 = vsel %vm780, %v779, %v777
    %782 = vrot.lane.b32.xlu0 %v781, 120
    %v783 = vpop.permute.xlu0 %782
    %vm784 = vcmask 1048512
    %s785 = scalar_lea.vmem [#allocation0], 16
    %786 = vst.msk [vmem:[%s785] sm:$0xf] %vm784, %v783
    %s787 = scalar_lea.vmem [#allocation0], 20
    %788 = vst.msk [vmem:[%s787] sm:$0xf0] %vm784, %v783
    %s789 = scalar_lea.vmem [#allocation1], 56
    %v790 = vld [vmem:[%s789] sm:$0x1]
    %s791 = scalar_lea.vmem [#allocation1], 183
    %v792 = vld [vmem:[%s791] sm:$0x2]
    %vm793 = vcmask 1041409
    %v794 = vsel %vm793, %v792, %v790
    %s795 = scalar_lea.vmem [#allocation1], 310
    %v796 = vld [vmem:[%s795] sm:$0x4]
    %vm797 = vcmask 1042434
    %v798 = vsel %vm797, %v796, %v794
    %s799 = scalar_lea.vmem [#allocation1], 437
    %v800 = vld [vmem:[%s799] sm:$0x8]
    %vm801 = vcmask 1043459
    %v802 = vsel %vm801, %v800, %v798
    %s803 = scalar_lea.vmem [#allocation1], 116
    %v804 = vld [vmem:[%s803] sm:$0x10]
    %vm805 = vcmask 1044484
    %v806 = vsel %vm805, %v804, %v802
    %s807 = scalar_lea.vmem [#allocation1], 243
    %v808 = vld [vmem:[%s807] sm:$0x20]
    %vm809 = vcmask 1045509
    %v810 = vsel %vm809, %v808, %v806
    %s811 = scalar_lea.vmem [#allocation1], 370
    %v812 = vld [vmem:[%s811] sm:$0x40]
    %vm813 = vcmask 1046534
    %v814 = vsel %vm813, %v812, %v810
    %s815 = scalar_lea.vmem [#allocation1], 497
    %v816 = vld [vmem:[%s815] sm:$0x80]
    %vm817 = vcmask 1047559
    %v818 = vsel %vm817, %v816, %v814
    %819 = vrot.lane.b32.xlu0 %v818, 112
    %v820 = vpop.permute.xlu0 %819
    %vm821 = vcmask 982912
    %822 = vst.msk [vmem:[#allocation0] sm:$0xf] %vm821, %v820
    %s823 = scalar_lea.vmem [#allocation0], 4
    %824 = vst.msk [vmem:[%s823] sm:$0xf0] %vm821, %v820
    %s825 = scalar_lea.vmem [#allocation1], 568
    %v826 = vld [vmem:[%s825] sm:$0x1]
    %s827 = scalar_lea.vmem [#allocation1], 695
    %v828 = vld [vmem:[%s827] sm:$0x2]
    %vm829 = vcmask 1041409
    %v830 = vsel %vm829, %v828, %v826
    %s831 = scalar_lea.vmem [#allocation1], 822
    %v832 = vld [vmem:[%s831] sm:$0x4]
    %vm833 = vcmask 1042434
    %v834 = vsel %vm833, %v832, %v830
    %s835 = scalar_lea.vmem [#allocation1], 949
    %v836 = vld [vmem:[%s835] sm:$0x8]
    %vm837 = vcmask 1043459
    %v838 = vsel %vm837, %v836, %v834
    %s839 = scalar_lea.vmem [#allocation1], 628
    %v840 = vld [vmem:[%s839] sm:$0x10]
    %vm841 = vcmask 1044484
    %v842 = vsel %vm841, %v840, %v838
    %s843 = scalar_lea.vmem [#allocation1], 755
    %v844 = vld [vmem:[%s843] sm:$0x20]
    %vm845 = vcmask 1045509
    %v846 = vsel %vm845, %v844, %v842
    %s847 = scalar_lea.vmem [#allocation1], 882
    %v848 = vld [vmem:[%s847] sm:$0x40]
    %vm849 = vcmask 1046534
    %v850 = vsel %vm849, %v848, %v846
    %s851 = scalar_lea.vmem [#allocation1], 1009
    %v852 = vld [vmem:[%s851] sm:$0x80]
    %vm853 = vcmask 1047559
    %v854 = vsel %vm853, %v852, %v850
    %855 = vrot.lane.b32.xlu0 %v854, 112
    %v856 = vpop.permute.xlu0 %855
    %vm857 = vcmask 982912
    %s858 = scalar_lea.vmem [#allocation0], 16
    %859 = vst.msk [vmem:[%s858] sm:$0xf] %vm857, %v856
    %s860 = scalar_lea.vmem [#allocation0], 20
    %861 = vst.msk [vmem:[%s860] sm:$0xf0] %vm857, %v856
    %s862 = scalar_lea.vmem [#allocation1], 49
    %v863 = vld [vmem:[%s862] sm:$0x1]
    %s864 = scalar_lea.vmem [#allocation1], 176
    %v865 = vld [vmem:[%s864] sm:$0x2]
    %vm866 = vcmask 1041409
    %v867 = vsel %vm866, %v865, %v863
    %s868 = scalar_lea.vmem [#allocation1], 303
    %v869 = vld [vmem:[%s868] sm:$0x4]
    %vm870 = vcmask 1042434
    %v871 = vsel %vm870, %v869, %v867
    %s872 = scalar_lea.vmem [#allocation1], 430
    %v873 = vld [vmem:[%s872] sm:$0x8]
    %vm874 = vcmask 1043459
    %v875 = vsel %vm874, %v873, %v871
    %s876 = scalar_lea.vmem [#allocation1], 109
    %v877 = vld [vmem:[%s876] sm:$0x10]
    %vm878 = vcmask 1044484
    %v879 = vsel %vm878, %v877, %v875
    %s880 = scalar_lea.vmem [#allocation1], 236
    %v881 = vld [vmem:[%s880] sm:$0x20]
    %vm882 = vcmask 1045509
    %v883 = vsel %vm882, %v881, %v879
    %s884 = scalar_lea.vmem [#allocation1], 363
    %v885 = vld [vmem:[%s884] sm:$0x40]
    %vm886 = vcmask 1046534
    %v887 = vsel %vm886, %v885, %v883
    %s888 = scalar_lea.vmem [#allocation1], 490
    %v889 = vld [vmem:[%s888] sm:$0x80]
    %vm890 = vcmask 1047559
    %v891 = vsel %vm890, %v889, %v887
    %892 = vrot.lane.b32.xlu0 %v891, 104
    %v893 = vpop.permute.xlu0 %892
    %vm894 = vcmask 917312
    %895 = vst.msk [vmem:[#allocation0] sm:$0xf] %vm894, %v893
    %s896 = scalar_lea.vmem [#allocation0], 4
    %897 = vst.msk [vmem:[%s896] sm:$0xf0] %vm894, %v893
    %s898 = scalar_lea.vmem [#allocation1], 561
    %v899 = vld [vmem:[%s898] sm:$0x1]
    %s900 = scalar_lea.vmem [#allocation1], 688
    %v901 = vld [vmem:[%s900] sm:$0x2]
    %vm902 = vcmask 1041409
    %v903 = vsel %vm902, %v901, %v899
    %s904 = scalar_lea.vmem [#allocation1], 815
    %v905 = vld [vmem:[%s904] sm:$0x4]
    %vm906 = vcmask 1042434
    %v907 = vsel %vm906, %v905, %v903
    %s908 = scalar_lea.vmem [#allocation1], 942
    %v909 = vld [vmem:[%s908] sm:$0x8]
    %vm910 = vcmask 1043459
    %v911 = vsel %vm910, %v909, %v907
    %s912 = scalar_lea.vmem [#allocation1], 621
    %v913 = vld [vmem:[%s912] sm:$0x10]
    %vm914 = vcmask 1044484
    %v915 = vsel %vm914, %v913, %v911
    %s916 = scalar_lea.vmem [#allocation1], 748
    %v917 = vld [vmem:[%s916] sm:$0x20]
    %vm918 = vcmask 1045509
    %v919 = vsel %vm918, %v917, %v915
    %s920 = scalar_lea.vmem [#allocation1], 875
    %v921 = vld [vmem:[%s920] sm:$0x40]
    %vm922 = vcmask 1046534
    %v923 = vsel %vm922, %v921, %v919
    %s924 = scalar_lea.vmem [#allocation1], 1002
    %v925 = vld [vmem:[%s924] sm:$0x80]
    %vm926 = vcmask 1047559
    %v927 = vsel %vm926, %v925, %v923
    %928 = vrot.lane.b32.xlu0 %v927, 104
    %v929 = vpop.permute.xlu0 %928
    %vm930 = vcmask 917312
    %s931 = scalar_lea.vmem [#allocation0], 16
    %932 = vst.msk [vmem:[%s931] sm:$0xf] %vm930, %v929
    %s933 = scalar_lea.vmem [#allocation0], 20
    %934 = vst.msk [vmem:[%s933] sm:$0xf0] %vm930, %v929
    %s935 = scalar_lea.vmem [#allocation1], 48
    %v936 = vld [vmem:[%s935] sm:$0x1]
    %s937 = scalar_lea.vmem [#allocation1], 175
    %v938 = vld [vmem:[%s937] sm:$0x2]
    %vm939 = vcmask 1041409
    %v940 = vsel %vm939, %v938, %v936
    %s941 = scalar_lea.vmem [#allocation1], 302
    %v942 = vld [vmem:[%s941] sm:$0x4]
    %vm943 = vcmask 1042434
    %v944 = vsel %vm943, %v942, %v940
    %s945 = scalar_lea.vmem [#allocation1], 429
    %v946 = vld [vmem:[%s945] sm:$0x8]
    %vm947 = vcmask 1043459
    %v948 = vsel %vm947, %v946, %v944
    %s949 = scalar_lea.vmem [#allocation1], 108
    %v950 = vld [vmem:[%s949] sm:$0x10]
    %vm951 = vcmask 1044484
    %v952 = vsel %vm951, %v950, %v948
    %s953 = scalar_lea.vmem [#allocation1], 235
    %v954 = vld [vmem:[%s953] sm:$0x20]
    %vm955 = vcmask 1045509
    %v956 = vsel %vm955, %v954, %v952
    %s957 = scalar_lea.vmem [#allocation1], 362
    %v958 = vld [vmem:[%s957] sm:$0x40]
    %vm959 = vcmask 1046534
    %v960 = vsel %vm959, %v958, %v956
    %s961 = scalar_lea.vmem [#allocation1], 489
    %v962 = vld [vmem:[%s961] sm:$0x80]
    %vm963 = vcmask 1047559
    %v964 = vsel %vm963, %v962, %v960
    %965 = vrot.lane.b32.xlu0 %v964, 96
    %v966 = vpop.permute.xlu0 %965
    %vm967 = vcmask 851712
    %968 = vst.msk [vmem:[#allocation0] sm:$0xf] %vm967, %v966
    %s969 = scalar_lea.vmem [#allocation0], 4
    %970 = vst.msk [vmem:[%s969] sm:$0xf0] %vm967, %v966
    %s971 = scalar_lea.vmem [#allocation1], 560
    %v972 = vld [vmem:[%s971] sm:$0x1]
    %s973 = scalar_lea.vmem [#allocation1], 687
    %v974 = vld [vmem:[%s973] sm:$0x2]
    %vm975 = vcmask 1041409
    %v976 = vsel %vm975, %v974, %v972
    %s977 = scalar_lea.vmem [#allocation1], 814
    %v978 = vld [vmem:[%s977] sm:$0x4]
    %vm979 = vcmask 1042434
    %v980 = vsel %vm979, %v978, %v976
    %s981 = scalar_lea.vmem [#allocation1], 941
    %v982 = vld [vmem:[%s981] sm:$0x8]
    %vm983 = vcmask 1043459
    %v984 = vsel %vm983, %v982, %v980
    %s985 = scalar_lea.vmem [#allocation1], 620
    %v986 = vld [vmem:[%s985] sm:$0x10]
    %vm987 = vcmask 1044484
    %v988 = vsel %vm987, %v986, %v984
    %s989 = scalar_lea.vmem [#allocation1], 747
    %v990 = vld [vmem:[%s989] sm:$0x20]
    %vm991 = vcmask 1045509
    %v992 = vsel %vm991, %v990, %v988
    %s993 = scalar_lea.vmem [#allocation1], 874
    %v994 = vld [vmem:[%s993] sm:$0x40]
    %vm995 = vcmask 1046534
    %v996 = vsel %vm995, %v994, %v992
    %s997 = scalar_lea.vmem [#allocation1], 1001
    %v998 = vld [vmem:[%s997] sm:$0x80]
    %vm999 = vcmask 1047559
    %v1000 = vsel %vm999, %v998, %v996
    %1001 = vrot.lane.b32.xlu0 %v1000, 96
    %v1002 = vpop.permute.xlu0 %1001
    %vm1003 = vcmask 851712
    %s1004 = scalar_lea.vmem [#allocation0], 16
    %1005 = vst.msk [vmem:[%s1004] sm:$0xf] %vm1003, %v1002
    %s1006 = scalar_lea.vmem [#allocation0], 20
    %1007 = vst.msk [vmem:[%s1006] sm:$0xf0] %vm1003, %v1002
    %s1008 = scalar_lea.vmem [#allocation1], 41
    %v1009 = vld [vmem:[%s1008] sm:$0x1]
    %s1010 = scalar_lea.vmem [#allocation1], 168
    %v1011 = vld [vmem:[%s1010] sm:$0x2]
    %vm1012 = vcmask 1041409
    %v1013 = vsel %vm1012, %v1011, %v1009
    %s1014 = scalar_lea.vmem [#allocation1], 295
    %v1015 = vld [vmem:[%s1014] sm:$0x4]
    %vm1016 = vcmask 1042434
    %v1017 = vsel %vm1016, %v1015, %v1013
    %s1018 = scalar_lea.vmem [#allocation1], 422
    %v1019 = vld [vmem:[%s1018] sm:$0x8]
    %vm1020 = vcmask 1043459
    %v1021 = vsel %vm1020, %v1019, %v1017
    %s1022 = scalar_lea.vmem [#allocation1], 101
    %v1023 = vld [vmem:[%s1022] sm:$0x10]
    %vm1024 = vcmask 1044484
    %v1025 = vsel %vm1024, %v1023, %v1021
    %s1026 = scalar_lea.vmem [#allocation1], 228
    %v1027 = vld [vmem:[%s1026] sm:$0x20]
    %vm1028 = vcmask 1045509
    %v1029 = vsel %vm1028, %v1027, %v1025
    %s1030 = scalar_lea.vmem [#allocation1], 355
    %v1031 = vld [vmem:[%s1030] sm:$0x40]
    %vm1032 = vcmask 1046534
    %v1033 = vsel %vm1032, %v1031, %v1029
    %s1034 = scalar_lea.vmem [#allocation1], 482
    %v1035 = vld [vmem:[%s1034] sm:$0x80]
    %vm1036 = vcmask 1047559
    %v1037 = vsel %vm1036, %v1035, %v1033
    %1038 = vrot.lane.b32.xlu0 %v1037, 88
    %v1039 = vpop.permute.xlu0 %1038
    %vm1040 = vcmask 786112
    %1041 = vst.msk [vmem:[#allocation0] sm:$0xf] %vm1040, %v1039
    %s1042 = scalar_lea.vmem [#allocation0], 4
    %1043 = vst.msk [vmem:[%s1042] sm:$0xf0] %vm1040, %v1039
    %s1044 = scalar_lea.vmem [#allocation1], 553
    %v1045 = vld [vmem:[%s1044] sm:$0x1]
    %s1046 = scalar_lea.vmem [#allocation1], 680
    %v1047 = vld [vmem:[%s1046] sm:$0x2]
    %vm1048 = vcmask 1041409
    %v1049 = vsel %vm1048, %v1047, %v1045
    %s1050 = scalar_lea.vmem [#allocation1], 807
    %v1051 = vld [vmem:[%s1050] sm:$0x4]
    %vm1052 = vcmask 1042434
    %v1053 = vsel %vm1052, %v1051, %v1049
    %s1054 = scalar_lea.vmem [#allocation1], 934
    %v1055 = vld [vmem:[%s1054] sm:$0x8]
    %vm1056 = vcmask 1043459
    %v1057 = vsel %vm1056, %v1055, %v1053
    %s1058 = scalar_lea.vmem [#allocation1], 613
    %v1059 = vld [vmem:[%s1058] sm:$0x10]
    %vm1060 = vcmask 1044484
    %v1061 = vsel %vm1060, %v1059, %v1057
    %s1062 = scalar_lea.vmem [#allocation1], 740
    %v1063 = vld [vmem:[%s1062] sm:$0x20]
    %vm1064 = vcmask 1045509
    %v1065 = vsel %vm1064, %v1063, %v1061
    %s1066 = scalar_lea.vmem [#allocation1], 867
    %v1067 = vld [vmem:[%s1066] sm:$0x40]
    %vm1068 = vcmask 1046534
    %v1069 = vsel %vm1068, %v1067, %v1065
    %s1070 = scalar_lea.vmem [#allocation1], 994
    %v1071 = vld [vmem:[%s1070] sm:$0x80]
    %vm1072 = vcmask 1047559
    %v1073 = vsel %vm1072, %v1071, %v1069
    %1074 = vrot.lane.b32.xlu0 %v1073, 88
    %v1075 = vpop.permute.xlu0 %1074
    %vm1076 = vcmask 786112
    %s1077 = scalar_lea.vmem [#allocation0], 16
    %1078 = vst.msk [vmem:[%s1077] sm:$0xf] %vm1076, %v1075
    %s1079 = scalar_lea.vmem [#allocation0], 20
    %1080 = vst.msk [vmem:[%s1079] sm:$0xf0] %vm1076, %v1075
    %s1081 = scalar_lea.vmem [#allocation1], 40
    %v1082 = vld [vmem:[%s1081] sm:$0x1]
    %s1083 = scalar_lea.vmem [#allocation1], 167
    %v1084 = vld [vmem:[%s1083] sm:$0x2]
    %vm1085 = vcmask 1041409
    %v1086 = vsel %vm1085, %v1084, %v1082
    %s1087 = scalar_lea.vmem [#allocation1], 294
    %v1088 = vld [vmem:[%s1087] sm:$0x4]
    %vm1089 = vcmask 1042434
    %v1090 = vsel %vm1089, %v1088, %v1086
    %s1091 = scalar_lea.vmem [#allocation1], 421
    %v1092 = vld [vmem:[%s1091] sm:$0x8]
    %vm1093 = vcmask 1043459
    %v1094 = vsel %vm1093, %v1092, %v1090
    %s1095 = scalar_lea.vmem [#allocation1], 100
    %v1096 = vld [vmem:[%s1095] sm:$0x10]
    %vm1097 = vcmask 1044484
    %v1098 = vsel %vm1097, %v1096, %v1094
    %s1099 = scalar_lea.vmem [#allocation1], 227
    %v1100 = vld [vmem:[%s1099] sm:$0x20]
    %vm1101 = vcmask 1045509
    %v1102 = vsel %vm1101, %v1100, %v1098
    %s1103 = scalar_lea.vmem [#allocation1], 354
    %v1104 = vld [vmem:[%s1103] sm:$0x40]
    %vm1105 = vcmask 1046534
    %v1106 = vsel %vm1105, %v1104, %v1102
    %s1107 = scalar_lea.vmem [#allocation1], 481
    %v1108 = vld [vmem:[%s1107] sm:$0x80]
    %vm1109 = vcmask 1047559
    %v1110 = vsel %vm1109, %v1108, %v1106
    %1111 = vrot.lane.b32.xlu0 %v1110, 80
    %v1112 = vpop.permute.xlu0 %1111
    %vm1113 = vcmask 720512
    %1114 = vst.msk [vmem:[#allocation0] sm:$0xf] %vm1113, %v1112
    %s1115 = scalar_lea.vmem [#allocation0], 4
    %1116 = vst.msk [vmem:[%s1115] sm:$0xf0] %vm1113, %v1112
    %s1117 = scalar_lea.vmem [#allocation1], 552
    %v1118 = vld [vmem:[%s1117] sm:$0x1]
    %s1119 = scalar_lea.vmem [#allocation1], 679
    %v1120 = vld [vmem:[%s1119] sm:$0x2]
    %vm1121 = vcmask 1041409
    %v1122 = vsel %vm1121, %v1120, %v1118
    %s1123 = scalar_lea.vmem [#allocation1], 806
    %v1124 = vld [vmem:[%s1123] sm:$0x4]
    %vm1125 = vcmask 1042434
    %v1126 = vsel %vm1125, %v1124, %v1122
    %s1127 = scalar_lea.vmem [#allocation1], 933
    %v1128 = vld [vmem:[%s1127] sm:$0x8]
    %vm1129 = vcmask 1043459
    %v1130 = vsel %vm1129, %v1128, %v1126
    %s1131 = scalar_lea.vmem [#allocation1], 612
    %v1132 = vld [vmem:[%s1131] sm:$0x10]
    %vm1133 = vcmask 1044484
    %v1134 = vsel %vm1133, %v1132, %v1130
    %s1135 = scalar_lea.vmem [#allocation1], 739
    %v1136 = vld [vmem:[%s1135] sm:$0x20]
    %vm1137 = vcmask 1045509
    %v1138 = vsel %vm1137, %v1136, %v1134
    %s1139 = scalar_lea.vmem [#allocation1], 866
    %v1140 = vld [vmem:[%s1139] sm:$0x40]
    %vm1141 = vcmask 1046534
    %v1142 = vsel %vm1141, %v1140, %v1138
    %s1143 = scalar_lea.vmem [#allocation1], 993
    %v1144 = vld [vmem:[%s1143] sm:$0x80]
    %vm1145 = vcmask 1047559
    %v1146 = vsel %vm1145, %v1144, %v1142
    %1147 = vrot.lane.b32.xlu0 %v1146, 80
    %v1148 = vpop.permute.xlu0 %1147
    %vm1149 = vcmask 720512
    %s1150 = scalar_lea.vmem [#allocation0], 16
    %1151 = vst.msk [vmem:[%s1150] sm:$0xf] %vm1149, %v1148
    %s1152 = scalar_lea.vmem [#allocation0], 20
    %1153 = vst.msk [vmem:[%s1152] sm:$0xf0] %vm1149, %v1148
    %s1154 = scalar_lea.vmem [#allocation1], 33
    %v1155 = vld [vmem:[%s1154] sm:$0x1]
    %s1156 = scalar_lea.vmem [#allocation1], 160
    %v1157 = vld [vmem:[%s1156] sm:$0x2]
    %vm1158 = vcmask 1041409
    %v1159 = vsel %vm1158, %v1157, %v1155
    %s1160 = scalar_lea.vmem [#allocation1], 287
    %v1161 = vld [vmem:[%s1160] sm:$0x4]
    %vm1162 = vcmask 1042434
    %v1163 = vsel %vm1162, %v1161, %v1159
    %s1164 = scalar_lea.vmem [#allocation1], 414
    %v1165 = vld [vmem:[%s1164] sm:$0x8]
    %vm1166 = vcmask 1043459
    %v1167 = vsel %vm1166, %v1165, %v1163
    %s1168 = scalar_lea.vmem [#allocation1], 93
    %v1169 = vld [vmem:[%s1168] sm:$0x10]
    %vm1170 = vcmask 1044484
    %v1171 = vsel %vm1170, %v1169, %v1167
    %s1172 = scalar_lea.vmem [#allocation1], 220
    %v1173 = vld [vmem:[%s1172] sm:$0x20]
    %vm1174 = vcmask 1045509
    %v1175 = vsel %vm1174, %v1173, %v1171
    %s1176 = scalar_lea.vmem [#allocation1], 347
    %v1177 = vld [vmem:[%s1176] sm:$0x40]
    %vm1178 = vcmask 1046534
    %v1179 = vsel %vm1178, %v1177, %v1175
    %s1180 = scalar_lea.vmem [#allocation1], 474
    %v1181 = vld [vmem:[%s1180] sm:$0x80]
    %vm1182 = vcmask 1047559
    %v1183 = vsel %vm1182, %v1181, %v1179
    %1184 = vrot.lane.b32.xlu0 %v1183, 72
    %v1185 = vpop.permute.xlu0 %1184
    %vm1186 = vcmask 654912
    %1187 = vst.msk [vmem:[#allocation0] sm:$0xf] %vm1186, %v1185
    %s1188 = scalar_lea.vmem [#allocation0], 4
    %1189 = vst.msk [vmem:[%s1188] sm:$0xf0] %vm1186, %v1185
    %s1190 = scalar_lea.vmem [#allocation1], 545
    %v1191 = vld [vmem:[%s1190] sm:$0x1]
    %s1192 = scalar_lea.vmem [#allocation1], 672
    %v1193 = vld [vmem:[%s1192] sm:$0x2]
    %vm1194 = vcmask 1041409
    %v1195 = vsel %vm1194, %v1193, %v1191
    %s1196 = scalar_lea.vmem [#allocation1], 799
    %v1197 = vld [vmem:[%s1196] sm:$0x4]
    %vm1198 = vcmask 1042434
    %v1199 = vsel %vm1198, %v1197, %v1195
    %s1200 = scalar_lea.vmem [#allocation1], 926
    %v1201 = vld [vmem:[%s1200] sm:$0x8]
    %vm1202 = vcmask 1043459
    %v1203 = vsel %vm1202, %v1201, %v1199
    %s1204 = scalar_lea.vmem [#allocation1], 605
    %v1205 = vld [vmem:[%s1204] sm:$0x10]
    %vm1206 = vcmask 1044484
    %v1207 = vsel %vm1206, %v1205, %v1203
    %s1208 = scalar_lea.vmem [#allocation1], 732
    %v1209 = vld [vmem:[%s1208] sm:$0x20]
    %vm1210 = vcmask 1045509
    %v1211 = vsel %vm1210, %v1209, %v1207
    %s1212 = scalar_lea.vmem [#allocation1], 859
    %v1213 = vld [vmem:[%s1212] sm:$0x40]
    %vm1214 = vcmask 1046534
    %v1215 = vsel %vm1214, %v1213, %v1211
    %s1216 = scalar_lea.vmem [#allocation1], 986
    %v1217 = vld [vmem:[%s1216] sm:$0x80]
    %vm1218 = vcmask 1047559
    %v1219 = vsel %vm1218, %v1217, %v1215
    %1220 = vrot.lane.b32.xlu0 %v1219, 72
    %v1221 = vpop.permute.xlu0 %1220
    %vm1222 = vcmask 654912
    %s1223 = scalar_lea.vmem [#allocation0], 16
    %1224 = vst.msk [vmem:[%s1223] sm:$0xf] %vm1222, %v1221
    %s1225 = scalar_lea.vmem [#allocation0], 20
    %1226 = vst.msk [vmem:[%s1225] sm:$0xf0] %vm1222, %v1221
    %s1227 = scalar_lea.vmem [#allocation1], 32
    %v1228 = vld [vmem:[%s1227] sm:$0x1]
    %s1229 = scalar_lea.vmem [#allocation1], 159
    %v1230 = vld [vmem:[%s1229] sm:$0x2]
    %vm1231 = vcmask 1041409
    %v1232 = vsel %vm1231, %v1230, %v1228
    %s1233 = scalar_lea.vmem [#allocation1], 286
    %v1234 = vld [vmem:[%s1233] sm:$0x4]
    %vm1235 = vcmask 1042434
    %v1236 = vsel %vm1235, %v1234, %v1232
    %s1237 = scalar_lea.vmem [#allocation1], 413
    %v1238 = vld [vmem:[%s1237] sm:$0x8]
    %vm1239 = vcmask 1043459
    %v1240 = vsel %vm1239, %v1238, %v1236
    %s1241 = scalar_lea.vmem [#allocation1], 92
    %v1242 = vld [vmem:[%s1241] sm:$0x10]
    %vm1243 = vcmask 1044484
    %v1244 = vsel %vm1243, %v1242, %v1240
    %s1245 = scalar_lea.vmem [#allocation1], 219
    %v1246 = vld [vmem:[%s1245] sm:$0x20]
    %vm1247 = vcmask 1045509
    %v1248 = vsel %vm1247, %v1246, %v1244
    %s1249 = scalar_lea.vmem [#allocation1], 346
    %v1250 = vld [vmem:[%s1249] sm:$0x40]
    %vm1251 = vcmask 1046534
    %v1252 = vsel %vm1251, %v1250, %v1248
    %s1253 = scalar_lea.vmem [#allocation1], 473
    %v1254 = vld [vmem:[%s1253] sm:$0x80]
    %vm1255 = vcmask 1047559
    %v1256 = vsel %vm1255, %v1254, %v1252
    %1257 = vrot.lane.b32.xlu0 %v1256, 64
    %v1258 = vpop.permute.xlu0 %1257
    %vm1259 = vcmask 589312
    %1260 = vst.msk [vmem:[#allocation0] sm:$0xf] %vm1259, %v1258
    %s1261 = scalar_lea.vmem [#allocation0], 4
    %1262 = vst.msk [vmem:[%s1261] sm:$0xf0] %vm1259, %v1258
    %s1263 = scalar_lea.vmem [#allocation1], 544
    %v1264 = vld [vmem:[%s1263] sm:$0x1]
    %s1265 = scalar_lea.vmem [#allocation1], 671
    %v1266 = vld [vmem:[%s1265] sm:$0x2]
    %vm1267 = vcmask 1041409
    %v1268 = vsel %vm1267, %v1266, %v1264
    %s1269 = scalar_lea.vmem [#allocation1], 798
    %v1270 = vld [vmem:[%s1269] sm:$0x4]
    %vm1271 = vcmask 1042434
    %v1272 = vsel %vm1271, %v1270, %v1268
    %s1273 = scalar_lea.vmem [#allocation1], 925
    %v1274 = vld [vmem:[%s1273] sm:$0x8]
    %vm1275 = vcmask 1043459
    %v1276 = vsel %vm1275, %v1274, %v1272
    %s1277 = scalar_lea.vmem [#allocation1], 604
    %v1278 = vld [vmem:[%s1277] sm:$0x10]
    %vm1279 = vcmask 1044484
    %v1280 = vsel %vm1279, %v1278, %v1276
    %s1281 = scalar_lea.vmem [#allocation1], 731
    %v1282 = vld [vmem:[%s1281] sm:$0x20]
    %vm1283 = vcmask 1045509
    %v1284 = vsel %vm1283, %v1282, %v1280
    %s1285 = scalar_lea.vmem [#allocation1], 858
    %v1286 = vld [vmem:[%s1285] sm:$0x40]
    %vm1287 = vcmask 1046534
    %v1288 = vsel %vm1287, %v1286, %v1284
    %s1289 = scalar_lea.vmem [#allocation1], 985
    %v1290 = vld [vmem:[%s1289] sm:$0x80]
    %vm1291 = vcmask 1047559
    %v1292 = vsel %vm1291, %v1290, %v1288
    %1293 = vrot.lane.b32.xlu0 %v1292, 64
    %v1294 = vpop.permute.xlu0 %1293
    %vm1295 = vcmask 589312
    %s1296 = scalar_lea.vmem [#allocation0], 16
    %1297 = vst.msk [vmem:[%s1296] sm:$0xf] %vm1295, %v1294
    %s1298 = scalar_lea.vmem [#allocation0], 20
    %1299 = vst.msk [vmem:[%s1298] sm:$0xf0] %vm1295, %v1294
    %s1300 = scalar_lea.vmem [#allocation1], 25
    %v1301 = vld [vmem:[%s1300] sm:$0x1]
    %s1302 = scalar_lea.vmem [#allocation1], 152
    %v1303 = vld [vmem:[%s1302] sm:$0x2]
    %vm1304 = vcmask 1041409
    %v1305 = vsel %vm1304, %v1303, %v1301
    %s1306 = scalar_lea.vmem [#allocation1], 279
    %v1307 = vld [vmem:[%s1306] sm:$0x4]
    %vm1308 = vcmask 1042434
    %v1309 = vsel %vm1308, %v1307, %v1305
    %s1310 = scalar_lea.vmem [#allocation1], 406
    %v1311 = vld [vmem:[%s1310] sm:$0x8]
    %vm1312 = vcmask 1043459
    %v1313 = vsel %vm1312, %v1311, %v1309
    %s1314 = scalar_lea.vmem [#allocation1], 85
    %v1315 = vld [vmem:[%s1314] sm:$0x10]
    %vm1316 = vcmask 1044484
    %v1317 = vsel %vm1316, %v1315, %v1313
    %s1318 = scalar_lea.vmem [#allocation1], 212
    %v1319 = vld [vmem:[%s1318] sm:$0x20]
    %vm1320 = vcmask 1045509
    %v1321 = vsel %vm1320, %v1319, %v1317
    %s1322 = scalar_lea.vmem [#allocation1], 339
    %v1323 = vld [vmem:[%s1322] sm:$0x40]
    %vm1324 = vcmask 1046534
    %v1325 = vsel %vm1324, %v1323, %v1321
    %s1326 = scalar_lea.vmem [#allocation1], 466
    %v1327 = vld [vmem:[%s1326] sm:$0x80]
    %vm1328 = vcmask 1047559
    %v1329 = vsel %vm1328, %v1327, %v1325
    %1330 = vrot.lane.b32.xlu0 %v1329, 56
    %v1331 = vpop.permute.xlu0 %1330
    %vm1332 = vcmask 523712
    %1333 = vst.msk [vmem:[#allocation0] sm:$0xf] %vm1332, %v1331
    %s1334 = scalar_lea.vmem [#allocation0], 4
    %1335 = vst.msk [vmem:[%s1334] sm:$0xf0] %vm1332, %v1331
    %s1336 = scalar_lea.vmem [#allocation1], 537
    %v1337 = vld [vmem:[%s1336] sm:$0x1]
    %s1338 = scalar_lea.vmem [#allocation1], 664
    %v1339 = vld [vmem:[%s1338] sm:$0x2]
    %vm1340 = vcmask 1041409
    %v1341 = vsel %vm1340, %v1339, %v1337
    %s1342 = scalar_lea.vmem [#allocation1], 791
    %v1343 = vld [vmem:[%s1342] sm:$0x4]
    %vm1344 = vcmask 1042434
    %v1345 = vsel %vm1344, %v1343, %v1341
    %s1346 = scalar_lea.vmem [#allocation1], 918
    %v1347 = vld [vmem:[%s1346] sm:$0x8]
    %vm1348 = vcmask 1043459
    %v1349 = vsel %vm1348, %v1347, %v1345
    %s1350 = scalar_lea.vmem [#allocation1], 597
    %v1351 = vld [vmem:[%s1350] sm:$0x10]
    %vm1352 = vcmask 1044484
    %v1353 = vsel %vm1352, %v1351, %v1349
    %s1354 = scalar_lea.vmem [#allocation1], 724
    %v1355 = vld [vmem:[%s1354] sm:$0x20]
    %vm1356 = vcmask 1045509
    %v1357 = vsel %vm1356, %v1355, %v1353
    %s1358 = scalar_lea.vmem [#allocation1], 851
    %v1359 = vld [vmem:[%s1358] sm:$0x40]
    %vm1360 = vcmask 1046534
    %v1361 = vsel %vm1360, %v1359, %v1357
    %s1362 = scalar_lea.vmem [#allocation1], 978
    %v1363 = vld [vmem:[%s1362] sm:$0x80]
    %vm1364 = vcmask 1047559
    %v1365 = vsel %vm1364, %v1363, %v1361
    %1366 = vrot.lane.b32.xlu0 %v1365, 56
    %v1367 = vpop.permute.xlu0 %1366
    %vm1368 = vcmask 523712
    %s1369 = scalar_lea.vmem [#allocation0], 16
    %1370 = vst.msk [vmem:[%s1369] sm:$0xf] %vm1368, %v1367
    %s1371 = scalar_lea.vmem [#allocation0], 20
    %1372 = vst.msk [vmem:[%s1371] sm:$0xf0] %vm1368, %v1367
    %s1373 = scalar_lea.vmem [#allocation1], 24
    %v1374 = vld [vmem:[%s1373] sm:$0x1]
    %s1375 = scalar_lea.vmem [#allocation1], 151
    %v1376 = vld [vmem:[%s1375] sm:$0x2]
    %vm1377 = vcmask 1041409
    %v1378 = vsel %vm1377, %v1376, %v1374
    %s1379 = scalar_lea.vmem [#allocation1], 278
    %v1380 = vld [vmem:[%s1379] sm:$0x4]
    %vm1381 = vcmask 1042434
    %v1382 = vsel %vm1381, %v1380, %v1378
    %s1383 = scalar_lea.vmem [#allocation1], 405
    %v1384 = vld [vmem:[%s1383] sm:$0x8]
    %vm1385 = vcmask 1043459
    %v1386 = vsel %vm1385, %v1384, %v1382
    %s1387 = scalar_lea.vmem [#allocation1], 84
    %v1388 = vld [vmem:[%s1387] sm:$0x10]
    %vm1389 = vcmask 1044484
    %v1390 = vsel %vm1389, %v1388, %v1386
    %s1391 = scalar_lea.vmem [#allocation1], 211
    %v1392 = vld [vmem:[%s1391] sm:$0x20]
    %vm1393 = vcmask 1045509
    %v1394 = vsel %vm1393, %v1392, %v1390
    %s1395 = scalar_lea.vmem [#allocation1], 338
    %v1396 = vld [vmem:[%s1395] sm:$0x40]
    %vm1397 = vcmask 1046534
    %v1398 = vsel %vm1397, %v1396, %v1394
    %s1399 = scalar_lea.vmem [#allocation1], 465
    %v1400 = vld [vmem:[%s1399] sm:$0x80]
    %vm1401 = vcmask 1047559
    %v1402 = vsel %vm1401, %v1400, %v1398
    %1403 = vrot.lane.b32.xlu0 %v1402, 48
    %v1404 = vpop.permute.xlu0 %1403
    %vm1405 = vcmask 458112
    %1406 = vst.msk [vmem:[#allocation0] sm:$0xf] %vm1405, %v1404
    %s1407 = scalar_lea.vmem [#allocation0], 4
    %1408 = vst.msk [vmem:[%s1407] sm:$0xf0] %vm1405, %v1404
    %s1409 = scalar_lea.vmem [#allocation1], 536
    %v1410 = vld [vmem:[%s1409] sm:$0x1]
    %s1411 = scalar_lea.vmem [#allocation1], 663
    %v1412 = vld [vmem:[%s1411] sm:$0x2]
    %vm1413 = vcmask 1041409
    %v1414 = vsel %vm1413, %v1412, %v1410
    %s1415 = scalar_lea.vmem [#allocation1], 790
    %v1416 = vld [vmem:[%s1415] sm:$0x4]
    %vm1417 = vcmask 1042434
    %v1418 = vsel %vm1417, %v1416, %v1414
    %s1419 = scalar_lea.vmem [#allocation1], 917
    %v1420 = vld [vmem:[%s1419] sm:$0x8]
    %vm1421 = vcmask 1043459
    %v1422 = vsel %vm1421, %v1420, %v1418
    %s1423 = scalar_lea.vmem [#allocation1], 596
    %v1424 = vld [vmem:[%s1423] sm:$0x10]
    %vm1425 = vcmask 1044484
    %v1426 = vsel %vm1425, %v1424, %v1422
    %s1427 = scalar_lea.vmem [#allocation1], 723
    %v1428 = vld [vmem:[%s1427] sm:$0x20]
    %vm1429 = vcmask 1045509
    %v1430 = vsel %vm1429, %v1428, %v1426
    %s1431 = scalar_lea.vmem [#allocation1], 850
    %v1432 = vld [vmem:[%s1431] sm:$0x40]
    %vm1433 = vcmask 1046534
    %v1434 = vsel %vm1433, %v1432, %v1430
    %s1435 = scalar_lea.vmem [#allocation1], 977
    %v1436 = vld [vmem:[%s1435] sm:$0x80]
    %vm1437 = vcmask 1047559
    %v1438 = vsel %vm1437, %v1436, %v1434
    %1439 = vrot.lane.b32.xlu0 %v1438, 48
    %v1440 = vpop.permute.xlu0 %1439
    %vm1441 = vcmask 458112
    %s1442 = scalar_lea.vmem [#allocation0], 16
    %1443 = vst.msk [vmem:[%s1442] sm:$0xf] %vm1441, %v1440
    %s1444 = scalar_lea.vmem [#allocation0], 20
    %1445 = vst.msk [vmem:[%s1444] sm:$0xf0] %vm1441, %v1440
    %s1446 = scalar_lea.vmem [#allocation1], 17
    %v1447 = vld [vmem:[%s1446] sm:$0x1]
    %s1448 = scalar_lea.vmem [#allocation1], 144
    %v1449 = vld [vmem:[%s1448] sm:$0x2]
    %vm1450 = vcmask 1041409
    %v1451 = vsel %vm1450, %v1449, %v1447
    %s1452 = scalar_lea.vmem [#allocation1], 271
    %v1453 = vld [vmem:[%s1452] sm:$0x4]
    %vm1454 = vcmask 1042434
    %v1455 = vsel %vm1454, %v1453, %v1451
    %s1456 = scalar_lea.vmem [#allocation1], 398
    %v1457 = vld [vmem:[%s1456] sm:$0x8]
    %vm1458 = vcmask 1043459
    %v1459 = vsel %vm1458, %v1457, %v1455
    %s1460 = scalar_lea.vmem [#allocation1], 77
    %v1461 = vld [vmem:[%s1460] sm:$0x10]
    %vm1462 = vcmask 1044484
    %v1463 = vsel %vm1462, %v1461, %v1459
    %s1464 = scalar_lea.vmem [#allocation1], 204
    %v1465 = vld [vmem:[%s1464] sm:$0x20]
    %vm1466 = vcmask 1045509
    %v1467 = vsel %vm1466, %v1465, %v1463
    %s1468 = scalar_lea.vmem [#allocation1], 331
    %v1469 = vld [vmem:[%s1468] sm:$0x40]
    %vm1470 = vcmask 1046534
    %v1471 = vsel %vm1470, %v1469, %v1467
    %s1472 = scalar_lea.vmem [#allocation1], 458
    %v1473 = vld [vmem:[%s1472] sm:$0x80]
    %vm1474 = vcmask 1047559
    %v1475 = vsel %vm1474, %v1473, %v1471
    %1476 = vrot.lane.b32.xlu0 %v1475, 40
    %v1477 = vpop.permute.xlu0 %1476
    %vm1478 = vcmask 392512
    %1479 = vst.msk [vmem:[#allocation0] sm:$0xf] %vm1478, %v1477
    %s1480 = scalar_lea.vmem [#allocation0], 4
    %1481 = vst.msk [vmem:[%s1480] sm:$0xf0] %vm1478, %v1477
    %s1482 = scalar_lea.vmem [#allocation1], 529
    %v1483 = vld [vmem:[%s1482] sm:$0x1]
    %s1484 = scalar_lea.vmem [#allocation1], 656
    %v1485 = vld [vmem:[%s1484] sm:$0x2]
    %vm1486 = vcmask 1041409
    %v1487 = vsel %vm1486, %v1485, %v1483
    %s1488 = scalar_lea.vmem [#allocation1], 783
    %v1489 = vld [vmem:[%s1488] sm:$0x4]
    %vm1490 = vcmask 1042434
    %v1491 = vsel %vm1490, %v1489, %v1487
    %s1492 = scalar_lea.vmem [#allocation1], 910
    %v1493 = vld [vmem:[%s1492] sm:$0x8]
    %vm1494 = vcmask 1043459
    %v1495 = vsel %vm1494, %v1493, %v1491
    %s1496 = scalar_lea.vmem [#allocation1], 589
    %v1497 = vld [vmem:[%s1496] sm:$0x10]
    %vm1498 = vcmask 1044484
    %v1499 = vsel %vm1498, %v1497, %v1495
    %s1500 = scalar_lea.vmem [#allocation1], 716
    %v1501 = vld [vmem:[%s1500] sm:$0x20]
    %vm1502 = vcmask 1045509
    %v1503 = vsel %vm1502, %v1501, %v1499
    %s1504 = scalar_lea.vmem [#allocation1], 843
    %v1505 = vld [vmem:[%s1504] sm:$0x40]
    %vm1506 = vcmask 1046534
    %v1507 = vsel %vm1506, %v1505, %v1503
    %s1508 = scalar_lea.vmem [#allocation1], 970
    %v1509 = vld [vmem:[%s1508] sm:$0x80]
    %vm1510 = vcmask 1047559
    %v1511 = vsel %vm1510, %v1509, %v1507
    %1512 = vrot.lane.b32.xlu0 %v1511, 40
    %v1513 = vpop.permute.xlu0 %1512
    %vm1514 = vcmask 392512
    %s1515 = scalar_lea.vmem [#allocation0], 16
    %1516 = vst.msk [vmem:[%s1515] sm:$0xf] %vm1514, %v1513
    %s1517 = scalar_lea.vmem [#allocation0], 20
    %1518 = vst.msk [vmem:[%s1517] sm:$0xf0] %vm1514, %v1513
    %s1519 = scalar_lea.vmem [#allocation1], 16
    %v1520 = vld [vmem:[%s1519] sm:$0x1]
    %s1521 = scalar_lea.vmem [#allocation1], 143
    %v1522 = vld [vmem:[%s1521] sm:$0x2]
    %vm1523 = vcmask 1041409
    %v1524 = vsel %vm1523, %v1522, %v1520
    %s1525 = scalar_lea.vmem [#allocation1], 270
    %v1526 = vld [vmem:[%s1525] sm:$0x4]
    %vm1527 = vcmask 1042434
    %v1528 = vsel %vm1527, %v1526, %v1524
    %s1529 = scalar_lea.vmem [#allocation1], 397
    %v1530 = vld [vmem:[%s1529] sm:$0x8]
    %vm1531 = vcmask 1043459
    %v1532 = vsel %vm1531, %v1530, %v1528
    %s1533 = scalar_lea.vmem [#allocation1], 76
    %v1534 = vld [vmem:[%s1533] sm:$0x10]
    %vm1535 = vcmask 1044484
    %v1536 = vsel %vm1535, %v1534, %v1532
    %s1537 = scalar_lea.vmem [#allocation1], 203
    %v1538 = vld [vmem:[%s1537] sm:$0x20]
    %vm1539 = vcmask 1045509
    %v1540 = vsel %vm1539, %v1538, %v1536
    %s1541 = scalar_lea.vmem [#allocation1], 330
    %v1542 = vld [vmem:[%s1541] sm:$0x40]
    %vm1543 = vcmask 1046534
    %v1544 = vsel %vm1543, %v1542, %v1540
    %s1545 = scalar_lea.vmem [#allocation1], 457
    %v1546 = vld [vmem:[%s1545] sm:$0x80]
    %vm1547 = vcmask 1047559
    %v1548 = vsel %vm1547, %v1546, %v1544
    %1549 = vrot.lane.b32.xlu0 %v1548, 32
    %v1550 = vpop.permute.xlu0 %1549
    %vm1551 = vcmask 326912
    %1552 = vst.msk [vmem:[#allocation0] sm:$0xf] %vm1551, %v1550
    %s1553 = scalar_lea.vmem [#allocation0], 4
    %1554 = vst.msk [vmem:[%s1553] sm:$0xf0] %vm1551, %v1550
    %s1555 = scalar_lea.vmem [#allocation1], 528
    %v1556 = vld [vmem:[%s1555] sm:$0x1]
    %s1557 = scalar_lea.vmem [#allocation1], 655
    %v1558 = vld [vmem:[%s1557] sm:$0x2]
    %vm1559 = vcmask 1041409
    %v1560 = vsel %vm1559, %v1558, %v1556
    %s1561 = scalar_lea.vmem [#allocation1], 782
    %v1562 = vld [vmem:[%s1561] sm:$0x4]
    %vm1563 = vcmask 1042434
    %v1564 = vsel %vm1563, %v1562, %v1560
    %s1565 = scalar_lea.vmem [#allocation1], 909
    %v1566 = vld [vmem:[%s1565] sm:$0x8]
    %vm1567 = vcmask 1043459
    %v1568 = vsel %vm1567, %v1566, %v1564
    %s1569 = scalar_lea.vmem [#allocation1], 588
    %v1570 = vld [vmem:[%s1569] sm:$0x10]
    %vm1571 = vcmask 1044484
    %v1572 = vsel %vm1571, %v1570, %v1568
    %s1573 = scalar_lea.vmem [#allocation1], 715
    %v1574 = vld [vmem:[%s1573] sm:$0x20]
    %vm1575 = vcmask 1045509
    %v1576 = vsel %vm1575, %v1574, %v1572
    %s1577 = scalar_lea.vmem [#allocation1], 842
    %v1578 = vld [vmem:[%s1577] sm:$0x40]
    %vm1579 = vcmask 1046534
    %v1580 = vsel %vm1579, %v1578, %v1576
    %s1581 = scalar_lea.vmem [#allocation1], 969
    %v1582 = vld [vmem:[%s1581] sm:$0x80]
    %vm1583 = vcmask 1047559
    %v1584 = vsel %vm1583, %v1582, %v1580
    %1585 = vrot.lane.b32.xlu0 %v1584, 32
    %v1586 = vpop.permute.xlu0 %1585
    %vm1587 = vcmask 326912
    %s1588 = scalar_lea.vmem [#allocation0], 16
    %1589 = vst.msk [vmem:[%s1588] sm:$0xf] %vm1587, %v1586
    %s1590 = scalar_lea.vmem [#allocation0], 20
    %1591 = vst.msk [vmem:[%s1590] sm:$0xf0] %vm1587, %v1586
    %s1592 = scalar_lea.vmem [#allocation1], 9
    %v1593 = vld [vmem:[%s1592] sm:$0x1]
    %s1594 = scalar_lea.vmem [#allocation1], 136
    %v1595 = vld [vmem:[%s1594] sm:$0x2]
    %vm1596 = vcmask 1041409
    %v1597 = vsel %vm1596, %v1595, %v1593
    %s1598 = scalar_lea.vmem [#allocation1], 263
    %v1599 = vld [vmem:[%s1598] sm:$0x4]
    %vm1600 = vcmask 1042434
    %v1601 = vsel %vm1600, %v1599, %v1597
    %s1602 = scalar_lea.vmem [#allocation1], 390
    %v1603 = vld [vmem:[%s1602] sm:$0x8]
    %vm1604 = vcmask 1043459
    %v1605 = vsel %vm1604, %v1603, %v1601
    %s1606 = scalar_lea.vmem [#allocation1], 69
    %v1607 = vld [vmem:[%s1606] sm:$0x10]
    %vm1608 = vcmask 1044484
    %v1609 = vsel %vm1608, %v1607, %v1605
    %s1610 = scalar_lea.vmem [#allocation1], 196
    %v1611 = vld [vmem:[%s1610] sm:$0x20]
    %vm1612 = vcmask 1045509
    %v1613 = vsel %vm1612, %v1611, %v1609
    %s1614 = scalar_lea.vmem [#allocation1], 323
    %v1615 = vld [vmem:[%s1614] sm:$0x40]
    %vm1616 = vcmask 1046534
    %v1617 = vsel %vm1616, %v1615, %v1613
    %s1618 = scalar_lea.vmem [#allocation1], 450
    %v1619 = vld [vmem:[%s1618] sm:$0x80]
    %vm1620 = vcmask 1047559
    %v1621 = vsel %vm1620, %v1619, %v1617
    %1622 = vrot.lane.b32.xlu0 %v1621, 24
    %v1623 = vpop.permute.xlu0 %1622
    %vm1624 = vcmask 261312
    %1625 = vst.msk [vmem:[#allocation0] sm:$0xf] %vm1624, %v1623
    %s1626 = scalar_lea.vmem [#allocation0], 4
    %1627 = vst.msk [vmem:[%s1626] sm:$0xf0] %vm1624, %v1623
    %s1628 = scalar_lea.vmem [#allocation1], 521
    %v1629 = vld [vmem:[%s1628] sm:$0x1]
    %s1630 = scalar_lea.vmem [#allocation1], 648
    %v1631 = vld [vmem:[%s1630] sm:$0x2]
    %vm1632 = vcmask 1041409
    %v1633 = vsel %vm1632, %v1631, %v1629
    %s1634 = scalar_lea.vmem [#allocation1], 775
    %v1635 = vld [vmem:[%s1634] sm:$0x4]
    %vm1636 = vcmask 1042434
    %v1637 = vsel %vm1636, %v1635, %v1633
    %s1638 = scalar_lea.vmem [#allocation1], 902
    %v1639 = vld [vmem:[%s1638] sm:$0x8]
    %vm1640 = vcmask 1043459
    %v1641 = vsel %vm1640, %v1639, %v1637
    %s1642 = scalar_lea.vmem [#allocation1], 581
    %v1643 = vld [vmem:[%s1642] sm:$0x10]
    %vm1644 = vcmask 1044484
    %v1645 = vsel %vm1644, %v1643, %v1641
    %s1646 = scalar_lea.vmem [#allocation1], 708
    %v1647 = vld [vmem:[%s1646] sm:$0x20]
    %vm1648 = vcmask 1045509
    %v1649 = vsel %vm1648, %v1647, %v1645
    %s1650 = scalar_lea.vmem [#allocation1], 835
    %v1651 = vld [vmem:[%s1650] sm:$0x40]
    %vm1652 = vcmask 1046534
    %v1653 = vsel %vm1652, %v1651, %v1649
    %s1654 = scalar_lea.vmem [#allocation1], 962
    %v1655 = vld [vmem:[%s1654] sm:$0x80]
    %vm1656 = vcmask 1047559
    %v1657 = vsel %vm1656, %v1655, %v1653
    %1658 = vrot.lane.b32.xlu0 %v1657, 24
    %v1659 = vpop.permute.xlu0 %1658
    %vm1660 = vcmask 261312
    %s1661 = scalar_lea.vmem [#allocation0], 16
    %1662 = vst.msk [vmem:[%s1661] sm:$0xf] %vm1660, %v1659
    %s1663 = scalar_lea.vmem [#allocation0], 20
    %1664 = vst.msk [vmem:[%s1663] sm:$0xf0] %vm1660, %v1659
    %s1665 = scalar_lea.vmem [#allocation1], 8
    %v1666 = vld [vmem:[%s1665] sm:$0x1]
    %s1667 = scalar_lea.vmem [#allocation1], 135
    %v1668 = vld [vmem:[%s1667] sm:$0x2]
    %vm1669 = vcmask 1041409
    %v1670 = vsel %vm1669, %v1668, %v1666
    %s1671 = scalar_lea.vmem [#allocation1], 262
    %v1672 = vld [vmem:[%s1671] sm:$0x4]
    %vm1673 = vcmask 1042434
    %v1674 = vsel %vm1673, %v1672, %v1670
    %s1675 = scalar_lea.vmem [#allocation1], 389
    %v1676 = vld [vmem:[%s1675] sm:$0x8]
    %vm1677 = vcmask 1043459
    %v1678 = vsel %vm1677, %v1676, %v1674
    %s1679 = scalar_lea.vmem [#allocation1], 68
    %v1680 = vld [vmem:[%s1679] sm:$0x10]
    %vm1681 = vcmask 1044484
    %v1682 = vsel %vm1681, %v1680, %v1678
    %s1683 = scalar_lea.vmem [#allocation1], 195
    %v1684 = vld [vmem:[%s1683] sm:$0x20]
    %vm1685 = vcmask 1045509
    %v1686 = vsel %vm1685, %v1684, %v1682
    %s1687 = scalar_lea.vmem [#allocation1], 322
    %v1688 = vld [vmem:[%s1687] sm:$0x40]
    %vm1689 = vcmask 1046534
    %v1690 = vsel %vm1689, %v1688, %v1686
    %s1691 = scalar_lea.vmem [#allocation1], 449
    %v1692 = vld [vmem:[%s1691] sm:$0x80]
    %vm1693 = vcmask 1047559
    %v1694 = vsel %vm1693, %v1692, %v1690
    %1695 = vrot.lane.b32.xlu0 %v1694, 16
    %v1696 = vpop.permute.xlu0 %1695
    %vm1697 = vcmask 195712
    %1698 = vst.msk [vmem:[#allocation0] sm:$0xf] %vm1697, %v1696
    %s1699 = scalar_lea.vmem [#allocation0], 4
    %1700 = vst.msk [vmem:[%s1699] sm:$0xf0] %vm1697, %v1696
    %s1701 = scalar_lea.vmem [#allocation1], 520
    %v1702 = vld [vmem:[%s1701] sm:$0x1]
    %s1703 = scalar_lea.vmem [#allocation1], 647
    %v1704 = vld [vmem:[%s1703] sm:$0x2]
    %vm1705 = vcmask 1041409
    %v1706 = vsel %vm1705, %v1704, %v1702
    %s1707 = scalar_lea.vmem [#allocation1], 774
    %v1708 = vld [vmem:[%s1707] sm:$0x4]
    %vm1709 = vcmask 1042434
    %v1710 = vsel %vm1709, %v1708, %v1706
    %s1711 = scalar_lea.vmem [#allocation1], 901
    %v1712 = vld [vmem:[%s1711] sm:$0x8]
    %vm1713 = vcmask 1043459
    %v1714 = vsel %vm1713, %v1712, %v1710
    %s1715 = scalar_lea.vmem [#allocation1], 580
    %v1716 = vld [vmem:[%s1715] sm:$0x10]
    %vm1717 = vcmask 1044484
    %v1718 = vsel %vm1717, %v1716, %v1714
    %s1719 = scalar_lea.vmem [#allocation1], 707
    %v1720 = vld [vmem:[%s1719] sm:$0x20]
    %vm1721 = vcmask 1045509
    %v1722 = vsel %vm1721, %v1720, %v1718
    %s1723 = scalar_lea.vmem [#allocation1], 834
    %v1724 = vld [vmem:[%s1723] sm:$0x40]
    %vm1725 = vcmask 1046534
    %v1726 = vsel %vm1725, %v1724, %v1722
    %s1727 = scalar_lea.vmem [#allocation1], 961
    %v1728 = vld [vmem:[%s1727] sm:$0x80]
    %vm1729 = vcmask 1047559
    %v1730 = vsel %vm1729, %v1728, %v1726
    %1731 = vrot.lane.b32.xlu0 %v1730, 16
    %v1732 = vpop.permute.xlu0 %1731
    %vm1733 = vcmask 195712
    %s1734 = scalar_lea.vmem [#allocation0], 16
    %1735 = vst.msk [vmem:[%s1734] sm:$0xf] %vm1733, %v1732
    %s1736 = scalar_lea.vmem [#allocation0], 20
    %1737 = vst.msk [vmem:[%s1736] sm:$0xf0] %vm1733, %v1732
    %s1738 = scalar_lea.vmem [#allocation1], 1
    %v1739 = vld [vmem:[%s1738] sm:$0x1]
    %s1740 = scalar_lea.vmem [#allocation1], 128
    %v1741 = vld [vmem:[%s1740] sm:$0x2]
    %vm1742 = vcmask 1041409
    %v1743 = vsel %vm1742, %v1741, %v1739
    %s1744 = scalar_lea.vmem [#allocation1], 255
    %v1745 = vld [vmem:[%s1744] sm:$0x4]
    %vm1746 = vcmask 1042434
    %v1747 = vsel %vm1746, %v1745, %v1743
    %s1748 = scalar_lea.vmem [#allocation1], 382
    %v1749 = vld [vmem:[%s1748] sm:$0x8]
    %vm1750 = vcmask 1043459
    %v1751 = vsel %vm1750, %v1749, %v1747
    %s1752 = scalar_lea.vmem [#allocation1], 61
    %v1753 = vld [vmem:[%s1752] sm:$0x10]
    %vm1754 = vcmask 1044484
    %v1755 = vsel %vm1754, %v1753, %v1751
    %s1756 = scalar_lea.vmem [#allocation1], 188
    %v1757 = vld [vmem:[%s1756] sm:$0x20]
    %vm1758 = vcmask 1045509
    %v1759 = vsel %vm1758, %v1757, %v1755
    %s1760 = scalar_lea.vmem [#allocation1], 315
    %v1761 = vld [vmem:[%s1760] sm:$0x40]
    %vm1762 = vcmask 1046534
    %v1763 = vsel %vm1762, %v1761, %v1759
    %s1764 = scalar_lea.vmem [#allocation1], 442
    %v1765 = vld [vmem:[%s1764] sm:$0x80]
    %vm1766 = vcmask 1047559
    %v1767 = vsel %vm1766, %v1765, %v1763
    %1768 = vrot.lane.b32.xlu0 %v1767, 8
    %v1769 = vpop.permute.xlu0 %1768
    %vm1770 = vcmask 130112
    %1771 = vst.msk [vmem:[#allocation0] sm:$0xf] %vm1770, %v1769
    %s1772 = scalar_lea.vmem [#allocation0], 4
    %1773 = vst.msk [vmem:[%s1772] sm:$0xf0] %vm1770, %v1769
    %s1774 = scalar_lea.vmem [#allocation1], 513
    %v1775 = vld [vmem:[%s1774] sm:$0x1]
    %s1776 = scalar_lea.vmem [#allocation1], 640
    %v1777 = vld [vmem:[%s1776] sm:$0x2]
    %vm1778 = vcmask 1041409
    %v1779 = vsel %vm1778, %v1777, %v1775
    %s1780 = scalar_lea.vmem [#allocation1], 767
    %v1781 = vld [vmem:[%s1780] sm:$0x4]
    %vm1782 = vcmask 1042434
    %v1783 = vsel %vm1782, %v1781, %v1779
    %s1784 = scalar_lea.vmem [#allocation1], 894
    %v1785 = vld [vmem:[%s1784] sm:$0x8]
    %vm1786 = vcmask 1043459
    %v1787 = vsel %vm1786, %v1785, %v1783
    %s1788 = scalar_lea.vmem [#allocation1], 573
    %v1789 = vld [vmem:[%s1788] sm:$0x10]
    %vm1790 = vcmask 1044484
    %v1791 = vsel %vm1790, %v1789, %v1787
    %s1792 = scalar_lea.vmem [#allocation1], 700
    %v1793 = vld [vmem:[%s1792] sm:$0x20]
    %vm1794 = vcmask 1045509
    %v1795 = vsel %vm1794, %v1793, %v1791
    %s1796 = scalar_lea.vmem [#allocation1], 827
    %v1797 = vld [vmem:[%s1796] sm:$0x40]
    %vm1798 = vcmask 1046534
    %v1799 = vsel %vm1798, %v1797, %v1795
    %s1800 = scalar_lea.vmem [#allocation1], 954
    %v1801 = vld [vmem:[%s1800] sm:$0x80]
    %vm1802 = vcmask 1047559
    %v1803 = vsel %vm1802, %v1801, %v1799
    %1804 = vrot.lane.b32.xlu0 %v1803, 8
    %v1805 = vpop.permute.xlu0 %1804
    %vm1806 = vcmask 130112
    %s1807 = scalar_lea.vmem [#allocation0], 16
    %1808 = vst.msk [vmem:[%s1807] sm:$0xf] %vm1806, %v1805
    %s1809 = scalar_lea.vmem [#allocation0], 20
    %1810 = vst.msk [vmem:[%s1809] sm:$0xf0] %vm1806, %v1805
    %s1812 = sshllo.u32 0, 4
    %v1814 = vld [vmem:[#allocation0] sm:%s1812]
    %s1815 = sshllo.u32 0, 4
    %1816 = vst [vmem:[%s1] sm:%s1815] %v1814
    %s1817 = scalar_lea.vmem [#allocation0], 8
    %v1818 = vld [vmem:[%s1817] sm:%s1812]
    %s1819 = sshllo.u32 0, 4
    %s1820 = scalar_lea.vmem %s1, 4
    %1821 = vst [vmem:[%s1820] sm:%s1819] %v1818
    %s1822 = scalar_lea.vmem [#allocation0], 16
    %v1823 = vld [vmem:[%s1822] sm:%s1812]
    %s1824 = sshllo.u32 0, 4
    %s1825 = smul.addr 4, 2
    %s1826 = scalar_lea.vmem %s1, %s1825
    %1827 = vst [vmem:[%s1826] sm:%s1824] %v1823
    %s1828 = scalar_lea.vmem [#allocation0], 24
    %v1829 = vld [vmem:[%s1828] sm:%s1812]
    %s1830 = sshllo.u32 0, 4
    %s1831 = smul.addr 4, 3
    %s1832 = scalar_lea.vmem %s1, %s1831
    %1833 = vst [vmem:[%s1832] sm:%s1830] %v1829

// kernel: mam_ffc_forward.5
$region0: #{mam_ffc_forward.5}
  #allocation0 [shape = 'u32[]', space=smem, size = 0x4, offset = 0x4, fixed_abs, tag = 'smem constant byte address 0x4 - core index']
  #allocation1 [shape = 'u32[144,128]{1,0:T(1,128)}', space=vmem, size = 0x12000, scoped, tag = 'internal scratch']
  %s0 = inlined_call_operand.vmem [shape: f32[2,4,256], index: 0, kind: input, shape index: {}]
  %s1 = inlined_call_operand.vmem [shape: f32[2,4,256], index: 1, kind: input, shape index: {}]
  %s2 = inlined_call_operand.vmem [shape: f32[2,4,256], index: 2, kind: input, shape index: {}]
  %s3 = inlined_call_operand.vmem [shape: f32[2,8,256], index: 3, kind: input, shape index: {}]
  %s4 = inlined_call_operand.vmem [shape: f32[8,4], index: 4, kind: input, shape index: {}]
  %s5 = inlined_call_operand.vmem [shape: f32[2,8,256], index: 5, kind: output, shape index: {}]
  %s6 = sld [smem:[#allocation0]]
  $region53: #{mam_ffc_forward.5} parent=0
    _
  %s8 = ssub.s32 1, %s6
  %s9 = scalar_select 0, %s8, %s6
  loop: start=0, step=1, limit=4
  $region2: #{mam_ffc_forward.5} parent=0 // loop_pre_header
    _
  $region3: #{mam_ffc_forward.5} parent=0 // loop_header
    %s11 = sphi 0, %s15
    %p12 = scmp.ge.s32.totalorder %s11, 4
    %s21 = sphi 0, %s23
    %s24 = sphi 0, %s21
    %s25 = sphi 0, %s24
    %s41 = sphi 0, %s25
    %s47 = sphi 0, %s49
    %s50 = sphi 0, %s47
    %s51 = sphi 0, %s50
    %s67 = sphi 0, %s51
    %s73 = sphi 0, %s75
    %s76 = sphi 0, %s73
    %s77 = sphi 0, %s76
    %s93 = sphi 0, %s77
    %s99 = sphi 0, %s101
    %s102 = sphi 0, %s99
    %s103 = sphi 0, %s102
    %s119 = sphi 0, %s103
    %s123 = sphi 0, %s123
    %s125 = sphi 0, %s123
    %s126 = sphi 0, %s125
    %s140 = sphi 0, %s126
    %s146 = sphi 0, %s148
    %s149 = sphi 0, %s146
    %s150 = sphi 0, %s149
    %s166 = sphi 0, %s150
  $region4: #{mam_ffc_forward.5} parent=0 // loop_header_branch
    %14 = sbr.rel (%p12) target = $region8
  $region5: #{mam_ffc_forward.5} parent=0 // loop_body
    %s16 = ssub.s32 %s11, 1
    %s17 = ssub.s32 %s11, 2
    %s18 = sadd.s32 %s11, 1
    %s19 = ssub.s32 %s11, %s18
    %p20 = scmp.eq.s32.totalorder %s19, 0
    %s22 = sadd.s32 %s21, 1
    %s23 = scalar_select %p20, %s21, %s22
    %p26 = pneg %p20
    %p27 = scmp.eq.s32.totalorder %s11, 1
    %p28 = por %p26, %p27
    %p29 = scmp.ne.s32.totalorder %s21, %s24
    %p30 = scmp.eq.s32.totalorder %s11, 0
    %p31 = por %p29, %p30
    %p32 = scmp.ne.s32.totalorder %s21, %s24
    %p33 = scmp.eq.s32.totalorder %s16, 1
    %p34 = por %p32, %p33
    %p35 = scmp.ne.s32.totalorder %s24, %s25
    %p36 = scmp.eq.s32.totalorder %s16, 0
    %p37 = por %p35, %p36
    %p38 = scmp.ne.s32.totalorder %s24, %s25
    %p39 = scmp.eq.s32.totalorder %s17, 1
    %p40 = por %p38, %p39
    %p42 = scmp.ne.s32.totalorder %s25, %s41
    %p43 = scmp.eq.s32.totalorder %s17, 0
    %p44 = por %p42, %p43
    %s45 = ssub.s32 %s11, %s18
    %p46 = scmp.eq.s32.totalorder %s45, 0
    %s48 = sadd.s32 %s47, 1
    %s49 = scalar_select %p46, %s47, %s48
    %p52 = pneg %p46
    %p53 = scmp.eq.s32.totalorder %s11, 1
    %p54 = por %p52, %p53
    %p55 = scmp.ne.s32.totalorder %s47, %s50
    %p56 = scmp.eq.s32.totalorder %s11, 0
    %p57 = por %p55, %p56
    %p58 = scmp.ne.s32.totalorder %s47, %s50
    %p59 = scmp.eq.s32.totalorder %s16, 1
    %p60 = por %p58, %p59
    %p61 = scmp.ne.s32.totalorder %s50, %s51
    %p62 = scmp.eq.s32.totalorder %s16, 0
    %p63 = por %p61, %p62
    %p64 = scmp.ne.s32.totalorder %s50, %s51
    %p65 = scmp.eq.s32.totalorder %s17, 1
    %p66 = por %p64, %p65
    %p68 = scmp.ne.s32.totalorder %s51, %s67
    %p69 = scmp.eq.s32.totalorder %s17, 0
    %p70 = por %p68, %p69
    %s71 = ssub.s32 %s11, %s18
    %p72 = scmp.eq.s32.totalorder %s71, 0
    %s74 = sadd.s32 %s73, 1
    %s75 = scalar_select %p72, %s73, %s74
    %p78 = pneg %p72
    %p79 = scmp.eq.s32.totalorder %s11, 1
    %p80 = por %p78, %p79
    %p81 = scmp.ne.s32.totalorder %s73, %s76
    %p82 = scmp.eq.s32.totalorder %s11, 0
    %p83 = por %p81, %p82
    %p84 = scmp.ne.s32.totalorder %s73, %s76
    %p85 = scmp.eq.s32.totalorder %s16, 1
    %p86 = por %p84, %p85
    %p87 = scmp.ne.s32.totalorder %s76, %s77
    %p88 = scmp.eq.s32.totalorder %s16, 0
    %p89 = por %p87, %p88
    %p90 = scmp.ne.s32.totalorder %s76, %s77
    %p91 = scmp.eq.s32.totalorder %s17, 1
    %p92 = por %p90, %p91
    %p94 = scmp.ne.s32.totalorder %s77, %s93
    %p95 = scmp.eq.s32.totalorder %s17, 0
    %p96 = por %p94, %p95
    %s97 = ssub.s32 %s11, %s18
    %p98 = scmp.eq.s32.totalorder %s97, 0
    %s100 = sadd.s32 %s99, 1
    %s101 = scalar_select %p98, %s99, %s100
    %p104 = pneg %p98
    %p105 = scmp.eq.s32.totalorder %s11, 1
    %p106 = por %p104, %p105
    %p107 = scmp.ne.s32.totalorder %s99, %s102
    %p108 = scmp.eq.s32.totalorder %s11, 0
    %p109 = por %p107, %p108
    %p110 = scmp.ne.s32.totalorder %s99, %s102
    %p111 = scmp.eq.s32.totalorder %s16, 1
    %p112 = por %p110, %p111
    %p113 = scmp.ne.s32.totalorder %s102, %s103
    %p114 = scmp.eq.s32.totalorder %s16, 0
    %p115 = por %p113, %p114
    %p116 = scmp.ne.s32.totalorder %s102, %s103
    %p117 = scmp.eq.s32.totalorder %s17, 1
    %p118 = por %p116, %p117
    %p120 = scmp.ne.s32.totalorder %s103, %s119
    %p121 = scmp.eq.s32.totalorder %s17, 0
    %p122 = por %p120, %p121
    %s124 = sadd.s32 %s123, 1
    %p127 = scmp.eq.s32.totalorder %s11, 1
    %p128 = scmp.ne.s32.totalorder %s123, %s125
    %p129 = scmp.eq.s32.totalorder %s11, 0
    %p130 = por %p128, %p129
    %p131 = scmp.ne.s32.totalorder %s123, %s125
    %p132 = scmp.eq.s32.totalorder %s16, 1
    %p133 = por %p131, %p132
    %p134 = scmp.ne.s32.totalorder %s125, %s126
    %p135 = scmp.eq.s32.totalorder %s16, 0
    %p136 = por %p134, %p135
    %p137 = scmp.ne.s32.totalorder %s125, %s126
    %p138 = scmp.eq.s32.totalorder %s17, 1
    %p139 = por %p137, %p138
    %p141 = scmp.ne.s32.totalorder %s126, %s140
    %p142 = scmp.eq.s32.totalorder %s17, 0
    %p143 = por %p141, %p142
    %s144 = ssub.s32 %s11, %s18
    %p145 = scmp.eq.s32.totalorder %s144, 0
    %s147 = sadd.s32 %s146, 1
    %s148 = scalar_select %p145, %s146, %s147
    %p151 = pneg %p145
    %p152 = scmp.eq.s32.totalorder %s11, 1
    %p153 = por %p151, %p152
    %p154 = scmp.ne.s32.totalorder %s146, %s149
    %p155 = scmp.eq.s32.totalorder %s11, 0
    %p156 = por %p154, %p155
    %p157 = scmp.ne.s32.totalorder %s146, %s149
    %p158 = scmp.eq.s32.totalorder %s16, 1
    %p159 = por %p157, %p158
    %p160 = scmp.ne.s32.totalorder %s149, %s150
    %p161 = scmp.eq.s32.totalorder %s16, 0
    %p162 = por %p160, %p161
    %p163 = scmp.ne.s32.totalorder %s149, %s150
    %p164 = scmp.eq.s32.totalorder %s17, 1
    %p165 = por %p163, %p164
    %p167 = scmp.ne.s32.totalorder %s150, %s166
    %p168 = scmp.eq.s32.totalorder %s17, 0
    %p169 = por %p167, %p168
    %p170 = scmp.le.s32.totalorder 1, %s11
    %p171 = scmp.lt.s32.totalorder %s11, 3
    %p172 = pnand %p170, %p171
    %p173 = pneg %p172
    // Predicated region
    $region9: #{mam_ffc_forward.5} parent=5 // pred_check
      _
    $region10: #{mam_ffc_forward.5} parent=5 // pred_check_branch
      %175 = sbr.rel (%p172) target = $region12
    $region11: #{mam_ffc_forward.5} parent=5 // pred_region
      %s176 = ssub.s32 %s11, 1
      // Predicated region
      $region13: #{mam_ffc_forward.5} parent=11 // pred_check
        %p177 = pneg %p136
      $region14: #{mam_ffc_forward.5} parent=11 // pred_check_branch
        %179 = sbr.rel (%p177) target = $region16
      $region15: #{mam_ffc_forward.5} parent=11 // pred_region
        _
      $region16: #{mam_ffc_forward.5} parent=11 // pred_fallthru
        _
    $region12: #{mam_ffc_forward.5} parent=5 // pred_fallthru
      _
    %p180 = scmp.lt.s32.totalorder %s11, 2
    // Predicated region
    $region17: #{mam_ffc_forward.5} parent=5 // pred_check
      %p181 = pneg %p180
    $region18: #{mam_ffc_forward.5} parent=5 // pred_check_branch
      %183 = sbr.rel (%p181) target = $region20
    $region19: #{mam_ffc_forward.5} parent=5 // pred_region
      // Predicated region
      $region21: #{mam_ffc_forward.5} parent=19 // pred_check
        %p184 = pneg %p31
      $region22: #{mam_ffc_forward.5} parent=19 // pred_check_branch
        %186 = sbr.rel (%p184) target = $region24
      $region23: #{mam_ffc_forward.5} parent=19 // pred_region
        %p187 = scmp.lt.s32.totalorder %s11, 1
        %s188 = scalar_select %p187, %s11, 1
        %s189 = smul.addr %s188, 2
        %s190 = smul.addr %s189, 4
        %s191 = scalar_lea.vmem %s0, %s190
      $region24: #{mam_ffc_forward.5} parent=19 // pred_fallthru
        _
      // Predicated region
      $region25: #{mam_ffc_forward.5} parent=19 // pred_check
        %p192 = pneg %p57
      $region26: #{mam_ffc_forward.5} parent=19 // pred_check_branch
        %194 = sbr.rel (%p192) target = $region28
      $region27: #{mam_ffc_forward.5} parent=19 // pred_region
        %p195 = scmp.lt.s32.totalorder %s11, 1
        %s196 = scalar_select %p195, %s11, 1
        %s197 = smul.addr %s196, 2
        %s198 = smul.addr %s197, 4
        %s199 = scalar_lea.vmem %s1, %s198
      $region28: #{mam_ffc_forward.5} parent=19 // pred_fallthru
        _
      // Predicated region
      $region29: #{mam_ffc_forward.5} parent=19 // pred_check
        %p200 = pneg %p83
      $region30: #{mam_ffc_forward.5} parent=19 // pred_check_branch
        %202 = sbr.rel (%p200) target = $region32
      $region31: #{mam_ffc_forward.5} parent=19 // pred_region
        %p203 = scmp.lt.s32.totalorder %s11, 1
        %s204 = scalar_select %p203, %s11, 1
        %s205 = smul.addr %s204, 2
        %s206 = smul.addr %s205, 4
        %s207 = scalar_lea.vmem %s2, %s206
      $region32: #{mam_ffc_forward.5} parent=19 // pred_fallthru
        _
      // Predicated region
      $region33: #{mam_ffc_forward.5} parent=19 // pred_check
        %p208 = pneg %p109
      $region34: #{mam_ffc_forward.5} parent=19 // pred_check_branch
        %210 = sbr.rel (%p208) target = $region36
      $region35: #{mam_ffc_forward.5} parent=19 // pred_region
        %p211 = scmp.lt.s32.totalorder %s11, 1
        %s212 = scalar_select %p211, %s11, 1
        %s213 = smul.addr %s212, 2
        %s214 = smul.addr %s213, 8
        %s215 = scalar_lea.vmem %s3, %s214
      $region36: #{mam_ffc_forward.5} parent=19 // pred_fallthru
        _
    $region20: #{mam_ffc_forward.5} parent=5 // pred_fallthru
      _
    %p216 = scmp.le.s32.totalorder 1, %s11
    %p217 = scmp.lt.s32.totalorder %s11, 3
    %p218 = pnand %p216, %p217
    %p219 = pneg %p218
    // Predicated region
    $region37: #{mam_ffc_forward.5} parent=5 // pred_check
      _
    $region38: #{mam_ffc_forward.5} parent=5 // pred_check_branch
      %221 = sbr.rel (%p218) target = $region40
    $region39: #{mam_ffc_forward.5} parent=5 // pred_region
      %s222 = ssub.s32 %s11, 1
      %p223 = scmp.lt.s32.totalorder %s16, 1
      %s224 = scalar_select %p223, %s16, 1
      %s225 = smul.addr %s224, 2
      %s226 = smul.addr %s225, 4
      %s227 = scalar_lea.vmem %s0, %s226
      %p228 = pneg %p37
      %p229 = pneg %p34
      %p230 = scmp.lt.s32.totalorder %s16, 1
      %s231 = scalar_select %p230, %s16, 1
      %s232 = smul.addr %s231, 2
      %s233 = smul.addr %s232, 4
      %s234 = scalar_lea.vmem %s1, %s233
      %p235 = pneg %p63
      %p236 = pneg %p60
      %p237 = scmp.lt.s32.totalorder %s16, 1
      %s238 = scalar_select %p237, %s16, 1
      %s239 = smul.addr %s238, 2
      %s240 = smul.addr %s239, 4
      %s241 = scalar_lea.vmem %s2, %s240
      %p242 = pneg %p89
      %p243 = pneg %p86
      %p244 = scmp.lt.s32.totalorder %s16, 1
      %s245 = scalar_select %p244, %s16, 1
      %s246 = smul.addr %s245, 2
      %s247 = smul.addr %s246, 8
      %s248 = scalar_lea.vmem %s3, %s247
      %p249 = pneg %p115
      %p250 = pneg %p112
      %p251 = pneg %p136
      %p252 = pneg %p133
      %p253 = pneg %p162
      %p254 = pneg %p159
      %p255 = scmp.lt.s32.totalorder %s16, 1
      %s256 = scalar_select %p255, %s16, 1
      %s257 = smul.addr %s256, 2
      %s258 = smul.addr %s257, 8
      %s259 = scalar_lea.vmem %s5, %s258
      %p260 = scmp.lt.s32.totalorder %s16, 1
      %s261 = scalar_select %p260, %s16, 1
      %s262 = smul.addr %s261, 2
      %s263 = smul.addr %s262, 4
      %s264 = scalar_lea.vmem %s0, %s263
      %p265 = scmp.lt.s32.totalorder %s16, 1
      %s266 = scalar_select %p265, %s16, 1
      %s267 = smul.addr %s266, 2
      %s268 = smul.addr %s267, 4
      %s269 = scalar_lea.vmem %s1, %s268
      %p270 = scmp.lt.s32.totalorder %s16, 1
      %s271 = scalar_select %p270, %s16, 1
      %s272 = smul.addr %s271, 2
      %s273 = smul.addr %s272, 4
      %s274 = scalar_lea.vmem %s2, %s273
      %p275 = scmp.lt.s32.totalorder %s16, 1
      %s276 = scalar_select %p275, %s16, 1
      %s277 = smul.addr %s276, 2
      %s278 = smul.addr %s277, 8
      %s279 = scalar_lea.vmem %s3, %s278
      %p280 = scmp.lt.s32.totalorder %s16, 1
      %s281 = scalar_select %p280, %s16, 1
      %s282 = smul.addr %s281, 2
      %s283 = smul.addr %s282, 8
      %s284 = scalar_lea.vmem %s5, %s283
      %v285 = vld [vmem:[%s264] sm:$0xff]
      %v286 = vld [vmem:[%s269] sm:$0xff]
      %v287 = vadd.f32 %v285, %v286
      %v288 = vld [vmem:[%s274] sm:$0xff]
      %v289 = vadd.f32 %v287, %v288
      %v290 = vld [vmem:[%s4] sm:$0xff]
      %v291 = vld [vmem:[%s279] sm:$0xff]
      %v292 = vld [vmem:[%s279 + $0x8] sm:$0xff]
      %v294 = vcombine.high %v289, %v289
      %vm295 = vcmask 31744
      %v297 = vsel %vm295, %v290, 0
      %vm299 = vcmask 1043456
      %v300 = vsel %vm299, %v289, 0
      %v302 = vsel %vm299, %v294, 0
      %304 = vmatprep.subr.mxu0 %v302
      %305 = vmatpush1.msra.mxu0 %v300
      %306 = vmatprep.subr.mxu0 0.0
      %307 = vmatpush1.msra.mxu0 0.0
      %308 = vmatprep.subr.mxu0 0.0
      %309 = vmatpush1.msra.mxu0 0.0
      %310 = vmatprep.subr.mxu0 0.0
      %311 = vmatpush1.msra.mxu0 0.0
      %312 = vmatprep.subr.mxu0 0.0
      %313 = vmatpush1.msra.mxu0 0.0
      %314 = vmatprep.subr.mxu0 0.0
      %315 = vmatpush1.msra.mxu0 0.0
      %316 = vmatprep.subr.mxu0 0.0
      %317 = vmatpush1.msra.mxu0 0.0
      %318 = vmatprep.subr.mxu0 0.0
      %319 = vmatpush1.msra.mxu0 0.0
      %320 = vmatprep.subr.mxu0 0.0
      %321 = vmatpush1.msra.mxu0 0.0
      %322 = vmatprep.subr.mxu0 0.0
      %323 = vmatpush1.msra.mxu0 0.0
      %324 = vmatprep.subr.mxu0 0.0
      %325 = vmatpush1.msra.mxu0 0.0
      %326 = vmatprep.subr.mxu0 0.0
      %327 = vmatpush1.msra.mxu0 0.0
      %328 = vmatprep.subr.mxu0 0.0
      %329 = vmatpush1.msra.mxu0 0.0
      %330 = vmatprep.subr.mxu0 0.0
      %331 = vmatpush1.msra.mxu0 0.0
      %332 = vmatprep.subr.mxu0 0.0
      %333 = vmatpush1.msra.mxu0 0.0
      %334 = vmatprep.subr.mxu0 0.0
      %335 = vmatpush1.msra.mxu0 0.0
      %336 = vmatprep.subr.mxu0 0.0
      %337 = vmatpush1.msra.mxu0 0.0
      %338 = vmatprep.subr.mxu0 0.0
      %339 = vmatpush1.msra.mxu0 0.0
      %340 = vmatprep.subr.mxu0 0.0
      %341 = vmatpush1.msra.mxu0 0.0
      %342 = vmatprep.subr.mxu0 0.0
      %343 = vmatpush1.msra.mxu0 0.0
      %344 = vmatprep.subr.mxu0 0.0
      %345 = vmatpush1.msra.mxu0 0.0
      %346 = vmatprep.subr.mxu0 0.0
      %347 = vmatpush1.msra.mxu0 0.0
      %348 = vmatprep.subr.mxu0 0.0
      %349 = vmatpush1.msra.mxu0 0.0
      %350 = vmatprep.subr.mxu0 0.0
      %351 = vmatpush1.msra.mxu0 0.0
      %352 = vmatprep.subr.mxu0 0.0
      %353 = vmatpush1.msra.mxu0 0.0
      %354 = vmatprep.subr.mxu0 0.0
      %355 = vmatpush1.msra.mxu0 0.0
      %356 = vmatprep.subr.mxu0 0.0
      %357 = vmatpush1.msra.mxu0 0.0
      %358 = vmatprep.subr.mxu0 0.0
      %359 = vmatpush1.msra.mxu0 0.0
      %360 = vmatprep.subr.mxu0 0.0
      %361 = vmatpush1.msra.mxu0 0.0
      %362 = vmatprep.subr.mxu0 0.0
      %363 = vmatpush1.msra.mxu0 0.0
      %364 = vmatprep.subr.mxu0 0.0
      %365 = vmatpush1.msra.mxu0 0.0
      %366 = vmatprep.subr.mxu0 0.0
      %367 = vmatpush1.msra.mxu0 0.0
      %368 = vmatprep.mubr.f32.mxu0 0.0
      %369 = vmatmul.mubr.f32.gmra.mrb[0].mxu0 %v297
      %v370 = vpop.f32.mrb[0].mxu0
      %v371 = vadd.f32 %v291, %v370
      %v372 = vpop.f32.mrb[0].mxu0
      %v373 = vadd.f32 %v292, %v372
      %374 = vdwg.mxu0
      %375 = vst [vmem:[%s284] sm:$0xff] %v371
      %376 = vst [vmem:[%s284 + $0x8] sm:$0xff] %v373
      %p377 = scmp.lt.s32.totalorder %s16, 1
      %s378 = scalar_select %p377, %s16, 1
      %s379 = smul.addr %s378, 2
      %s380 = smul.addr %s379, 8
      %s381 = scalar_lea.vmem %s5, %s380
      // Predicated region
      $region41: #{mam_ffc_forward.5} parent=39 // pred_check
        %p382 = pneg %p159
      $region42: #{mam_ffc_forward.5} parent=39 // pred_check_branch
        %384 = sbr.rel (%p382) target = $region44
      $region43: #{mam_ffc_forward.5} parent=39 // pred_region
        _
      $region44: #{mam_ffc_forward.5} parent=39 // pred_fallthru
        _
    $region40: #{mam_ffc_forward.5} parent=5 // pred_fallthru
      _
    %p385 = scmp.le.s32.totalorder 2, %s11
    // Predicated region
    $region45: #{mam_ffc_forward.5} parent=5 // pred_check
      %p386 = pneg %p385
    $region46: #{mam_ffc_forward.5} parent=5 // pred_check_branch
      %388 = sbr.rel (%p386) target = $region48
    $region47: #{mam_ffc_forward.5} parent=5 // pred_region
      %s389 = ssub.s32 %s11, 2
      // Predicated region
      $region49: #{mam_ffc_forward.5} parent=47 // pred_check
        %p390 = pneg %p165
      $region50: #{mam_ffc_forward.5} parent=47 // pred_check_branch
        %392 = sbr.rel (%p390) target = $region52
      $region51: #{mam_ffc_forward.5} parent=47 // pred_region
        %p393 = scmp.lt.s32.totalorder %s17, 1
        %s394 = scalar_select %p393, %s17, 1
        %s395 = smul.addr %s394, 2
        %s396 = smul.addr %s395, 8
        %s397 = scalar_lea.vmem %s5, %s396
      $region52: #{mam_ffc_forward.5} parent=47 // pred_fallthru
        _
    $region48: #{mam_ffc_forward.5} parent=5 // pred_fallthru
      _
  $region6: #{mam_ffc_forward.5} parent=0 // loop_footer
    %s15 = sadd.s32 1, %s11
  $region7: #{mam_ffc_forward.5} parent=0 // loop_footer_branch
    %10 = sbr.rel target = $region3
  $region8: #{mam_ffc_forward.5} parent=0 // loop_exit
    _

</llo_original>
